<compile_context>
chip_gen: v7x
topology: tpu7x:2x2x1
jax: 0.10.0
libtpu: 0.0.40
codegen_flags: <defaults>
</compile_context>

<pallas_src>
import functools

import jax
import jax.numpy as jnp
from jax import lax
from jax.experimental import pallas as pl
from jax.experimental.pallas import tpu as pltpu


def _lstm_decoder_kernel(
    x_ref,       # (T*B, D)     time-major, flattened rows (row = t*B + b)
    wih1_ref,    # (D, 4*GP)    lstm1 input weights, gate-col padded
    whh1_ref,    # (GP, 4*GP)   lstm1 hidden weights, row + gate-col padded
    b1_ref,      # (1, 4*GP)    lstm1 combined bias (b_ih + b_hh), gate padded
    w2_ref,      # (2*GP, 4*GP) fused [W_ih2 ; W_hh2], row + gate-col padded
    b2_ref,      # (1, 4*GP)    lstm2 combined bias, gate padded
    wfc1_ref,    # (GP, GP)     fc1 weight (pre-transposed, zero padded)
    bfc1_ref,    # (1, GP)      fc1 bias (zero padded)
    wfc2_ref,    # (1, GP)      fc2 weight row (zero padded)
    bfc2_ref,    # (1,)         fc2 bias scalar (SMEM)
    out_ref,     # (T*B, 1)     output
    xp_ref,      # scratch (T*B, 4*GP): hoisted layer-1 input projection
    h2_ref,      # scratch (T*B, GP):   per-step h2 history for the head
    *,
    voc_size: int,
    seq_len: int,
    batch: int,
):
    f32 = jnp.float32
    GP = whh1_ref.shape[0]          # padded (lane-tile aligned) hidden width

    # ---- hoisted layer-1 input projection: one big matmul, no recurrence ----
    xp_ref[...] = (
        jnp.dot(x_ref[...], wih1_ref[...], preferred_element_type=f32)
        + b1_ref[...]
    )

    def gates_to_hc(gates, c):
        # PyTorch gate order: i, f, g, o -- each occupies one full GP lane tile.
        i = jax.nn.sigmoid(gates[:, 0 * GP:1 * GP])
        f = jax.nn.sigmoid(gates[:, 1 * GP:2 * GP])
        g = jnp.tanh(gates[:, 2 * GP:3 * GP])
        o = jax.nn.sigmoid(gates[:, 3 * GP:4 * GP])
        c_new = f * c + i * g
        h_new = o * jnp.tanh(c_new)
        return h_new, c_new

    def body(t, carry):
        h1, c1, h2, c2 = carry
        row = pl.ds(t * batch, batch)
        # layer 1: recurrent part only (input part precomputed in xp_ref)
        g1 = (jnp.dot(h1, whh1_ref[...], preferred_element_type=f32)
              + xp_ref[row, :])
        h1, c1 = gates_to_hc(g1, c1)
        # layer 2: single fused matmul on [h1 | h2]
        g2 = (jnp.dot(jnp.concatenate([h1, h2], axis=-1), w2_ref[...],
                      preferred_element_type=f32)
              + b2_ref[...])
        h2, c2 = gates_to_hc(g2, c2)
        h2_ref[row, :] = h2
        return (h1, c1, h2, c2)

    zeros = jnp.zeros((batch, GP), f32)
    lax.fori_loop(0, seq_len, body, (zeros, zeros, zeros, zeros), unroll=True)

    # ---- batched head over all timesteps: fc2(relu(fc1(h2))), sigmoid, scale
    a1 = jnp.maximum(
        jnp.dot(h2_ref[...], wfc1_ref[...], preferred_element_type=f32)
        + bfc1_ref[...],
        0.0,
    )
    y = jnp.sum(a1 * wfc2_ref[...], axis=-1, keepdims=True) + bfc2_ref[0]
    out_ref[...] = (jax.nn.sigmoid(y) * float(voc_size - 1)).astype(out_ref.dtype)


def lstm_decoder_forward(x, kparams, voc_size):
    """x: (B, T, D) float32 (batch_first).  Returns (T, B) like the PyTorch module."""
    B, T, D = x.shape
    GP = kparams[1].shape[0]                                 # whh1_p: (GP, 4*GP)
    x_flat = jnp.transpose(x, (1, 0, 2)).reshape(T * B, D)   # time-major rows

    kernel = functools.partial(
        _lstm_decoder_kernel, voc_size=voc_size, seq_len=T, batch=B)
    vmem = pl.BlockSpec(memory_space=pltpu.MemorySpace.VMEM)
    smem = pl.BlockSpec(memory_space=pltpu.MemorySpace.SMEM)

    out = pl.pallas_call(
        kernel,
        out_shape=jax.ShapeDtypeStruct((T * B, 1), jnp.float32),
        in_specs=[vmem] * 9 + [smem],
        out_specs=vmem,
        scratch_shapes=[
            pltpu.VMEM((T * B, 4 * GP), jnp.float32),   # hoisted input projection
            pltpu.VMEM((T * B, GP), jnp.float32),       # h2 history for the head
        ],
    )(x_flat, *kparams)
    return out.reshape(T, B)


def init_raw_params(key, hidden_dim):
    """PyTorch-shaped parameters (nn.LSTM / nn.Linear layouts)."""
    D = hidden_dim
    H2 = 2 * hidden_dim
    keys = jax.random.split(key, 12)

    def u(k, shape, bound):
        return jax.random.uniform(k, shape, jnp.float32, minval=-bound, maxval=bound)

    kb = 1.0 / float(H2) ** 0.5
    return dict(
        w_ih1=u(keys[0], (4 * H2, D), kb),
        w_hh1=u(keys[1], (4 * H2, H2), kb),
        b_ih1=u(keys[2], (4 * H2,), kb),
        b_hh1=u(keys[3], (4 * H2,), kb),
        w_ih2=u(keys[4], (4 * H2, H2), kb),
        w_hh2=u(keys[5], (4 * H2, H2), kb),
        b_ih2=u(keys[6], (4 * H2,), kb),
        b_hh2=u(keys[7], (4 * H2,), kb),
        w_fc1=u(keys[8], (H2, H2), kb),
        b_fc1=u(keys[9], (H2,), kb),
        w_fc2=u(keys[10], (1, H2), kb),
        b_fc2=u(keys[11], (1,), kb),
    )


def prepare_params(raw, hidden_dim):
    """Pre-transpose, gate-pad to 128-lane tiles, and fuse weights for the kernel."""
    H2 = 2 * hidden_dim
    GP = ((H2 + 127) // 128) * 128        # lane-tile-padded per-gate width

    def gate_pad_cols(w_t):               # (K, 4*H2) -> (K, 4*GP), zeros elsewhere
        K = w_t.shape[0]
        out = jnp.zeros((K, 4 * GP), jnp.float32)
        for k in range(4):
            out = out.at[:, k * GP:k * GP + H2].set(w_t[:, k * H2:(k + 1) * H2])
        return out

    def pad_rows(w, rows):                # (K, N) -> (rows, N), zero rows below
        return jnp.zeros((rows, w.shape[1]), w.dtype).at[:w.shape[0], :].set(w)

    wih1_p = gate_pad_cols(raw["w_ih1"].T)                       # (D, 4*GP)
    whh1_p = pad_rows(gate_pad_cols(raw["w_hh1"].T), GP)         # (GP, 4*GP)
    b1_p = gate_pad_cols((raw["b_ih1"] + raw["b_hh1"])[None, :])  # (1, 4*GP)

    wih2_p = pad_rows(gate_pad_cols(raw["w_ih2"].T), GP)         # (GP, 4*GP)
    whh2_p = pad_rows(gate_pad_cols(raw["w_hh2"].T), GP)         # (GP, 4*GP)
    w2_p = jnp.concatenate([wih2_p, whh2_p], axis=0)             # (2*GP, 4*GP)
    b2_p = gate_pad_cols((raw["b_ih2"] + raw["b_hh2"])[None, :])  # (1, 4*GP)

    wfc1_p = jnp.zeros((GP, GP), jnp.float32).at[:H2, :H2].set(raw["w_fc1"].T)
    bfc1_p = jnp.zeros((1, GP), jnp.float32).at[0, :H2].set(raw["b_fc1"])
    wfc2_p = jnp.zeros((1, GP), jnp.float32).at[0, :H2].set(raw["w_fc2"][0])
    bfc2_s = raw["b_fc2"].reshape(1).astype(jnp.float32)         # (1,) for SMEM

    return (wih1_p, whh1_p, b1_p, w2_p, b2_p, wfc1_p, bfc1_p, wfc2_p, bfc2_s)


def reference_forward(x, raw, voc_size):
    """Pure-JAX reference reproducing the PyTorch forward with the raw params."""
    B, T, D = x.shape
    H2 = raw["w_hh1"].shape[1]

    def cell(x_t, h, c, w_ih, w_hh, b_ih, b_hh):
        g = x_t @ w_ih.T + h @ w_hh.T + b_ih + b_hh
        i = jax.nn.sigmoid(g[:, 0 * H2:1 * H2])
        f = jax.nn.sigmoid(g[:, 1 * H2:2 * H2])
        gg = jnp.tanh(g[:, 2 * H2:3 * H2])
        o = jax.nn.sigmoid(g[:, 3 * H2:4 * H2])
        c = f * c + i * gg
        h = o * jnp.tanh(c)
        return h, c

    h1 = c1 = h2 = c2 = jnp.zeros((B, H2), jnp.float32)
    outs = []
    for t in range(T):
        h1, c1 = cell(x[:, t, :], h1, c1,
                      raw["w_ih1"], raw["w_hh1"], raw["b_ih1"], raw["b_hh1"])
        h2, c2 = cell(h1, h2, c2,
                      raw["w_ih2"], raw["w_hh2"], raw["b_ih2"], raw["b_hh2"])
        a1 = jnp.maximum(h2 @ raw["w_fc1"].T + raw["b_fc1"], 0.0)
        y = a1 @ raw["w_fc2"].T + raw["b_fc2"]                  # (B, 1)
        outs.append(jax.nn.sigmoid(y[:, 0]) * float(voc_size - 1))
    return jnp.stack(outs, axis=0)                              # (T, B)


if __name__ == "__main__":
    VOC_SIZE = 100
    HIDDEN_DIM = 32        # -> LSTM hidden size 64, gate tiles padded to 128
    B, T = 2, 8

    key = jax.random.PRNGKey(0)
    k_x, k_p = jax.random.split(key)
    x = jax.random.normal(k_x, (B, T, HIDDEN_DIM), dtype=jnp.float32)
    raw = init_raw_params(k_p, HIDDEN_DIM)
    kparams = prepare_params(raw, HIDDEN_DIM)

    out = jax.block_until_ready(lstm_decoder_forward(x, kparams, VOC_SIZE))
    ref = jax.block_until_ready(reference_forward(x, raw, VOC_SIZE))

    assert out.shape == (T, B), out.shape
    max_err = float(jnp.max(jnp.abs(out - ref)))
    assert jnp.allclose(out, ref, atol=5e-3, rtol=1e-3), max_err
    print("KERNEL_OK")
</pallas_src>

<mosaic_0001>
module attributes {stable_mosaic.version = 11 : i64} {
  func.func @_lstm_decoder_kernel(%arg0: memref<16x32xf32, #tpu.memory_space<vmem>>, %arg1: memref<32x512xf32, #tpu.memory_space<vmem>>, %arg2: memref<128x512xf32, #tpu.memory_space<vmem>>, %arg3: memref<1x512xf32, #tpu.memory_space<vmem>>, %arg4: memref<256x512xf32, #tpu.memory_space<vmem>>, %arg5: memref<1x512xf32, #tpu.memory_space<vmem>>, %arg6: memref<128x128xf32, #tpu.memory_space<vmem>>, %arg7: memref<1x128xf32, #tpu.memory_space<vmem>>, %arg8: memref<1x128xf32, #tpu.memory_space<vmem>>, %arg9: memref<1xf32, #tpu.memory_space<smem>>, %arg10: memref<16x1xf32, #tpu.memory_space<vmem>>, %arg11: memref<16x512xf32, #tpu.memory_space<vmem>>, %arg12: memref<16x128xf32, #tpu.memory_space<vmem>>) attributes {dimension_semantics = [], scalar_prefetch = 0 : i64, scratch_operands = 2 : i64, tpu.core_type = #tpu.core_type<tc>} {
    %c0 = arith.constant 0 : index
    %c0_0 = arith.constant 0 : index
    %0 = vector.load %arg0[%c0, %c0_0] : memref<16x32xf32, #tpu.memory_space<vmem>>, vector<16x32xf32>
    %c0_1 = arith.constant 0 : index
    %c0_2 = arith.constant 0 : index
    %1 = vector.load %arg1[%c0_1, %c0_2] : memref<32x512xf32, #tpu.memory_space<vmem>>, vector<32x512xf32>
    %cst = arith.constant dense<0.000000e+00> : vector<16x512xf32>
    %2 = tpu.matmul %0, %1, %cst {dimension_numbers = #tpu.dot_dimension_numbers<[1], [0], [0], [1], [0, 0, 1, 1], [], []>} : vector<16x32xf32>, vector<32x512xf32>, vector<16x512xf32> -> vector<16x512xf32>
    %c0_3 = arith.constant 0 : index
    %c0_4 = arith.constant 0 : index
    %3 = vector.load %arg3[%c0_3, %c0_4] : memref<1x512xf32, #tpu.memory_space<vmem>>, vector<1x512xf32>
    %4 = vector.broadcast %3 : vector<1x512xf32> to vector<16x512xf32>
    %5 = arith.addf %2, %4 : vector<16x512xf32>
    %c0_5 = arith.constant 0 : index
    %c0_6 = arith.constant 0 : index
    %6 = vector.load %arg11[%c0_5, %c0_6] : memref<16x512xf32, #tpu.memory_space<vmem>>, vector<16x512xf32>
    tpu.vector_store %arg11[%c0_5, %c0_6], %5 {strides = array<i32>} : memref<16x512xf32, #tpu.memory_space<vmem>>, vector<16x512xf32>,
    %cst_7 = arith.constant 0.000000e+00 : f32
    %7 = vector.broadcast %cst_7 : f32 to vector<2x128xf32>
    %c0_i32 = arith.constant 0 : i32
    %c2_i32 = arith.constant 2 : i32
    %8 = arith.muli %c0_i32, %c2_i32 : i32
    %c0_8 = arith.constant 0 : index
    %c0_9 = arith.constant 0 : index
    %9 = vector.load %arg2[%c0_8, %c0_9] : memref<128x512xf32, #tpu.memory_space<vmem>>, vector<128x512xf32>
    %cst_10 = arith.constant dense<0.000000e+00> : vector<2x512xf32>
    %10 = tpu.matmul %7, %9, %cst_10 {dimension_numbers = #tpu.dot_dimension_numbers<[1], [0], [0], [1], [0, 0, 1, 1], [], []>} : vector<2x128xf32>, vector<128x512xf32>, vector<2x512xf32> -> vector<2x512xf32>
    %11 = arith.index_cast %8 : i32 to index
    %c0_11 = arith.constant 0 : index
    %12 = vector.load %arg11[%11, %c0_11] : memref<16x512xf32, #tpu.memory_space<vmem>>, vector<2x512xf32>
    %13 = arith.addf %10, %12 : vector<2x512xf32>
    %14 = vector.extract_strided_slice %13 {offsets = [0, 0], sizes = [2, 128], strides = [1, 1]} : vector<2x512xf32> to vector<2x128xf32>
    %15 = arith.negf %14 : vector<2x128xf32>
    %16 = math.exp %15 : vector<2x128xf32>
    %cst_12 = arith.constant 1.000000e+00 : f32
    %17 = vector.broadcast %cst_12 : f32 to vector<2x128xf32>
    %18 = arith.addf %17, %16 : vector<2x128xf32>
    %19 = arith.divf %17, %18 : vector<2x128xf32>
    %20 = vector.extract_strided_slice %13 {offsets = [0, 128], sizes = [2, 128], strides = [1, 1]} : vector<2x512xf32> to vector<2x128xf32>
    %21 = arith.negf %20 : vector<2x128xf32>
    %22 = math.exp %21 : vector<2x128xf32>
    %cst_13 = arith.constant 1.000000e+00 : f32
    %23 = vector.broadcast %cst_13 : f32 to vector<2x128xf32>
    %24 = arith.addf %23, %22 : vector<2x128xf32>
    %25 = arith.divf %23, %24 : vector<2x128xf32>
    %26 = vector.extract_strided_slice %13 {offsets = [0, 256], sizes = [2, 128], strides = [1, 1]} : vector<2x512xf32> to vector<2x128xf32>
    %27 = math.tanh %26 : vector<2x128xf32>
    %28 = vector.extract_strided_slice %13 {offsets = [0, 384], sizes = [2, 128], strides = [1, 1]} : vector<2x512xf32> to vector<2x128xf32>
    %29 = arith.negf %28 : vector<2x128xf32>
    %30 = math.exp %29 : vector<2x128xf32>
    %cst_14 = arith.constant 1.000000e+00 : f32
    %31 = vector.broadcast %cst_14 : f32 to vector<2x128xf32>
    %32 = arith.addf %31, %30 : vector<2x128xf32>
    %33 = arith.divf %31, %32 : vector<2x128xf32>
    %34 = arith.mulf %25, %7 : vector<2x128xf32>
    %35 = arith.mulf %19, %27 : vector<2x128xf32>
    %36 = arith.addf %34, %35 : vector<2x128xf32>
    %37 = math.tanh %36 : vector<2x128xf32>
    %38 = arith.mulf %33, %37 : vector<2x128xf32>
    %39 = tpu.concatenate %38, %7 in 1 : vector<2x128xf32>, vector<2x128xf32> -> vector<2x256xf32>
    %c0_15 = arith.constant 0 : index
    %c0_16 = arith.constant 0 : index
    %40 = vector.load %arg4[%c0_15, %c0_16] : memref<256x512xf32, #tpu.memory_space<vmem>>, vector<256x512xf32>
    %cst_17 = arith.constant dense<0.000000e+00> : vector<2x512xf32>
    %41 = tpu.matmul %39, %40, %cst_17 {dimension_numbers = #tpu.dot_dimension_numbers<[1], [0], [0], [1], [0, 0, 1, 1], [], []>} : vector<2x256xf32>, vector<256x512xf32>, vector<2x512xf32> -> vector<2x512xf32>
    %c0_18 = arith.constant 0 : index
    %c0_19 = arith.constant 0 : index
    %42 = vector.load %arg5[%c0_18, %c0_19] : memref<1x512xf32, #tpu.memory_space<vmem>>, vector<1x512xf32>
    %43 = vector.broadcast %42 : vector<1x512xf32> to vector<2x512xf32>
    %44 = arith.addf %41, %43 : vector<2x512xf32>
    %45 = vector.extract_strided_slice %44 {offsets = [0, 0], sizes = [2, 128], strides = [1, 1]} : vector<2x512xf32> to vector<2x128xf32>
    %46 = arith.negf %45 : vector<2x128xf32>
    %47 = math.exp %46 : vector<2x128xf32>
    %cst_20 = arith.constant 1.000000e+00 : f32
    %48 = vector.broadcast %cst_20 : f32 to vector<2x128xf32>
    %49 = arith.addf %48, %47 : vector<2x128xf32>
    %50 = arith.divf %48, %49 : vector<2x128xf32>
    %51 = vector.extract_strided_slice %44 {offsets = [0, 128], sizes = [2, 128], strides = [1, 1]} : vector<2x512xf32> to vector<2x128xf32>
    %52 = arith.negf %51 : vector<2x128xf32>
    %53 = math.exp %52 : vector<2x128xf32>
    %cst_21 = arith.constant 1.000000e+00 : f32
    %54 = vector.broadcast %cst_21 : f32 to vector<2x128xf32>
    %55 = arith.addf %54, %53 : vector<2x128xf32>
    %56 = arith.divf %54, %55 : vector<2x128xf32>
    %57 = vector.extract_strided_slice %44 {offsets = [0, 256], sizes = [2, 128], strides = [1, 1]} : vector<2x512xf32> to vector<2x128xf32>
    %58 = math.tanh %57 : vector<2x128xf32>
    %59 = vector.extract_strided_slice %44 {offsets = [0, 384], sizes = [2, 128], strides = [1, 1]} : vector<2x512xf32> to vector<2x128xf32>
    %60 = arith.negf %59 : vector<2x128xf32>
    %61 = math.exp %60 : vector<2x128xf32>
    %cst_22 = arith.constant 1.000000e+00 : f32
    %62 = vector.broadcast %cst_22 : f32 to vector<2x128xf32>
    %63 = arith.addf %62, %61 : vector<2x128xf32>
    %64 = arith.divf %62, %63 : vector<2x128xf32>
    %65 = arith.mulf %56, %7 : vector<2x128xf32>
    %66 = arith.mulf %50, %58 : vector<2x128xf32>
    %67 = arith.addf %65, %66 : vector<2x128xf32>
    %68 = math.tanh %67 : vector<2x128xf32>
    %69 = arith.mulf %64, %68 : vector<2x128xf32>
    %70 = arith.index_cast %8 : i32 to index
    %c0_23 = arith.constant 0 : index
    %71 = vector.load %arg12[%70, %c0_23] : memref<16x128xf32, #tpu.memory_space<vmem>>, vector<2x128xf32>
    tpu.vector_store %arg12[%70, %c0_23], %69 {strides = array<i32>} : memref<16x128xf32, #tpu.memory_space<vmem>>, vector<2x128xf32>,
    %c1_i32 = arith.constant 1 : i32
    %c2_i32_24 = arith.constant 2 : i32
    %72 = arith.muli %c1_i32, %c2_i32_24 : i32
    %c0_25 = arith.constant 0 : index
    %c0_26 = arith.constant 0 : index
    %73 = vector.load %arg2[%c0_25, %c0_26] : memref<128x512xf32, #tpu.memory_space<vmem>>, vector<128x512xf32>
    %cst_27 = arith.constant dense<0.000000e+00> : vector<2x512xf32>
    %74 = tpu.matmul %38, %73, %cst_27 {dimension_numbers = #tpu.dot_dimension_numbers<[1], [0], [0], [1], [0, 0, 1, 1], [], []>} : vector<2x128xf32>, vector<128x512xf32>, vector<2x512xf32> -> vector<2x512xf32>
    %75 = arith.index_cast %72 : i32 to index
    %c0_28 = arith.constant 0 : index
    %76 = vector.load %arg11[%75, %c0_28] : memref<16x512xf32, #tpu.memory_space<vmem>>, vector<2x512xf32>
    %77 = arith.addf %74, %76 : vector<2x512xf32>
    %78 = vector.extract_strided_slice %77 {offsets = [0, 0], sizes = [2, 128], strides = [1, 1]} : vector<2x512xf32> to vector<2x128xf32>
    %79 = arith.negf %78 : vector<2x128xf32>
    %80 = math.exp %79 : vector<2x128xf32>
    %cst_29 = arith.constant 1.000000e+00 : f32
    %81 = vector.broadcast %cst_29 : f32 to vector<2x128xf32>
    %82 = arith.addf %81, %80 : vector<2x128xf32>
    %83 = arith.divf %81, %82 : vector<2x128xf32>
    %84 = vector.extract_strided_slice %77 {offsets = [0, 128], sizes = [2, 128], strides = [1, 1]} : vector<2x512xf32> to vector<2x128xf32>
    %85 = arith.negf %84 : vector<2x128xf32>
    %86 = math.exp %85 : vector<2x128xf32>
    %cst_30 = arith.constant 1.000000e+00 : f32
    %87 = vector.broadcast %cst_30 : f32 to vector<2x128xf32>
    %88 = arith.addf %87, %86 : vector<2x128xf32>
    %89 = arith.divf %87, %88 : vector<2x128xf32>
    %90 = vector.extract_strided_slice %77 {offsets = [0, 256], sizes = [2, 128], strides = [1, 1]} : vector<2x512xf32> to vector<2x128xf32>
    %91 = math.tanh %90 : vector<2x128xf32>
    %92 = vector.extract_strided_slice %77 {offsets = [0, 384], sizes = [2, 128], strides = [1, 1]} : vector<2x512xf32> to vector<2x128xf32>
    %93 = arith.negf %92 : vector<2x128xf32>
    %94 = math.exp %93 : vector<2x128xf32>
    %cst_31 = arith.constant 1.000000e+00 : f32
    %95 = vector.broadcast %cst_31 : f32 to vector<2x128xf32>
    %96 = arith.addf %95, %94 : vector<2x128xf32>
    %97 = arith.divf %95, %96 : vector<2x128xf32>
    %98 = arith.mulf %89, %36 : vector<2x128xf32>
    %99 = arith.mulf %83, %91 : vector<2x128xf32>
    %100 = arith.addf %98, %99 : vector<2x128xf32>
    %101 = math.tanh %100 : vector<2x128xf32>
    %102 = arith.mulf %97, %101 : vector<2x128xf32>
    %103 = tpu.concatenate %102, %69 in 1 : vector<2x128xf32>, vector<2x128xf32> -> vector<2x256xf32>
    %c0_32 = arith.constant 0 : index
    %c0_33 = arith.constant 0 : index
    %104 = vector.load %arg4[%c0_32, %c0_33] : memref<256x512xf32, #tpu.memory_space<vmem>>, vector<256x512xf32>
    %cst_34 = arith.constant dense<0.000000e+00> : vector<2x512xf32>
    %105 = tpu.matmul %103, %104, %cst_34 {dimension_numbers = #tpu.dot_dimension_numbers<[1], [0], [0], [1], [0, 0, 1, 1], [], []>} : vector<2x256xf32>, vector<256x512xf32>, vector<2x512xf32> -> vector<2x512xf32>
    %c0_35 = arith.constant 0 : index
    %c0_36 = arith.constant 0 : index
    %106 = vector.load %arg5[%c0_35, %c0_36] : memref<1x512xf32, #tpu.memory_space<vmem>>, vector<1x512xf32>
    %107 = vector.broadcast %106 : vector<1x512xf32> to vector<2x512xf32>
    %108 = arith.addf %105, %107 : vector<2x512xf32>
    %109 = vector.extract_strided_slice %108 {offsets = [0, 0], sizes = [2, 128], strides = [1, 1]} : vector<2x512xf32> to vector<2x128xf32>
    %110 = arith.negf %109 : vector<2x128xf32>
    %111 = math.exp %110 : vector<2x128xf32>
    %cst_37 = arith.constant 1.000000e+00 : f32
    %112 = vector.broadcast %cst_37 : f32 to vector<2x128xf32>
    %113 = arith.addf %112, %111 : vector<2x128xf32>
    %114 = arith.divf %112, %113 : vector<2x128xf32>
    %115 = vector.extract_strided_slice %108 {offsets = [0, 128], sizes = [2, 128], strides = [1, 1]} : vector<2x512xf32> to vector<2x128xf32>
    %116 = arith.negf %115 : vector<2x128xf32>
    %117 = math.exp %116 : vector<2x128xf32>
    %cst_38 = arith.constant 1.000000e+00 : f32
    %118 = vector.broadcast %cst_38 : f32 to vector<2x128xf32>
    %119 = arith.addf %118, %117 : vector<2x128xf32>
    %120 = arith.divf %118, %119 : vector<2x128xf32>
    %121 = vector.extract_strided_slice %108 {offsets = [0, 256], sizes = [2, 128], strides = [1, 1]} : vector<2x512xf32> to vector<2x128xf32>
    %122 = math.tanh %121 : vector<2x128xf32>
    %123 = vector.extract_strided_slice %108 {offsets = [0, 384], sizes = [2, 128], strides = [1, 1]} : vector<2x512xf32> to vector<2x128xf32>
    %124 = arith.negf %123 : vector<2x128xf32>
    %125 = math.exp %124 : vector<2x128xf32>
    %cst_39 = arith.constant 1.000000e+00 : f32
    %126 = vector.broadcast %cst_39 : f32 to vector<2x128xf32>
    %127 = arith.addf %126, %125 : vector<2x128xf32>
    %128 = arith.divf %126, %127 : vector<2x128xf32>
    %129 = arith.mulf %120, %67 : vector<2x128xf32>
    %130 = arith.mulf %114, %122 : vector<2x128xf32>
    %131 = arith.addf %129, %130 : vector<2x128xf32>
    %132 = math.tanh %131 : vector<2x128xf32>
    %133 = arith.mulf %128, %132 : vector<2x128xf32>
    %134 = arith.index_cast %72 : i32 to index
    %c0_40 = arith.constant 0 : index
    %135 = vector.load %arg12[%134, %c0_40] : memref<16x128xf32, #tpu.memory_space<vmem>>, vector<2x128xf32>
    tpu.vector_store %arg12[%134, %c0_40], %133 {strides = array<i32>} : memref<16x128xf32, #tpu.memory_space<vmem>>, vector<2x128xf32>,
    %c2_i32_41 = arith.constant 2 : i32
    %c2_i32_42 = arith.constant 2 : i32
    %136 = arith.muli %c2_i32_41, %c2_i32_42 : i32
    %c0_43 = arith.constant 0 : index
    %c0_44 = arith.constant 0 : index
    %137 = vector.load %arg2[%c0_43, %c0_44] : memref<128x512xf32, #tpu.memory_space<vmem>>, vector<128x512xf32>
    %cst_45 = arith.constant dense<0.000000e+00> : vector<2x512xf32>
    %138 = tpu.matmul %102, %137, %cst_45 {dimension_numbers = #tpu.dot_dimension_numbers<[1], [0], [0], [1], [0, 0, 1, 1], [], []>} : vector<2x128xf32>, vector<128x512xf32>, vector<2x512xf32> -> vector<2x512xf32>
    %139 = arith.index_cast %136 : i32 to index
    %c0_46 = arith.constant 0 : index
    %140 = vector.load %arg11[%139, %c0_46] : memref<16x512xf32, #tpu.memory_space<vmem>>, vector<2x512xf32>
    %141 = arith.addf %138, %140 : vector<2x512xf32>
    %142 = vector.extract_strided_slice %141 {offsets = [0, 0], sizes = [2, 128], strides = [1, 1]} : vector<2x512xf32> to vector<2x128xf32>
    %143 = arith.negf %142 : vector<2x128xf32>
    %144 = math.exp %143 : vector<2x128xf32>
    %cst_47 = arith.constant 1.000000e+00 : f32
    %145 = vector.broadcast %cst_47 : f32 to vector<2x128xf32>
    %146 = arith.addf %145, %144 : vector<2x128xf32>
    %147 = arith.divf %145, %146 : vector<2x128xf32>
    %148 = vector.extract_strided_slice %141 {offsets = [0, 128], sizes = [2, 128], strides = [1, 1]} : vector<2x512xf32> to vector<2x128xf32>
    %149 = arith.negf %148 : vector<2x128xf32>
    %150 = math.exp %149 : vector<2x128xf32>
    %cst_48 = arith.constant 1.000000e+00 : f32
    %151 = vector.broadcast %cst_48 : f32 to vector<2x128xf32>
    %152 = arith.addf %151, %150 : vector<2x128xf32>
    %153 = arith.divf %151, %152 : vector<2x128xf32>
    %154 = vector.extract_strided_slice %141 {offsets = [0, 256], sizes = [2, 128], strides = [1, 1]} : vector<2x512xf32> to vector<2x128xf32>
    %155 = math.tanh %154 : vector<2x128xf32>
    %156 = vector.extract_strided_slice %141 {offsets = [0, 384], sizes = [2, 128], strides = [1, 1]} : vector<2x512xf32> to vector<2x128xf32>
    %157 = arith.negf %156 : vector<2x128xf32>
    %158 = math.exp %157 : vector<2x128xf32>
    %cst_49 = arith.constant 1.000000e+00 : f32
    %159 = vector.broadcast %cst_49 : f32 to vector<2x128xf32>
    %160 = arith.addf %159, %158 : vector<2x128xf32>
    %161 = arith.divf %159, %160 : vector<2x128xf32>
    %162 = arith.mulf %153, %100 : vector<2x128xf32>
    %163 = arith.mulf %147, %155 : vector<2x128xf32>
    %164 = arith.addf %162, %163 : vector<2x128xf32>
    %165 = math.tanh %164 : vector<2x128xf32>
    %166 = arith.mulf %161, %165 : vector<2x128xf32>
    %167 = tpu.concatenate %166, %133 in 1 : vector<2x128xf32>, vector<2x128xf32> -> vector<2x256xf32>
    %c0_50 = arith.constant 0 : index
    %c0_51 = arith.constant 0 : index
    %168 = vector.load %arg4[%c0_50, %c0_51] : memref<256x512xf32, #tpu.memory_space<vmem>>, vector<256x512xf32>
    %cst_52 = arith.constant dense<0.000000e+00> : vector<2x512xf32>
    %169 = tpu.matmul %167, %168, %cst_52 {dimension_numbers = #tpu.dot_dimension_numbers<[1], [0], [0], [1], [0, 0, 1, 1], [], []>} : vector<2x256xf32>, vector<256x512xf32>, vector<2x512xf32> -> vector<2x512xf32>
    %c0_53 = arith.constant 0 : index
    %c0_54 = arith.constant 0 : index
    %170 = vector.load %arg5[%c0_53, %c0_54] : memref<1x512xf32, #tpu.memory_space<vmem>>, vector<1x512xf32>
    %171 = vector.broadcast %170 : vector<1x512xf32> to vector<2x512xf32>
    %172 = arith.addf %169, %171 : vector<2x512xf32>
    %173 = vector.extract_strided_slice %172 {offsets = [0, 0], sizes = [2, 128], strides = [1, 1]} : vector<2x512xf32> to vector<2x128xf32>
    %174 = arith.negf %173 : vector<2x128xf32>
    %175 = math.exp %174 : vector<2x128xf32>
    %cst_55 = arith.constant 1.000000e+00 : f32
    %176 = vector.broadcast %cst_55 : f32 to vector<2x128xf32>
    %177 = arith.addf %176, %175 : vector<2x128xf32>
    %178 = arith.divf %176, %177 : vector<2x128xf32>
    %179 = vector.extract_strided_slice %172 {offsets = [0, 128], sizes = [2, 128], strides = [1, 1]} : vector<2x512xf32> to vector<2x128xf32>
    %180 = arith.negf %179 : vector<2x128xf32>
    %181 = math.exp %180 : vector<2x128xf32>
    %cst_56 = arith.constant 1.000000e+00 : f32
    %182 = vector.broadcast %cst_56 : f32 to vector<2x128xf32>
    %183 = arith.addf %182, %181 : vector<2x128xf32>
    %184 = arith.divf %182, %183 : vector<2x128xf32>
    %185 = vector.extract_strided_slice %172 {offsets = [0, 256], sizes = [2, 128], strides = [1, 1]} : vector<2x512xf32> to vector<2x128xf32>
    %186 = math.tanh %185 : vector<2x128xf32>
    %187 = vector.extract_strided_slice %172 {offsets = [0, 384], sizes = [2, 128], strides = [1, 1]} : vector<2x512xf32> to vector<2x128xf32>
    %188 = arith.negf %187 : vector<2x128xf32>
    %189 = math.exp %188 : vector<2x128xf32>
    %cst_57 = arith.constant 1.000000e+00 : f32
    %190 = vector.broadcast %cst_57 : f32 to vector<2x128xf32>
    %191 = arith.addf %190, %189 : vector<2x128xf32>
    %192 = arith.divf %190, %191 : vector<2x128xf32>
    %193 = arith.mulf %184, %131 : vector<2x128xf32>
    %194 = arith.mulf %178, %186 : vector<2x128xf32>
    %195 = arith.addf %193, %194 : vector<2x128xf32>
    %196 = math.tanh %195 : vector<2x128xf32>
    %197 = arith.mulf %192, %196 : vector<2x128xf32>
    %198 = arith.index_cast %136 : i32 to index
    %c0_58 = arith.constant 0 : index
    %199 = vector.load %arg12[%198, %c0_58] : memref<16x128xf32, #tpu.memory_space<vmem>>, vector<2x128xf32>
    tpu.vector_store %arg12[%198, %c0_58], %197 {strides = array<i32>} : memref<16x128xf32, #tpu.memory_space<vmem>>, vector<2x128xf32>,
    %c3_i32 = arith.constant 3 : i32
    %c2_i32_59 = arith.constant 2 : i32
    %200 = arith.muli %c3_i32, %c2_i32_59 : i32
    %c0_60 = arith.constant 0 : index
    %c0_61 = arith.constant 0 : index
    %201 = vector.load %arg2[%c0_60, %c0_61] : memref<128x512xf32, #tpu.memory_space<vmem>>, vector<128x512xf32>
    %cst_62 = arith.constant dense<0.000000e+00> : vector<2x512xf32>
    %202 = tpu.matmul %166, %201, %cst_62 {dimension_numbers = #tpu.dot_dimension_numbers<[1], [0], [0], [1], [0, 0, 1, 1], [], []>} : vector<2x128xf32>, vector<128x512xf32>, vector<2x512xf32> -> vector<2x512xf32>
    %203 = arith.index_cast %200 : i32 to index
    %c0_63 = arith.constant 0 : index
    %204 = vector.load %arg11[%203, %c0_63] : memref<16x512xf32, #tpu.memory_space<vmem>>, vector<2x512xf32>
    %205 = arith.addf %202, %204 : vector<2x512xf32>
    %206 = vector.extract_strided_slice %205 {offsets = [0, 0], sizes = [2, 128], strides = [1, 1]} : vector<2x512xf32> to vector<2x128xf32>
    %207 = arith.negf %206 : vector<2x128xf32>
    %208 = math.exp %207 : vector<2x128xf32>
    %cst_64 = arith.constant 1.000000e+00 : f32
    %209 = vector.broadcast %cst_64 : f32 to vector<2x128xf32>
    %210 = arith.addf %209, %208 : vector<2x128xf32>
    %211 = arith.divf %209, %210 : vector<2x128xf32>
    %212 = vector.extract_strided_slice %205 {offsets = [0, 128], sizes = [2, 128], strides = [1, 1]} : vector<2x512xf32> to vector<2x128xf32>
    %213 = arith.negf %212 : vector<2x128xf32>
    %214 = math.exp %213 : vector<2x128xf32>
    %cst_65 = arith.constant 1.000000e+00 : f32
    %215 = vector.broadcast %cst_65 : f32 to vector<2x128xf32>
    %216 = arith.addf %215, %214 : vector<2x128xf32>
    %217 = arith.divf %215, %216 : vector<2x128xf32>
    %218 = vector.extract_strided_slice %205 {offsets = [0, 256], sizes = [2, 128], strides = [1, 1]} : vector<2x512xf32> to vector<2x128xf32>
    %219 = math.tanh %218 : vector<2x128xf32>
    %220 = vector.extract_strided_slice %205 {offsets = [0, 384], sizes = [2, 128], strides = [1, 1]} : vector<2x512xf32> to vector<2x128xf32>
    %221 = arith.negf %220 : vector<2x128xf32>
    %222 = math.exp %221 : vector<2x128xf32>
    %cst_66 = arith.constant 1.000000e+00 : f32
    %223 = vector.broadcast %cst_66 : f32 to vector<2x128xf32>
    %224 = arith.addf %223, %222 : vector<2x128xf32>
    %225 = arith.divf %223, %224 : vector<2x128xf32>
    %226 = arith.mulf %217, %164 : vector<2x128xf32>
    %227 = arith.mulf %211, %219 : vector<2x128xf32>
    %228 = arith.addf %226, %227 : vector<2x128xf32>
    %229 = math.tanh %228 : vector<2x128xf32>
    %230 = arith.mulf %225, %229 : vector<2x128xf32>
    %231 = tpu.concatenate %230, %197 in 1 : vector<2x128xf32>, vector<2x128xf32> -> vector<2x256xf32>
    %c0_67 = arith.constant 0 : index
    %c0_68 = arith.constant 0 : index
    %232 = vector.load %arg4[%c0_67, %c0_68] : memref<256x512xf32, #tpu.memory_space<vmem>>, vector<256x512xf32>
    %cst_69 = arith.constant dense<0.000000e+00> : vector<2x512xf32>
    %233 = tpu.matmul %231, %232, %cst_69 {dimension_numbers = #tpu.dot_dimension_numbers<[1], [0], [0], [1], [0, 0, 1, 1], [], []>} : vector<2x256xf32>, vector<256x512xf32>, vector<2x512xf32> -> vector<2x512xf32>
    %c0_70 = arith.constant 0 : index
    %c0_71 = arith.constant 0 : index
    %234 = vector.load %arg5[%c0_70, %c0_71] : memref<1x512xf32, #tpu.memory_space<vmem>>, vector<1x512xf32>
    %235 = vector.broadcast %234 : vector<1x512xf32> to vector<2x512xf32>
    %236 = arith.addf %233, %235 : vector<2x512xf32>
    %237 = vector.extract_strided_slice %236 {offsets = [0, 0], sizes = [2, 128], strides = [1, 1]} : vector<2x512xf32> to vector<2x128xf32>
    %238 = arith.negf %237 : vector<2x128xf32>
    %239 = math.exp %238 : vector<2x128xf32>
    %cst_72 = arith.constant 1.000000e+00 : f32
    %240 = vector.broadcast %cst_72 : f32 to vector<2x128xf32>
    %241 = arith.addf %240, %239 : vector<2x128xf32>
    %242 = arith.divf %240, %241 : vector<2x128xf32>
    %243 = vector.extract_strided_slice %236 {offsets = [0, 128], sizes = [2, 128], strides = [1, 1]} : vector<2x512xf32> to vector<2x128xf32>
    %244 = arith.negf %243 : vector<2x128xf32>
    %245 = math.exp %244 : vector<2x128xf32>
    %cst_73 = arith.constant 1.000000e+00 : f32
    %246 = vector.broadcast %cst_73 : f32 to vector<2x128xf32>
    %247 = arith.addf %246, %245 : vector<2x128xf32>
    %248 = arith.divf %246, %247 : vector<2x128xf32>
    %249 = vector.extract_strided_slice %236 {offsets = [0, 256], sizes = [2, 128], strides = [1, 1]} : vector<2x512xf32> to vector<2x128xf32>
    %250 = math.tanh %249 : vector<2x128xf32>
    %251 = vector.extract_strided_slice %236 {offsets = [0, 384], sizes = [2, 128], strides = [1, 1]} : vector<2x512xf32> to vector<2x128xf32>
    %252 = arith.negf %251 : vector<2x128xf32>
    %253 = math.exp %252 : vector<2x128xf32>
    %cst_74 = arith.constant 1.000000e+00 : f32
    %254 = vector.broadcast %cst_74 : f32 to vector<2x128xf32>
    %255 = arith.addf %254, %253 : vector<2x128xf32>
    %256 = arith.divf %254, %255 : vector<2x128xf32>
    %257 = arith.mulf %248, %195 : vector<2x128xf32>
    %258 = arith.mulf %242, %250 : vector<2x128xf32>
    %259 = arith.addf %257, %258 : vector<2x128xf32>
    %260 = math.tanh %259 : vector<2x128xf32>
    %261 = arith.mulf %256, %260 : vector<2x128xf32>
    %262 = arith.index_cast %200 : i32 to index
    %c0_75 = arith.constant 0 : index
    %263 = vector.load %arg12[%262, %c0_75] : memref<16x128xf32, #tpu.memory_space<vmem>>, vector<2x128xf32>
    tpu.vector_store %arg12[%262, %c0_75], %261 {strides = array<i32>} : memref<16x128xf32, #tpu.memory_space<vmem>>, vector<2x128xf32>,
    %c4_i32 = arith.constant 4 : i32
    %c2_i32_76 = arith.constant 2 : i32
    %264 = arith.muli %c4_i32, %c2_i32_76 : i32
    %c0_77 = arith.constant 0 : index
    %c0_78 = arith.constant 0 : index
    %265 = vector.load %arg2[%c0_77, %c0_78] : memref<128x512xf32, #tpu.memory_space<vmem>>, vector<128x512xf32>
    %cst_79 = arith.constant dense<0.000000e+00> : vector<2x512xf32>
    %266 = tpu.matmul %230, %265, %cst_79 {dimension_numbers = #tpu.dot_dimension_numbers<[1], [0], [0], [1], [0, 0, 1, 1], [], []>} : vector<2x128xf32>, vector<128x512xf32>, vector<2x512xf32> -> vector<2x512xf32>
    %267 = arith.index_cast %264 : i32 to index
    %c0_80 = arith.constant 0 : index
    %268 = vector.load %arg11[%267, %c0_80] : memref<16x512xf32, #tpu.memory_space<vmem>>, vector<2x512xf32>
    %269 = arith.addf %266, %268 : vector<2x512xf32>
    %270 = vector.extract_strided_slice %269 {offsets = [0, 0], sizes = [2, 128], strides = [1, 1]} : vector<2x512xf32> to vector<2x128xf32>
    %271 = arith.negf %270 : vector<2x128xf32>
    %272 = math.exp %271 : vector<2x128xf32>
    %cst_81 = arith.constant 1.000000e+00 : f32
    %273 = vector.broadcast %cst_81 : f32 to vector<2x128xf32>
    %274 = arith.addf %273, %272 : vector<2x128xf32>
    %275 = arith.divf %273, %274 : vector<2x128xf32>
    %276 = vector.extract_strided_slice %269 {offsets = [0, 128], sizes = [2, 128], strides = [1, 1]} : vector<2x512xf32> to vector<2x128xf32>
    %277 = arith.negf %276 : vector<2x128xf32>
    %278 = math.exp %277 : vector<2x128xf32>
    %cst_82 = arith.constant 1.000000e+00 : f32
    %279 = vector.broadcast %cst_82 : f32 to vector<2x128xf32>
    %280 = arith.addf %279, %278 : vector<2x128xf32>
    %281 = arith.divf %279, %280 : vector<2x128xf32>
    %282 = vector.extract_strided_slice %269 {offsets = [0, 256], sizes = [2, 128], strides = [1, 1]} : vector<2x512xf32> to vector<2x128xf32>
    %283 = math.tanh %282 : vector<2x128xf32>
    %284 = vector.extract_strided_slice %269 {offsets = [0, 384], sizes = [2, 128], strides = [1, 1]} : vector<2x512xf32> to vector<2x128xf32>
    %285 = arith.negf %284 : vector<2x128xf32>
    %286 = math.exp %285 : vector<2x128xf32>
    %cst_83 = arith.constant 1.000000e+00 : f32
    %287 = vector.broadcast %cst_83 : f32 to vector<2x128xf32>
    %288 = arith.addf %287, %286 : vector<2x128xf32>
    %289 = arith.divf %287, %288 : vector<2x128xf32>
    %290 = arith.mulf %281, %228 : vector<2x128xf32>
    %291 = arith.mulf %275, %283 : vector<2x128xf32>
    %292 = arith.addf %290, %291 : vector<2x128xf32>
    %293 = math.tanh %292 : vector<2x128xf32>
    %294 = arith.mulf %289, %293 : vector<2x128xf32>
    %295 = tpu.concatenate %294, %261 in 1 : vector<2x128xf32>, vector<2x128xf32> -> vector<2x256xf32>
    %c0_84 = arith.constant 0 : index
    %c0_85 = arith.constant 0 : index
    %296 = vector.load %arg4[%c0_84, %c0_85] : memref<256x512xf32, #tpu.memory_space<vmem>>, vector<256x512xf32>
    %cst_86 = arith.constant dense<0.000000e+00> : vector<2x512xf32>
    %297 = tpu.matmul %295, %296, %cst_86 {dimension_numbers = #tpu.dot_dimension_numbers<[1], [0], [0], [1], [0, 0, 1, 1], [], []>} : vector<2x256xf32>, vector<256x512xf32>, vector<2x512xf32> -> vector<2x512xf32>
    %c0_87 = arith.constant 0 : index
    %c0_88 = arith.constant 0 : index
    %298 = vector.load %arg5[%c0_87, %c0_88] : memref<1x512xf32, #tpu.memory_space<vmem>>, vector<1x512xf32>
    %299 = vector.broadcast %298 : vector<1x512xf32> to vector<2x512xf32>
    %300 = arith.addf %297, %299 : vector<2x512xf32>
    %301 = vector.extract_strided_slice %300 {offsets = [0, 0], sizes = [2, 128], strides = [1, 1]} : vector<2x512xf32> to vector<2x128xf32>
    %302 = arith.negf %301 : vector<2x128xf32>
    %303 = math.exp %302 : vector<2x128xf32>
    %cst_89 = arith.constant 1.000000e+00 : f32
    %304 = vector.broadcast %cst_89 : f32 to vector<2x128xf32>
    %305 = arith.addf %304, %303 : vector<2x128xf32>
    %306 = arith.divf %304, %305 : vector<2x128xf32>
    %307 = vector.extract_strided_slice %300 {offsets = [0, 128], sizes = [2, 128], strides = [1, 1]} : vector<2x512xf32> to vector<2x128xf32>
    %308 = arith.negf %307 : vector<2x128xf32>
    %309 = math.exp %308 : vector<2x128xf32>
    %cst_90 = arith.constant 1.000000e+00 : f32
    %310 = vector.broadcast %cst_90 : f32 to vector<2x128xf32>
    %311 = arith.addf %310, %309 : vector<2x128xf32>
    %312 = arith.divf %310, %311 : vector<2x128xf32>
    %313 = vector.extract_strided_slice %300 {offsets = [0, 256], sizes = [2, 128], strides = [1, 1]} : vector<2x512xf32> to vector<2x128xf32>
    %314 = math.tanh %313 : vector<2x128xf32>
    %315 = vector.extract_strided_slice %300 {offsets = [0, 384], sizes = [2, 128], strides = [1, 1]} : vector<2x512xf32> to vector<2x128xf32>
    %316 = arith.negf %315 : vector<2x128xf32>
    %317 = math.exp %316 : vector<2x128xf32>
    %cst_91 = arith.constant 1.000000e+00 : f32
    %318 = vector.broadcast %cst_91 : f32 to vector<2x128xf32>
    %319 = arith.addf %318, %317 : vector<2x128xf32>
    %320 = arith.divf %318, %319 : vector<2x128xf32>
    %321 = arith.mulf %312, %259 : vector<2x128xf32>
    %322 = arith.mulf %306, %314 : vector<2x128xf32>
    %323 = arith.addf %321, %322 : vector<2x128xf32>
    %324 = math.tanh %323 : vector<2x128xf32>
    %325 = arith.mulf %320, %324 : vector<2x128xf32>
    %326 = arith.index_cast %264 : i32 to index
    %c0_92 = arith.constant 0 : index
    %327 = vector.load %arg12[%326, %c0_92] : memref<16x128xf32, #tpu.memory_space<vmem>>, vector<2x128xf32>
    tpu.vector_store %arg12[%326, %c0_92], %325 {strides = array<i32>} : memref<16x128xf32, #tpu.memory_space<vmem>>, vector<2x128xf32>,
    %c5_i32 = arith.constant 5 : i32
    %c2_i32_93 = arith.constant 2 : i32
    %328 = arith.muli %c5_i32, %c2_i32_93 : i32
    %c0_94 = arith.constant 0 : index
    %c0_95 = arith.constant 0 : index
    %329 = vector.load %arg2[%c0_94, %c0_95] : memref<128x512xf32, #tpu.memory_space<vmem>>, vector<128x512xf32>
    %cst_96 = arith.constant dense<0.000000e+00> : vector<2x512xf32>
    %330 = tpu.matmul %294, %329, %cst_96 {dimension_numbers = #tpu.dot_dimension_numbers<[1], [0], [0], [1], [0, 0, 1, 1], [], []>} : vector<2x128xf32>, vector<128x512xf32>, vector<2x512xf32> -> vector<2x512xf32>
    %331 = arith.index_cast %328 : i32 to index
    %c0_97 = arith.constant 0 : index
    %332 = vector.load %arg11[%331, %c0_97] : memref<16x512xf32, #tpu.memory_space<vmem>>, vector<2x512xf32>
    %333 = arith.addf %330, %332 : vector<2x512xf32>
    %334 = vector.extract_strided_slice %333 {offsets = [0, 0], sizes = [2, 128], strides = [1, 1]} : vector<2x512xf32> to vector<2x128xf32>
    %335 = arith.negf %334 : vector<2x128xf32>
    %336 = math.exp %335 : vector<2x128xf32>
    %cst_98 = arith.constant 1.000000e+00 : f32
    %337 = vector.broadcast %cst_98 : f32 to vector<2x128xf32>
    %338 = arith.addf %337, %336 : vector<2x128xf32>
    %339 = arith.divf %337, %338 : vector<2x128xf32>
    %340 = vector.extract_strided_slice %333 {offsets = [0, 128], sizes = [2, 128], strides = [1, 1]} : vector<2x512xf32> to vector<2x128xf32>
    %341 = arith.negf %340 : vector<2x128xf32>
    %342 = math.exp %341 : vector<2x128xf32>
    %cst_99 = arith.constant 1.000000e+00 : f32
    %343 = vector.broadcast %cst_99 : f32 to vector<2x128xf32>
    %344 = arith.addf %343, %342 : vector<2x128xf32>
    %345 = arith.divf %343, %344 : vector<2x128xf32>
    %346 = vector.extract_strided_slice %333 {offsets = [0, 256], sizes = [2, 128], strides = [1, 1]} : vector<2x512xf32> to vector<2x128xf32>
    %347 = math.tanh %346 : vector<2x128xf32>
    %348 = vector.extract_strided_slice %333 {offsets = [0, 384], sizes = [2, 128], strides = [1, 1]} : vector<2x512xf32> to vector<2x128xf32>
    %349 = arith.negf %348 : vector<2x128xf32>
    %350 = math.exp %349 : vector<2x128xf32>
    %cst_100 = arith.constant 1.000000e+00 : f32
    %351 = vector.broadcast %cst_100 : f32 to vector<2x128xf32>
    %352 = arith.addf %351, %350 : vector<2x128xf32>
    %353 = arith.divf %351, %352 : vector<2x128xf32>
    %354 = arith.mulf %345, %292 : vector<2x128xf32>
    %355 = arith.mulf %339, %347 : vector<2x128xf32>
    %356 = arith.addf %354, %355 : vector<2x128xf32>
    %357 = math.tanh %356 : vector<2x128xf32>
    %358 = arith.mulf %353, %357 : vector<2x128xf32>
    %359 = tpu.concatenate %358, %325 in 1 : vector<2x128xf32>, vector<2x128xf32> -> vector<2x256xf32>
    %c0_101 = arith.constant 0 : index
    %c0_102 = arith.constant 0 : index
    %360 = vector.load %arg4[%c0_101, %c0_102] : memref<256x512xf32, #tpu.memory_space<vmem>>, vector<256x512xf32>
    %cst_103 = arith.constant dense<0.000000e+00> : vector<2x512xf32>
    %361 = tpu.matmul %359, %360, %cst_103 {dimension_numbers = #tpu.dot_dimension_numbers<[1], [0], [0], [1], [0, 0, 1, 1], [], []>} : vector<2x256xf32>, vector<256x512xf32>, vector<2x512xf32> -> vector<2x512xf32>
    %c0_104 = arith.constant 0 : index
    %c0_105 = arith.constant 0 : index
    %362 = vector.load %arg5[%c0_104, %c0_105] : memref<1x512xf32, #tpu.memory_space<vmem>>, vector<1x512xf32>
    %363 = vector.broadcast %362 : vector<1x512xf32> to vector<2x512xf32>
    %364 = arith.addf %361, %363 : vector<2x512xf32>
    %365 = vector.extract_strided_slice %364 {offsets = [0, 0], sizes = [2, 128], strides = [1, 1]} : vector<2x512xf32> to vector<2x128xf32>
    %366 = arith.negf %365 : vector<2x128xf32>
    %367 = math.exp %366 : vector<2x128xf32>
    %cst_106 = arith.constant 1.000000e+00 : f32
    %368 = vector.broadcast %cst_106 : f32 to vector<2x128xf32>
    %369 = arith.addf %368, %367 : vector<2x128xf32>
    %370 = arith.divf %368, %369 : vector<2x128xf32>
    %371 = vector.extract_strided_slice %364 {offsets = [0, 128], sizes = [2, 128], strides = [1, 1]} : vector<2x512xf32> to vector<2x128xf32>
    %372 = arith.negf %371 : vector<2x128xf32>
    %373 = math.exp %372 : vector<2x128xf32>
    %cst_107 = arith.constant 1.000000e+00 : f32
    %374 = vector.broadcast %cst_107 : f32 to vector<2x128xf32>
    %375 = arith.addf %374, %373 : vector<2x128xf32>
    %376 = arith.divf %374, %375 : vector<2x128xf32>
    %377 = vector.extract_strided_slice %364 {offsets = [0, 256], sizes = [2, 128], strides = [1, 1]} : vector<2x512xf32> to vector<2x128xf32>
    %378 = math.tanh %377 : vector<2x128xf32>
    %379 = vector.extract_strided_slice %364 {offsets = [0, 384], sizes = [2, 128], strides = [1, 1]} : vector<2x512xf32> to vector<2x128xf32>
    %380 = arith.negf %379 : vector<2x128xf32>
    %381 = math.exp %380 : vector<2x128xf32>
    %cst_108 = arith.constant 1.000000e+00 : f32
    %382 = vector.broadcast %cst_108 : f32 to vector<2x128xf32>
    %383 = arith.addf %382, %381 : vector<2x128xf32>
    %384 = arith.divf %382, %383 : vector<2x128xf32>
    %385 = arith.mulf %376, %323 : vector<2x128xf32>
    %386 = arith.mulf %370, %378 : vector<2x128xf32>
    %387 = arith.addf %385, %386 : vector<2x128xf32>
    %388 = math.tanh %387 : vector<2x128xf32>
    %389 = arith.mulf %384, %388 : vector<2x128xf32>
    %390 = arith.index_cast %328 : i32 to index
    %c0_109 = arith.constant 0 : index
    %391 = vector.load %arg12[%390, %c0_109] : memref<16x128xf32, #tpu.memory_space<vmem>>, vector<2x128xf32>
    tpu.vector_store %arg12[%390, %c0_109], %389 {strides = array<i32>} : memref<16x128xf32, #tpu.memory_space<vmem>>, vector<2x128xf32>,
    %c6_i32 = arith.constant 6 : i32
    %c2_i32_110 = arith.constant 2 : i32
    %392 = arith.muli %c6_i32, %c2_i32_110 : i32
    %c0_111 = arith.constant 0 : index
    %c0_112 = arith.constant 0 : index
    %393 = vector.load %arg2[%c0_111, %c0_112] : memref<128x512xf32, #tpu.memory_space<vmem>>, vector<128x512xf32>
    %cst_113 = arith.constant dense<0.000000e+00> : vector<2x512xf32>
    %394 = tpu.matmul %358, %393, %cst_113 {dimension_numbers = #tpu.dot_dimension_numbers<[1], [0], [0], [1], [0, 0, 1, 1], [], []>} : vector<2x128xf32>, vector<128x512xf32>, vector<2x512xf32> -> vector<2x512xf32>
    %395 = arith.index_cast %392 : i32 to index
    %c0_114 = arith.constant 0 : index
    %396 = vector.load %arg11[%395, %c0_114] : memref<16x512xf32, #tpu.memory_space<vmem>>, vector<2x512xf32>
    %397 = arith.addf %394, %396 : vector<2x512xf32>
    %398 = vector.extract_strided_slice %397 {offsets = [0, 0], sizes = [2, 128], strides = [1, 1]} : vector<2x512xf32> to vector<2x128xf32>
    %399 = arith.negf %398 : vector<2x128xf32>
    %400 = math.exp %399 : vector<2x128xf32>
    %cst_115 = arith.constant 1.000000e+00 : f32
    %401 = vector.broadcast %cst_115 : f32 to vector<2x128xf32>
    %402 = arith.addf %401, %400 : vector<2x128xf32>
    %403 = arith.divf %401, %402 : vector<2x128xf32>
    %404 = vector.extract_strided_slice %397 {offsets = [0, 128], sizes = [2, 128], strides = [1, 1]} : vector<2x512xf32> to vector<2x128xf32>
    %405 = arith.negf %404 : vector<2x128xf32>
    %406 = math.exp %405 : vector<2x128xf32>
    %cst_116 = arith.constant 1.000000e+00 : f32
    %407 = vector.broadcast %cst_116 : f32 to vector<2x128xf32>
    %408 = arith.addf %407, %406 : vector<2x128xf32>
    %409 = arith.divf %407, %408 : vector<2x128xf32>
    %410 = vector.extract_strided_slice %397 {offsets = [0, 256], sizes = [2, 128], strides = [1, 1]} : vector<2x512xf32> to vector<2x128xf32>
    %411 = math.tanh %410 : vector<2x128xf32>
    %412 = vector.extract_strided_slice %397 {offsets = [0, 384], sizes = [2, 128], strides = [1, 1]} : vector<2x512xf32> to vector<2x128xf32>
    %413 = arith.negf %412 : vector<2x128xf32>
    %414 = math.exp %413 : vector<2x128xf32>
    %cst_117 = arith.constant 1.000000e+00 : f32
    %415 = vector.broadcast %cst_117 : f32 to vector<2x128xf32>
    %416 = arith.addf %415, %414 : vector<2x128xf32>
    %417 = arith.divf %415, %416 : vector<2x128xf32>
    %418 = arith.mulf %409, %356 : vector<2x128xf32>
    %419 = arith.mulf %403, %411 : vector<2x128xf32>
    %420 = arith.addf %418, %419 : vector<2x128xf32>
    %421 = math.tanh %420 : vector<2x128xf32>
    %422 = arith.mulf %417, %421 : vector<2x128xf32>
    %423 = tpu.concatenate %422, %389 in 1 : vector<2x128xf32>, vector<2x128xf32> -> vector<2x256xf32>
    %c0_118 = arith.constant 0 : index
    %c0_119 = arith.constant 0 : index
    %424 = vector.load %arg4[%c0_118, %c0_119] : memref<256x512xf32, #tpu.memory_space<vmem>>, vector<256x512xf32>
    %cst_120 = arith.constant dense<0.000000e+00> : vector<2x512xf32>
    %425 = tpu.matmul %423, %424, %cst_120 {dimension_numbers = #tpu.dot_dimension_numbers<[1], [0], [0], [1], [0, 0, 1, 1], [], []>} : vector<2x256xf32>, vector<256x512xf32>, vector<2x512xf32> -> vector<2x512xf32>
    %c0_121 = arith.constant 0 : index
    %c0_122 = arith.constant 0 : index
    %426 = vector.load %arg5[%c0_121, %c0_122] : memref<1x512xf32, #tpu.memory_space<vmem>>, vector<1x512xf32>
    %427 = vector.broadcast %426 : vector<1x512xf32> to vector<2x512xf32>
    %428 = arith.addf %425, %427 : vector<2x512xf32>
    %429 = vector.extract_strided_slice %428 {offsets = [0, 0], sizes = [2, 128], strides = [1, 1]} : vector<2x512xf32> to vector<2x128xf32>
    %430 = arith.negf %429 : vector<2x128xf32>
    %431 = math.exp %430 : vector<2x128xf32>
    %cst_123 = arith.constant 1.000000e+00 : f32
    %432 = vector.broadcast %cst_123 : f32 to vector<2x128xf32>
    %433 = arith.addf %432, %431 : vector<2x128xf32>
    %434 = arith.divf %432, %433 : vector<2x128xf32>
    %435 = vector.extract_strided_slice %428 {offsets = [0, 128], sizes = [2, 128], strides = [1, 1]} : vector<2x512xf32> to vector<2x128xf32>
    %436 = arith.negf %435 : vector<2x128xf32>
    %437 = math.exp %436 : vector<2x128xf32>
    %cst_124 = arith.constant 1.000000e+00 : f32
    %438 = vector.broadcast %cst_124 : f32 to vector<2x128xf32>
    %439 = arith.addf %438, %437 : vector<2x128xf32>
    %440 = arith.divf %438, %439 : vector<2x128xf32>
    %441 = vector.extract_strided_slice %428 {offsets = [0, 256], sizes = [2, 128], strides = [1, 1]} : vector<2x512xf32> to vector<2x128xf32>
    %442 = math.tanh %441 : vector<2x128xf32>
    %443 = vector.extract_strided_slice %428 {offsets = [0, 384], sizes = [2, 128], strides = [1, 1]} : vector<2x512xf32> to vector<2x128xf32>
    %444 = arith.negf %443 : vector<2x128xf32>
    %445 = math.exp %444 : vector<2x128xf32>
    %cst_125 = arith.constant 1.000000e+00 : f32
    %446 = vector.broadcast %cst_125 : f32 to vector<2x128xf32>
    %447 = arith.addf %446, %445 : vector<2x128xf32>
    %448 = arith.divf %446, %447 : vector<2x128xf32>
    %449 = arith.mulf %440, %387 : vector<2x128xf32>
    %450 = arith.mulf %434, %442 : vector<2x128xf32>
    %451 = arith.addf %449, %450 : vector<2x128xf32>
    %452 = math.tanh %451 : vector<2x128xf32>
    %453 = arith.mulf %448, %452 : vector<2x128xf32>
    %454 = arith.index_cast %392 : i32 to index
    %c0_126 = arith.constant 0 : index
    %455 = vector.load %arg12[%454, %c0_126] : memref<16x128xf32, #tpu.memory_space<vmem>>, vector<2x128xf32>
    tpu.vector_store %arg12[%454, %c0_126], %453 {strides = array<i32>} : memref<16x128xf32, #tpu.memory_space<vmem>>, vector<2x128xf32>,
    %c7_i32 = arith.constant 7 : i32
    %c2_i32_127 = arith.constant 2 : i32
    %456 = arith.muli %c7_i32, %c2_i32_127 : i32
    %c0_128 = arith.constant 0 : index
    %c0_129 = arith.constant 0 : index
    %457 = vector.load %arg2[%c0_128, %c0_129] : memref<128x512xf32, #tpu.memory_space<vmem>>, vector<128x512xf32>
    %cst_130 = arith.constant dense<0.000000e+00> : vector<2x512xf32>
    %458 = tpu.matmul %422, %457, %cst_130 {dimension_numbers = #tpu.dot_dimension_numbers<[1], [0], [0], [1], [0, 0, 1, 1], [], []>} : vector<2x128xf32>, vector<128x512xf32>, vector<2x512xf32> -> vector<2x512xf32>
    %459 = arith.index_cast %456 : i32 to index
    %c0_131 = arith.constant 0 : index
    %460 = vector.load %arg11[%459, %c0_131] : memref<16x512xf32, #tpu.memory_space<vmem>>, vector<2x512xf32>
    %461 = arith.addf %458, %460 : vector<2x512xf32>
    %462 = vector.extract_strided_slice %461 {offsets = [0, 0], sizes = [2, 128], strides = [1, 1]} : vector<2x512xf32> to vector<2x128xf32>
    %463 = arith.negf %462 : vector<2x128xf32>
    %464 = math.exp %463 : vector<2x128xf32>
    %cst_132 = arith.constant 1.000000e+00 : f32
    %465 = vector.broadcast %cst_132 : f32 to vector<2x128xf32>
    %466 = arith.addf %465, %464 : vector<2x128xf32>
    %467 = arith.divf %465, %466 : vector<2x128xf32>
    %468 = vector.extract_strided_slice %461 {offsets = [0, 128], sizes = [2, 128], strides = [1, 1]} : vector<2x512xf32> to vector<2x128xf32>
    %469 = arith.negf %468 : vector<2x128xf32>
    %470 = math.exp %469 : vector<2x128xf32>
    %cst_133 = arith.constant 1.000000e+00 : f32
    %471 = vector.broadcast %cst_133 : f32 to vector<2x128xf32>
    %472 = arith.addf %471, %470 : vector<2x128xf32>
    %473 = arith.divf %471, %472 : vector<2x128xf32>
    %474 = vector.extract_strided_slice %461 {offsets = [0, 256], sizes = [2, 128], strides = [1, 1]} : vector<2x512xf32> to vector<2x128xf32>
    %475 = math.tanh %474 : vector<2x128xf32>
    %476 = vector.extract_strided_slice %461 {offsets = [0, 384], sizes = [2, 128], strides = [1, 1]} : vector<2x512xf32> to vector<2x128xf32>
    %477 = arith.negf %476 : vector<2x128xf32>
    %478 = math.exp %477 : vector<2x128xf32>
    %cst_134 = arith.constant 1.000000e+00 : f32
    %479 = vector.broadcast %cst_134 : f32 to vector<2x128xf32>
    %480 = arith.addf %479, %478 : vector<2x128xf32>
    %481 = arith.divf %479, %480 : vector<2x128xf32>
    %482 = arith.mulf %473, %420 : vector<2x128xf32>
    %483 = arith.mulf %467, %475 : vector<2x128xf32>
    %484 = arith.addf %482, %483 : vector<2x128xf32>
    %485 = math.tanh %484 : vector<2x128xf32>
    %486 = arith.mulf %481, %485 : vector<2x128xf32>
    %487 = tpu.concatenate %486, %453 in 1 : vector<2x128xf32>, vector<2x128xf32> -> vector<2x256xf32>
    %c0_135 = arith.constant 0 : index
    %c0_136 = arith.constant 0 : index
    %488 = vector.load %arg4[%c0_135, %c0_136] : memref<256x512xf32, #tpu.memory_space<vmem>>, vector<256x512xf32>
    %cst_137 = arith.constant dense<0.000000e+00> : vector<2x512xf32>
    %489 = tpu.matmul %487, %488, %cst_137 {dimension_numbers = #tpu.dot_dimension_numbers<[1], [0], [0], [1], [0, 0, 1, 1], [], []>} : vector<2x256xf32>, vector<256x512xf32>, vector<2x512xf32> -> vector<2x512xf32>
    %c0_138 = arith.constant 0 : index
    %c0_139 = arith.constant 0 : index
    %490 = vector.load %arg5[%c0_138, %c0_139] : memref<1x512xf32, #tpu.memory_space<vmem>>, vector<1x512xf32>
    %491 = vector.broadcast %490 : vector<1x512xf32> to vector<2x512xf32>
    %492 = arith.addf %489, %491 : vector<2x512xf32>
    %493 = vector.extract_strided_slice %492 {offsets = [0, 0], sizes = [2, 128], strides = [1, 1]} : vector<2x512xf32> to vector<2x128xf32>
    %494 = arith.negf %493 : vector<2x128xf32>
    %495 = math.exp %494 : vector<2x128xf32>
    %cst_140 = arith.constant 1.000000e+00 : f32
    %496 = vector.broadcast %cst_140 : f32 to vector<2x128xf32>
    %497 = arith.addf %496, %495 : vector<2x128xf32>
    %498 = arith.divf %496, %497 : vector<2x128xf32>
    %499 = vector.extract_strided_slice %492 {offsets = [0, 128], sizes = [2, 128], strides = [1, 1]} : vector<2x512xf32> to vector<2x128xf32>
    %500 = arith.negf %499 : vector<2x128xf32>
    %501 = math.exp %500 : vector<2x128xf32>
    %cst_141 = arith.constant 1.000000e+00 : f32
    %502 = vector.broadcast %cst_141 : f32 to vector<2x128xf32>
    %503 = arith.addf %502, %501 : vector<2x128xf32>
    %504 = arith.divf %502, %503 : vector<2x128xf32>
    %505 = vector.extract_strided_slice %492 {offsets = [0, 256], sizes = [2, 128], strides = [1, 1]} : vector<2x512xf32> to vector<2x128xf32>
    %506 = math.tanh %505 : vector<2x128xf32>
    %507 = vector.extract_strided_slice %492 {offsets = [0, 384], sizes = [2, 128], strides = [1, 1]} : vector<2x512xf32> to vector<2x128xf32>
    %508 = arith.negf %507 : vector<2x128xf32>
    %509 = math.exp %508 : vector<2x128xf32>
    %cst_142 = arith.constant 1.000000e+00 : f32
    %510 = vector.broadcast %cst_142 : f32 to vector<2x128xf32>
    %511 = arith.addf %510, %509 : vector<2x128xf32>
    %512 = arith.divf %510, %511 : vector<2x128xf32>
    %513 = arith.mulf %504, %451 : vector<2x128xf32>
    %514 = arith.mulf %498, %506 : vector<2x128xf32>
    %515 = arith.addf %513, %514 : vector<2x128xf32>
    %516 = math.tanh %515 : vector<2x128xf32>
    %517 = arith.mulf %512, %516 : vector<2x128xf32>
    %518 = arith.index_cast %456 : i32 to index
    %c0_143 = arith.constant 0 : index
    %519 = vector.load %arg12[%518, %c0_143] : memref<16x128xf32, #tpu.memory_space<vmem>>, vector<2x128xf32>
    tpu.vector_store %arg12[%518, %c0_143], %517 {strides = array<i32>} : memref<16x128xf32, #tpu.memory_space<vmem>>, vector<2x128xf32>,
    %c8_i32 = arith.constant 8 : i32
    %c0_144 = arith.constant 0 : index
    %c0_145 = arith.constant 0 : index
    %520 = vector.load %arg12[%c0_144, %c0_145] : memref<16x128xf32, #tpu.memory_space<vmem>>, vector<16x128xf32>
    %c0_146 = arith.constant 0 : index
    %c0_147 = arith.constant 0 : index
    %521 = vector.load %arg6[%c0_146, %c0_147] : memref<128x128xf32, #tpu.memory_space<vmem>>, vector<128x128xf32>
    %cst_148 = arith.constant dense<0.000000e+00> : vector<16x128xf32>
    %522 = tpu.matmul %520, %521, %cst_148 {dimension_numbers = #tpu.dot_dimension_numbers<[1], [0], [0], [1], [0, 0, 1, 1], [], []>} : vector<16x128xf32>, vector<128x128xf32>, vector<16x128xf32> -> vector<16x128xf32>
    %c0_149 = arith.constant 0 : index
    %c0_150 = arith.constant 0 : index
    %523 = vector.load %arg7[%c0_149, %c0_150] : memref<1x128xf32, #tpu.memory_space<vmem>>, vector<1x128xf32>
    %524 = vector.broadcast %523 : vector<1x128xf32> to vector<16x128xf32>
    %525 = arith.addf %522, %524 : vector<16x128xf32>
    %cst_151 = arith.constant 0.000000e+00 : f32
    %526 = vector.broadcast %cst_151 : f32 to vector<16x128xf32>
    %527 = arith.maximumf %525, %526 : vector<16x128xf32>
    %c0_152 = arith.constant 0 : index
    %c0_153 = arith.constant 0 : index
    %528 = vector.load %arg8[%c0_152, %c0_153] : memref<1x128xf32, #tpu.memory_space<vmem>>, vector<1x128xf32>
    %529 = vector.broadcast %528 : vector<1x128xf32> to vector<16x128xf32>
    %530 = arith.mulf %527, %529 : vector<16x128xf32>
    %cst_154 = arith.constant dense<0.000000e+00> : vector<16xf32>
    %531 = vector.multi_reduction <add>, %530, %cst_154 [1] : vector<16x128xf32> to vector<16xf32>
    %532 = vector.shape_cast %531 : vector<16xf32> to vector<16x1xf32>
    %c0_155 = arith.constant 0 : index
    %533 = memref.load %arg9[%c0_155] : memref<1xf32, #tpu.memory_space<smem>>
    %534 = vector.broadcast %533 : f32 to vector<16x1xf32>
    %535 = arith.addf %532, %534 : vector<16x1xf32>
    %536 = arith.negf %535 : vector<16x1xf32>
    %537 = math.exp %536 : vector<16x1xf32>
    %cst_156 = arith.constant 1.000000e+00 : f32
    %538 = vector.broadcast %cst_156 : f32 to vector<16x1xf32>
    %539 = arith.addf %538, %537 : vector<16x1xf32>
    %540 = arith.divf %538, %539 : vector<16x1xf32>
    %cst_157 = arith.constant 9.900000e+01 : f32
    %541 = vector.broadcast %cst_157 : f32 to vector<16x1xf32>
    %542 = arith.mulf %540, %541 : vector<16x1xf32>
    %c0_158 = arith.constant 0 : index
    %c0_159 = arith.constant 0 : index
    %543 = vector.load %arg10[%c0_158, %c0_159] : memref<16x1xf32, #tpu.memory_space<vmem>>, vector<16x1xf32>
    tpu.vector_store %arg10[%c0_158, %c0_159], %542 {strides = array<i32>} : memref<16x1xf32, #tpu.memory_space<vmem>>, vector<16x1xf32>,
    return
  }
}

</mosaic_0001>

<llo_original>
// kernel: tpu_custom_call.1
$region0: #{tpu_custom_call.1}
  #allocation0 [shape = 'u32[]', space=smem, size = 0x4, offset = 0x4, fixed_abs, tag = 'smem constant byte address 0x4 - core index']
  #allocation1 [shape = 'u32[144,128]{1,0:T(1,128)}', space=vmem, size = 0x12000, scoped, tag = 'internal scratch']
  #allocation2 [shape = 'f32[16,512]{1,0:T(8,128)}', space=vmem, size = 0x8000, scoped, tag = 'scratch operand']
  #allocation3 [shape = 'f32[16,128]{1,0:T(8,128)}', space=vmem, size = 0x2000, scoped, tag = 'scratch operand']
  #allocation4 [shape = 'f32[1]{0:T(128)S(6)}', space=smem, size = 0x200, scoped, tag = 'scoped memory for tpu_custom_call.1']
  %s0 = inlined_call_operand.hbm [shape: f32[16,32], index: 0, kind: input, shape index: {}]
  %s1 = inlined_call_operand.hbm [shape: f32[32,512], index: 1, kind: input, shape index: {}]
  %s2 = inlined_call_operand.hbm [shape: f32[128,512], index: 2, kind: input, shape index: {}]
  %s3 = inlined_call_operand.vmem [shape: f32[1,512], index: 3, kind: input, shape index: {}]
  %s4 = inlined_call_operand.hbm [shape: f32[256,512], index: 4, kind: input, shape index: {}]
  %s5 = inlined_call_operand.vmem [shape: f32[1,512], index: 5, kind: input, shape index: {}]
  %s6 = inlined_call_operand.hbm [shape: f32[128,128], index: 6, kind: input, shape index: {}]
  %s7 = inlined_call_operand.vmem [shape: f32[1,128], index: 7, kind: input, shape index: {}]
  %s8 = inlined_call_operand.vmem [shape: f32[1,128], index: 8, kind: input, shape index: {}]
  %s9 = inlined_call_operand.<no memory space> [shape: f32[1], index: 9, kind: input, shape index: {}]
  %s10 = inlined_call_operand.vmem [shape: f32[16,1], index: 10, kind: output, shape index: {}]
  %s11 = sld [smem:[#allocation0]]
  $region70: #{tpu_custom_call.1} parent=0
    _
  %s13 = ssub.s32 1, %s11
  %s14 = scalar_select 0, %s13, %s11
  %15 = sst [smem:[#allocation4]] %s9
  $region1: #{tpu_custom_call.1} parent=0
    #allocation5 [shape = 'u8[8192]{0}', space=vmem, size = 0x2000, scoped, tag = 'input window, operand 0, single buffered']
    #allocation6 [shape = 's32[1]{0}', space=sflag, size = 0x4, scoped, tag = 'scoped memory for tpu_custom_call.1']
    #allocation7 [shape = 'u8[65536]{0}', space=vmem, size = 0x10000, scoped, tag = 'input window, operand 1, single buffered']
    #allocation8 [shape = 's32[1]{0}', space=sflag, size = 0x4, scoped, tag = 'scoped memory for tpu_custom_call.1']
    #allocation9 [shape = 'u8[262144]{0}', space=vmem, size = 0x40000, scoped, tag = 'input window, operand 2, single buffered']
    #allocation10 [shape = 'u8[524288]{0}', space=vmem, size = 0x80000, scoped, tag = 'input window, operand 4, single buffered']
    #allocation11 [shape = 's32[1]{0}', space=sflag, size = 0x4, scoped, tag = 'scoped memory for tpu_custom_call.1']
    #allocation12 [shape = 'u8[65536]{0}', space=vmem, size = 0x10000, scoped, tag = 'input window, operand 6, single buffered']
    %16 = vsyncpa [#allocation6], 0
    %17 = vsyncpa [#allocation8], 0
    %18 = vsyncpa [#allocation11], 0
    // Predicated region
    $region2: #{tpu_custom_call.1} parent=1 // pred_check
      _
    $region3: #{tpu_custom_call.1} parent=1 // pred_check_branch
      %20 = sbr.rel (0) target = $region5
    $region4: #{tpu_custom_call.1} parent=1 // pred_region
      %s22 = ssub.s32 256, 256
      %23 = vsyncadd [#allocation6], %s22
      %s24 = sshll.u32 [#allocation5], 4
      %s25 = int_to_ptr.vmem [resolvable:$true] %s24
      %30 = dma.hbm_to_vmem [thread:$0]  %s0, 256, %s25, [#allocation6], 128, 128, 8
    $region5: #{tpu_custom_call.1} parent=1 // pred_fallthru
      _
    // Predicated region
    $region6: #{tpu_custom_call.1} parent=1 // pred_check
      _
    $region7: #{tpu_custom_call.1} parent=1 // pred_check_branch
      %32 = sbr.rel (0) target = $region9
    $region8: #{tpu_custom_call.1} parent=1 // pred_region
      %s34 = ssub.s32 2048, 2048
      %35 = vsyncadd [#allocation8], %s34
      %s36 = sshll.u32 [#allocation7], 4
      %s37 = int_to_ptr.vmem [resolvable:$true] %s36
      %42 = dma.hbm_to_vmem [thread:$0]  %s1, 2048, %s37, [#allocation8], 512, 512, 32
    $region9: #{tpu_custom_call.1} parent=1 // pred_fallthru
      _
    // Predicated region
    $region10: #{tpu_custom_call.1} parent=1 // pred_check
      _
    $region11: #{tpu_custom_call.1} parent=1 // pred_check_branch
      %44 = sbr.rel (0) target = $region13
    $region12: #{tpu_custom_call.1} parent=1 // pred_region
      %s46 = ssub.s32 8192, 8192
      %47 = vsyncadd [#allocation8], %s46
      %s48 = sshll.u32 [#allocation9], 4
      %s49 = int_to_ptr.vmem [resolvable:$true] %s48
      %54 = dma.hbm_to_vmem [thread:$0]  %s2, 8192, %s49, [#allocation8], 512, 512, 32
    $region13: #{tpu_custom_call.1} parent=1 // pred_fallthru
      _
    // Predicated region
    $region14: #{tpu_custom_call.1} parent=1 // pred_check
      _
    $region15: #{tpu_custom_call.1} parent=1 // pred_check_branch
      %56 = sbr.rel (0) target = $region17
    $region16: #{tpu_custom_call.1} parent=1 // pred_region
      _
    $region17: #{tpu_custom_call.1} parent=1 // pred_fallthru
      _
    // Predicated region
    $region18: #{tpu_custom_call.1} parent=1 // pred_check
      _
    $region19: #{tpu_custom_call.1} parent=1 // pred_check_branch
      %58 = sbr.rel (0) target = $region21
    $region20: #{tpu_custom_call.1} parent=1 // pred_region
      %s60 = ssub.s32 16384, 16384
      %61 = vsyncadd [#allocation11], %s60
      %s62 = sshll.u32 [#allocation10], 4
      %s63 = int_to_ptr.vmem [resolvable:$true] %s62
      %68 = dma.hbm_to_vmem [thread:$0]  %s4, 16384, %s63, [#allocation11], 512, 512, 32
    $region21: #{tpu_custom_call.1} parent=1 // pred_fallthru
      _
    // Predicated region
    $region22: #{tpu_custom_call.1} parent=1 // pred_check
      _
    $region23: #{tpu_custom_call.1} parent=1 // pred_check_branch
      %70 = sbr.rel (0) target = $region25
    $region24: #{tpu_custom_call.1} parent=1 // pred_region
      _
    $region25: #{tpu_custom_call.1} parent=1 // pred_fallthru
      _
    // Predicated region
    $region26: #{tpu_custom_call.1} parent=1 // pred_check
      _
    $region27: #{tpu_custom_call.1} parent=1 // pred_check_branch
      %72 = sbr.rel (0) target = $region29
    $region28: #{tpu_custom_call.1} parent=1 // pred_region
      %s74 = ssub.s32 2048, 2048
      %75 = vsyncadd [#allocation11], %s74
      %s76 = sshll.u32 [#allocation12], 4
      %s77 = int_to_ptr.vmem [resolvable:$true] %s76
      %82 = dma.hbm_to_vmem [thread:$0]  %s6, 2048, %s77, [#allocation11], 128, 128, 8
    $region29: #{tpu_custom_call.1} parent=1 // pred_fallthru
      _
    // Predicated region
    $region30: #{tpu_custom_call.1} parent=1 // pred_check
      _
    $region31: #{tpu_custom_call.1} parent=1 // pred_check_branch
      %84 = sbr.rel (0) target = $region33
    $region32: #{tpu_custom_call.1} parent=1 // pred_region
      _
    $region33: #{tpu_custom_call.1} parent=1 // pred_fallthru
      _
    // Predicated region
    $region34: #{tpu_custom_call.1} parent=1 // pred_check
      _
    $region35: #{tpu_custom_call.1} parent=1 // pred_check_branch
      %86 = sbr.rel (0) target = $region37
    $region36: #{tpu_custom_call.1} parent=1 // pred_region
      _
    $region37: #{tpu_custom_call.1} parent=1 // pred_fallthru
      _
    // Predicated region
    $region38: #{tpu_custom_call.1} parent=1 // pred_check
      _
    $region39: #{tpu_custom_call.1} parent=1 // pred_check_branch
      %88 = sbr.rel (0) target = $region41
    $region40: #{tpu_custom_call.1} parent=1 // pred_region
      _
    $region41: #{tpu_custom_call.1} parent=1 // pred_fallthru
      _
    // Predicated region
    $region42: #{tpu_custom_call.1} parent=1 // pred_check
      _
    $region43: #{tpu_custom_call.1} parent=1 // pred_check_branch
      %90 = sbr.rel (0) target = $region45
    $region44: #{tpu_custom_call.1} parent=1 // pred_region
      %91 = dma.done [#allocation6], 256
    $region45: #{tpu_custom_call.1} parent=1 // pred_fallthru
      _
    // Predicated region
    $region46: #{tpu_custom_call.1} parent=1 // pred_check
      _
    $region47: #{tpu_custom_call.1} parent=1 // pred_check_branch
      %93 = sbr.rel (0) target = $region49
    $region48: #{tpu_custom_call.1} parent=1 // pred_region
      %94 = dma.done [#allocation8], 2048
    $region49: #{tpu_custom_call.1} parent=1 // pred_fallthru
      _
    // Predicated region
    $region50: #{tpu_custom_call.1} parent=1 // pred_check
      _
    $region51: #{tpu_custom_call.1} parent=1 // pred_check_branch
      %96 = sbr.rel (0) target = $region53
    $region52: #{tpu_custom_call.1} parent=1 // pred_region
      %97 = dma.done [#allocation8], 8192
    $region53: #{tpu_custom_call.1} parent=1 // pred_fallthru
      _
    // Predicated region
    $region54: #{tpu_custom_call.1} parent=1 // pred_check
      _
    $region55: #{tpu_custom_call.1} parent=1 // pred_check_branch
      %99 = sbr.rel (0) target = $region57
    $region56: #{tpu_custom_call.1} parent=1 // pred_region
      %100 = dma.done [#allocation11], 16384
    $region57: #{tpu_custom_call.1} parent=1 // pred_fallthru
      _
    // Predicated region
    $region58: #{tpu_custom_call.1} parent=1 // pred_check
      _
    $region59: #{tpu_custom_call.1} parent=1 // pred_check_branch
      %102 = sbr.rel (0) target = $region61
    $region60: #{tpu_custom_call.1} parent=1 // pred_region
      %103 = dma.done [#allocation11], 2048
    $region61: #{tpu_custom_call.1} parent=1 // pred_fallthru
      _
    %v104 = vld [vmem:[#allocation5] sm:$0xff]
    %v105 = vld [vmem:[#allocation5 + $0x8] sm:$0xff]
    %v106 = vld [vmem:[#allocation7] sm:$0xff]
    %v107 = vld [vmem:[#allocation7 + $0x8] sm:$0xff]
    %v108 = vld [vmem:[#allocation7 + $0x10] sm:$0xff]
    %v109 = vld [vmem:[#allocation7 + $0x18] sm:$0xff]
    %v110 = vld [vmem:[#allocation7 + $0x20] sm:$0xff]
    %v111 = vld [vmem:[#allocation7 + $0x28] sm:$0xff]
    %v112 = vld [vmem:[#allocation7 + $0x30] sm:$0xff]
    %v113 = vld [vmem:[#allocation7 + $0x38] sm:$0xff]
    %v114 = vld [vmem:[#allocation7 + $0x40] sm:$0xff]
    %v115 = vld [vmem:[#allocation7 + $0x48] sm:$0xff]
    %v116 = vld [vmem:[#allocation7 + $0x50] sm:$0xff]
    %v117 = vld [vmem:[#allocation7 + $0x58] sm:$0xff]
    %v118 = vld [vmem:[#allocation7 + $0x60] sm:$0xff]
    %v119 = vld [vmem:[#allocation7 + $0x68] sm:$0xff]
    %v120 = vld [vmem:[#allocation7 + $0x70] sm:$0xff]
    %v121 = vld [vmem:[#allocation7 + $0x78] sm:$0xff]
    %v122 = vld [vmem:[%s3] sm:$0xf]
    %v124 = vlaneseq
    %v125 = vshrl.u32 %v124, 7
    %v126 = vsub.s32 0, %v125
    %v127 = vrot.slane %v122, %v126
    %v128 = vlaneseq
    %v129 = vshrl.u32 %v128, 7
    %v130 = vsub.s32 1, %v129
    %v131 = vrot.slane %v122, %v130
    %v132 = vlaneseq
    %v133 = vshrl.u32 %v132, 7
    %v134 = vsub.s32 2, %v133
    %v135 = vrot.slane %v122, %v134
    %v136 = vlaneseq
    %v137 = vshrl.u32 %v136, 7
    %v138 = vsub.s32 3, %v137
    %v139 = vrot.slane %v122, %v138
    %vm144 = vcmask 261120
    %v146 = vsel %vm144, %v104, 0
    %v149 = vsel %vm144, %v105, 0
    %151 = vmatprep.subr.mxu0 %v107
    %152 = vmatpush1.msra.mxu0 %v106
    %153 = vmatprep.subr.mxu0 %v111
    %154 = vmatpush1.msra.mxu0 %v110
    %155 = vmatprep.subr.mxu0 %v115
    %156 = vmatpush1.msra.mxu0 %v114
    %157 = vmatprep.subr.mxu0 %v119
    %158 = vmatpush1.msra.mxu0 %v118
    %159 = vmatprep.subr.mxu0 0.0
    %160 = vmatpush1.msra.mxu0 0.0
    %161 = vmatprep.subr.mxu0 0.0
    %162 = vmatpush1.msra.mxu0 0.0
    %163 = vmatprep.subr.mxu0 0.0
    %164 = vmatpush1.msra.mxu0 0.0
    %165 = vmatprep.subr.mxu0 0.0
    %166 = vmatpush1.msra.mxu0 0.0
    %167 = vmatprep.subr.mxu0 0.0
    %168 = vmatpush1.msra.mxu0 0.0
    %169 = vmatprep.subr.mxu0 0.0
    %170 = vmatpush1.msra.mxu0 0.0
    %171 = vmatprep.subr.mxu0 0.0
    %172 = vmatpush1.msra.mxu0 0.0
    %173 = vmatprep.subr.mxu0 0.0
    %174 = vmatpush1.msra.mxu0 0.0
    %175 = vmatprep.subr.mxu0 0.0
    %176 = vmatpush1.msra.mxu0 0.0
    %177 = vmatprep.subr.mxu0 0.0
    %178 = vmatpush1.msra.mxu0 0.0
    %179 = vmatprep.subr.mxu0 0.0
    %180 = vmatpush1.msra.mxu0 0.0
    %181 = vmatprep.subr.mxu0 0.0
    %182 = vmatpush1.msra.mxu0 0.0
    %183 = vmatprep.subr.mxu0 0.0
    %184 = vmatpush1.msra.mxu0 0.0
    %185 = vmatprep.subr.mxu0 0.0
    %186 = vmatpush1.msra.mxu0 0.0
    %187 = vmatprep.subr.mxu0 0.0
    %188 = vmatpush1.msra.mxu0 0.0
    %189 = vmatprep.subr.mxu0 0.0
    %190 = vmatpush1.msra.mxu0 0.0
    %191 = vmatprep.subr.mxu0 0.0
    %192 = vmatpush1.msra.mxu0 0.0
    %193 = vmatprep.subr.mxu0 0.0
    %194 = vmatpush1.msra.mxu0 0.0
    %195 = vmatprep.subr.mxu0 0.0
    %196 = vmatpush1.msra.mxu0 0.0
    %197 = vmatprep.subr.mxu0 0.0
    %198 = vmatpush1.msra.mxu0 0.0
    %199 = vmatprep.subr.mxu0 0.0
    %200 = vmatpush1.msra.mxu0 0.0
    %201 = vmatprep.subr.mxu0 0.0
    %202 = vmatpush1.msra.mxu0 0.0
    %203 = vmatprep.subr.mxu0 0.0
    %204 = vmatpush1.msra.mxu0 0.0
    %205 = vmatprep.subr.mxu0 0.0
    %206 = vmatpush1.msra.mxu0 0.0
    %207 = vmatprep.subr.mxu0 0.0
    %208 = vmatpush1.msra.mxu0 0.0
    %209 = vmatprep.subr.mxu0 0.0
    %210 = vmatpush1.msra.mxu0 0.0
    %211 = vmatprep.subr.mxu0 0.0
    %212 = vmatpush1.msra.mxu0 0.0
    %213 = vmatprep.subr.mxu0 0.0
    %214 = vmatpush1.msra.mxu0 0.0
    %215 = vmatprep.mubr.f32.mxu0 0.0
    %216 = vmatmul.mubr.f32.gmra.mrb[0].mxu0 %v146
    %v217 = vpop.f32.mrb[0].mxu0
    %v218 = vadd.f32 %v127, %v217
    %v219 = vpop.f32.mrb[0].mxu0
    %v220 = vadd.f32 %v131, %v219
    %221 = vmatprep.mubr.f32.mxu0 0.0
    %222 = vmatmul.mubr.f32.gmra.mrb[0].mxu0 %v149
    %v223 = vpop.f32.mrb[0].mxu0
    %v224 = vadd.f32 %v127, %v223
    %v225 = vpop.f32.mrb[0].mxu0
    %v226 = vadd.f32 %v131, %v225
    %227 = vdwg.mxu0
    %228 = vmatprep.subr.mxu0 %v109
    %229 = vmatpush1.msra.mxu0 %v108
    %230 = vmatprep.subr.mxu0 %v113
    %231 = vmatpush1.msra.mxu0 %v112
    %232 = vmatprep.subr.mxu0 %v117
    %233 = vmatpush1.msra.mxu0 %v116
    %234 = vmatprep.subr.mxu0 %v121
    %235 = vmatpush1.msra.mxu0 %v120
    %236 = vmatprep.subr.mxu0 0.0
    %237 = vmatpush1.msra.mxu0 0.0
    %238 = vmatprep.subr.mxu0 0.0
    %239 = vmatpush1.msra.mxu0 0.0
    %240 = vmatprep.subr.mxu0 0.0
    %241 = vmatpush1.msra.mxu0 0.0
    %242 = vmatprep.subr.mxu0 0.0
    %243 = vmatpush1.msra.mxu0 0.0
    %244 = vmatprep.subr.mxu0 0.0
    %245 = vmatpush1.msra.mxu0 0.0
    %246 = vmatprep.subr.mxu0 0.0
    %247 = vmatpush1.msra.mxu0 0.0
    %248 = vmatprep.subr.mxu0 0.0
    %249 = vmatpush1.msra.mxu0 0.0
    %250 = vmatprep.subr.mxu0 0.0
    %251 = vmatpush1.msra.mxu0 0.0
    %252 = vmatprep.subr.mxu0 0.0
    %253 = vmatpush1.msra.mxu0 0.0
    %254 = vmatprep.subr.mxu0 0.0
    %255 = vmatpush1.msra.mxu0 0.0
    %256 = vmatprep.subr.mxu0 0.0
    %257 = vmatpush1.msra.mxu0 0.0
    %258 = vmatprep.subr.mxu0 0.0
    %259 = vmatpush1.msra.mxu0 0.0
    %260 = vmatprep.subr.mxu0 0.0
    %261 = vmatpush1.msra.mxu0 0.0
    %262 = vmatprep.subr.mxu0 0.0
    %263 = vmatpush1.msra.mxu0 0.0
    %264 = vmatprep.subr.mxu0 0.0
    %265 = vmatpush1.msra.mxu0 0.0
    %266 = vmatprep.subr.mxu0 0.0
    %267 = vmatpush1.msra.mxu0 0.0
    %268 = vmatprep.subr.mxu0 0.0
    %269 = vmatpush1.msra.mxu0 0.0
    %270 = vmatprep.subr.mxu0 0.0
    %271 = vmatpush1.msra.mxu0 0.0
    %272 = vmatprep.subr.mxu0 0.0
    %273 = vmatpush1.msra.mxu0 0.0
    %274 = vmatprep.subr.mxu0 0.0
    %275 = vmatpush1.msra.mxu0 0.0
    %276 = vmatprep.subr.mxu0 0.0
    %277 = vmatpush1.msra.mxu0 0.0
    %278 = vmatprep.subr.mxu0 0.0
    %279 = vmatpush1.msra.mxu0 0.0
    %280 = vmatprep.subr.mxu0 0.0
    %281 = vmatpush1.msra.mxu0 0.0
    %282 = vmatprep.subr.mxu0 0.0
    %283 = vmatpush1.msra.mxu0 0.0
    %284 = vmatprep.subr.mxu0 0.0
    %285 = vmatpush1.msra.mxu0 0.0
    %286 = vmatprep.subr.mxu0 0.0
    %287 = vmatpush1.msra.mxu0 0.0
    %288 = vmatprep.subr.mxu0 0.0
    %289 = vmatpush1.msra.mxu0 0.0
    %290 = vmatprep.subr.mxu0 0.0
    %291 = vmatpush1.msra.mxu0 0.0
    %292 = vmatprep.mubr.f32.mxu0 0.0
    %293 = vmatmul.mubr.f32.gmra.mrb[0].mxu0 %v146
    %v294 = vpop.f32.mrb[0].mxu0
    %v295 = vadd.f32 %v135, %v294
    %v296 = vpop.f32.mrb[0].mxu0
    %v297 = vadd.f32 %v139, %v296
    %298 = vmatprep.mubr.f32.mxu0 0.0
    %299 = vmatmul.mubr.f32.gmra.mrb[0].mxu0 %v149
    %v300 = vpop.f32.mrb[0].mxu0
    %v301 = vadd.f32 %v135, %v300
    %v302 = vpop.f32.mrb[0].mxu0
    %v303 = vadd.f32 %v139, %v302
    %304 = vdwg.mxu0
    %305 = vst [vmem:[#allocation2] sm:$0xff] %v218
    %306 = vst [vmem:[#allocation2 + $0x8] sm:$0xff] %v220
    %307 = vst [vmem:[#allocation2 + $0x10] sm:$0xff] %v295
    %308 = vst [vmem:[#allocation2 + $0x18] sm:$0xff] %v297
    %309 = vst [vmem:[#allocation2 + $0x20] sm:$0xff] %v224
    %310 = vst [vmem:[#allocation2 + $0x28] sm:$0xff] %v226
    %311 = vst [vmem:[#allocation2 + $0x30] sm:$0xff] %v301
    %312 = vst [vmem:[#allocation2 + $0x38] sm:$0xff] %v303
    %v313 = vld [vmem:[#allocation9] sm:$0xff]
    %v314 = vld [vmem:[#allocation9 + $0x8] sm:$0xff]
    %v315 = vld [vmem:[#allocation9 + $0x10] sm:$0xff]
    %v316 = vld [vmem:[#allocation9 + $0x18] sm:$0xff]
    %v317 = vld [vmem:[#allocation9 + $0x20] sm:$0xff]
    %v318 = vld [vmem:[#allocation9 + $0x28] sm:$0xff]
    %v319 = vld [vmem:[#allocation9 + $0x30] sm:$0xff]
    %v320 = vld [vmem:[#allocation9 + $0x38] sm:$0xff]
    %v321 = vld [vmem:[#allocation9 + $0x40] sm:$0xff]
    %v322 = vld [vmem:[#allocation9 + $0x48] sm:$0xff]
    %v323 = vld [vmem:[#allocation9 + $0x50] sm:$0xff]
    %v324 = vld [vmem:[#allocation9 + $0x58] sm:$0xff]
    %v325 = vld [vmem:[#allocation9 + $0x60] sm:$0xff]
    %v326 = vld [vmem:[#allocation9 + $0x68] sm:$0xff]
    %v327 = vld [vmem:[#allocation9 + $0x70] sm:$0xff]
    %v328 = vld [vmem:[#allocation9 + $0x78] sm:$0xff]
    %v329 = vld [vmem:[#allocation9 + $0x80] sm:$0xff]
    %v330 = vld [vmem:[#allocation9 + $0x88] sm:$0xff]
    %v331 = vld [vmem:[#allocation9 + $0x90] sm:$0xff]
    %v332 = vld [vmem:[#allocation9 + $0x98] sm:$0xff]
    %v333 = vld [vmem:[#allocation9 + $0xa0] sm:$0xff]
    %v334 = vld [vmem:[#allocation9 + $0xa8] sm:$0xff]
    %v335 = vld [vmem:[#allocation9 + $0xb0] sm:$0xff]
    %v336 = vld [vmem:[#allocation9 + $0xb8] sm:$0xff]
    %v337 = vld [vmem:[#allocation9 + $0xc0] sm:$0xff]
    %v338 = vld [vmem:[#allocation9 + $0xc8] sm:$0xff]
    %v339 = vld [vmem:[#allocation9 + $0xd0] sm:$0xff]
    %v340 = vld [vmem:[#allocation9 + $0xd8] sm:$0xff]
    %v341 = vld [vmem:[#allocation9 + $0xe0] sm:$0xff]
    %v342 = vld [vmem:[#allocation9 + $0xe8] sm:$0xff]
    %v343 = vld [vmem:[#allocation9 + $0xf0] sm:$0xff]
    %v344 = vld [vmem:[#allocation9 + $0xf8] sm:$0xff]
    %v345 = vld [vmem:[#allocation9 + $0x100] sm:$0xff]
    %v346 = vld [vmem:[#allocation9 + $0x108] sm:$0xff]
    %v347 = vld [vmem:[#allocation9 + $0x110] sm:$0xff]
    %v348 = vld [vmem:[#allocation9 + $0x118] sm:$0xff]
    %v349 = vld [vmem:[#allocation9 + $0x120] sm:$0xff]
    %v350 = vld [vmem:[#allocation9 + $0x128] sm:$0xff]
    %v351 = vld [vmem:[#allocation9 + $0x130] sm:$0xff]
    %v352 = vld [vmem:[#allocation9 + $0x138] sm:$0xff]
    %v353 = vld [vmem:[#allocation9 + $0x140] sm:$0xff]
    %v354 = vld [vmem:[#allocation9 + $0x148] sm:$0xff]
    %v355 = vld [vmem:[#allocation9 + $0x150] sm:$0xff]
    %v356 = vld [vmem:[#allocation9 + $0x158] sm:$0xff]
    %v357 = vld [vmem:[#allocation9 + $0x160] sm:$0xff]
    %v358 = vld [vmem:[#allocation9 + $0x168] sm:$0xff]
    %v359 = vld [vmem:[#allocation9 + $0x170] sm:$0xff]
    %v360 = vld [vmem:[#allocation9 + $0x178] sm:$0xff]
    %v361 = vld [vmem:[#allocation9 + $0x180] sm:$0xff]
    %v362 = vld [vmem:[#allocation9 + $0x188] sm:$0xff]
    %v363 = vld [vmem:[#allocation9 + $0x190] sm:$0xff]
    %v364 = vld [vmem:[#allocation9 + $0x198] sm:$0xff]
    %v365 = vld [vmem:[#allocation9 + $0x1a0] sm:$0xff]
    %v366 = vld [vmem:[#allocation9 + $0x1a8] sm:$0xff]
    %v367 = vld [vmem:[#allocation9 + $0x1b0] sm:$0xff]
    %v368 = vld [vmem:[#allocation9 + $0x1b8] sm:$0xff]
    %v369 = vld [vmem:[#allocation9 + $0x1c0] sm:$0xff]
    %v370 = vld [vmem:[#allocation9 + $0x1c8] sm:$0xff]
    %v371 = vld [vmem:[#allocation9 + $0x1d0] sm:$0xff]
    %v372 = vld [vmem:[#allocation9 + $0x1d8] sm:$0xff]
    %v373 = vld [vmem:[#allocation9 + $0x1e0] sm:$0xff]
    %v374 = vld [vmem:[#allocation9 + $0x1e8] sm:$0xff]
    %v375 = vld [vmem:[#allocation9 + $0x1f0] sm:$0xff]
    %v376 = vld [vmem:[#allocation9 + $0x1f8] sm:$0xff]
    %v377 = vld [vmem:[#allocation2] sm:$0x3]
    %v378 = vld [vmem:[#allocation2 + $0x8] sm:$0x3]
    %v379 = vld [vmem:[#allocation2 + $0x10] sm:$0x3]
    %v380 = vld [vmem:[#allocation2 + $0x18] sm:$0x3]
    %381 = vmatprep.subr.mxu0 %v314
    %382 = vmatpush1.msra.mxu0 %v313
    %383 = vmatprep.subr.mxu0 %v318
    %384 = vmatpush1.msra.mxu0 %v317
    %385 = vmatprep.subr.mxu0 %v322
    %386 = vmatpush1.msra.mxu0 %v321
    %387 = vmatprep.subr.mxu0 %v326
    %388 = vmatpush1.msra.mxu0 %v325
    %389 = vmatprep.subr.mxu0 %v330
    %390 = vmatpush1.msra.mxu0 %v329
    %391 = vmatprep.subr.mxu0 %v334
    %392 = vmatpush1.msra.mxu0 %v333
    %393 = vmatprep.subr.mxu0 %v338
    %394 = vmatpush1.msra.mxu0 %v337
    %395 = vmatprep.subr.mxu0 %v342
    %396 = vmatpush1.msra.mxu0 %v341
    %397 = vmatprep.subr.mxu0 %v346
    %398 = vmatpush1.msra.mxu0 %v345
    %399 = vmatprep.subr.mxu0 %v350
    %400 = vmatpush1.msra.mxu0 %v349
    %401 = vmatprep.subr.mxu0 %v354
    %402 = vmatpush1.msra.mxu0 %v353
    %403 = vmatprep.subr.mxu0 %v358
    %404 = vmatpush1.msra.mxu0 %v357
    %405 = vmatprep.subr.mxu0 %v362
    %406 = vmatpush1.msra.mxu0 %v361
    %407 = vmatprep.subr.mxu0 %v366
    %408 = vmatpush1.msra.mxu0 %v365
    %409 = vmatprep.subr.mxu0 %v370
    %410 = vmatpush1.msra.mxu0 %v369
    %411 = vmatprep.subr.mxu0 %v374
    %412 = vmatpush1.msra.mxu0 %v373
    %413 = vmatprep.subr.mxu0 0.0
    %414 = vmatpush1.msra.mxu0 0.0
    %415 = vmatprep.subr.mxu0 0.0
    %416 = vmatpush1.msra.mxu0 0.0
    %417 = vmatprep.subr.mxu0 0.0
    %418 = vmatpush1.msra.mxu0 0.0
    %419 = vmatprep.subr.mxu0 0.0
    %420 = vmatpush1.msra.mxu0 0.0
    %421 = vmatprep.subr.mxu0 0.0
    %422 = vmatpush1.msra.mxu0 0.0
    %423 = vmatprep.subr.mxu0 0.0
    %424 = vmatpush1.msra.mxu0 0.0
    %425 = vmatprep.subr.mxu0 0.0
    %426 = vmatpush1.msra.mxu0 0.0
    %427 = vmatprep.subr.mxu0 0.0
    %428 = vmatpush1.msra.mxu0 0.0
    %429 = vmatprep.subr.mxu0 0.0
    %430 = vmatpush1.msra.mxu0 0.0
    %431 = vmatprep.subr.mxu0 0.0
    %432 = vmatpush1.msra.mxu0 0.0
    %433 = vmatprep.subr.mxu0 0.0
    %434 = vmatpush1.msra.mxu0 0.0
    %435 = vmatprep.subr.mxu0 0.0
    %436 = vmatpush1.msra.mxu0 0.0
    %437 = vmatprep.subr.mxu0 0.0
    %438 = vmatpush1.msra.mxu0 0.0
    %439 = vmatprep.subr.mxu0 0.0
    %440 = vmatpush1.msra.mxu0 0.0
    %441 = vmatprep.subr.mxu0 0.0
    %442 = vmatpush1.msra.mxu0 0.0
    %443 = vmatprep.subr.mxu0 0.0
    %444 = vmatpush1.msra.mxu0 0.0
    %445 = vmatprep.mubr.f32.mxu0 0.0
    %446 = vmatmul.mubr.f32.gmra.mrb[0].mxu0 0.0
    %v447 = vpop.f32.mrb[0].mxu0
    %v448 = vadd.f32 %v377, %v447
    %v449 = vpop.f32.mrb[0].mxu0
    %v450 = vadd.f32 %v378, %v449
    %451 = vdwg.mxu0
    %452 = vmatprep.subr.mxu0 %v316
    %453 = vmatpush1.msra.mxu0 %v315
    %454 = vmatprep.subr.mxu0 %v320
    %455 = vmatpush1.msra.mxu0 %v319
    %456 = vmatprep.subr.mxu0 %v324
    %457 = vmatpush1.msra.mxu0 %v323
    %458 = vmatprep.subr.mxu0 %v328
    %459 = vmatpush1.msra.mxu0 %v327
    %460 = vmatprep.subr.mxu0 %v332
    %461 = vmatpush1.msra.mxu0 %v331
    %462 = vmatprep.subr.mxu0 %v336
    %463 = vmatpush1.msra.mxu0 %v335
    %464 = vmatprep.subr.mxu0 %v340
    %465 = vmatpush1.msra.mxu0 %v339
    %466 = vmatprep.subr.mxu0 %v344
    %467 = vmatpush1.msra.mxu0 %v343
    %468 = vmatprep.subr.mxu0 %v348
    %469 = vmatpush1.msra.mxu0 %v347
    %470 = vmatprep.subr.mxu0 %v352
    %471 = vmatpush1.msra.mxu0 %v351
    %472 = vmatprep.subr.mxu0 %v356
    %473 = vmatpush1.msra.mxu0 %v355
    %474 = vmatprep.subr.mxu0 %v360
    %475 = vmatpush1.msra.mxu0 %v359
    %476 = vmatprep.subr.mxu0 %v364
    %477 = vmatpush1.msra.mxu0 %v363
    %478 = vmatprep.subr.mxu0 %v368
    %479 = vmatpush1.msra.mxu0 %v367
    %480 = vmatprep.subr.mxu0 %v372
    %481 = vmatpush1.msra.mxu0 %v371
    %482 = vmatprep.subr.mxu0 %v376
    %483 = vmatpush1.msra.mxu0 %v375
    %484 = vmatprep.subr.mxu0 0.0
    %485 = vmatpush1.msra.mxu0 0.0
    %486 = vmatprep.subr.mxu0 0.0
    %487 = vmatpush1.msra.mxu0 0.0
    %488 = vmatprep.subr.mxu0 0.0
    %489 = vmatpush1.msra.mxu0 0.0
    %490 = vmatprep.subr.mxu0 0.0
    %491 = vmatpush1.msra.mxu0 0.0
    %492 = vmatprep.subr.mxu0 0.0
    %493 = vmatpush1.msra.mxu0 0.0
    %494 = vmatprep.subr.mxu0 0.0
    %495 = vmatpush1.msra.mxu0 0.0
    %496 = vmatprep.subr.mxu0 0.0
    %497 = vmatpush1.msra.mxu0 0.0
    %498 = vmatprep.subr.mxu0 0.0
    %499 = vmatpush1.msra.mxu0 0.0
    %500 = vmatprep.subr.mxu0 0.0
    %501 = vmatpush1.msra.mxu0 0.0
    %502 = vmatprep.subr.mxu0 0.0
    %503 = vmatpush1.msra.mxu0 0.0
    %504 = vmatprep.subr.mxu0 0.0
    %505 = vmatpush1.msra.mxu0 0.0
    %506 = vmatprep.subr.mxu0 0.0
    %507 = vmatpush1.msra.mxu0 0.0
    %508 = vmatprep.subr.mxu0 0.0
    %509 = vmatpush1.msra.mxu0 0.0
    %510 = vmatprep.subr.mxu0 0.0
    %511 = vmatpush1.msra.mxu0 0.0
    %512 = vmatprep.subr.mxu0 0.0
    %513 = vmatpush1.msra.mxu0 0.0
    %514 = vmatprep.subr.mxu0 0.0
    %515 = vmatpush1.msra.mxu0 0.0
    %516 = vmatprep.mubr.f32.mxu0 0.0
    %517 = vmatmul.mubr.f32.gmra.mrb[0].mxu0 0.0
    %v518 = vpop.f32.mrb[0].mxu0
    %v519 = vadd.f32 %v379, %v518
    %v520 = vpop.f32.mrb[0].mxu0
    %v521 = vadd.f32 %v380, %v520
    %522 = vdwg.mxu0
    %v523 = vxor.u32 %v448, 2147483648
    %v524 = vmul.f32 %v523, 1.442695
    %v525 = vpow.pop %v524
    %v526 = vadd.f32 %v525, 1.0
    %v527 = vrcp.pop %v526
    %v528 = vmul.f32 1.0, %v527
    %v529 = vxor.u32 %v450, 2147483648
    %v530 = vmul.f32 %v529, 1.442695
    %v531 = vpow.pop %v530
    %v532 = vadd.f32 %v531, 1.0
    %v533 = vrcp.pop %v532
    %v534 = vmul.f32 1.0, %v533
    %v535 = vtanh.pop %v519
    %v536 = vxor.u32 %v521, 2147483648
    %v537 = vmul.f32 %v536, 1.442695
    %v538 = vpow.pop %v537
    %v539 = vadd.f32 %v538, 1.0
    %v540 = vrcp.pop %v539
    %v541 = vmul.f32 1.0, %v540
    %v542 = vmul.f32 %v534, 0.0
    %v543 = vmul.f32 %v528, %v535
    %v544 = vadd.f32 %v542, %v543
    %v545 = vtanh.pop %v544
    %v546 = vmul.f32 %v541, %v545
    %v547 = vld [vmem:[#allocation10] sm:$0xff]
    %v548 = vld [vmem:[#allocation10 + $0x8] sm:$0xff]
    %v549 = vld [vmem:[#allocation10 + $0x10] sm:$0xff]
    %v550 = vld [vmem:[#allocation10 + $0x18] sm:$0xff]
    %v551 = vld [vmem:[#allocation10 + $0x20] sm:$0xff]
    %v552 = vld [vmem:[#allocation10 + $0x28] sm:$0xff]
    %v553 = vld [vmem:[#allocation10 + $0x30] sm:$0xff]
    %v554 = vld [vmem:[#allocation10 + $0x38] sm:$0xff]
    %v555 = vld [vmem:[#allocation10 + $0x40] sm:$0xff]
    %v556 = vld [vmem:[#allocation10 + $0x48] sm:$0xff]
    %v557 = vld [vmem:[#allocation10 + $0x50] sm:$0xff]
    %v558 = vld [vmem:[#allocation10 + $0x58] sm:$0xff]
    %v559 = vld [vmem:[#allocation10 + $0x60] sm:$0xff]
    %v560 = vld [vmem:[#allocation10 + $0x68] sm:$0xff]
    %v561 = vld [vmem:[#allocation10 + $0x70] sm:$0xff]
    %v562 = vld [vmem:[#allocation10 + $0x78] sm:$0xff]
    %v563 = vld [vmem:[#allocation10 + $0x80] sm:$0xff]
    %v564 = vld [vmem:[#allocation10 + $0x88] sm:$0xff]
    %v565 = vld [vmem:[#allocation10 + $0x90] sm:$0xff]
    %v566 = vld [vmem:[#allocation10 + $0x98] sm:$0xff]
    %v567 = vld [vmem:[#allocation10 + $0xa0] sm:$0xff]
    %v568 = vld [vmem:[#allocation10 + $0xa8] sm:$0xff]
    %v569 = vld [vmem:[#allocation10 + $0xb0] sm:$0xff]
    %v570 = vld [vmem:[#allocation10 + $0xb8] sm:$0xff]
    %v571 = vld [vmem:[#allocation10 + $0xc0] sm:$0xff]
    %v572 = vld [vmem:[#allocation10 + $0xc8] sm:$0xff]
    %v573 = vld [vmem:[#allocation10 + $0xd0] sm:$0xff]
    %v574 = vld [vmem:[#allocation10 + $0xd8] sm:$0xff]
    %v575 = vld [vmem:[#allocation10 + $0xe0] sm:$0xff]
    %v576 = vld [vmem:[#allocation10 + $0xe8] sm:$0xff]
    %v577 = vld [vmem:[#allocation10 + $0xf0] sm:$0xff]
    %v578 = vld [vmem:[#allocation10 + $0xf8] sm:$0xff]
    %v579 = vld [vmem:[#allocation10 + $0x100] sm:$0xff]
    %v580 = vld [vmem:[#allocation10 + $0x108] sm:$0xff]
    %v581 = vld [vmem:[#allocation10 + $0x110] sm:$0xff]
    %v582 = vld [vmem:[#allocation10 + $0x118] sm:$0xff]
    %v583 = vld [vmem:[#allocation10 + $0x120] sm:$0xff]
    %v584 = vld [vmem:[#allocation10 + $0x128] sm:$0xff]
    %v585 = vld [vmem:[#allocation10 + $0x130] sm:$0xff]
    %v586 = vld [vmem:[#allocation10 + $0x138] sm:$0xff]
    %v587 = vld [vmem:[#allocation10 + $0x140] sm:$0xff]
    %v588 = vld [vmem:[#allocation10 + $0x148] sm:$0xff]
    %v589 = vld [vmem:[#allocation10 + $0x150] sm:$0xff]
    %v590 = vld [vmem:[#allocation10 + $0x158] sm:$0xff]
    %v591 = vld [vmem:[#allocation10 + $0x160] sm:$0xff]
    %v592 = vld [vmem:[#allocation10 + $0x168] sm:$0xff]
    %v593 = vld [vmem:[#allocation10 + $0x170] sm:$0xff]
    %v594 = vld [vmem:[#allocation10 + $0x178] sm:$0xff]
    %v595 = vld [vmem:[#allocation10 + $0x180] sm:$0xff]
    %v596 = vld [vmem:[#allocation10 + $0x188] sm:$0xff]
    %v597 = vld [vmem:[#allocation10 + $0x190] sm:$0xff]
    %v598 = vld [vmem:[#allocation10 + $0x198] sm:$0xff]
    %v599 = vld [vmem:[#allocation10 + $0x1a0] sm:$0xff]
    %v600 = vld [vmem:[#allocation10 + $0x1a8] sm:$0xff]
    %v601 = vld [vmem:[#allocation10 + $0x1b0] sm:$0xff]
    %v602 = vld [vmem:[#allocation10 + $0x1b8] sm:$0xff]
    %v603 = vld [vmem:[#allocation10 + $0x1c0] sm:$0xff]
    %v604 = vld [vmem:[#allocation10 + $0x1c8] sm:$0xff]
    %v605 = vld [vmem:[#allocation10 + $0x1d0] sm:$0xff]
    %v606 = vld [vmem:[#allocation10 + $0x1d8] sm:$0xff]
    %v607 = vld [vmem:[#allocation10 + $0x1e0] sm:$0xff]
    %v608 = vld [vmem:[#allocation10 + $0x1e8] sm:$0xff]
    %v609 = vld [vmem:[#allocation10 + $0x1f0] sm:$0xff]
    %v610 = vld [vmem:[#allocation10 + $0x1f8] sm:$0xff]
    %v611 = vld [vmem:[#allocation10 + $0x200] sm:$0xff]
    %v612 = vld [vmem:[#allocation10 + $0x208] sm:$0xff]
    %v613 = vld [vmem:[#allocation10 + $0x210] sm:$0xff]
    %v614 = vld [vmem:[#allocation10 + $0x218] sm:$0xff]
    %v615 = vld [vmem:[#allocation10 + $0x220] sm:$0xff]
    %v616 = vld [vmem:[#allocation10 + $0x228] sm:$0xff]
    %v617 = vld [vmem:[#allocation10 + $0x230] sm:$0xff]
    %v618 = vld [vmem:[#allocation10 + $0x238] sm:$0xff]
    %v619 = vld [vmem:[#allocation10 + $0x240] sm:$0xff]
    %v620 = vld [vmem:[#allocation10 + $0x248] sm:$0xff]
    %v621 = vld [vmem:[#allocation10 + $0x250] sm:$0xff]
    %v622 = vld [vmem:[#allocation10 + $0x258] sm:$0xff]
    %v623 = vld [vmem:[#allocation10 + $0x260] sm:$0xff]
    %v624 = vld [vmem:[#allocation10 + $0x268] sm:$0xff]
    %v625 = vld [vmem:[#allocation10 + $0x270] sm:$0xff]
    %v626 = vld [vmem:[#allocation10 + $0x278] sm:$0xff]
    %v627 = vld [vmem:[#allocation10 + $0x280] sm:$0xff]
    %v628 = vld [vmem:[#allocation10 + $0x288] sm:$0xff]
    %v629 = vld [vmem:[#allocation10 + $0x290] sm:$0xff]
    %v630 = vld [vmem:[#allocation10 + $0x298] sm:$0xff]
    %v631 = vld [vmem:[#allocation10 + $0x2a0] sm:$0xff]
    %v632 = vld [vmem:[#allocation10 + $0x2a8] sm:$0xff]
    %v633 = vld [vmem:[#allocation10 + $0x2b0] sm:$0xff]
    %v634 = vld [vmem:[#allocation10 + $0x2b8] sm:$0xff]
    %v635 = vld [vmem:[#allocation10 + $0x2c0] sm:$0xff]
    %v636 = vld [vmem:[#allocation10 + $0x2c8] sm:$0xff]
    %v637 = vld [vmem:[#allocation10 + $0x2d0] sm:$0xff]
    %v638 = vld [vmem:[#allocation10 + $0x2d8] sm:$0xff]
    %v639 = vld [vmem:[#allocation10 + $0x2e0] sm:$0xff]
    %v640 = vld [vmem:[#allocation10 + $0x2e8] sm:$0xff]
    %v641 = vld [vmem:[#allocation10 + $0x2f0] sm:$0xff]
    %v642 = vld [vmem:[#allocation10 + $0x2f8] sm:$0xff]
    %v643 = vld [vmem:[#allocation10 + $0x300] sm:$0xff]
    %v644 = vld [vmem:[#allocation10 + $0x308] sm:$0xff]
    %v645 = vld [vmem:[#allocation10 + $0x310] sm:$0xff]
    %v646 = vld [vmem:[#allocation10 + $0x318] sm:$0xff]
    %v647 = vld [vmem:[#allocation10 + $0x320] sm:$0xff]
    %v648 = vld [vmem:[#allocation10 + $0x328] sm:$0xff]
    %v649 = vld [vmem:[#allocation10 + $0x330] sm:$0xff]
    %v650 = vld [vmem:[#allocation10 + $0x338] sm:$0xff]
    %v651 = vld [vmem:[#allocation10 + $0x340] sm:$0xff]
    %v652 = vld [vmem:[#allocation10 + $0x348] sm:$0xff]
    %v653 = vld [vmem:[#allocation10 + $0x350] sm:$0xff]
    %v654 = vld [vmem:[#allocation10 + $0x358] sm:$0xff]
    %v655 = vld [vmem:[#allocation10 + $0x360] sm:$0xff]
    %v656 = vld [vmem:[#allocation10 + $0x368] sm:$0xff]
    %v657 = vld [vmem:[#allocation10 + $0x370] sm:$0xff]
    %v658 = vld [vmem:[#allocation10 + $0x378] sm:$0xff]
    %v659 = vld [vmem:[#allocation10 + $0x380] sm:$0xff]
    %v660 = vld [vmem:[#allocation10 + $0x388] sm:$0xff]
    %v661 = vld [vmem:[#allocation10 + $0x390] sm:$0xff]
    %v662 = vld [vmem:[#allocation10 + $0x398] sm:$0xff]
    %v663 = vld [vmem:[#allocation10 + $0x3a0] sm:$0xff]
    %v664 = vld [vmem:[#allocation10 + $0x3a8] sm:$0xff]
    %v665 = vld [vmem:[#allocation10 + $0x3b0] sm:$0xff]
    %v666 = vld [vmem:[#allocation10 + $0x3b8] sm:$0xff]
    %v667 = vld [vmem:[#allocation10 + $0x3c0] sm:$0xff]
    %v668 = vld [vmem:[#allocation10 + $0x3c8] sm:$0xff]
    %v669 = vld [vmem:[#allocation10 + $0x3d0] sm:$0xff]
    %v670 = vld [vmem:[#allocation10 + $0x3d8] sm:$0xff]
    %v671 = vld [vmem:[#allocation10 + $0x3e0] sm:$0xff]
    %v672 = vld [vmem:[#allocation10 + $0x3e8] sm:$0xff]
    %v673 = vld [vmem:[#allocation10 + $0x3f0] sm:$0xff]
    %v674 = vld [vmem:[#allocation10 + $0x3f8] sm:$0xff]
    %v675 = vld [vmem:[%s5] sm:$0xf]
    %v677 = vlaneseq
    %v678 = vshrl.u32 %v677, 7
    %v679 = vsub.s32 0, %v678
    %v680 = vrot.slane %v675, %v679
    %v681 = vlaneseq
    %v682 = vshrl.u32 %v681, 7
    %v683 = vsub.s32 1, %v682
    %v684 = vrot.slane %v675, %v683
    %v685 = vlaneseq
    %v686 = vshrl.u32 %v685, 7
    %v687 = vsub.s32 2, %v686
    %v688 = vrot.slane %v675, %v687
    %v689 = vlaneseq
    %v690 = vshrl.u32 %v689, 7
    %v691 = vsub.s32 3, %v690
    %v692 = vrot.slane %v675, %v691
    %697 = vmatprep.subr.mxu0 %v548
    %698 = vmatpush1.msra.mxu0 %v547
    %699 = vmatprep.subr.mxu0 %v552
    %700 = vmatpush1.msra.mxu0 %v551
    %701 = vmatprep.subr.mxu0 %v556
    %702 = vmatpush1.msra.mxu0 %v555
    %703 = vmatprep.subr.mxu0 %v560
    %704 = vmatpush1.msra.mxu0 %v559
    %705 = vmatprep.subr.mxu0 %v564
    %706 = vmatpush1.msra.mxu0 %v563
    %707 = vmatprep.subr.mxu0 %v568
    %708 = vmatpush1.msra.mxu0 %v567
    %709 = vmatprep.subr.mxu0 %v572
    %710 = vmatpush1.msra.mxu0 %v571
    %711 = vmatprep.subr.mxu0 %v576
    %712 = vmatpush1.msra.mxu0 %v575
    %713 = vmatprep.subr.mxu0 %v580
    %714 = vmatpush1.msra.mxu0 %v579
    %715 = vmatprep.subr.mxu0 %v584
    %716 = vmatpush1.msra.mxu0 %v583
    %717 = vmatprep.subr.mxu0 %v588
    %718 = vmatpush1.msra.mxu0 %v587
    %719 = vmatprep.subr.mxu0 %v592
    %720 = vmatpush1.msra.mxu0 %v591
    %721 = vmatprep.subr.mxu0 %v596
    %722 = vmatpush1.msra.mxu0 %v595
    %723 = vmatprep.subr.mxu0 %v600
    %724 = vmatpush1.msra.mxu0 %v599
    %725 = vmatprep.subr.mxu0 %v604
    %726 = vmatpush1.msra.mxu0 %v603
    %727 = vmatprep.subr.mxu0 %v608
    %728 = vmatpush1.msra.mxu0 %v607
    %729 = vmatprep.subr.mxu0 %v612
    %730 = vmatpush1.msra.mxu0 %v611
    %731 = vmatprep.subr.mxu0 %v616
    %732 = vmatpush1.msra.mxu0 %v615
    %733 = vmatprep.subr.mxu0 %v620
    %734 = vmatpush1.msra.mxu0 %v619
    %735 = vmatprep.subr.mxu0 %v624
    %736 = vmatpush1.msra.mxu0 %v623
    %737 = vmatprep.subr.mxu0 %v628
    %738 = vmatpush1.msra.mxu0 %v627
    %739 = vmatprep.subr.mxu0 %v632
    %740 = vmatpush1.msra.mxu0 %v631
    %741 = vmatprep.subr.mxu0 %v636
    %742 = vmatpush1.msra.mxu0 %v635
    %743 = vmatprep.subr.mxu0 %v640
    %744 = vmatpush1.msra.mxu0 %v639
    %745 = vmatprep.subr.mxu0 %v644
    %746 = vmatpush1.msra.mxu0 %v643
    %747 = vmatprep.subr.mxu0 %v648
    %748 = vmatpush1.msra.mxu0 %v647
    %749 = vmatprep.subr.mxu0 %v652
    %750 = vmatpush1.msra.mxu0 %v651
    %751 = vmatprep.subr.mxu0 %v656
    %752 = vmatpush1.msra.mxu0 %v655
    %753 = vmatprep.subr.mxu0 %v660
    %754 = vmatpush1.msra.mxu0 %v659
    %755 = vmatprep.subr.mxu0 %v664
    %756 = vmatpush1.msra.mxu0 %v663
    %757 = vmatprep.subr.mxu0 %v668
    %758 = vmatpush1.msra.mxu0 %v667
    %759 = vmatprep.subr.mxu0 %v672
    %760 = vmatpush1.msra.mxu0 %v671
    %761 = vmatprep.mubr.f32.mxu0 0.0
    %762 = vmatmul.mubr.f32.gmra.mrb[0].mxu0 %v546
    %v763 = vpop.f32.mrb[0].mxu0
    %v764 = vadd.f32 %v680, %v763
    %v765 = vpop.f32.mrb[0].mxu0
    %v766 = vadd.f32 %v684, %v765
    %767 = vdwg.mxu0
    %768 = vmatprep.subr.mxu0 %v550
    %769 = vmatpush1.msra.mxu0 %v549
    %770 = vmatprep.subr.mxu0 %v554
    %771 = vmatpush1.msra.mxu0 %v553
    %772 = vmatprep.subr.mxu0 %v558
    %773 = vmatpush1.msra.mxu0 %v557
    %774 = vmatprep.subr.mxu0 %v562
    %775 = vmatpush1.msra.mxu0 %v561
    %776 = vmatprep.subr.mxu0 %v566
    %777 = vmatpush1.msra.mxu0 %v565
    %778 = vmatprep.subr.mxu0 %v570
    %779 = vmatpush1.msra.mxu0 %v569
    %780 = vmatprep.subr.mxu0 %v574
    %781 = vmatpush1.msra.mxu0 %v573
    %782 = vmatprep.subr.mxu0 %v578
    %783 = vmatpush1.msra.mxu0 %v577
    %784 = vmatprep.subr.mxu0 %v582
    %785 = vmatpush1.msra.mxu0 %v581
    %786 = vmatprep.subr.mxu0 %v586
    %787 = vmatpush1.msra.mxu0 %v585
    %788 = vmatprep.subr.mxu0 %v590
    %789 = vmatpush1.msra.mxu0 %v589
    %790 = vmatprep.subr.mxu0 %v594
    %791 = vmatpush1.msra.mxu0 %v593
    %792 = vmatprep.subr.mxu0 %v598
    %793 = vmatpush1.msra.mxu0 %v597
    %794 = vmatprep.subr.mxu0 %v602
    %795 = vmatpush1.msra.mxu0 %v601
    %796 = vmatprep.subr.mxu0 %v606
    %797 = vmatpush1.msra.mxu0 %v605
    %798 = vmatprep.subr.mxu0 %v610
    %799 = vmatpush1.msra.mxu0 %v609
    %800 = vmatprep.subr.mxu0 %v614
    %801 = vmatpush1.msra.mxu0 %v613
    %802 = vmatprep.subr.mxu0 %v618
    %803 = vmatpush1.msra.mxu0 %v617
    %804 = vmatprep.subr.mxu0 %v622
    %805 = vmatpush1.msra.mxu0 %v621
    %806 = vmatprep.subr.mxu0 %v626
    %807 = vmatpush1.msra.mxu0 %v625
    %808 = vmatprep.subr.mxu0 %v630
    %809 = vmatpush1.msra.mxu0 %v629
    %810 = vmatprep.subr.mxu0 %v634
    %811 = vmatpush1.msra.mxu0 %v633
    %812 = vmatprep.subr.mxu0 %v638
    %813 = vmatpush1.msra.mxu0 %v637
    %814 = vmatprep.subr.mxu0 %v642
    %815 = vmatpush1.msra.mxu0 %v641
    %816 = vmatprep.subr.mxu0 %v646
    %817 = vmatpush1.msra.mxu0 %v645
    %818 = vmatprep.subr.mxu0 %v650
    %819 = vmatpush1.msra.mxu0 %v649
    %820 = vmatprep.subr.mxu0 %v654
    %821 = vmatpush1.msra.mxu0 %v653
    %822 = vmatprep.subr.mxu0 %v658
    %823 = vmatpush1.msra.mxu0 %v657
    %824 = vmatprep.subr.mxu0 %v662
    %825 = vmatpush1.msra.mxu0 %v661
    %826 = vmatprep.subr.mxu0 %v666
    %827 = vmatpush1.msra.mxu0 %v665
    %828 = vmatprep.subr.mxu0 %v670
    %829 = vmatpush1.msra.mxu0 %v669
    %830 = vmatprep.subr.mxu0 %v674
    %831 = vmatpush1.msra.mxu0 %v673
    %832 = vmatprep.mubr.f32.mxu0 0.0
    %833 = vmatmul.mubr.f32.gmra.mrb[0].mxu0 %v546
    %v834 = vpop.f32.mrb[0].mxu0
    %v835 = vadd.f32 %v688, %v834
    %v836 = vpop.f32.mrb[0].mxu0
    %v837 = vadd.f32 %v692, %v836
    %838 = vdwg.mxu0
    %v839 = vxor.u32 %v764, 2147483648
    %v840 = vmul.f32 %v839, 1.442695
    %v841 = vpow.pop %v840
    %v842 = vadd.f32 %v841, 1.0
    %v843 = vrcp.pop %v842
    %v844 = vmul.f32 1.0, %v843
    %v845 = vxor.u32 %v766, 2147483648
    %v846 = vmul.f32 %v845, 1.442695
    %v847 = vpow.pop %v846
    %v848 = vadd.f32 %v847, 1.0
    %v849 = vrcp.pop %v848
    %v850 = vmul.f32 1.0, %v849
    %v851 = vtanh.pop %v835
    %v852 = vxor.u32 %v837, 2147483648
    %v853 = vmul.f32 %v852, 1.442695
    %v854 = vpow.pop %v853
    %v855 = vadd.f32 %v854, 1.0
    %v856 = vrcp.pop %v855
    %v857 = vmul.f32 1.0, %v856
    %v858 = vmul.f32 %v850, 0.0
    %v859 = vmul.f32 %v844, %v851
    %v860 = vadd.f32 %v858, %v859
    %v861 = vtanh.pop %v860
    %v862 = vmul.f32 %v857, %v861
    %863 = vst [vmem:[#allocation3] sm:$0x3] %v862
    %v864 = vld [vmem:[#allocation9] sm:$0xff]
    %v865 = vld [vmem:[#allocation9 + $0x8] sm:$0xff]
    %v866 = vld [vmem:[#allocation9 + $0x10] sm:$0xff]
    %v867 = vld [vmem:[#allocation9 + $0x18] sm:$0xff]
    %v868 = vld [vmem:[#allocation9 + $0x20] sm:$0xff]
    %v869 = vld [vmem:[#allocation9 + $0x28] sm:$0xff]
    %v870 = vld [vmem:[#allocation9 + $0x30] sm:$0xff]
    %v871 = vld [vmem:[#allocation9 + $0x38] sm:$0xff]
    %v872 = vld [vmem:[#allocation9 + $0x40] sm:$0xff]
    %v873 = vld [vmem:[#allocation9 + $0x48] sm:$0xff]
    %v874 = vld [vmem:[#allocation9 + $0x50] sm:$0xff]
    %v875 = vld [vmem:[#allocation9 + $0x58] sm:$0xff]
    %v876 = vld [vmem:[#allocation9 + $0x60] sm:$0xff]
    %v877 = vld [vmem:[#allocation9 + $0x68] sm:$0xff]
    %v878 = vld [vmem:[#allocation9 + $0x70] sm:$0xff]
    %v879 = vld [vmem:[#allocation9 + $0x78] sm:$0xff]
    %v880 = vld [vmem:[#allocation9 + $0x80] sm:$0xff]
    %v881 = vld [vmem:[#allocation9 + $0x88] sm:$0xff]
    %v882 = vld [vmem:[#allocation9 + $0x90] sm:$0xff]
    %v883 = vld [vmem:[#allocation9 + $0x98] sm:$0xff]
    %v884 = vld [vmem:[#allocation9 + $0xa0] sm:$0xff]
    %v885 = vld [vmem:[#allocation9 + $0xa8] sm:$0xff]
    %v886 = vld [vmem:[#allocation9 + $0xb0] sm:$0xff]
    %v887 = vld [vmem:[#allocation9 + $0xb8] sm:$0xff]
    %v888 = vld [vmem:[#allocation9 + $0xc0] sm:$0xff]
    %v889 = vld [vmem:[#allocation9 + $0xc8] sm:$0xff]
    %v890 = vld [vmem:[#allocation9 + $0xd0] sm:$0xff]
    %v891 = vld [vmem:[#allocation9 + $0xd8] sm:$0xff]
    %v892 = vld [vmem:[#allocation9 + $0xe0] sm:$0xff]
    %v893 = vld [vmem:[#allocation9 + $0xe8] sm:$0xff]
    %v894 = vld [vmem:[#allocation9 + $0xf0] sm:$0xff]
    %v895 = vld [vmem:[#allocation9 + $0xf8] sm:$0xff]
    %v896 = vld [vmem:[#allocation9 + $0x100] sm:$0xff]
    %v897 = vld [vmem:[#allocation9 + $0x108] sm:$0xff]
    %v898 = vld [vmem:[#allocation9 + $0x110] sm:$0xff]
    %v899 = vld [vmem:[#allocation9 + $0x118] sm:$0xff]
    %v900 = vld [vmem:[#allocation9 + $0x120] sm:$0xff]
    %v901 = vld [vmem:[#allocation9 + $0x128] sm:$0xff]
    %v902 = vld [vmem:[#allocation9 + $0x130] sm:$0xff]
    %v903 = vld [vmem:[#allocation9 + $0x138] sm:$0xff]
    %v904 = vld [vmem:[#allocation9 + $0x140] sm:$0xff]
    %v905 = vld [vmem:[#allocation9 + $0x148] sm:$0xff]
    %v906 = vld [vmem:[#allocation9 + $0x150] sm:$0xff]
    %v907 = vld [vmem:[#allocation9 + $0x158] sm:$0xff]
    %v908 = vld [vmem:[#allocation9 + $0x160] sm:$0xff]
    %v909 = vld [vmem:[#allocation9 + $0x168] sm:$0xff]
    %v910 = vld [vmem:[#allocation9 + $0x170] sm:$0xff]
    %v911 = vld [vmem:[#allocation9 + $0x178] sm:$0xff]
    %v912 = vld [vmem:[#allocation9 + $0x180] sm:$0xff]
    %v913 = vld [vmem:[#allocation9 + $0x188] sm:$0xff]
    %v914 = vld [vmem:[#allocation9 + $0x190] sm:$0xff]
    %v915 = vld [vmem:[#allocation9 + $0x198] sm:$0xff]
    %v916 = vld [vmem:[#allocation9 + $0x1a0] sm:$0xff]
    %v917 = vld [vmem:[#allocation9 + $0x1a8] sm:$0xff]
    %v918 = vld [vmem:[#allocation9 + $0x1b0] sm:$0xff]
    %v919 = vld [vmem:[#allocation9 + $0x1b8] sm:$0xff]
    %v920 = vld [vmem:[#allocation9 + $0x1c0] sm:$0xff]
    %v921 = vld [vmem:[#allocation9 + $0x1c8] sm:$0xff]
    %v922 = vld [vmem:[#allocation9 + $0x1d0] sm:$0xff]
    %v923 = vld [vmem:[#allocation9 + $0x1d8] sm:$0xff]
    %v924 = vld [vmem:[#allocation9 + $0x1e0] sm:$0xff]
    %v925 = vld [vmem:[#allocation9 + $0x1e8] sm:$0xff]
    %v926 = vld [vmem:[#allocation9 + $0x1f0] sm:$0xff]
    %v927 = vld [vmem:[#allocation9 + $0x1f8] sm:$0xff]
    %v928 = vld [vmem:[#allocation2] sm:$0xc]
    %v929 = vld [vmem:[#allocation2 + $0x8] sm:$0xc]
    %v930 = vld [vmem:[#allocation2 + $0x10] sm:$0xc]
    %v931 = vld [vmem:[#allocation2 + $0x18] sm:$0xc]
    %v936 = vrot.slane %v928, 2
    %v937 = vrot.slane %v929, 2
    %v938 = vrot.slane %v930, 2
    %v939 = vrot.slane %v931, 2
    %944 = vmatprep.subr.mxu0 %v865
    %945 = vmatpush1.msra.mxu0 %v864
    %946 = vmatprep.subr.mxu0 %v869
    %947 = vmatpush1.msra.mxu0 %v868
    %948 = vmatprep.subr.mxu0 %v873
    %949 = vmatpush1.msra.mxu0 %v872
    %950 = vmatprep.subr.mxu0 %v877
    %951 = vmatpush1.msra.mxu0 %v876
    %952 = vmatprep.subr.mxu0 %v881
    %953 = vmatpush1.msra.mxu0 %v880
    %954 = vmatprep.subr.mxu0 %v885
    %955 = vmatpush1.msra.mxu0 %v884
    %956 = vmatprep.subr.mxu0 %v889
    %957 = vmatpush1.msra.mxu0 %v888
    %958 = vmatprep.subr.mxu0 %v893
    %959 = vmatpush1.msra.mxu0 %v892
    %960 = vmatprep.subr.mxu0 %v897
    %961 = vmatpush1.msra.mxu0 %v896
    %962 = vmatprep.subr.mxu0 %v901
    %963 = vmatpush1.msra.mxu0 %v900
    %964 = vmatprep.subr.mxu0 %v905
    %965 = vmatpush1.msra.mxu0 %v904
    %966 = vmatprep.subr.mxu0 %v909
    %967 = vmatpush1.msra.mxu0 %v908
    %968 = vmatprep.subr.mxu0 %v913
    %969 = vmatpush1.msra.mxu0 %v912
    %970 = vmatprep.subr.mxu0 %v917
    %971 = vmatpush1.msra.mxu0 %v916
    %972 = vmatprep.subr.mxu0 %v921
    %973 = vmatpush1.msra.mxu0 %v920
    %974 = vmatprep.subr.mxu0 %v925
    %975 = vmatpush1.msra.mxu0 %v924
    %976 = vmatprep.subr.mxu0 0.0
    %977 = vmatpush1.msra.mxu0 0.0
    %978 = vmatprep.subr.mxu0 0.0
    %979 = vmatpush1.msra.mxu0 0.0
    %980 = vmatprep.subr.mxu0 0.0
    %981 = vmatpush1.msra.mxu0 0.0
    %982 = vmatprep.subr.mxu0 0.0
    %983 = vmatpush1.msra.mxu0 0.0
    %984 = vmatprep.subr.mxu0 0.0
    %985 = vmatpush1.msra.mxu0 0.0
    %986 = vmatprep.subr.mxu0 0.0
    %987 = vmatpush1.msra.mxu0 0.0
    %988 = vmatprep.subr.mxu0 0.0
    %989 = vmatpush1.msra.mxu0 0.0
    %990 = vmatprep.subr.mxu0 0.0
    %991 = vmatpush1.msra.mxu0 0.0
    %992 = vmatprep.subr.mxu0 0.0
    %993 = vmatpush1.msra.mxu0 0.0
    %994 = vmatprep.subr.mxu0 0.0
    %995 = vmatpush1.msra.mxu0 0.0
    %996 = vmatprep.subr.mxu0 0.0
    %997 = vmatpush1.msra.mxu0 0.0
    %998 = vmatprep.subr.mxu0 0.0
    %999 = vmatpush1.msra.mxu0 0.0
    %1000 = vmatprep.subr.mxu0 0.0
    %1001 = vmatpush1.msra.mxu0 0.0
    %1002 = vmatprep.subr.mxu0 0.0
    %1003 = vmatpush1.msra.mxu0 0.0
    %1004 = vmatprep.subr.mxu0 0.0
    %1005 = vmatpush1.msra.mxu0 0.0
    %1006 = vmatprep.subr.mxu0 0.0
    %1007 = vmatpush1.msra.mxu0 0.0
    %1008 = vmatprep.mubr.f32.mxu0 0.0
    %1009 = vmatmul.mubr.f32.gmra.mrb[0].mxu0 %v546
    %v1010 = vpop.f32.mrb[0].mxu0
    %v1011 = vadd.f32 %v936, %v1010
    %v1012 = vpop.f32.mrb[0].mxu0
    %v1013 = vadd.f32 %v937, %v1012
    %1014 = vdwg.mxu0
    %1015 = vmatprep.subr.mxu0 %v867
    %1016 = vmatpush1.msra.mxu0 %v866
    %1017 = vmatprep.subr.mxu0 %v871
    %1018 = vmatpush1.msra.mxu0 %v870
    %1019 = vmatprep.subr.mxu0 %v875
    %1020 = vmatpush1.msra.mxu0 %v874
    %1021 = vmatprep.subr.mxu0 %v879
    %1022 = vmatpush1.msra.mxu0 %v878
    %1023 = vmatprep.subr.mxu0 %v883
    %1024 = vmatpush1.msra.mxu0 %v882
    %1025 = vmatprep.subr.mxu0 %v887
    %1026 = vmatpush1.msra.mxu0 %v886
    %1027 = vmatprep.subr.mxu0 %v891
    %1028 = vmatpush1.msra.mxu0 %v890
    %1029 = vmatprep.subr.mxu0 %v895
    %1030 = vmatpush1.msra.mxu0 %v894
    %1031 = vmatprep.subr.mxu0 %v899
    %1032 = vmatpush1.msra.mxu0 %v898
    %1033 = vmatprep.subr.mxu0 %v903
    %1034 = vmatpush1.msra.mxu0 %v902
    %1035 = vmatprep.subr.mxu0 %v907
    %1036 = vmatpush1.msra.mxu0 %v906
    %1037 = vmatprep.subr.mxu0 %v911
    %1038 = vmatpush1.msra.mxu0 %v910
    %1039 = vmatprep.subr.mxu0 %v915
    %1040 = vmatpush1.msra.mxu0 %v914
    %1041 = vmatprep.subr.mxu0 %v919
    %1042 = vmatpush1.msra.mxu0 %v918
    %1043 = vmatprep.subr.mxu0 %v923
    %1044 = vmatpush1.msra.mxu0 %v922
    %1045 = vmatprep.subr.mxu0 %v927
    %1046 = vmatpush1.msra.mxu0 %v926
    %1047 = vmatprep.subr.mxu0 0.0
    %1048 = vmatpush1.msra.mxu0 0.0
    %1049 = vmatprep.subr.mxu0 0.0
    %1050 = vmatpush1.msra.mxu0 0.0
    %1051 = vmatprep.subr.mxu0 0.0
    %1052 = vmatpush1.msra.mxu0 0.0
    %1053 = vmatprep.subr.mxu0 0.0
    %1054 = vmatpush1.msra.mxu0 0.0
    %1055 = vmatprep.subr.mxu0 0.0
    %1056 = vmatpush1.msra.mxu0 0.0
    %1057 = vmatprep.subr.mxu0 0.0
    %1058 = vmatpush1.msra.mxu0 0.0
    %1059 = vmatprep.subr.mxu0 0.0
    %1060 = vmatpush1.msra.mxu0 0.0
    %1061 = vmatprep.subr.mxu0 0.0
    %1062 = vmatpush1.msra.mxu0 0.0
    %1063 = vmatprep.subr.mxu0 0.0
    %1064 = vmatpush1.msra.mxu0 0.0
    %1065 = vmatprep.subr.mxu0 0.0
    %1066 = vmatpush1.msra.mxu0 0.0
    %1067 = vmatprep.subr.mxu0 0.0
    %1068 = vmatpush1.msra.mxu0 0.0
    %1069 = vmatprep.subr.mxu0 0.0
    %1070 = vmatpush1.msra.mxu0 0.0
    %1071 = vmatprep.subr.mxu0 0.0
    %1072 = vmatpush1.msra.mxu0 0.0
    %1073 = vmatprep.subr.mxu0 0.0
    %1074 = vmatpush1.msra.mxu0 0.0
    %1075 = vmatprep.subr.mxu0 0.0
    %1076 = vmatpush1.msra.mxu0 0.0
    %1077 = vmatprep.subr.mxu0 0.0
    %1078 = vmatpush1.msra.mxu0 0.0
    %1079 = vmatprep.mubr.f32.mxu0 0.0
    %1080 = vmatmul.mubr.f32.gmra.mrb[0].mxu0 %v546
    %v1081 = vpop.f32.mrb[0].mxu0
    %v1082 = vadd.f32 %v938, %v1081
    %v1083 = vpop.f32.mrb[0].mxu0
    %v1084 = vadd.f32 %v939, %v1083
    %1085 = vdwg.mxu0
    %v1086 = vxor.u32 %v1011, 2147483648
    %v1087 = vmul.f32 %v1086, 1.442695
    %v1088 = vpow.pop %v1087
    %v1089 = vadd.f32 %v1088, 1.0
    %v1090 = vrcp.pop %v1089
    %v1091 = vmul.f32 1.0, %v1090
    %v1092 = vxor.u32 %v1013, 2147483648
    %v1093 = vmul.f32 %v1092, 1.442695
    %v1094 = vpow.pop %v1093
    %v1095 = vadd.f32 %v1094, 1.0
    %v1096 = vrcp.pop %v1095
    %v1097 = vmul.f32 1.0, %v1096
    %v1098 = vtanh.pop %v1082
    %v1099 = vxor.u32 %v1084, 2147483648
    %v1100 = vmul.f32 %v1099, 1.442695
    %v1101 = vpow.pop %v1100
    %v1102 = vadd.f32 %v1101, 1.0
    %v1103 = vrcp.pop %v1102
    %v1104 = vmul.f32 1.0, %v1103
    %v1105 = vmul.f32 %v1097, %v544
    %v1106 = vmul.f32 %v1091, %v1098
    %v1107 = vadd.f32 %v1105, %v1106
    %v1108 = vtanh.pop %v1107
    %v1109 = vmul.f32 %v1104, %v1108
    %v1110 = vld [vmem:[#allocation10] sm:$0xff]
    %v1111 = vld [vmem:[#allocation10 + $0x8] sm:$0xff]
    %v1112 = vld [vmem:[#allocation10 + $0x10] sm:$0xff]
    %v1113 = vld [vmem:[#allocation10 + $0x18] sm:$0xff]
    %v1114 = vld [vmem:[#allocation10 + $0x20] sm:$0xff]
    %v1115 = vld [vmem:[#allocation10 + $0x28] sm:$0xff]
    %v1116 = vld [vmem:[#allocation10 + $0x30] sm:$0xff]
    %v1117 = vld [vmem:[#allocation10 + $0x38] sm:$0xff]
    %v1118 = vld [vmem:[#allocation10 + $0x40] sm:$0xff]
    %v1119 = vld [vmem:[#allocation10 + $0x48] sm:$0xff]
    %v1120 = vld [vmem:[#allocation10 + $0x50] sm:$0xff]
    %v1121 = vld [vmem:[#allocation10 + $0x58] sm:$0xff]
    %v1122 = vld [vmem:[#allocation10 + $0x60] sm:$0xff]
    %v1123 = vld [vmem:[#allocation10 + $0x68] sm:$0xff]
    %v1124 = vld [vmem:[#allocation10 + $0x70] sm:$0xff]
    %v1125 = vld [vmem:[#allocation10 + $0x78] sm:$0xff]
    %v1126 = vld [vmem:[#allocation10 + $0x80] sm:$0xff]
    %v1127 = vld [vmem:[#allocation10 + $0x88] sm:$0xff]
    %v1128 = vld [vmem:[#allocation10 + $0x90] sm:$0xff]
    %v1129 = vld [vmem:[#allocation10 + $0x98] sm:$0xff]
    %v1130 = vld [vmem:[#allocation10 + $0xa0] sm:$0xff]
    %v1131 = vld [vmem:[#allocation10 + $0xa8] sm:$0xff]
    %v1132 = vld [vmem:[#allocation10 + $0xb0] sm:$0xff]
    %v1133 = vld [vmem:[#allocation10 + $0xb8] sm:$0xff]
    %v1134 = vld [vmem:[#allocation10 + $0xc0] sm:$0xff]
    %v1135 = vld [vmem:[#allocation10 + $0xc8] sm:$0xff]
    %v1136 = vld [vmem:[#allocation10 + $0xd0] sm:$0xff]
    %v1137 = vld [vmem:[#allocation10 + $0xd8] sm:$0xff]
    %v1138 = vld [vmem:[#allocation10 + $0xe0] sm:$0xff]
    %v1139 = vld [vmem:[#allocation10 + $0xe8] sm:$0xff]
    %v1140 = vld [vmem:[#allocation10 + $0xf0] sm:$0xff]
    %v1141 = vld [vmem:[#allocation10 + $0xf8] sm:$0xff]
    %v1142 = vld [vmem:[#allocation10 + $0x100] sm:$0xff]
    %v1143 = vld [vmem:[#allocation10 + $0x108] sm:$0xff]
    %v1144 = vld [vmem:[#allocation10 + $0x110] sm:$0xff]
    %v1145 = vld [vmem:[#allocation10 + $0x118] sm:$0xff]
    %v1146 = vld [vmem:[#allocation10 + $0x120] sm:$0xff]
    %v1147 = vld [vmem:[#allocation10 + $0x128] sm:$0xff]
    %v1148 = vld [vmem:[#allocation10 + $0x130] sm:$0xff]
    %v1149 = vld [vmem:[#allocation10 + $0x138] sm:$0xff]
    %v1150 = vld [vmem:[#allocation10 + $0x140] sm:$0xff]
    %v1151 = vld [vmem:[#allocation10 + $0x148] sm:$0xff]
    %v1152 = vld [vmem:[#allocation10 + $0x150] sm:$0xff]
    %v1153 = vld [vmem:[#allocation10 + $0x158] sm:$0xff]
    %v1154 = vld [vmem:[#allocation10 + $0x160] sm:$0xff]
    %v1155 = vld [vmem:[#allocation10 + $0x168] sm:$0xff]
    %v1156 = vld [vmem:[#allocation10 + $0x170] sm:$0xff]
    %v1157 = vld [vmem:[#allocation10 + $0x178] sm:$0xff]
    %v1158 = vld [vmem:[#allocation10 + $0x180] sm:$0xff]
    %v1159 = vld [vmem:[#allocation10 + $0x188] sm:$0xff]
    %v1160 = vld [vmem:[#allocation10 + $0x190] sm:$0xff]
    %v1161 = vld [vmem:[#allocation10 + $0x198] sm:$0xff]
    %v1162 = vld [vmem:[#allocation10 + $0x1a0] sm:$0xff]
    %v1163 = vld [vmem:[#allocation10 + $0x1a8] sm:$0xff]
    %v1164 = vld [vmem:[#allocation10 + $0x1b0] sm:$0xff]
    %v1165 = vld [vmem:[#allocation10 + $0x1b8] sm:$0xff]
    %v1166 = vld [vmem:[#allocation10 + $0x1c0] sm:$0xff]
    %v1167 = vld [vmem:[#allocation10 + $0x1c8] sm:$0xff]
    %v1168 = vld [vmem:[#allocation10 + $0x1d0] sm:$0xff]
    %v1169 = vld [vmem:[#allocation10 + $0x1d8] sm:$0xff]
    %v1170 = vld [vmem:[#allocation10 + $0x1e0] sm:$0xff]
    %v1171 = vld [vmem:[#allocation10 + $0x1e8] sm:$0xff]
    %v1172 = vld [vmem:[#allocation10 + $0x1f0] sm:$0xff]
    %v1173 = vld [vmem:[#allocation10 + $0x1f8] sm:$0xff]
    %v1174 = vld [vmem:[#allocation10 + $0x200] sm:$0xff]
    %v1175 = vld [vmem:[#allocation10 + $0x208] sm:$0xff]
    %v1176 = vld [vmem:[#allocation10 + $0x210] sm:$0xff]
    %v1177 = vld [vmem:[#allocation10 + $0x218] sm:$0xff]
    %v1178 = vld [vmem:[#allocation10 + $0x220] sm:$0xff]
    %v1179 = vld [vmem:[#allocation10 + $0x228] sm:$0xff]
    %v1180 = vld [vmem:[#allocation10 + $0x230] sm:$0xff]
    %v1181 = vld [vmem:[#allocation10 + $0x238] sm:$0xff]
    %v1182 = vld [vmem:[#allocation10 + $0x240] sm:$0xff]
    %v1183 = vld [vmem:[#allocation10 + $0x248] sm:$0xff]
    %v1184 = vld [vmem:[#allocation10 + $0x250] sm:$0xff]
    %v1185 = vld [vmem:[#allocation10 + $0x258] sm:$0xff]
    %v1186 = vld [vmem:[#allocation10 + $0x260] sm:$0xff]
    %v1187 = vld [vmem:[#allocation10 + $0x268] sm:$0xff]
    %v1188 = vld [vmem:[#allocation10 + $0x270] sm:$0xff]
    %v1189 = vld [vmem:[#allocation10 + $0x278] sm:$0xff]
    %v1190 = vld [vmem:[#allocation10 + $0x280] sm:$0xff]
    %v1191 = vld [vmem:[#allocation10 + $0x288] sm:$0xff]
    %v1192 = vld [vmem:[#allocation10 + $0x290] sm:$0xff]
    %v1193 = vld [vmem:[#allocation10 + $0x298] sm:$0xff]
    %v1194 = vld [vmem:[#allocation10 + $0x2a0] sm:$0xff]
    %v1195 = vld [vmem:[#allocation10 + $0x2a8] sm:$0xff]
    %v1196 = vld [vmem:[#allocation10 + $0x2b0] sm:$0xff]
    %v1197 = vld [vmem:[#allocation10 + $0x2b8] sm:$0xff]
    %v1198 = vld [vmem:[#allocation10 + $0x2c0] sm:$0xff]
    %v1199 = vld [vmem:[#allocation10 + $0x2c8] sm:$0xff]
    %v1200 = vld [vmem:[#allocation10 + $0x2d0] sm:$0xff]
    %v1201 = vld [vmem:[#allocation10 + $0x2d8] sm:$0xff]
    %v1202 = vld [vmem:[#allocation10 + $0x2e0] sm:$0xff]
    %v1203 = vld [vmem:[#allocation10 + $0x2e8] sm:$0xff]
    %v1204 = vld [vmem:[#allocation10 + $0x2f0] sm:$0xff]
    %v1205 = vld [vmem:[#allocation10 + $0x2f8] sm:$0xff]
    %v1206 = vld [vmem:[#allocation10 + $0x300] sm:$0xff]
    %v1207 = vld [vmem:[#allocation10 + $0x308] sm:$0xff]
    %v1208 = vld [vmem:[#allocation10 + $0x310] sm:$0xff]
    %v1209 = vld [vmem:[#allocation10 + $0x318] sm:$0xff]
    %v1210 = vld [vmem:[#allocation10 + $0x320] sm:$0xff]
    %v1211 = vld [vmem:[#allocation10 + $0x328] sm:$0xff]
    %v1212 = vld [vmem:[#allocation10 + $0x330] sm:$0xff]
    %v1213 = vld [vmem:[#allocation10 + $0x338] sm:$0xff]
    %v1214 = vld [vmem:[#allocation10 + $0x340] sm:$0xff]
    %v1215 = vld [vmem:[#allocation10 + $0x348] sm:$0xff]
    %v1216 = vld [vmem:[#allocation10 + $0x350] sm:$0xff]
    %v1217 = vld [vmem:[#allocation10 + $0x358] sm:$0xff]
    %v1218 = vld [vmem:[#allocation10 + $0x360] sm:$0xff]
    %v1219 = vld [vmem:[#allocation10 + $0x368] sm:$0xff]
    %v1220 = vld [vmem:[#allocation10 + $0x370] sm:$0xff]
    %v1221 = vld [vmem:[#allocation10 + $0x378] sm:$0xff]
    %v1222 = vld [vmem:[#allocation10 + $0x380] sm:$0xff]
    %v1223 = vld [vmem:[#allocation10 + $0x388] sm:$0xff]
    %v1224 = vld [vmem:[#allocation10 + $0x390] sm:$0xff]
    %v1225 = vld [vmem:[#allocation10 + $0x398] sm:$0xff]
    %v1226 = vld [vmem:[#allocation10 + $0x3a0] sm:$0xff]
    %v1227 = vld [vmem:[#allocation10 + $0x3a8] sm:$0xff]
    %v1228 = vld [vmem:[#allocation10 + $0x3b0] sm:$0xff]
    %v1229 = vld [vmem:[#allocation10 + $0x3b8] sm:$0xff]
    %v1230 = vld [vmem:[#allocation10 + $0x3c0] sm:$0xff]
    %v1231 = vld [vmem:[#allocation10 + $0x3c8] sm:$0xff]
    %v1232 = vld [vmem:[#allocation10 + $0x3d0] sm:$0xff]
    %v1233 = vld [vmem:[#allocation10 + $0x3d8] sm:$0xff]
    %v1234 = vld [vmem:[#allocation10 + $0x3e0] sm:$0xff]
    %v1235 = vld [vmem:[#allocation10 + $0x3e8] sm:$0xff]
    %v1236 = vld [vmem:[#allocation10 + $0x3f0] sm:$0xff]
    %v1237 = vld [vmem:[#allocation10 + $0x3f8] sm:$0xff]
    %v1238 = vld [vmem:[%s5] sm:$0xf]
    %v1240 = vlaneseq
    %v1241 = vshrl.u32 %v1240, 7
    %v1242 = vsub.s32 0, %v1241
    %v1243 = vrot.slane %v1238, %v1242
    %v1244 = vlaneseq
    %v1245 = vshrl.u32 %v1244, 7
    %v1246 = vsub.s32 1, %v1245
    %v1247 = vrot.slane %v1238, %v1246
    %v1248 = vlaneseq
    %v1249 = vshrl.u32 %v1248, 7
    %v1250 = vsub.s32 2, %v1249
    %v1251 = vrot.slane %v1238, %v1250
    %v1252 = vlaneseq
    %v1253 = vshrl.u32 %v1252, 7
    %v1254 = vsub.s32 3, %v1253
    %v1255 = vrot.slane %v1238, %v1254
    %1260 = vmatprep.subr.mxu0 %v1111
    %1261 = vmatpush1.msra.mxu0 %v1110
    %1262 = vmatprep.subr.mxu0 %v1115
    %1263 = vmatpush1.msra.mxu0 %v1114
    %1264 = vmatprep.subr.mxu0 %v1119
    %1265 = vmatpush1.msra.mxu0 %v1118
    %1266 = vmatprep.subr.mxu0 %v1123
    %1267 = vmatpush1.msra.mxu0 %v1122
    %1268 = vmatprep.subr.mxu0 %v1127
    %1269 = vmatpush1.msra.mxu0 %v1126
    %1270 = vmatprep.subr.mxu0 %v1131
    %1271 = vmatpush1.msra.mxu0 %v1130
    %1272 = vmatprep.subr.mxu0 %v1135
    %1273 = vmatpush1.msra.mxu0 %v1134
    %1274 = vmatprep.subr.mxu0 %v1139
    %1275 = vmatpush1.msra.mxu0 %v1138
    %1276 = vmatprep.subr.mxu0 %v1143
    %1277 = vmatpush1.msra.mxu0 %v1142
    %1278 = vmatprep.subr.mxu0 %v1147
    %1279 = vmatpush1.msra.mxu0 %v1146
    %1280 = vmatprep.subr.mxu0 %v1151
    %1281 = vmatpush1.msra.mxu0 %v1150
    %1282 = vmatprep.subr.mxu0 %v1155
    %1283 = vmatpush1.msra.mxu0 %v1154
    %1284 = vmatprep.subr.mxu0 %v1159
    %1285 = vmatpush1.msra.mxu0 %v1158
    %1286 = vmatprep.subr.mxu0 %v1163
    %1287 = vmatpush1.msra.mxu0 %v1162
    %1288 = vmatprep.subr.mxu0 %v1167
    %1289 = vmatpush1.msra.mxu0 %v1166
    %1290 = vmatprep.subr.mxu0 %v1171
    %1291 = vmatpush1.msra.mxu0 %v1170
    %1292 = vmatprep.subr.mxu0 %v1175
    %1293 = vmatpush1.msra.mxu0 %v1174
    %1294 = vmatprep.subr.mxu0 %v1179
    %1295 = vmatpush1.msra.mxu0 %v1178
    %1296 = vmatprep.subr.mxu0 %v1183
    %1297 = vmatpush1.msra.mxu0 %v1182
    %1298 = vmatprep.subr.mxu0 %v1187
    %1299 = vmatpush1.msra.mxu0 %v1186
    %1300 = vmatprep.subr.mxu0 %v1191
    %1301 = vmatpush1.msra.mxu0 %v1190
    %1302 = vmatprep.subr.mxu0 %v1195
    %1303 = vmatpush1.msra.mxu0 %v1194
    %1304 = vmatprep.subr.mxu0 %v1199
    %1305 = vmatpush1.msra.mxu0 %v1198
    %1306 = vmatprep.subr.mxu0 %v1203
    %1307 = vmatpush1.msra.mxu0 %v1202
    %1308 = vmatprep.subr.mxu0 %v1207
    %1309 = vmatpush1.msra.mxu0 %v1206
    %1310 = vmatprep.subr.mxu0 %v1211
    %1311 = vmatpush1.msra.mxu0 %v1210
    %1312 = vmatprep.subr.mxu0 %v1215
    %1313 = vmatpush1.msra.mxu0 %v1214
    %1314 = vmatprep.subr.mxu0 %v1219
    %1315 = vmatpush1.msra.mxu0 %v1218
    %1316 = vmatprep.subr.mxu0 %v1223
    %1317 = vmatpush1.msra.mxu0 %v1222
    %1318 = vmatprep.subr.mxu0 %v1227
    %1319 = vmatpush1.msra.mxu0 %v1226
    %1320 = vmatprep.subr.mxu0 %v1231
    %1321 = vmatpush1.msra.mxu0 %v1230
    %1322 = vmatprep.subr.mxu0 %v1235
    %1323 = vmatpush1.msra.mxu0 %v1234
    %1324 = vmatprep.mubr.f32.mxu0 %v862
    %1325 = vmatmul.mubr.f32.gmra.mrb[0].mxu0 %v1109
    %v1326 = vpop.f32.mrb[0].mxu0
    %v1327 = vadd.f32 %v1243, %v1326
    %v1328 = vpop.f32.mrb[0].mxu0
    %v1329 = vadd.f32 %v1247, %v1328
    %1330 = vdwg.mxu0
    %1331 = vmatprep.subr.mxu0 %v1113
    %1332 = vmatpush1.msra.mxu0 %v1112
    %1333 = vmatprep.subr.mxu0 %v1117
    %1334 = vmatpush1.msra.mxu0 %v1116
    %1335 = vmatprep.subr.mxu0 %v1121
    %1336 = vmatpush1.msra.mxu0 %v1120
    %1337 = vmatprep.subr.mxu0 %v1125
    %1338 = vmatpush1.msra.mxu0 %v1124
    %1339 = vmatprep.subr.mxu0 %v1129
    %1340 = vmatpush1.msra.mxu0 %v1128
    %1341 = vmatprep.subr.mxu0 %v1133
    %1342 = vmatpush1.msra.mxu0 %v1132
    %1343 = vmatprep.subr.mxu0 %v1137
    %1344 = vmatpush1.msra.mxu0 %v1136
    %1345 = vmatprep.subr.mxu0 %v1141
    %1346 = vmatpush1.msra.mxu0 %v1140
    %1347 = vmatprep.subr.mxu0 %v1145
    %1348 = vmatpush1.msra.mxu0 %v1144
    %1349 = vmatprep.subr.mxu0 %v1149
    %1350 = vmatpush1.msra.mxu0 %v1148
    %1351 = vmatprep.subr.mxu0 %v1153
    %1352 = vmatpush1.msra.mxu0 %v1152
    %1353 = vmatprep.subr.mxu0 %v1157
    %1354 = vmatpush1.msra.mxu0 %v1156
    %1355 = vmatprep.subr.mxu0 %v1161
    %1356 = vmatpush1.msra.mxu0 %v1160
    %1357 = vmatprep.subr.mxu0 %v1165
    %1358 = vmatpush1.msra.mxu0 %v1164
    %1359 = vmatprep.subr.mxu0 %v1169
    %1360 = vmatpush1.msra.mxu0 %v1168
    %1361 = vmatprep.subr.mxu0 %v1173
    %1362 = vmatpush1.msra.mxu0 %v1172
    %1363 = vmatprep.subr.mxu0 %v1177
    %1364 = vmatpush1.msra.mxu0 %v1176
    %1365 = vmatprep.subr.mxu0 %v1181
    %1366 = vmatpush1.msra.mxu0 %v1180
    %1367 = vmatprep.subr.mxu0 %v1185
    %1368 = vmatpush1.msra.mxu0 %v1184
    %1369 = vmatprep.subr.mxu0 %v1189
    %1370 = vmatpush1.msra.mxu0 %v1188
    %1371 = vmatprep.subr.mxu0 %v1193
    %1372 = vmatpush1.msra.mxu0 %v1192
    %1373 = vmatprep.subr.mxu0 %v1197
    %1374 = vmatpush1.msra.mxu0 %v1196
    %1375 = vmatprep.subr.mxu0 %v1201
    %1376 = vmatpush1.msra.mxu0 %v1200
    %1377 = vmatprep.subr.mxu0 %v1205
    %1378 = vmatpush1.msra.mxu0 %v1204
    %1379 = vmatprep.subr.mxu0 %v1209
    %1380 = vmatpush1.msra.mxu0 %v1208
    %1381 = vmatprep.subr.mxu0 %v1213
    %1382 = vmatpush1.msra.mxu0 %v1212
    %1383 = vmatprep.subr.mxu0 %v1217
    %1384 = vmatpush1.msra.mxu0 %v1216
    %1385 = vmatprep.subr.mxu0 %v1221
    %1386 = vmatpush1.msra.mxu0 %v1220
    %1387 = vmatprep.subr.mxu0 %v1225
    %1388 = vmatpush1.msra.mxu0 %v1224
    %1389 = vmatprep.subr.mxu0 %v1229
    %1390 = vmatpush1.msra.mxu0 %v1228
    %1391 = vmatprep.subr.mxu0 %v1233
    %1392 = vmatpush1.msra.mxu0 %v1232
    %1393 = vmatprep.subr.mxu0 %v1237
    %1394 = vmatpush1.msra.mxu0 %v1236
    %1395 = vmatprep.mubr.f32.mxu0 %v862
    %1396 = vmatmul.mubr.f32.gmra.mrb[0].mxu0 %v1109
    %v1397 = vpop.f32.mrb[0].mxu0
    %v1398 = vadd.f32 %v1251, %v1397
    %v1399 = vpop.f32.mrb[0].mxu0
    %v1400 = vadd.f32 %v1255, %v1399
    %1401 = vdwg.mxu0
    %v1402 = vxor.u32 %v1327, 2147483648
    %v1403 = vmul.f32 %v1402, 1.442695
    %v1404 = vpow.pop %v1403
    %v1405 = vadd.f32 %v1404, 1.0
    %v1406 = vrcp.pop %v1405
    %v1407 = vmul.f32 1.0, %v1406
    %v1408 = vxor.u32 %v1329, 2147483648
    %v1409 = vmul.f32 %v1408, 1.442695
    %v1410 = vpow.pop %v1409
    %v1411 = vadd.f32 %v1410, 1.0
    %v1412 = vrcp.pop %v1411
    %v1413 = vmul.f32 1.0, %v1412
    %v1414 = vtanh.pop %v1398
    %v1415 = vxor.u32 %v1400, 2147483648
    %v1416 = vmul.f32 %v1415, 1.442695
    %v1417 = vpow.pop %v1416
    %v1418 = vadd.f32 %v1417, 1.0
    %v1419 = vrcp.pop %v1418
    %v1420 = vmul.f32 1.0, %v1419
    %v1421 = vmul.f32 %v1413, %v860
    %v1422 = vmul.f32 %v1407, %v1414
    %v1423 = vadd.f32 %v1421, %v1422
    %v1424 = vtanh.pop %v1423
    %v1425 = vmul.f32 %v1420, %v1424
    %1426 = vst [vmem:[#allocation3 + $0x2] sm:$0x3] %v1425
    %v1427 = vld [vmem:[#allocation9] sm:$0xff]
    %v1428 = vld [vmem:[#allocation9 + $0x8] sm:$0xff]
    %v1429 = vld [vmem:[#allocation9 + $0x10] sm:$0xff]
    %v1430 = vld [vmem:[#allocation9 + $0x18] sm:$0xff]
    %v1431 = vld [vmem:[#allocation9 + $0x20] sm:$0xff]
    %v1432 = vld [vmem:[#allocation9 + $0x28] sm:$0xff]
    %v1433 = vld [vmem:[#allocation9 + $0x30] sm:$0xff]
    %v1434 = vld [vmem:[#allocation9 + $0x38] sm:$0xff]
    %v1435 = vld [vmem:[#allocation9 + $0x40] sm:$0xff]
    %v1436 = vld [vmem:[#allocation9 + $0x48] sm:$0xff]
    %v1437 = vld [vmem:[#allocation9 + $0x50] sm:$0xff]
    %v1438 = vld [vmem:[#allocation9 + $0x58] sm:$0xff]
    %v1439 = vld [vmem:[#allocation9 + $0x60] sm:$0xff]
    %v1440 = vld [vmem:[#allocation9 + $0x68] sm:$0xff]
    %v1441 = vld [vmem:[#allocation9 + $0x70] sm:$0xff]
    %v1442 = vld [vmem:[#allocation9 + $0x78] sm:$0xff]
    %v1443 = vld [vmem:[#allocation9 + $0x80] sm:$0xff]
    %v1444 = vld [vmem:[#allocation9 + $0x88] sm:$0xff]
    %v1445 = vld [vmem:[#allocation9 + $0x90] sm:$0xff]
    %v1446 = vld [vmem:[#allocation9 + $0x98] sm:$0xff]
    %v1447 = vld [vmem:[#allocation9 + $0xa0] sm:$0xff]
    %v1448 = vld [vmem:[#allocation9 + $0xa8] sm:$0xff]
    %v1449 = vld [vmem:[#allocation9 + $0xb0] sm:$0xff]
    %v1450 = vld [vmem:[#allocation9 + $0xb8] sm:$0xff]
    %v1451 = vld [vmem:[#allocation9 + $0xc0] sm:$0xff]
    %v1452 = vld [vmem:[#allocation9 + $0xc8] sm:$0xff]
    %v1453 = vld [vmem:[#allocation9 + $0xd0] sm:$0xff]
    %v1454 = vld [vmem:[#allocation9 + $0xd8] sm:$0xff]
    %v1455 = vld [vmem:[#allocation9 + $0xe0] sm:$0xff]
    %v1456 = vld [vmem:[#allocation9 + $0xe8] sm:$0xff]
    %v1457 = vld [vmem:[#allocation9 + $0xf0] sm:$0xff]
    %v1458 = vld [vmem:[#allocation9 + $0xf8] sm:$0xff]
    %v1459 = vld [vmem:[#allocation9 + $0x100] sm:$0xff]
    %v1460 = vld [vmem:[#allocation9 + $0x108] sm:$0xff]
    %v1461 = vld [vmem:[#allocation9 + $0x110] sm:$0xff]
    %v1462 = vld [vmem:[#allocation9 + $0x118] sm:$0xff]
    %v1463 = vld [vmem:[#allocation9 + $0x120] sm:$0xff]
    %v1464 = vld [vmem:[#allocation9 + $0x128] sm:$0xff]
    %v1465 = vld [vmem:[#allocation9 + $0x130] sm:$0xff]
    %v1466 = vld [vmem:[#allocation9 + $0x138] sm:$0xff]
    %v1467 = vld [vmem:[#allocation9 + $0x140] sm:$0xff]
    %v1468 = vld [vmem:[#allocation9 + $0x148] sm:$0xff]
    %v1469 = vld [vmem:[#allocation9 + $0x150] sm:$0xff]
    %v1470 = vld [vmem:[#allocation9 + $0x158] sm:$0xff]
    %v1471 = vld [vmem:[#allocation9 + $0x160] sm:$0xff]
    %v1472 = vld [vmem:[#allocation9 + $0x168] sm:$0xff]
    %v1473 = vld [vmem:[#allocation9 + $0x170] sm:$0xff]
    %v1474 = vld [vmem:[#allocation9 + $0x178] sm:$0xff]
    %v1475 = vld [vmem:[#allocation9 + $0x180] sm:$0xff]
    %v1476 = vld [vmem:[#allocation9 + $0x188] sm:$0xff]
    %v1477 = vld [vmem:[#allocation9 + $0x190] sm:$0xff]
    %v1478 = vld [vmem:[#allocation9 + $0x198] sm:$0xff]
    %v1479 = vld [vmem:[#allocation9 + $0x1a0] sm:$0xff]
    %v1480 = vld [vmem:[#allocation9 + $0x1a8] sm:$0xff]
    %v1481 = vld [vmem:[#allocation9 + $0x1b0] sm:$0xff]
    %v1482 = vld [vmem:[#allocation9 + $0x1b8] sm:$0xff]
    %v1483 = vld [vmem:[#allocation9 + $0x1c0] sm:$0xff]
    %v1484 = vld [vmem:[#allocation9 + $0x1c8] sm:$0xff]
    %v1485 = vld [vmem:[#allocation9 + $0x1d0] sm:$0xff]
    %v1486 = vld [vmem:[#allocation9 + $0x1d8] sm:$0xff]
    %v1487 = vld [vmem:[#allocation9 + $0x1e0] sm:$0xff]
    %v1488 = vld [vmem:[#allocation9 + $0x1e8] sm:$0xff]
    %v1489 = vld [vmem:[#allocation9 + $0x1f0] sm:$0xff]
    %v1490 = vld [vmem:[#allocation9 + $0x1f8] sm:$0xff]
    %v1491 = vld [vmem:[#allocation2] sm:$0x30]
    %v1492 = vld [vmem:[#allocation2 + $0x8] sm:$0x30]
    %v1493 = vld [vmem:[#allocation2 + $0x10] sm:$0x30]
    %v1494 = vld [vmem:[#allocation2 + $0x18] sm:$0x30]
    %v1499 = vrot.slane %v1491, 4
    %v1500 = vrot.slane %v1492, 4
    %v1501 = vrot.slane %v1493, 4
    %v1502 = vrot.slane %v1494, 4
    %1507 = vmatprep.subr.mxu0 %v1428
    %1508 = vmatpush1.msra.mxu0 %v1427
    %1509 = vmatprep.subr.mxu0 %v1432
    %1510 = vmatpush1.msra.mxu0 %v1431
    %1511 = vmatprep.subr.mxu0 %v1436
    %1512 = vmatpush1.msra.mxu0 %v1435
    %1513 = vmatprep.subr.mxu0 %v1440
    %1514 = vmatpush1.msra.mxu0 %v1439
    %1515 = vmatprep.subr.mxu0 %v1444
    %1516 = vmatpush1.msra.mxu0 %v1443
    %1517 = vmatprep.subr.mxu0 %v1448
    %1518 = vmatpush1.msra.mxu0 %v1447
    %1519 = vmatprep.subr.mxu0 %v1452
    %1520 = vmatpush1.msra.mxu0 %v1451
    %1521 = vmatprep.subr.mxu0 %v1456
    %1522 = vmatpush1.msra.mxu0 %v1455
    %1523 = vmatprep.subr.mxu0 %v1460
    %1524 = vmatpush1.msra.mxu0 %v1459
    %1525 = vmatprep.subr.mxu0 %v1464
    %1526 = vmatpush1.msra.mxu0 %v1463
    %1527 = vmatprep.subr.mxu0 %v1468
    %1528 = vmatpush1.msra.mxu0 %v1467
    %1529 = vmatprep.subr.mxu0 %v1472
    %1530 = vmatpush1.msra.mxu0 %v1471
    %1531 = vmatprep.subr.mxu0 %v1476
    %1532 = vmatpush1.msra.mxu0 %v1475
    %1533 = vmatprep.subr.mxu0 %v1480
    %1534 = vmatpush1.msra.mxu0 %v1479
    %1535 = vmatprep.subr.mxu0 %v1484
    %1536 = vmatpush1.msra.mxu0 %v1483
    %1537 = vmatprep.subr.mxu0 %v1488
    %1538 = vmatpush1.msra.mxu0 %v1487
    %1539 = vmatprep.subr.mxu0 0.0
    %1540 = vmatpush1.msra.mxu0 0.0
    %1541 = vmatprep.subr.mxu0 0.0
    %1542 = vmatpush1.msra.mxu0 0.0
    %1543 = vmatprep.subr.mxu0 0.0
    %1544 = vmatpush1.msra.mxu0 0.0
    %1545 = vmatprep.subr.mxu0 0.0
    %1546 = vmatpush1.msra.mxu0 0.0
    %1547 = vmatprep.subr.mxu0 0.0
    %1548 = vmatpush1.msra.mxu0 0.0
    %1549 = vmatprep.subr.mxu0 0.0
    %1550 = vmatpush1.msra.mxu0 0.0
    %1551 = vmatprep.subr.mxu0 0.0
    %1552 = vmatpush1.msra.mxu0 0.0
    %1553 = vmatprep.subr.mxu0 0.0
    %1554 = vmatpush1.msra.mxu0 0.0
    %1555 = vmatprep.subr.mxu0 0.0
    %1556 = vmatpush1.msra.mxu0 0.0
    %1557 = vmatprep.subr.mxu0 0.0
    %1558 = vmatpush1.msra.mxu0 0.0
    %1559 = vmatprep.subr.mxu0 0.0
    %1560 = vmatpush1.msra.mxu0 0.0
    %1561 = vmatprep.subr.mxu0 0.0
    %1562 = vmatpush1.msra.mxu0 0.0
    %1563 = vmatprep.subr.mxu0 0.0
    %1564 = vmatpush1.msra.mxu0 0.0
    %1565 = vmatprep.subr.mxu0 0.0
    %1566 = vmatpush1.msra.mxu0 0.0
    %1567 = vmatprep.subr.mxu0 0.0
    %1568 = vmatpush1.msra.mxu0 0.0
    %1569 = vmatprep.subr.mxu0 0.0
    %1570 = vmatpush1.msra.mxu0 0.0
    %1571 = vmatprep.mubr.f32.mxu0 0.0
    %1572 = vmatmul.mubr.f32.gmra.mrb[0].mxu0 %v1109
    %v1573 = vpop.f32.mrb[0].mxu0
    %v1574 = vadd.f32 %v1499, %v1573
    %v1575 = vpop.f32.mrb[0].mxu0
    %v1576 = vadd.f32 %v1500, %v1575
    %1577 = vdwg.mxu0
    %1578 = vmatprep.subr.mxu0 %v1430
    %1579 = vmatpush1.msra.mxu0 %v1429
    %1580 = vmatprep.subr.mxu0 %v1434
    %1581 = vmatpush1.msra.mxu0 %v1433
    %1582 = vmatprep.subr.mxu0 %v1438
    %1583 = vmatpush1.msra.mxu0 %v1437
    %1584 = vmatprep.subr.mxu0 %v1442
    %1585 = vmatpush1.msra.mxu0 %v1441
    %1586 = vmatprep.subr.mxu0 %v1446
    %1587 = vmatpush1.msra.mxu0 %v1445
    %1588 = vmatprep.subr.mxu0 %v1450
    %1589 = vmatpush1.msra.mxu0 %v1449
    %1590 = vmatprep.subr.mxu0 %v1454
    %1591 = vmatpush1.msra.mxu0 %v1453
    %1592 = vmatprep.subr.mxu0 %v1458
    %1593 = vmatpush1.msra.mxu0 %v1457
    %1594 = vmatprep.subr.mxu0 %v1462
    %1595 = vmatpush1.msra.mxu0 %v1461
    %1596 = vmatprep.subr.mxu0 %v1466
    %1597 = vmatpush1.msra.mxu0 %v1465
    %1598 = vmatprep.subr.mxu0 %v1470
    %1599 = vmatpush1.msra.mxu0 %v1469
    %1600 = vmatprep.subr.mxu0 %v1474
    %1601 = vmatpush1.msra.mxu0 %v1473
    %1602 = vmatprep.subr.mxu0 %v1478
    %1603 = vmatpush1.msra.mxu0 %v1477
    %1604 = vmatprep.subr.mxu0 %v1482
    %1605 = vmatpush1.msra.mxu0 %v1481
    %1606 = vmatprep.subr.mxu0 %v1486
    %1607 = vmatpush1.msra.mxu0 %v1485
    %1608 = vmatprep.subr.mxu0 %v1490
    %1609 = vmatpush1.msra.mxu0 %v1489
    %1610 = vmatprep.subr.mxu0 0.0
    %1611 = vmatpush1.msra.mxu0 0.0
    %1612 = vmatprep.subr.mxu0 0.0
    %1613 = vmatpush1.msra.mxu0 0.0
    %1614 = vmatprep.subr.mxu0 0.0
    %1615 = vmatpush1.msra.mxu0 0.0
    %1616 = vmatprep.subr.mxu0 0.0
    %1617 = vmatpush1.msra.mxu0 0.0
    %1618 = vmatprep.subr.mxu0 0.0
    %1619 = vmatpush1.msra.mxu0 0.0
    %1620 = vmatprep.subr.mxu0 0.0
    %1621 = vmatpush1.msra.mxu0 0.0
    %1622 = vmatprep.subr.mxu0 0.0
    %1623 = vmatpush1.msra.mxu0 0.0
    %1624 = vmatprep.subr.mxu0 0.0
    %1625 = vmatpush1.msra.mxu0 0.0
    %1626 = vmatprep.subr.mxu0 0.0
    %1627 = vmatpush1.msra.mxu0 0.0
    %1628 = vmatprep.subr.mxu0 0.0
    %1629 = vmatpush1.msra.mxu0 0.0
    %1630 = vmatprep.subr.mxu0 0.0
    %1631 = vmatpush1.msra.mxu0 0.0
    %1632 = vmatprep.subr.mxu0 0.0
    %1633 = vmatpush1.msra.mxu0 0.0
    %1634 = vmatprep.subr.mxu0 0.0
    %1635 = vmatpush1.msra.mxu0 0.0
    %1636 = vmatprep.subr.mxu0 0.0
    %1637 = vmatpush1.msra.mxu0 0.0
    %1638 = vmatprep.subr.mxu0 0.0
    %1639 = vmatpush1.msra.mxu0 0.0
    %1640 = vmatprep.subr.mxu0 0.0
    %1641 = vmatpush1.msra.mxu0 0.0
    %1642 = vmatprep.mubr.f32.mxu0 0.0
    %1643 = vmatmul.mubr.f32.gmra.mrb[0].mxu0 %v1109
    %v1644 = vpop.f32.mrb[0].mxu0
    %v1645 = vadd.f32 %v1501, %v1644
    %v1646 = vpop.f32.mrb[0].mxu0
    %v1647 = vadd.f32 %v1502, %v1646
    %1648 = vdwg.mxu0
    %v1649 = vxor.u32 %v1574, 2147483648
    %v1650 = vmul.f32 %v1649, 1.442695
    %v1651 = vpow.pop %v1650
    %v1652 = vadd.f32 %v1651, 1.0
    %v1653 = vrcp.pop %v1652
    %v1654 = vmul.f32 1.0, %v1653
    %v1655 = vxor.u32 %v1576, 2147483648
    %v1656 = vmul.f32 %v1655, 1.442695
    %v1657 = vpow.pop %v1656
    %v1658 = vadd.f32 %v1657, 1.0
    %v1659 = vrcp.pop %v1658
    %v1660 = vmul.f32 1.0, %v1659
    %v1661 = vtanh.pop %v1645
    %v1662 = vxor.u32 %v1647, 2147483648
    %v1663 = vmul.f32 %v1662, 1.442695
    %v1664 = vpow.pop %v1663
    %v1665 = vadd.f32 %v1664, 1.0
    %v1666 = vrcp.pop %v1665
    %v1667 = vmul.f32 1.0, %v1666
    %v1668 = vmul.f32 %v1660, %v1107
    %v1669 = vmul.f32 %v1654, %v1661
    %v1670 = vadd.f32 %v1668, %v1669
    %v1671 = vtanh.pop %v1670
    %v1672 = vmul.f32 %v1667, %v1671
    %v1673 = vld [vmem:[#allocation10] sm:$0xff]
    %v1674 = vld [vmem:[#allocation10 + $0x8] sm:$0xff]
    %v1675 = vld [vmem:[#allocation10 + $0x10] sm:$0xff]
    %v1676 = vld [vmem:[#allocation10 + $0x18] sm:$0xff]
    %v1677 = vld [vmem:[#allocation10 + $0x20] sm:$0xff]
    %v1678 = vld [vmem:[#allocation10 + $0x28] sm:$0xff]
    %v1679 = vld [vmem:[#allocation10 + $0x30] sm:$0xff]
    %v1680 = vld [vmem:[#allocation10 + $0x38] sm:$0xff]
    %v1681 = vld [vmem:[#allocation10 + $0x40] sm:$0xff]
    %v1682 = vld [vmem:[#allocation10 + $0x48] sm:$0xff]
    %v1683 = vld [vmem:[#allocation10 + $0x50] sm:$0xff]
    %v1684 = vld [vmem:[#allocation10 + $0x58] sm:$0xff]
    %v1685 = vld [vmem:[#allocation10 + $0x60] sm:$0xff]
    %v1686 = vld [vmem:[#allocation10 + $0x68] sm:$0xff]
    %v1687 = vld [vmem:[#allocation10 + $0x70] sm:$0xff]
    %v1688 = vld [vmem:[#allocation10 + $0x78] sm:$0xff]
    %v1689 = vld [vmem:[#allocation10 + $0x80] sm:$0xff]
    %v1690 = vld [vmem:[#allocation10 + $0x88] sm:$0xff]
    %v1691 = vld [vmem:[#allocation10 + $0x90] sm:$0xff]
    %v1692 = vld [vmem:[#allocation10 + $0x98] sm:$0xff]
    %v1693 = vld [vmem:[#allocation10 + $0xa0] sm:$0xff]
    %v1694 = vld [vmem:[#allocation10 + $0xa8] sm:$0xff]
    %v1695 = vld [vmem:[#allocation10 + $0xb0] sm:$0xff]
    %v1696 = vld [vmem:[#allocation10 + $0xb8] sm:$0xff]
    %v1697 = vld [vmem:[#allocation10 + $0xc0] sm:$0xff]
    %v1698 = vld [vmem:[#allocation10 + $0xc8] sm:$0xff]
    %v1699 = vld [vmem:[#allocation10 + $0xd0] sm:$0xff]
    %v1700 = vld [vmem:[#allocation10 + $0xd8] sm:$0xff]
    %v1701 = vld [vmem:[#allocation10 + $0xe0] sm:$0xff]
    %v1702 = vld [vmem:[#allocation10 + $0xe8] sm:$0xff]
    %v1703 = vld [vmem:[#allocation10 + $0xf0] sm:$0xff]
    %v1704 = vld [vmem:[#allocation10 + $0xf8] sm:$0xff]
    %v1705 = vld [vmem:[#allocation10 + $0x100] sm:$0xff]
    %v1706 = vld [vmem:[#allocation10 + $0x108] sm:$0xff]
    %v1707 = vld [vmem:[#allocation10 + $0x110] sm:$0xff]
    %v1708 = vld [vmem:[#allocation10 + $0x118] sm:$0xff]
    %v1709 = vld [vmem:[#allocation10 + $0x120] sm:$0xff]
    %v1710 = vld [vmem:[#allocation10 + $0x128] sm:$0xff]
    %v1711 = vld [vmem:[#allocation10 + $0x130] sm:$0xff]
    %v1712 = vld [vmem:[#allocation10 + $0x138] sm:$0xff]
    %v1713 = vld [vmem:[#allocation10 + $0x140] sm:$0xff]
    %v1714 = vld [vmem:[#allocation10 + $0x148] sm:$0xff]
    %v1715 = vld [vmem:[#allocation10 + $0x150] sm:$0xff]
    %v1716 = vld [vmem:[#allocation10 + $0x158] sm:$0xff]
    %v1717 = vld [vmem:[#allocation10 + $0x160] sm:$0xff]
    %v1718 = vld [vmem:[#allocation10 + $0x168] sm:$0xff]
    %v1719 = vld [vmem:[#allocation10 + $0x170] sm:$0xff]
    %v1720 = vld [vmem:[#allocation10 + $0x178] sm:$0xff]
    %v1721 = vld [vmem:[#allocation10 + $0x180] sm:$0xff]
    %v1722 = vld [vmem:[#allocation10 + $0x188] sm:$0xff]
    %v1723 = vld [vmem:[#allocation10 + $0x190] sm:$0xff]
    %v1724 = vld [vmem:[#allocation10 + $0x198] sm:$0xff]
    %v1725 = vld [vmem:[#allocation10 + $0x1a0] sm:$0xff]
    %v1726 = vld [vmem:[#allocation10 + $0x1a8] sm:$0xff]
    %v1727 = vld [vmem:[#allocation10 + $0x1b0] sm:$0xff]
    %v1728 = vld [vmem:[#allocation10 + $0x1b8] sm:$0xff]
    %v1729 = vld [vmem:[#allocation10 + $0x1c0] sm:$0xff]
    %v1730 = vld [vmem:[#allocation10 + $0x1c8] sm:$0xff]
    %v1731 = vld [vmem:[#allocation10 + $0x1d0] sm:$0xff]
    %v1732 = vld [vmem:[#allocation10 + $0x1d8] sm:$0xff]
    %v1733 = vld [vmem:[#allocation10 + $0x1e0] sm:$0xff]
    %v1734 = vld [vmem:[#allocation10 + $0x1e8] sm:$0xff]
    %v1735 = vld [vmem:[#allocation10 + $0x1f0] sm:$0xff]
    %v1736 = vld [vmem:[#allocation10 + $0x1f8] sm:$0xff]
    %v1737 = vld [vmem:[#allocation10 + $0x200] sm:$0xff]
    %v1738 = vld [vmem:[#allocation10 + $0x208] sm:$0xff]
    %v1739 = vld [vmem:[#allocation10 + $0x210] sm:$0xff]
    %v1740 = vld [vmem:[#allocation10 + $0x218] sm:$0xff]
    %v1741 = vld [vmem:[#allocation10 + $0x220] sm:$0xff]
    %v1742 = vld [vmem:[#allocation10 + $0x228] sm:$0xff]
    %v1743 = vld [vmem:[#allocation10 + $0x230] sm:$0xff]
    %v1744 = vld [vmem:[#allocation10 + $0x238] sm:$0xff]
    %v1745 = vld [vmem:[#allocation10 + $0x240] sm:$0xff]
    %v1746 = vld [vmem:[#allocation10 + $0x248] sm:$0xff]
    %v1747 = vld [vmem:[#allocation10 + $0x250] sm:$0xff]
    %v1748 = vld [vmem:[#allocation10 + $0x258] sm:$0xff]
    %v1749 = vld [vmem:[#allocation10 + $0x260] sm:$0xff]
    %v1750 = vld [vmem:[#allocation10 + $0x268] sm:$0xff]
    %v1751 = vld [vmem:[#allocation10 + $0x270] sm:$0xff]
    %v1752 = vld [vmem:[#allocation10 + $0x278] sm:$0xff]
    %v1753 = vld [vmem:[#allocation10 + $0x280] sm:$0xff]
    %v1754 = vld [vmem:[#allocation10 + $0x288] sm:$0xff]
    %v1755 = vld [vmem:[#allocation10 + $0x290] sm:$0xff]
    %v1756 = vld [vmem:[#allocation10 + $0x298] sm:$0xff]
    %v1757 = vld [vmem:[#allocation10 + $0x2a0] sm:$0xff]
    %v1758 = vld [vmem:[#allocation10 + $0x2a8] sm:$0xff]
    %v1759 = vld [vmem:[#allocation10 + $0x2b0] sm:$0xff]
    %v1760 = vld [vmem:[#allocation10 + $0x2b8] sm:$0xff]
    %v1761 = vld [vmem:[#allocation10 + $0x2c0] sm:$0xff]
    %v1762 = vld [vmem:[#allocation10 + $0x2c8] sm:$0xff]
    %v1763 = vld [vmem:[#allocation10 + $0x2d0] sm:$0xff]
    %v1764 = vld [vmem:[#allocation10 + $0x2d8] sm:$0xff]
    %v1765 = vld [vmem:[#allocation10 + $0x2e0] sm:$0xff]
    %v1766 = vld [vmem:[#allocation10 + $0x2e8] sm:$0xff]
    %v1767 = vld [vmem:[#allocation10 + $0x2f0] sm:$0xff]
    %v1768 = vld [vmem:[#allocation10 + $0x2f8] sm:$0xff]
    %v1769 = vld [vmem:[#allocation10 + $0x300] sm:$0xff]
    %v1770 = vld [vmem:[#allocation10 + $0x308] sm:$0xff]
    %v1771 = vld [vmem:[#allocation10 + $0x310] sm:$0xff]
    %v1772 = vld [vmem:[#allocation10 + $0x318] sm:$0xff]
    %v1773 = vld [vmem:[#allocation10 + $0x320] sm:$0xff]
    %v1774 = vld [vmem:[#allocation10 + $0x328] sm:$0xff]
    %v1775 = vld [vmem:[#allocation10 + $0x330] sm:$0xff]
    %v1776 = vld [vmem:[#allocation10 + $0x338] sm:$0xff]
    %v1777 = vld [vmem:[#allocation10 + $0x340] sm:$0xff]
    %v1778 = vld [vmem:[#allocation10 + $0x348] sm:$0xff]
    %v1779 = vld [vmem:[#allocation10 + $0x350] sm:$0xff]
    %v1780 = vld [vmem:[#allocation10 + $0x358] sm:$0xff]
    %v1781 = vld [vmem:[#allocation10 + $0x360] sm:$0xff]
    %v1782 = vld [vmem:[#allocation10 + $0x368] sm:$0xff]
    %v1783 = vld [vmem:[#allocation10 + $0x370] sm:$0xff]
    %v1784 = vld [vmem:[#allocation10 + $0x378] sm:$0xff]
    %v1785 = vld [vmem:[#allocation10 + $0x380] sm:$0xff]
    %v1786 = vld [vmem:[#allocation10 + $0x388] sm:$0xff]
    %v1787 = vld [vmem:[#allocation10 + $0x390] sm:$0xff]
    %v1788 = vld [vmem:[#allocation10 + $0x398] sm:$0xff]
    %v1789 = vld [vmem:[#allocation10 + $0x3a0] sm:$0xff]
    %v1790 = vld [vmem:[#allocation10 + $0x3a8] sm:$0xff]
    %v1791 = vld [vmem:[#allocation10 + $0x3b0] sm:$0xff]
    %v1792 = vld [vmem:[#allocation10 + $0x3b8] sm:$0xff]
    %v1793 = vld [vmem:[#allocation10 + $0x3c0] sm:$0xff]
    %v1794 = vld [vmem:[#allocation10 + $0x3c8] sm:$0xff]
    %v1795 = vld [vmem:[#allocation10 + $0x3d0] sm:$0xff]
    %v1796 = vld [vmem:[#allocation10 + $0x3d8] sm:$0xff]
    %v1797 = vld [vmem:[#allocation10 + $0x3e0] sm:$0xff]
    %v1798 = vld [vmem:[#allocation10 + $0x3e8] sm:$0xff]
    %v1799 = vld [vmem:[#allocation10 + $0x3f0] sm:$0xff]
    %v1800 = vld [vmem:[#allocation10 + $0x3f8] sm:$0xff]
    %v1801 = vld [vmem:[%s5] sm:$0xf]
    %v1803 = vlaneseq
    %v1804 = vshrl.u32 %v1803, 7
    %v1805 = vsub.s32 0, %v1804
    %v1806 = vrot.slane %v1801, %v1805
    %v1807 = vlaneseq
    %v1808 = vshrl.u32 %v1807, 7
    %v1809 = vsub.s32 1, %v1808
    %v1810 = vrot.slane %v1801, %v1809
    %v1811 = vlaneseq
    %v1812 = vshrl.u32 %v1811, 7
    %v1813 = vsub.s32 2, %v1812
    %v1814 = vrot.slane %v1801, %v1813
    %v1815 = vlaneseq
    %v1816 = vshrl.u32 %v1815, 7
    %v1817 = vsub.s32 3, %v1816
    %v1818 = vrot.slane %v1801, %v1817
    %1823 = vmatprep.subr.mxu0 %v1674
    %1824 = vmatpush1.msra.mxu0 %v1673
    %1825 = vmatprep.subr.mxu0 %v1678
    %1826 = vmatpush1.msra.mxu0 %v1677
    %1827 = vmatprep.subr.mxu0 %v1682
    %1828 = vmatpush1.msra.mxu0 %v1681
    %1829 = vmatprep.subr.mxu0 %v1686
    %1830 = vmatpush1.msra.mxu0 %v1685
    %1831 = vmatprep.subr.mxu0 %v1690
    %1832 = vmatpush1.msra.mxu0 %v1689
    %1833 = vmatprep.subr.mxu0 %v1694
    %1834 = vmatpush1.msra.mxu0 %v1693
    %1835 = vmatprep.subr.mxu0 %v1698
    %1836 = vmatpush1.msra.mxu0 %v1697
    %1837 = vmatprep.subr.mxu0 %v1702
    %1838 = vmatpush1.msra.mxu0 %v1701
    %1839 = vmatprep.subr.mxu0 %v1706
    %1840 = vmatpush1.msra.mxu0 %v1705
    %1841 = vmatprep.subr.mxu0 %v1710
    %1842 = vmatpush1.msra.mxu0 %v1709
    %1843 = vmatprep.subr.mxu0 %v1714
    %1844 = vmatpush1.msra.mxu0 %v1713
    %1845 = vmatprep.subr.mxu0 %v1718
    %1846 = vmatpush1.msra.mxu0 %v1717
    %1847 = vmatprep.subr.mxu0 %v1722
    %1848 = vmatpush1.msra.mxu0 %v1721
    %1849 = vmatprep.subr.mxu0 %v1726
    %1850 = vmatpush1.msra.mxu0 %v1725
    %1851 = vmatprep.subr.mxu0 %v1730
    %1852 = vmatpush1.msra.mxu0 %v1729
    %1853 = vmatprep.subr.mxu0 %v1734
    %1854 = vmatpush1.msra.mxu0 %v1733
    %1855 = vmatprep.subr.mxu0 %v1738
    %1856 = vmatpush1.msra.mxu0 %v1737
    %1857 = vmatprep.subr.mxu0 %v1742
    %1858 = vmatpush1.msra.mxu0 %v1741
    %1859 = vmatprep.subr.mxu0 %v1746
    %1860 = vmatpush1.msra.mxu0 %v1745
    %1861 = vmatprep.subr.mxu0 %v1750
    %1862 = vmatpush1.msra.mxu0 %v1749
    %1863 = vmatprep.subr.mxu0 %v1754
    %1864 = vmatpush1.msra.mxu0 %v1753
    %1865 = vmatprep.subr.mxu0 %v1758
    %1866 = vmatpush1.msra.mxu0 %v1757
    %1867 = vmatprep.subr.mxu0 %v1762
    %1868 = vmatpush1.msra.mxu0 %v1761
    %1869 = vmatprep.subr.mxu0 %v1766
    %1870 = vmatpush1.msra.mxu0 %v1765
    %1871 = vmatprep.subr.mxu0 %v1770
    %1872 = vmatpush1.msra.mxu0 %v1769
    %1873 = vmatprep.subr.mxu0 %v1774
    %1874 = vmatpush1.msra.mxu0 %v1773
    %1875 = vmatprep.subr.mxu0 %v1778
    %1876 = vmatpush1.msra.mxu0 %v1777
    %1877 = vmatprep.subr.mxu0 %v1782
    %1878 = vmatpush1.msra.mxu0 %v1781
    %1879 = vmatprep.subr.mxu0 %v1786
    %1880 = vmatpush1.msra.mxu0 %v1785
    %1881 = vmatprep.subr.mxu0 %v1790
    %1882 = vmatpush1.msra.mxu0 %v1789
    %1883 = vmatprep.subr.mxu0 %v1794
    %1884 = vmatpush1.msra.mxu0 %v1793
    %1885 = vmatprep.subr.mxu0 %v1798
    %1886 = vmatpush1.msra.mxu0 %v1797
    %1887 = vmatprep.mubr.f32.mxu0 %v1425
    %1888 = vmatmul.mubr.f32.gmra.mrb[0].mxu0 %v1672
    %v1889 = vpop.f32.mrb[0].mxu0
    %v1890 = vadd.f32 %v1806, %v1889
    %v1891 = vpop.f32.mrb[0].mxu0
    %v1892 = vadd.f32 %v1810, %v1891
    %1893 = vdwg.mxu0
    %1894 = vmatprep.subr.mxu0 %v1676
    %1895 = vmatpush1.msra.mxu0 %v1675
    %1896 = vmatprep.subr.mxu0 %v1680
    %1897 = vmatpush1.msra.mxu0 %v1679
    %1898 = vmatprep.subr.mxu0 %v1684
    %1899 = vmatpush1.msra.mxu0 %v1683
    %1900 = vmatprep.subr.mxu0 %v1688
    %1901 = vmatpush1.msra.mxu0 %v1687
    %1902 = vmatprep.subr.mxu0 %v1692
    %1903 = vmatpush1.msra.mxu0 %v1691
    %1904 = vmatprep.subr.mxu0 %v1696
    %1905 = vmatpush1.msra.mxu0 %v1695
    %1906 = vmatprep.subr.mxu0 %v1700
    %1907 = vmatpush1.msra.mxu0 %v1699
    %1908 = vmatprep.subr.mxu0 %v1704
    %1909 = vmatpush1.msra.mxu0 %v1703
    %1910 = vmatprep.subr.mxu0 %v1708
    %1911 = vmatpush1.msra.mxu0 %v1707
    %1912 = vmatprep.subr.mxu0 %v1712
    %1913 = vmatpush1.msra.mxu0 %v1711
    %1914 = vmatprep.subr.mxu0 %v1716
    %1915 = vmatpush1.msra.mxu0 %v1715
    %1916 = vmatprep.subr.mxu0 %v1720
    %1917 = vmatpush1.msra.mxu0 %v1719
    %1918 = vmatprep.subr.mxu0 %v1724
    %1919 = vmatpush1.msra.mxu0 %v1723
    %1920 = vmatprep.subr.mxu0 %v1728
    %1921 = vmatpush1.msra.mxu0 %v1727
    %1922 = vmatprep.subr.mxu0 %v1732
    %1923 = vmatpush1.msra.mxu0 %v1731
    %1924 = vmatprep.subr.mxu0 %v1736
    %1925 = vmatpush1.msra.mxu0 %v1735
    %1926 = vmatprep.subr.mxu0 %v1740
    %1927 = vmatpush1.msra.mxu0 %v1739
    %1928 = vmatprep.subr.mxu0 %v1744
    %1929 = vmatpush1.msra.mxu0 %v1743
    %1930 = vmatprep.subr.mxu0 %v1748
    %1931 = vmatpush1.msra.mxu0 %v1747
    %1932 = vmatprep.subr.mxu0 %v1752
    %1933 = vmatpush1.msra.mxu0 %v1751
    %1934 = vmatprep.subr.mxu0 %v1756
    %1935 = vmatpush1.msra.mxu0 %v1755
    %1936 = vmatprep.subr.mxu0 %v1760
    %1937 = vmatpush1.msra.mxu0 %v1759
    %1938 = vmatprep.subr.mxu0 %v1764
    %1939 = vmatpush1.msra.mxu0 %v1763
    %1940 = vmatprep.subr.mxu0 %v1768
    %1941 = vmatpush1.msra.mxu0 %v1767
    %1942 = vmatprep.subr.mxu0 %v1772
    %1943 = vmatpush1.msra.mxu0 %v1771
    %1944 = vmatprep.subr.mxu0 %v1776
    %1945 = vmatpush1.msra.mxu0 %v1775
    %1946 = vmatprep.subr.mxu0 %v1780
    %1947 = vmatpush1.msra.mxu0 %v1779
    %1948 = vmatprep.subr.mxu0 %v1784
    %1949 = vmatpush1.msra.mxu0 %v1783
    %1950 = vmatprep.subr.mxu0 %v1788
    %1951 = vmatpush1.msra.mxu0 %v1787
    %1952 = vmatprep.subr.mxu0 %v1792
    %1953 = vmatpush1.msra.mxu0 %v1791
    %1954 = vmatprep.subr.mxu0 %v1796
    %1955 = vmatpush1.msra.mxu0 %v1795
    %1956 = vmatprep.subr.mxu0 %v1800
    %1957 = vmatpush1.msra.mxu0 %v1799
    %1958 = vmatprep.mubr.f32.mxu0 %v1425
    %1959 = vmatmul.mubr.f32.gmra.mrb[0].mxu0 %v1672
    %v1960 = vpop.f32.mrb[0].mxu0
    %v1961 = vadd.f32 %v1814, %v1960
    %v1962 = vpop.f32.mrb[0].mxu0
    %v1963 = vadd.f32 %v1818, %v1962
    %1964 = vdwg.mxu0
    %v1965 = vxor.u32 %v1890, 2147483648
    %v1966 = vmul.f32 %v1965, 1.442695
    %v1967 = vpow.pop %v1966
    %v1968 = vadd.f32 %v1967, 1.0
    %v1969 = vrcp.pop %v1968
    %v1970 = vmul.f32 1.0, %v1969
    %v1971 = vxor.u32 %v1892, 2147483648
    %v1972 = vmul.f32 %v1971, 1.442695
    %v1973 = vpow.pop %v1972
    %v1974 = vadd.f32 %v1973, 1.0
    %v1975 = vrcp.pop %v1974
    %v1976 = vmul.f32 1.0, %v1975
    %v1977 = vtanh.pop %v1961
    %v1978 = vxor.u32 %v1963, 2147483648
    %v1979 = vmul.f32 %v1978, 1.442695
    %v1980 = vpow.pop %v1979
    %v1981 = vadd.f32 %v1980, 1.0
    %v1982 = vrcp.pop %v1981
    %v1983 = vmul.f32 1.0, %v1982
    %v1984 = vmul.f32 %v1976, %v1423
    %v1985 = vmul.f32 %v1970, %v1977
    %v1986 = vadd.f32 %v1984, %v1985
    %v1987 = vtanh.pop %v1986
    %v1988 = vmul.f32 %v1983, %v1987
    %1989 = vst [vmem:[#allocation3 + $0x4] sm:$0x3] %v1988
    %v1990 = vld [vmem:[#allocation9] sm:$0xff]
    %v1991 = vld [vmem:[#allocation9 + $0x8] sm:$0xff]
    %v1992 = vld [vmem:[#allocation9 + $0x10] sm:$0xff]
    %v1993 = vld [vmem:[#allocation9 + $0x18] sm:$0xff]
    %v1994 = vld [vmem:[#allocation9 + $0x20] sm:$0xff]
    %v1995 = vld [vmem:[#allocation9 + $0x28] sm:$0xff]
    %v1996 = vld [vmem:[#allocation9 + $0x30] sm:$0xff]
    %v1997 = vld [vmem:[#allocation9 + $0x38] sm:$0xff]
    %v1998 = vld [vmem:[#allocation9 + $0x40] sm:$0xff]
    %v1999 = vld [vmem:[#allocation9 + $0x48] sm:$0xff]
    %v2000 = vld [vmem:[#allocation9 + $0x50] sm:$0xff]
    %v2001 = vld [vmem:[#allocation9 + $0x58] sm:$0xff]
    %v2002 = vld [vmem:[#allocation9 + $0x60] sm:$0xff]
    %v2003 = vld [vmem:[#allocation9 + $0x68] sm:$0xff]
    %v2004 = vld [vmem:[#allocation9 + $0x70] sm:$0xff]
    %v2005 = vld [vmem:[#allocation9 + $0x78] sm:$0xff]
    %v2006 = vld [vmem:[#allocation9 + $0x80] sm:$0xff]
    %v2007 = vld [vmem:[#allocation9 + $0x88] sm:$0xff]
    %v2008 = vld [vmem:[#allocation9 + $0x90] sm:$0xff]
    %v2009 = vld [vmem:[#allocation9 + $0x98] sm:$0xff]
    %v2010 = vld [vmem:[#allocation9 + $0xa0] sm:$0xff]
    %v2011 = vld [vmem:[#allocation9 + $0xa8] sm:$0xff]
    %v2012 = vld [vmem:[#allocation9 + $0xb0] sm:$0xff]
    %v2013 = vld [vmem:[#allocation9 + $0xb8] sm:$0xff]
    %v2014 = vld [vmem:[#allocation9 + $0xc0] sm:$0xff]
    %v2015 = vld [vmem:[#allocation9 + $0xc8] sm:$0xff]
    %v2016 = vld [vmem:[#allocation9 + $0xd0] sm:$0xff]
    %v2017 = vld [vmem:[#allocation9 + $0xd8] sm:$0xff]
    %v2018 = vld [vmem:[#allocation9 + $0xe0] sm:$0xff]
    %v2019 = vld [vmem:[#allocation9 + $0xe8] sm:$0xff]
    %v2020 = vld [vmem:[#allocation9 + $0xf0] sm:$0xff]
    %v2021 = vld [vmem:[#allocation9 + $0xf8] sm:$0xff]
    %v2022 = vld [vmem:[#allocation9 + $0x100] sm:$0xff]
    %v2023 = vld [vmem:[#allocation9 + $0x108] sm:$0xff]
    %v2024 = vld [vmem:[#allocation9 + $0x110] sm:$0xff]
    %v2025 = vld [vmem:[#allocation9 + $0x118] sm:$0xff]
    %v2026 = vld [vmem:[#allocation9 + $0x120] sm:$0xff]
    %v2027 = vld [vmem:[#allocation9 + $0x128] sm:$0xff]
    %v2028 = vld [vmem:[#allocation9 + $0x130] sm:$0xff]
    %v2029 = vld [vmem:[#allocation9 + $0x138] sm:$0xff]
    %v2030 = vld [vmem:[#allocation9 + $0x140] sm:$0xff]
    %v2031 = vld [vmem:[#allocation9 + $0x148] sm:$0xff]
    %v2032 = vld [vmem:[#allocation9 + $0x150] sm:$0xff]
    %v2033 = vld [vmem:[#allocation9 + $0x158] sm:$0xff]
    %v2034 = vld [vmem:[#allocation9 + $0x160] sm:$0xff]
    %v2035 = vld [vmem:[#allocation9 + $0x168] sm:$0xff]
    %v2036 = vld [vmem:[#allocation9 + $0x170] sm:$0xff]
    %v2037 = vld [vmem:[#allocation9 + $0x178] sm:$0xff]
    %v2038 = vld [vmem:[#allocation9 + $0x180] sm:$0xff]
    %v2039 = vld [vmem:[#allocation9 + $0x188] sm:$0xff]
    %v2040 = vld [vmem:[#allocation9 + $0x190] sm:$0xff]
    %v2041 = vld [vmem:[#allocation9 + $0x198] sm:$0xff]
    %v2042 = vld [vmem:[#allocation9 + $0x1a0] sm:$0xff]
    %v2043 = vld [vmem:[#allocation9 + $0x1a8] sm:$0xff]
    %v2044 = vld [vmem:[#allocation9 + $0x1b0] sm:$0xff]
    %v2045 = vld [vmem:[#allocation9 + $0x1b8] sm:$0xff]
    %v2046 = vld [vmem:[#allocation9 + $0x1c0] sm:$0xff]
    %v2047 = vld [vmem:[#allocation9 + $0x1c8] sm:$0xff]
    %v2048 = vld [vmem:[#allocation9 + $0x1d0] sm:$0xff]
    %v2049 = vld [vmem:[#allocation9 + $0x1d8] sm:$0xff]
    %v2050 = vld [vmem:[#allocation9 + $0x1e0] sm:$0xff]
    %v2051 = vld [vmem:[#allocation9 + $0x1e8] sm:$0xff]
    %v2052 = vld [vmem:[#allocation9 + $0x1f0] sm:$0xff]
    %v2053 = vld [vmem:[#allocation9 + $0x1f8] sm:$0xff]
    %v2054 = vld [vmem:[#allocation2] sm:$0xc0]
    %v2055 = vld [vmem:[#allocation2 + $0x8] sm:$0xc0]
    %v2056 = vld [vmem:[#allocation2 + $0x10] sm:$0xc0]
    %v2057 = vld [vmem:[#allocation2 + $0x18] sm:$0xc0]
    %v2062 = vrot.slane %v2054, 6
    %v2063 = vrot.slane %v2055, 6
    %v2064 = vrot.slane %v2056, 6
    %v2065 = vrot.slane %v2057, 6
    %2070 = vmatprep.subr.mxu0 %v1991
    %2071 = vmatpush1.msra.mxu0 %v1990
    %2072 = vmatprep.subr.mxu0 %v1995
    %2073 = vmatpush1.msra.mxu0 %v1994
    %2074 = vmatprep.subr.mxu0 %v1999
    %2075 = vmatpush1.msra.mxu0 %v1998
    %2076 = vmatprep.subr.mxu0 %v2003
    %2077 = vmatpush1.msra.mxu0 %v2002
    %2078 = vmatprep.subr.mxu0 %v2007
    %2079 = vmatpush1.msra.mxu0 %v2006
    %2080 = vmatprep.subr.mxu0 %v2011
    %2081 = vmatpush1.msra.mxu0 %v2010
    %2082 = vmatprep.subr.mxu0 %v2015
    %2083 = vmatpush1.msra.mxu0 %v2014
    %2084 = vmatprep.subr.mxu0 %v2019
    %2085 = vmatpush1.msra.mxu0 %v2018
    %2086 = vmatprep.subr.mxu0 %v2023
    %2087 = vmatpush1.msra.mxu0 %v2022
    %2088 = vmatprep.subr.mxu0 %v2027
    %2089 = vmatpush1.msra.mxu0 %v2026
    %2090 = vmatprep.subr.mxu0 %v2031
    %2091 = vmatpush1.msra.mxu0 %v2030
    %2092 = vmatprep.subr.mxu0 %v2035
    %2093 = vmatpush1.msra.mxu0 %v2034
    %2094 = vmatprep.subr.mxu0 %v2039
    %2095 = vmatpush1.msra.mxu0 %v2038
    %2096 = vmatprep.subr.mxu0 %v2043
    %2097 = vmatpush1.msra.mxu0 %v2042
    %2098 = vmatprep.subr.mxu0 %v2047
    %2099 = vmatpush1.msra.mxu0 %v2046
    %2100 = vmatprep.subr.mxu0 %v2051
    %2101 = vmatpush1.msra.mxu0 %v2050
    %2102 = vmatprep.subr.mxu0 0.0
    %2103 = vmatpush1.msra.mxu0 0.0
    %2104 = vmatprep.subr.mxu0 0.0
    %2105 = vmatpush1.msra.mxu0 0.0
    %2106 = vmatprep.subr.mxu0 0.0
    %2107 = vmatpush1.msra.mxu0 0.0
    %2108 = vmatprep.subr.mxu0 0.0
    %2109 = vmatpush1.msra.mxu0 0.0
    %2110 = vmatprep.subr.mxu0 0.0
    %2111 = vmatpush1.msra.mxu0 0.0
    %2112 = vmatprep.subr.mxu0 0.0
    %2113 = vmatpush1.msra.mxu0 0.0
    %2114 = vmatprep.subr.mxu0 0.0
    %2115 = vmatpush1.msra.mxu0 0.0
    %2116 = vmatprep.subr.mxu0 0.0
    %2117 = vmatpush1.msra.mxu0 0.0
    %2118 = vmatprep.subr.mxu0 0.0
    %2119 = vmatpush1.msra.mxu0 0.0
    %2120 = vmatprep.subr.mxu0 0.0
    %2121 = vmatpush1.msra.mxu0 0.0
    %2122 = vmatprep.subr.mxu0 0.0
    %2123 = vmatpush1.msra.mxu0 0.0
    %2124 = vmatprep.subr.mxu0 0.0
    %2125 = vmatpush1.msra.mxu0 0.0
    %2126 = vmatprep.subr.mxu0 0.0
    %2127 = vmatpush1.msra.mxu0 0.0
    %2128 = vmatprep.subr.mxu0 0.0
    %2129 = vmatpush1.msra.mxu0 0.0
    %2130 = vmatprep.subr.mxu0 0.0
    %2131 = vmatpush1.msra.mxu0 0.0
    %2132 = vmatprep.subr.mxu0 0.0
    %2133 = vmatpush1.msra.mxu0 0.0
    %2134 = vmatprep.mubr.f32.mxu0 0.0
    %2135 = vmatmul.mubr.f32.gmra.mrb[0].mxu0 %v1672
    %v2136 = vpop.f32.mrb[0].mxu0
    %v2137 = vadd.f32 %v2062, %v2136
    %v2138 = vpop.f32.mrb[0].mxu0
    %v2139 = vadd.f32 %v2063, %v2138
    %2140 = vdwg.mxu0
    %2141 = vmatprep.subr.mxu0 %v1993
    %2142 = vmatpush1.msra.mxu0 %v1992
    %2143 = vmatprep.subr.mxu0 %v1997
    %2144 = vmatpush1.msra.mxu0 %v1996
    %2145 = vmatprep.subr.mxu0 %v2001
    %2146 = vmatpush1.msra.mxu0 %v2000
    %2147 = vmatprep.subr.mxu0 %v2005
    %2148 = vmatpush1.msra.mxu0 %v2004
    %2149 = vmatprep.subr.mxu0 %v2009
    %2150 = vmatpush1.msra.mxu0 %v2008
    %2151 = vmatprep.subr.mxu0 %v2013
    %2152 = vmatpush1.msra.mxu0 %v2012
    %2153 = vmatprep.subr.mxu0 %v2017
    %2154 = vmatpush1.msra.mxu0 %v2016
    %2155 = vmatprep.subr.mxu0 %v2021
    %2156 = vmatpush1.msra.mxu0 %v2020
    %2157 = vmatprep.subr.mxu0 %v2025
    %2158 = vmatpush1.msra.mxu0 %v2024
    %2159 = vmatprep.subr.mxu0 %v2029
    %2160 = vmatpush1.msra.mxu0 %v2028
    %2161 = vmatprep.subr.mxu0 %v2033
    %2162 = vmatpush1.msra.mxu0 %v2032
    %2163 = vmatprep.subr.mxu0 %v2037
    %2164 = vmatpush1.msra.mxu0 %v2036
    %2165 = vmatprep.subr.mxu0 %v2041
    %2166 = vmatpush1.msra.mxu0 %v2040
    %2167 = vmatprep.subr.mxu0 %v2045
    %2168 = vmatpush1.msra.mxu0 %v2044
    %2169 = vmatprep.subr.mxu0 %v2049
    %2170 = vmatpush1.msra.mxu0 %v2048
    %2171 = vmatprep.subr.mxu0 %v2053
    %2172 = vmatpush1.msra.mxu0 %v2052
    %2173 = vmatprep.subr.mxu0 0.0
    %2174 = vmatpush1.msra.mxu0 0.0
    %2175 = vmatprep.subr.mxu0 0.0
    %2176 = vmatpush1.msra.mxu0 0.0
    %2177 = vmatprep.subr.mxu0 0.0
    %2178 = vmatpush1.msra.mxu0 0.0
    %2179 = vmatprep.subr.mxu0 0.0
    %2180 = vmatpush1.msra.mxu0 0.0
    %2181 = vmatprep.subr.mxu0 0.0
    %2182 = vmatpush1.msra.mxu0 0.0
    %2183 = vmatprep.subr.mxu0 0.0
    %2184 = vmatpush1.msra.mxu0 0.0
    %2185 = vmatprep.subr.mxu0 0.0
    %2186 = vmatpush1.msra.mxu0 0.0
    %2187 = vmatprep.subr.mxu0 0.0
    %2188 = vmatpush1.msra.mxu0 0.0
    %2189 = vmatprep.subr.mxu0 0.0
    %2190 = vmatpush1.msra.mxu0 0.0
    %2191 = vmatprep.subr.mxu0 0.0
    %2192 = vmatpush1.msra.mxu0 0.0
    %2193 = vmatprep.subr.mxu0 0.0
    %2194 = vmatpush1.msra.mxu0 0.0
    %2195 = vmatprep.subr.mxu0 0.0
    %2196 = vmatpush1.msra.mxu0 0.0
    %2197 = vmatprep.subr.mxu0 0.0
    %2198 = vmatpush1.msra.mxu0 0.0
    %2199 = vmatprep.subr.mxu0 0.0
    %2200 = vmatpush1.msra.mxu0 0.0
    %2201 = vmatprep.subr.mxu0 0.0
    %2202 = vmatpush1.msra.mxu0 0.0
    %2203 = vmatprep.subr.mxu0 0.0
    %2204 = vmatpush1.msra.mxu0 0.0
    %2205 = vmatprep.mubr.f32.mxu0 0.0
    %2206 = vmatmul.mubr.f32.gmra.mrb[0].mxu0 %v1672
    %v2207 = vpop.f32.mrb[0].mxu0
    %v2208 = vadd.f32 %v2064, %v2207
    %v2209 = vpop.f32.mrb[0].mxu0
    %v2210 = vadd.f32 %v2065, %v2209
    %2211 = vdwg.mxu0
    %v2212 = vxor.u32 %v2137, 2147483648
    %v2213 = vmul.f32 %v2212, 1.442695
    %v2214 = vpow.pop %v2213
    %v2215 = vadd.f32 %v2214, 1.0
    %v2216 = vrcp.pop %v2215
    %v2217 = vmul.f32 1.0, %v2216
    %v2218 = vxor.u32 %v2139, 2147483648
    %v2219 = vmul.f32 %v2218, 1.442695
    %v2220 = vpow.pop %v2219
    %v2221 = vadd.f32 %v2220, 1.0
    %v2222 = vrcp.pop %v2221
    %v2223 = vmul.f32 1.0, %v2222
    %v2224 = vtanh.pop %v2208
    %v2225 = vxor.u32 %v2210, 2147483648
    %v2226 = vmul.f32 %v2225, 1.442695
    %v2227 = vpow.pop %v2226
    %v2228 = vadd.f32 %v2227, 1.0
    %v2229 = vrcp.pop %v2228
    %v2230 = vmul.f32 1.0, %v2229
    %v2231 = vmul.f32 %v2223, %v1670
    %v2232 = vmul.f32 %v2217, %v2224
    %v2233 = vadd.f32 %v2231, %v2232
    %v2234 = vtanh.pop %v2233
    %v2235 = vmul.f32 %v2230, %v2234
    %v2236 = vld [vmem:[#allocation10] sm:$0xff]
    %v2237 = vld [vmem:[#allocation10 + $0x8] sm:$0xff]
    %v2238 = vld [vmem:[#allocation10 + $0x10] sm:$0xff]
    %v2239 = vld [vmem:[#allocation10 + $0x18] sm:$0xff]
    %v2240 = vld [vmem:[#allocation10 + $0x20] sm:$0xff]
    %v2241 = vld [vmem:[#allocation10 + $0x28] sm:$0xff]
    %v2242 = vld [vmem:[#allocation10 + $0x30] sm:$0xff]
    %v2243 = vld [vmem:[#allocation10 + $0x38] sm:$0xff]
    %v2244 = vld [vmem:[#allocation10 + $0x40] sm:$0xff]
    %v2245 = vld [vmem:[#allocation10 + $0x48] sm:$0xff]
    %v2246 = vld [vmem:[#allocation10 + $0x50] sm:$0xff]
    %v2247 = vld [vmem:[#allocation10 + $0x58] sm:$0xff]
    %v2248 = vld [vmem:[#allocation10 + $0x60] sm:$0xff]
    %v2249 = vld [vmem:[#allocation10 + $0x68] sm:$0xff]
    %v2250 = vld [vmem:[#allocation10 + $0x70] sm:$0xff]
    %v2251 = vld [vmem:[#allocation10 + $0x78] sm:$0xff]
    %v2252 = vld [vmem:[#allocation10 + $0x80] sm:$0xff]
    %v2253 = vld [vmem:[#allocation10 + $0x88] sm:$0xff]
    %v2254 = vld [vmem:[#allocation10 + $0x90] sm:$0xff]
    %v2255 = vld [vmem:[#allocation10 + $0x98] sm:$0xff]
    %v2256 = vld [vmem:[#allocation10 + $0xa0] sm:$0xff]
    %v2257 = vld [vmem:[#allocation10 + $0xa8] sm:$0xff]
    %v2258 = vld [vmem:[#allocation10 + $0xb0] sm:$0xff]
    %v2259 = vld [vmem:[#allocation10 + $0xb8] sm:$0xff]
    %v2260 = vld [vmem:[#allocation10 + $0xc0] sm:$0xff]
    %v2261 = vld [vmem:[#allocation10 + $0xc8] sm:$0xff]
    %v2262 = vld [vmem:[#allocation10 + $0xd0] sm:$0xff]
    %v2263 = vld [vmem:[#allocation10 + $0xd8] sm:$0xff]
    %v2264 = vld [vmem:[#allocation10 + $0xe0] sm:$0xff]
    %v2265 = vld [vmem:[#allocation10 + $0xe8] sm:$0xff]
    %v2266 = vld [vmem:[#allocation10 + $0xf0] sm:$0xff]
    %v2267 = vld [vmem:[#allocation10 + $0xf8] sm:$0xff]
    %v2268 = vld [vmem:[#allocation10 + $0x100] sm:$0xff]
    %v2269 = vld [vmem:[#allocation10 + $0x108] sm:$0xff]
    %v2270 = vld [vmem:[#allocation10 + $0x110] sm:$0xff]
    %v2271 = vld [vmem:[#allocation10 + $0x118] sm:$0xff]
    %v2272 = vld [vmem:[#allocation10 + $0x120] sm:$0xff]
    %v2273 = vld [vmem:[#allocation10 + $0x128] sm:$0xff]
    %v2274 = vld [vmem:[#allocation10 + $0x130] sm:$0xff]
    %v2275 = vld [vmem:[#allocation10 + $0x138] sm:$0xff]
    %v2276 = vld [vmem:[#allocation10 + $0x140] sm:$0xff]
    %v2277 = vld [vmem:[#allocation10 + $0x148] sm:$0xff]
    %v2278 = vld [vmem:[#allocation10 + $0x150] sm:$0xff]
    %v2279 = vld [vmem:[#allocation10 + $0x158] sm:$0xff]
    %v2280 = vld [vmem:[#allocation10 + $0x160] sm:$0xff]
    %v2281 = vld [vmem:[#allocation10 + $0x168] sm:$0xff]
    %v2282 = vld [vmem:[#allocation10 + $0x170] sm:$0xff]
    %v2283 = vld [vmem:[#allocation10 + $0x178] sm:$0xff]
    %v2284 = vld [vmem:[#allocation10 + $0x180] sm:$0xff]
    %v2285 = vld [vmem:[#allocation10 + $0x188] sm:$0xff]
    %v2286 = vld [vmem:[#allocation10 + $0x190] sm:$0xff]
    %v2287 = vld [vmem:[#allocation10 + $0x198] sm:$0xff]
    %v2288 = vld [vmem:[#allocation10 + $0x1a0] sm:$0xff]
    %v2289 = vld [vmem:[#allocation10 + $0x1a8] sm:$0xff]
    %v2290 = vld [vmem:[#allocation10 + $0x1b0] sm:$0xff]
    %v2291 = vld [vmem:[#allocation10 + $0x1b8] sm:$0xff]
    %v2292 = vld [vmem:[#allocation10 + $0x1c0] sm:$0xff]
    %v2293 = vld [vmem:[#allocation10 + $0x1c8] sm:$0xff]
    %v2294 = vld [vmem:[#allocation10 + $0x1d0] sm:$0xff]
    %v2295 = vld [vmem:[#allocation10 + $0x1d8] sm:$0xff]
    %v2296 = vld [vmem:[#allocation10 + $0x1e0] sm:$0xff]
    %v2297 = vld [vmem:[#allocation10 + $0x1e8] sm:$0xff]
    %v2298 = vld [vmem:[#allocation10 + $0x1f0] sm:$0xff]
    %v2299 = vld [vmem:[#allocation10 + $0x1f8] sm:$0xff]
    %v2300 = vld [vmem:[#allocation10 + $0x200] sm:$0xff]
    %v2301 = vld [vmem:[#allocation10 + $0x208] sm:$0xff]
    %v2302 = vld [vmem:[#allocation10 + $0x210] sm:$0xff]
    %v2303 = vld [vmem:[#allocation10 + $0x218] sm:$0xff]
    %v2304 = vld [vmem:[#allocation10 + $0x220] sm:$0xff]
    %v2305 = vld [vmem:[#allocation10 + $0x228] sm:$0xff]
    %v2306 = vld [vmem:[#allocation10 + $0x230] sm:$0xff]
    %v2307 = vld [vmem:[#allocation10 + $0x238] sm:$0xff]
    %v2308 = vld [vmem:[#allocation10 + $0x240] sm:$0xff]
    %v2309 = vld [vmem:[#allocation10 + $0x248] sm:$0xff]
    %v2310 = vld [vmem:[#allocation10 + $0x250] sm:$0xff]
    %v2311 = vld [vmem:[#allocation10 + $0x258] sm:$0xff]
    %v2312 = vld [vmem:[#allocation10 + $0x260] sm:$0xff]
    %v2313 = vld [vmem:[#allocation10 + $0x268] sm:$0xff]
    %v2314 = vld [vmem:[#allocation10 + $0x270] sm:$0xff]
    %v2315 = vld [vmem:[#allocation10 + $0x278] sm:$0xff]
    %v2316 = vld [vmem:[#allocation10 + $0x280] sm:$0xff]
    %v2317 = vld [vmem:[#allocation10 + $0x288] sm:$0xff]
    %v2318 = vld [vmem:[#allocation10 + $0x290] sm:$0xff]
    %v2319 = vld [vmem:[#allocation10 + $0x298] sm:$0xff]
    %v2320 = vld [vmem:[#allocation10 + $0x2a0] sm:$0xff]
    %v2321 = vld [vmem:[#allocation10 + $0x2a8] sm:$0xff]
    %v2322 = vld [vmem:[#allocation10 + $0x2b0] sm:$0xff]
    %v2323 = vld [vmem:[#allocation10 + $0x2b8] sm:$0xff]
    %v2324 = vld [vmem:[#allocation10 + $0x2c0] sm:$0xff]
    %v2325 = vld [vmem:[#allocation10 + $0x2c8] sm:$0xff]
    %v2326 = vld [vmem:[#allocation10 + $0x2d0] sm:$0xff]
    %v2327 = vld [vmem:[#allocation10 + $0x2d8] sm:$0xff]
    %v2328 = vld [vmem:[#allocation10 + $0x2e0] sm:$0xff]
    %v2329 = vld [vmem:[#allocation10 + $0x2e8] sm:$0xff]
    %v2330 = vld [vmem:[#allocation10 + $0x2f0] sm:$0xff]
    %v2331 = vld [vmem:[#allocation10 + $0x2f8] sm:$0xff]
    %v2332 = vld [vmem:[#allocation10 + $0x300] sm:$0xff]
    %v2333 = vld [vmem:[#allocation10 + $0x308] sm:$0xff]
    %v2334 = vld [vmem:[#allocation10 + $0x310] sm:$0xff]
    %v2335 = vld [vmem:[#allocation10 + $0x318] sm:$0xff]
    %v2336 = vld [vmem:[#allocation10 + $0x320] sm:$0xff]
    %v2337 = vld [vmem:[#allocation10 + $0x328] sm:$0xff]
    %v2338 = vld [vmem:[#allocation10 + $0x330] sm:$0xff]
    %v2339 = vld [vmem:[#allocation10 + $0x338] sm:$0xff]
    %v2340 = vld [vmem:[#allocation10 + $0x340] sm:$0xff]
    %v2341 = vld [vmem:[#allocation10 + $0x348] sm:$0xff]
    %v2342 = vld [vmem:[#allocation10 + $0x350] sm:$0xff]
    %v2343 = vld [vmem:[#allocation10 + $0x358] sm:$0xff]
    %v2344 = vld [vmem:[#allocation10 + $0x360] sm:$0xff]
    %v2345 = vld [vmem:[#allocation10 + $0x368] sm:$0xff]
    %v2346 = vld [vmem:[#allocation10 + $0x370] sm:$0xff]
    %v2347 = vld [vmem:[#allocation10 + $0x378] sm:$0xff]
    %v2348 = vld [vmem:[#allocation10 + $0x380] sm:$0xff]
    %v2349 = vld [vmem:[#allocation10 + $0x388] sm:$0xff]
    %v2350 = vld [vmem:[#allocation10 + $0x390] sm:$0xff]
    %v2351 = vld [vmem:[#allocation10 + $0x398] sm:$0xff]
    %v2352 = vld [vmem:[#allocation10 + $0x3a0] sm:$0xff]
    %v2353 = vld [vmem:[#allocation10 + $0x3a8] sm:$0xff]
    %v2354 = vld [vmem:[#allocation10 + $0x3b0] sm:$0xff]
    %v2355 = vld [vmem:[#allocation10 + $0x3b8] sm:$0xff]
    %v2356 = vld [vmem:[#allocation10 + $0x3c0] sm:$0xff]
    %v2357 = vld [vmem:[#allocation10 + $0x3c8] sm:$0xff]
    %v2358 = vld [vmem:[#allocation10 + $0x3d0] sm:$0xff]
    %v2359 = vld [vmem:[#allocation10 + $0x3d8] sm:$0xff]
    %v2360 = vld [vmem:[#allocation10 + $0x3e0] sm:$0xff]
    %v2361 = vld [vmem:[#allocation10 + $0x3e8] sm:$0xff]
    %v2362 = vld [vmem:[#allocation10 + $0x3f0] sm:$0xff]
    %v2363 = vld [vmem:[#allocation10 + $0x3f8] sm:$0xff]
    %v2364 = vld [vmem:[%s5] sm:$0xf]
    %v2366 = vlaneseq
    %v2367 = vshrl.u32 %v2366, 7
    %v2368 = vsub.s32 0, %v2367
    %v2369 = vrot.slane %v2364, %v2368
    %v2370 = vlaneseq
    %v2371 = vshrl.u32 %v2370, 7
    %v2372 = vsub.s32 1, %v2371
    %v2373 = vrot.slane %v2364, %v2372
    %v2374 = vlaneseq
    %v2375 = vshrl.u32 %v2374, 7
    %v2376 = vsub.s32 2, %v2375
    %v2377 = vrot.slane %v2364, %v2376
    %v2378 = vlaneseq
    %v2379 = vshrl.u32 %v2378, 7
    %v2380 = vsub.s32 3, %v2379
    %v2381 = vrot.slane %v2364, %v2380
    %2386 = vmatprep.subr.mxu0 %v2237
    %2387 = vmatpush1.msra.mxu0 %v2236
    %2388 = vmatprep.subr.mxu0 %v2241
    %2389 = vmatpush1.msra.mxu0 %v2240
    %2390 = vmatprep.subr.mxu0 %v2245
    %2391 = vmatpush1.msra.mxu0 %v2244
    %2392 = vmatprep.subr.mxu0 %v2249
    %2393 = vmatpush1.msra.mxu0 %v2248
    %2394 = vmatprep.subr.mxu0 %v2253
    %2395 = vmatpush1.msra.mxu0 %v2252
    %2396 = vmatprep.subr.mxu0 %v2257
    %2397 = vmatpush1.msra.mxu0 %v2256
    %2398 = vmatprep.subr.mxu0 %v2261
    %2399 = vmatpush1.msra.mxu0 %v2260
    %2400 = vmatprep.subr.mxu0 %v2265
    %2401 = vmatpush1.msra.mxu0 %v2264
    %2402 = vmatprep.subr.mxu0 %v2269
    %2403 = vmatpush1.msra.mxu0 %v2268
    %2404 = vmatprep.subr.mxu0 %v2273
    %2405 = vmatpush1.msra.mxu0 %v2272
    %2406 = vmatprep.subr.mxu0 %v2277
    %2407 = vmatpush1.msra.mxu0 %v2276
    %2408 = vmatprep.subr.mxu0 %v2281
    %2409 = vmatpush1.msra.mxu0 %v2280
    %2410 = vmatprep.subr.mxu0 %v2285
    %2411 = vmatpush1.msra.mxu0 %v2284
    %2412 = vmatprep.subr.mxu0 %v2289
    %2413 = vmatpush1.msra.mxu0 %v2288
    %2414 = vmatprep.subr.mxu0 %v2293
    %2415 = vmatpush1.msra.mxu0 %v2292
    %2416 = vmatprep.subr.mxu0 %v2297
    %2417 = vmatpush1.msra.mxu0 %v2296
    %2418 = vmatprep.subr.mxu0 %v2301
    %2419 = vmatpush1.msra.mxu0 %v2300
    %2420 = vmatprep.subr.mxu0 %v2305
    %2421 = vmatpush1.msra.mxu0 %v2304
    %2422 = vmatprep.subr.mxu0 %v2309
    %2423 = vmatpush1.msra.mxu0 %v2308
    %2424 = vmatprep.subr.mxu0 %v2313
    %2425 = vmatpush1.msra.mxu0 %v2312
    %2426 = vmatprep.subr.mxu0 %v2317
    %2427 = vmatpush1.msra.mxu0 %v2316
    %2428 = vmatprep.subr.mxu0 %v2321
    %2429 = vmatpush1.msra.mxu0 %v2320
    %2430 = vmatprep.subr.mxu0 %v2325
    %2431 = vmatpush1.msra.mxu0 %v2324
    %2432 = vmatprep.subr.mxu0 %v2329
    %2433 = vmatpush1.msra.mxu0 %v2328
    %2434 = vmatprep.subr.mxu0 %v2333
    %2435 = vmatpush1.msra.mxu0 %v2332
    %2436 = vmatprep.subr.mxu0 %v2337
    %2437 = vmatpush1.msra.mxu0 %v2336
    %2438 = vmatprep.subr.mxu0 %v2341
    %2439 = vmatpush1.msra.mxu0 %v2340
    %2440 = vmatprep.subr.mxu0 %v2345
    %2441 = vmatpush1.msra.mxu0 %v2344
    %2442 = vmatprep.subr.mxu0 %v2349
    %2443 = vmatpush1.msra.mxu0 %v2348
    %2444 = vmatprep.subr.mxu0 %v2353
    %2445 = vmatpush1.msra.mxu0 %v2352
    %2446 = vmatprep.subr.mxu0 %v2357
    %2447 = vmatpush1.msra.mxu0 %v2356
    %2448 = vmatprep.subr.mxu0 %v2361
    %2449 = vmatpush1.msra.mxu0 %v2360
    %2450 = vmatprep.mubr.f32.mxu0 %v1988
    %2451 = vmatmul.mubr.f32.gmra.mrb[0].mxu0 %v2235
    %v2452 = vpop.f32.mrb[0].mxu0
    %v2453 = vadd.f32 %v2369, %v2452
    %v2454 = vpop.f32.mrb[0].mxu0
    %v2455 = vadd.f32 %v2373, %v2454
    %2456 = vdwg.mxu0
    %2457 = vmatprep.subr.mxu0 %v2239
    %2458 = vmatpush1.msra.mxu0 %v2238
    %2459 = vmatprep.subr.mxu0 %v2243
    %2460 = vmatpush1.msra.mxu0 %v2242
    %2461 = vmatprep.subr.mxu0 %v2247
    %2462 = vmatpush1.msra.mxu0 %v2246
    %2463 = vmatprep.subr.mxu0 %v2251
    %2464 = vmatpush1.msra.mxu0 %v2250
    %2465 = vmatprep.subr.mxu0 %v2255
    %2466 = vmatpush1.msra.mxu0 %v2254
    %2467 = vmatprep.subr.mxu0 %v2259
    %2468 = vmatpush1.msra.mxu0 %v2258
    %2469 = vmatprep.subr.mxu0 %v2263
    %2470 = vmatpush1.msra.mxu0 %v2262
    %2471 = vmatprep.subr.mxu0 %v2267
    %2472 = vmatpush1.msra.mxu0 %v2266
    %2473 = vmatprep.subr.mxu0 %v2271
    %2474 = vmatpush1.msra.mxu0 %v2270
    %2475 = vmatprep.subr.mxu0 %v2275
    %2476 = vmatpush1.msra.mxu0 %v2274
    %2477 = vmatprep.subr.mxu0 %v2279
    %2478 = vmatpush1.msra.mxu0 %v2278
    %2479 = vmatprep.subr.mxu0 %v2283
    %2480 = vmatpush1.msra.mxu0 %v2282
    %2481 = vmatprep.subr.mxu0 %v2287
    %2482 = vmatpush1.msra.mxu0 %v2286
    %2483 = vmatprep.subr.mxu0 %v2291
    %2484 = vmatpush1.msra.mxu0 %v2290
    %2485 = vmatprep.subr.mxu0 %v2295
    %2486 = vmatpush1.msra.mxu0 %v2294
    %2487 = vmatprep.subr.mxu0 %v2299
    %2488 = vmatpush1.msra.mxu0 %v2298
    %2489 = vmatprep.subr.mxu0 %v2303
    %2490 = vmatpush1.msra.mxu0 %v2302
    %2491 = vmatprep.subr.mxu0 %v2307
    %2492 = vmatpush1.msra.mxu0 %v2306
    %2493 = vmatprep.subr.mxu0 %v2311
    %2494 = vmatpush1.msra.mxu0 %v2310
    %2495 = vmatprep.subr.mxu0 %v2315
    %2496 = vmatpush1.msra.mxu0 %v2314
    %2497 = vmatprep.subr.mxu0 %v2319
    %2498 = vmatpush1.msra.mxu0 %v2318
    %2499 = vmatprep.subr.mxu0 %v2323
    %2500 = vmatpush1.msra.mxu0 %v2322
    %2501 = vmatprep.subr.mxu0 %v2327
    %2502 = vmatpush1.msra.mxu0 %v2326
    %2503 = vmatprep.subr.mxu0 %v2331
    %2504 = vmatpush1.msra.mxu0 %v2330
    %2505 = vmatprep.subr.mxu0 %v2335
    %2506 = vmatpush1.msra.mxu0 %v2334
    %2507 = vmatprep.subr.mxu0 %v2339
    %2508 = vmatpush1.msra.mxu0 %v2338
    %2509 = vmatprep.subr.mxu0 %v2343
    %2510 = vmatpush1.msra.mxu0 %v2342
    %2511 = vmatprep.subr.mxu0 %v2347
    %2512 = vmatpush1.msra.mxu0 %v2346
    %2513 = vmatprep.subr.mxu0 %v2351
    %2514 = vmatpush1.msra.mxu0 %v2350
    %2515 = vmatprep.subr.mxu0 %v2355
    %2516 = vmatpush1.msra.mxu0 %v2354
    %2517 = vmatprep.subr.mxu0 %v2359
    %2518 = vmatpush1.msra.mxu0 %v2358
    %2519 = vmatprep.subr.mxu0 %v2363
    %2520 = vmatpush1.msra.mxu0 %v2362
    %2521 = vmatprep.mubr.f32.mxu0 %v1988
    %2522 = vmatmul.mubr.f32.gmra.mrb[0].mxu0 %v2235
    %v2523 = vpop.f32.mrb[0].mxu0
    %v2524 = vadd.f32 %v2377, %v2523
    %v2525 = vpop.f32.mrb[0].mxu0
    %v2526 = vadd.f32 %v2381, %v2525
    %2527 = vdwg.mxu0
    %v2528 = vxor.u32 %v2453, 2147483648
    %v2529 = vmul.f32 %v2528, 1.442695
    %v2530 = vpow.pop %v2529
    %v2531 = vadd.f32 %v2530, 1.0
    %v2532 = vrcp.pop %v2531
    %v2533 = vmul.f32 1.0, %v2532
    %v2534 = vxor.u32 %v2455, 2147483648
    %v2535 = vmul.f32 %v2534, 1.442695
    %v2536 = vpow.pop %v2535
    %v2537 = vadd.f32 %v2536, 1.0
    %v2538 = vrcp.pop %v2537
    %v2539 = vmul.f32 1.0, %v2538
    %v2540 = vtanh.pop %v2524
    %v2541 = vxor.u32 %v2526, 2147483648
    %v2542 = vmul.f32 %v2541, 1.442695
    %v2543 = vpow.pop %v2542
    %v2544 = vadd.f32 %v2543, 1.0
    %v2545 = vrcp.pop %v2544
    %v2546 = vmul.f32 1.0, %v2545
    %v2547 = vmul.f32 %v2539, %v1986
    %v2548 = vmul.f32 %v2533, %v2540
    %v2549 = vadd.f32 %v2547, %v2548
    %v2550 = vtanh.pop %v2549
    %v2551 = vmul.f32 %v2546, %v2550
    %2552 = vst [vmem:[#allocation3 + $0x6] sm:$0x3] %v2551
    %v2553 = vld [vmem:[#allocation9] sm:$0xff]
    %v2554 = vld [vmem:[#allocation9 + $0x8] sm:$0xff]
    %v2555 = vld [vmem:[#allocation9 + $0x10] sm:$0xff]
    %v2556 = vld [vmem:[#allocation9 + $0x18] sm:$0xff]
    %v2557 = vld [vmem:[#allocation9 + $0x20] sm:$0xff]
    %v2558 = vld [vmem:[#allocation9 + $0x28] sm:$0xff]
    %v2559 = vld [vmem:[#allocation9 + $0x30] sm:$0xff]
    %v2560 = vld [vmem:[#allocation9 + $0x38] sm:$0xff]
    %v2561 = vld [vmem:[#allocation9 + $0x40] sm:$0xff]
    %v2562 = vld [vmem:[#allocation9 + $0x48] sm:$0xff]
    %v2563 = vld [vmem:[#allocation9 + $0x50] sm:$0xff]
    %v2564 = vld [vmem:[#allocation9 + $0x58] sm:$0xff]
    %v2565 = vld [vmem:[#allocation9 + $0x60] sm:$0xff]
    %v2566 = vld [vmem:[#allocation9 + $0x68] sm:$0xff]
    %v2567 = vld [vmem:[#allocation9 + $0x70] sm:$0xff]
    %v2568 = vld [vmem:[#allocation9 + $0x78] sm:$0xff]
    %v2569 = vld [vmem:[#allocation9 + $0x80] sm:$0xff]
    %v2570 = vld [vmem:[#allocation9 + $0x88] sm:$0xff]
    %v2571 = vld [vmem:[#allocation9 + $0x90] sm:$0xff]
    %v2572 = vld [vmem:[#allocation9 + $0x98] sm:$0xff]
    %v2573 = vld [vmem:[#allocation9 + $0xa0] sm:$0xff]
    %v2574 = vld [vmem:[#allocation9 + $0xa8] sm:$0xff]
    %v2575 = vld [vmem:[#allocation9 + $0xb0] sm:$0xff]
    %v2576 = vld [vmem:[#allocation9 + $0xb8] sm:$0xff]
    %v2577 = vld [vmem:[#allocation9 + $0xc0] sm:$0xff]
    %v2578 = vld [vmem:[#allocation9 + $0xc8] sm:$0xff]
    %v2579 = vld [vmem:[#allocation9 + $0xd0] sm:$0xff]
    %v2580 = vld [vmem:[#allocation9 + $0xd8] sm:$0xff]
    %v2581 = vld [vmem:[#allocation9 + $0xe0] sm:$0xff]
    %v2582 = vld [vmem:[#allocation9 + $0xe8] sm:$0xff]
    %v2583 = vld [vmem:[#allocation9 + $0xf0] sm:$0xff]
    %v2584 = vld [vmem:[#allocation9 + $0xf8] sm:$0xff]
    %v2585 = vld [vmem:[#allocation9 + $0x100] sm:$0xff]
    %v2586 = vld [vmem:[#allocation9 + $0x108] sm:$0xff]
    %v2587 = vld [vmem:[#allocation9 + $0x110] sm:$0xff]
    %v2588 = vld [vmem:[#allocation9 + $0x118] sm:$0xff]
    %v2589 = vld [vmem:[#allocation9 + $0x120] sm:$0xff]
    %v2590 = vld [vmem:[#allocation9 + $0x128] sm:$0xff]
    %v2591 = vld [vmem:[#allocation9 + $0x130] sm:$0xff]
    %v2592 = vld [vmem:[#allocation9 + $0x138] sm:$0xff]
    %v2593 = vld [vmem:[#allocation9 + $0x140] sm:$0xff]
    %v2594 = vld [vmem:[#allocation9 + $0x148] sm:$0xff]
    %v2595 = vld [vmem:[#allocation9 + $0x150] sm:$0xff]
    %v2596 = vld [vmem:[#allocation9 + $0x158] sm:$0xff]
    %v2597 = vld [vmem:[#allocation9 + $0x160] sm:$0xff]
    %v2598 = vld [vmem:[#allocation9 + $0x168] sm:$0xff]
    %v2599 = vld [vmem:[#allocation9 + $0x170] sm:$0xff]
    %v2600 = vld [vmem:[#allocation9 + $0x178] sm:$0xff]
    %v2601 = vld [vmem:[#allocation9 + $0x180] sm:$0xff]
    %v2602 = vld [vmem:[#allocation9 + $0x188] sm:$0xff]
    %v2603 = vld [vmem:[#allocation9 + $0x190] sm:$0xff]
    %v2604 = vld [vmem:[#allocation9 + $0x198] sm:$0xff]
    %v2605 = vld [vmem:[#allocation9 + $0x1a0] sm:$0xff]
    %v2606 = vld [vmem:[#allocation9 + $0x1a8] sm:$0xff]
    %v2607 = vld [vmem:[#allocation9 + $0x1b0] sm:$0xff]
    %v2608 = vld [vmem:[#allocation9 + $0x1b8] sm:$0xff]
    %v2609 = vld [vmem:[#allocation9 + $0x1c0] sm:$0xff]
    %v2610 = vld [vmem:[#allocation9 + $0x1c8] sm:$0xff]
    %v2611 = vld [vmem:[#allocation9 + $0x1d0] sm:$0xff]
    %v2612 = vld [vmem:[#allocation9 + $0x1d8] sm:$0xff]
    %v2613 = vld [vmem:[#allocation9 + $0x1e0] sm:$0xff]
    %v2614 = vld [vmem:[#allocation9 + $0x1e8] sm:$0xff]
    %v2615 = vld [vmem:[#allocation9 + $0x1f0] sm:$0xff]
    %v2616 = vld [vmem:[#allocation9 + $0x1f8] sm:$0xff]
    %v2617 = vld [vmem:[#allocation2 + $0x20] sm:$0x3]
    %v2618 = vld [vmem:[#allocation2 + $0x28] sm:$0x3]
    %v2619 = vld [vmem:[#allocation2 + $0x30] sm:$0x3]
    %v2620 = vld [vmem:[#allocation2 + $0x38] sm:$0x3]
    %2621 = vmatprep.subr.mxu0 %v2554
    %2622 = vmatpush1.msra.mxu0 %v2553
    %2623 = vmatprep.subr.mxu0 %v2558
    %2624 = vmatpush1.msra.mxu0 %v2557
    %2625 = vmatprep.subr.mxu0 %v2562
    %2626 = vmatpush1.msra.mxu0 %v2561
    %2627 = vmatprep.subr.mxu0 %v2566
    %2628 = vmatpush1.msra.mxu0 %v2565
    %2629 = vmatprep.subr.mxu0 %v2570
    %2630 = vmatpush1.msra.mxu0 %v2569
    %2631 = vmatprep.subr.mxu0 %v2574
    %2632 = vmatpush1.msra.mxu0 %v2573
    %2633 = vmatprep.subr.mxu0 %v2578
    %2634 = vmatpush1.msra.mxu0 %v2577
    %2635 = vmatprep.subr.mxu0 %v2582
    %2636 = vmatpush1.msra.mxu0 %v2581
    %2637 = vmatprep.subr.mxu0 %v2586
    %2638 = vmatpush1.msra.mxu0 %v2585
    %2639 = vmatprep.subr.mxu0 %v2590
    %2640 = vmatpush1.msra.mxu0 %v2589
    %2641 = vmatprep.subr.mxu0 %v2594
    %2642 = vmatpush1.msra.mxu0 %v2593
    %2643 = vmatprep.subr.mxu0 %v2598
    %2644 = vmatpush1.msra.mxu0 %v2597
    %2645 = vmatprep.subr.mxu0 %v2602
    %2646 = vmatpush1.msra.mxu0 %v2601
    %2647 = vmatprep.subr.mxu0 %v2606
    %2648 = vmatpush1.msra.mxu0 %v2605
    %2649 = vmatprep.subr.mxu0 %v2610
    %2650 = vmatpush1.msra.mxu0 %v2609
    %2651 = vmatprep.subr.mxu0 %v2614
    %2652 = vmatpush1.msra.mxu0 %v2613
    %2653 = vmatprep.subr.mxu0 0.0
    %2654 = vmatpush1.msra.mxu0 0.0
    %2655 = vmatprep.subr.mxu0 0.0
    %2656 = vmatpush1.msra.mxu0 0.0
    %2657 = vmatprep.subr.mxu0 0.0
    %2658 = vmatpush1.msra.mxu0 0.0
    %2659 = vmatprep.subr.mxu0 0.0
    %2660 = vmatpush1.msra.mxu0 0.0
    %2661 = vmatprep.subr.mxu0 0.0
    %2662 = vmatpush1.msra.mxu0 0.0
    %2663 = vmatprep.subr.mxu0 0.0
    %2664 = vmatpush1.msra.mxu0 0.0
    %2665 = vmatprep.subr.mxu0 0.0
    %2666 = vmatpush1.msra.mxu0 0.0
    %2667 = vmatprep.subr.mxu0 0.0
    %2668 = vmatpush1.msra.mxu0 0.0
    %2669 = vmatprep.subr.mxu0 0.0
    %2670 = vmatpush1.msra.mxu0 0.0
    %2671 = vmatprep.subr.mxu0 0.0
    %2672 = vmatpush1.msra.mxu0 0.0
    %2673 = vmatprep.subr.mxu0 0.0
    %2674 = vmatpush1.msra.mxu0 0.0
    %2675 = vmatprep.subr.mxu0 0.0
    %2676 = vmatpush1.msra.mxu0 0.0
    %2677 = vmatprep.subr.mxu0 0.0
    %2678 = vmatpush1.msra.mxu0 0.0
    %2679 = vmatprep.subr.mxu0 0.0
    %2680 = vmatpush1.msra.mxu0 0.0
    %2681 = vmatprep.subr.mxu0 0.0
    %2682 = vmatpush1.msra.mxu0 0.0
    %2683 = vmatprep.subr.mxu0 0.0
    %2684 = vmatpush1.msra.mxu0 0.0
    %2685 = vmatprep.mubr.f32.mxu0 0.0
    %2686 = vmatmul.mubr.f32.gmra.mrb[0].mxu0 %v2235
    %v2687 = vpop.f32.mrb[0].mxu0
    %v2688 = vadd.f32 %v2617, %v2687
    %v2689 = vpop.f32.mrb[0].mxu0
    %v2690 = vadd.f32 %v2618, %v2689
    %2691 = vdwg.mxu0
    %2692 = vmatprep.subr.mxu0 %v2556
    %2693 = vmatpush1.msra.mxu0 %v2555
    %2694 = vmatprep.subr.mxu0 %v2560
    %2695 = vmatpush1.msra.mxu0 %v2559
    %2696 = vmatprep.subr.mxu0 %v2564
    %2697 = vmatpush1.msra.mxu0 %v2563
    %2698 = vmatprep.subr.mxu0 %v2568
    %2699 = vmatpush1.msra.mxu0 %v2567
    %2700 = vmatprep.subr.mxu0 %v2572
    %2701 = vmatpush1.msra.mxu0 %v2571
    %2702 = vmatprep.subr.mxu0 %v2576
    %2703 = vmatpush1.msra.mxu0 %v2575
    %2704 = vmatprep.subr.mxu0 %v2580
    %2705 = vmatpush1.msra.mxu0 %v2579
    %2706 = vmatprep.subr.mxu0 %v2584
    %2707 = vmatpush1.msra.mxu0 %v2583
    %2708 = vmatprep.subr.mxu0 %v2588
    %2709 = vmatpush1.msra.mxu0 %v2587
    %2710 = vmatprep.subr.mxu0 %v2592
    %2711 = vmatpush1.msra.mxu0 %v2591
    %2712 = vmatprep.subr.mxu0 %v2596
    %2713 = vmatpush1.msra.mxu0 %v2595
    %2714 = vmatprep.subr.mxu0 %v2600
    %2715 = vmatpush1.msra.mxu0 %v2599
    %2716 = vmatprep.subr.mxu0 %v2604
    %2717 = vmatpush1.msra.mxu0 %v2603
    %2718 = vmatprep.subr.mxu0 %v2608
    %2719 = vmatpush1.msra.mxu0 %v2607
    %2720 = vmatprep.subr.mxu0 %v2612
    %2721 = vmatpush1.msra.mxu0 %v2611
    %2722 = vmatprep.subr.mxu0 %v2616
    %2723 = vmatpush1.msra.mxu0 %v2615
    %2724 = vmatprep.subr.mxu0 0.0
    %2725 = vmatpush1.msra.mxu0 0.0
    %2726 = vmatprep.subr.mxu0 0.0
    %2727 = vmatpush1.msra.mxu0 0.0
    %2728 = vmatprep.subr.mxu0 0.0
    %2729 = vmatpush1.msra.mxu0 0.0
    %2730 = vmatprep.subr.mxu0 0.0
    %2731 = vmatpush1.msra.mxu0 0.0
    %2732 = vmatprep.subr.mxu0 0.0
    %2733 = vmatpush1.msra.mxu0 0.0
    %2734 = vmatprep.subr.mxu0 0.0
    %2735 = vmatpush1.msra.mxu0 0.0
    %2736 = vmatprep.subr.mxu0 0.0
    %2737 = vmatpush1.msra.mxu0 0.0
    %2738 = vmatprep.subr.mxu0 0.0
    %2739 = vmatpush1.msra.mxu0 0.0
    %2740 = vmatprep.subr.mxu0 0.0
    %2741 = vmatpush1.msra.mxu0 0.0
    %2742 = vmatprep.subr.mxu0 0.0
    %2743 = vmatpush1.msra.mxu0 0.0
    %2744 = vmatprep.subr.mxu0 0.0
    %2745 = vmatpush1.msra.mxu0 0.0
    %2746 = vmatprep.subr.mxu0 0.0
    %2747 = vmatpush1.msra.mxu0 0.0
    %2748 = vmatprep.subr.mxu0 0.0
    %2749 = vmatpush1.msra.mxu0 0.0
    %2750 = vmatprep.subr.mxu0 0.0
    %2751 = vmatpush1.msra.mxu0 0.0
    %2752 = vmatprep.subr.mxu0 0.0
    %2753 = vmatpush1.msra.mxu0 0.0
    %2754 = vmatprep.subr.mxu0 0.0
    %2755 = vmatpush1.msra.mxu0 0.0
    %2756 = vmatprep.mubr.f32.mxu0 0.0
    %2757 = vmatmul.mubr.f32.gmra.mrb[0].mxu0 %v2235
    %v2758 = vpop.f32.mrb[0].mxu0
    %v2759 = vadd.f32 %v2619, %v2758
    %v2760 = vpop.f32.mrb[0].mxu0
    %v2761 = vadd.f32 %v2620, %v2760
    %2762 = vdwg.mxu0
    %v2763 = vxor.u32 %v2688, 2147483648
    %v2764 = vmul.f32 %v2763, 1.442695
    %v2765 = vpow.pop %v2764
    %v2766 = vadd.f32 %v2765, 1.0
    %v2767 = vrcp.pop %v2766
    %v2768 = vmul.f32 1.0, %v2767
    %v2769 = vxor.u32 %v2690, 2147483648
    %v2770 = vmul.f32 %v2769, 1.442695
    %v2771 = vpow.pop %v2770
    %v2772 = vadd.f32 %v2771, 1.0
    %v2773 = vrcp.pop %v2772
    %v2774 = vmul.f32 1.0, %v2773
    %v2775 = vtanh.pop %v2759
    %v2776 = vxor.u32 %v2761, 2147483648
    %v2777 = vmul.f32 %v2776, 1.442695
    %v2778 = vpow.pop %v2777
    %v2779 = vadd.f32 %v2778, 1.0
    %v2780 = vrcp.pop %v2779
    %v2781 = vmul.f32 1.0, %v2780
    %v2782 = vmul.f32 %v2774, %v2233
    %v2783 = vmul.f32 %v2768, %v2775
    %v2784 = vadd.f32 %v2782, %v2783
    %v2785 = vtanh.pop %v2784
    %v2786 = vmul.f32 %v2781, %v2785
    %v2787 = vld [vmem:[#allocation10] sm:$0xff]
    %v2788 = vld [vmem:[#allocation10 + $0x8] sm:$0xff]
    %v2789 = vld [vmem:[#allocation10 + $0x10] sm:$0xff]
    %v2790 = vld [vmem:[#allocation10 + $0x18] sm:$0xff]
    %v2791 = vld [vmem:[#allocation10 + $0x20] sm:$0xff]
    %v2792 = vld [vmem:[#allocation10 + $0x28] sm:$0xff]
    %v2793 = vld [vmem:[#allocation10 + $0x30] sm:$0xff]
    %v2794 = vld [vmem:[#allocation10 + $0x38] sm:$0xff]
    %v2795 = vld [vmem:[#allocation10 + $0x40] sm:$0xff]
    %v2796 = vld [vmem:[#allocation10 + $0x48] sm:$0xff]
    %v2797 = vld [vmem:[#allocation10 + $0x50] sm:$0xff]
    %v2798 = vld [vmem:[#allocation10 + $0x58] sm:$0xff]
    %v2799 = vld [vmem:[#allocation10 + $0x60] sm:$0xff]
    %v2800 = vld [vmem:[#allocation10 + $0x68] sm:$0xff]
    %v2801 = vld [vmem:[#allocation10 + $0x70] sm:$0xff]
    %v2802 = vld [vmem:[#allocation10 + $0x78] sm:$0xff]
    %v2803 = vld [vmem:[#allocation10 + $0x80] sm:$0xff]
    %v2804 = vld [vmem:[#allocation10 + $0x88] sm:$0xff]
    %v2805 = vld [vmem:[#allocation10 + $0x90] sm:$0xff]
    %v2806 = vld [vmem:[#allocation10 + $0x98] sm:$0xff]
    %v2807 = vld [vmem:[#allocation10 + $0xa0] sm:$0xff]
    %v2808 = vld [vmem:[#allocation10 + $0xa8] sm:$0xff]
    %v2809 = vld [vmem:[#allocation10 + $0xb0] sm:$0xff]
    %v2810 = vld [vmem:[#allocation10 + $0xb8] sm:$0xff]
    %v2811 = vld [vmem:[#allocation10 + $0xc0] sm:$0xff]
    %v2812 = vld [vmem:[#allocation10 + $0xc8] sm:$0xff]
    %v2813 = vld [vmem:[#allocation10 + $0xd0] sm:$0xff]
    %v2814 = vld [vmem:[#allocation10 + $0xd8] sm:$0xff]
    %v2815 = vld [vmem:[#allocation10 + $0xe0] sm:$0xff]
    %v2816 = vld [vmem:[#allocation10 + $0xe8] sm:$0xff]
    %v2817 = vld [vmem:[#allocation10 + $0xf0] sm:$0xff]
    %v2818 = vld [vmem:[#allocation10 + $0xf8] sm:$0xff]
    %v2819 = vld [vmem:[#allocation10 + $0x100] sm:$0xff]
    %v2820 = vld [vmem:[#allocation10 + $0x108] sm:$0xff]
    %v2821 = vld [vmem:[#allocation10 + $0x110] sm:$0xff]
    %v2822 = vld [vmem:[#allocation10 + $0x118] sm:$0xff]
    %v2823 = vld [vmem:[#allocation10 + $0x120] sm:$0xff]
    %v2824 = vld [vmem:[#allocation10 + $0x128] sm:$0xff]
    %v2825 = vld [vmem:[#allocation10 + $0x130] sm:$0xff]
    %v2826 = vld [vmem:[#allocation10 + $0x138] sm:$0xff]
    %v2827 = vld [vmem:[#allocation10 + $0x140] sm:$0xff]
    %v2828 = vld [vmem:[#allocation10 + $0x148] sm:$0xff]
    %v2829 = vld [vmem:[#allocation10 + $0x150] sm:$0xff]
    %v2830 = vld [vmem:[#allocation10 + $0x158] sm:$0xff]
    %v2831 = vld [vmem:[#allocation10 + $0x160] sm:$0xff]
    %v2832 = vld [vmem:[#allocation10 + $0x168] sm:$0xff]
    %v2833 = vld [vmem:[#allocation10 + $0x170] sm:$0xff]
    %v2834 = vld [vmem:[#allocation10 + $0x178] sm:$0xff]
    %v2835 = vld [vmem:[#allocation10 + $0x180] sm:$0xff]
    %v2836 = vld [vmem:[#allocation10 + $0x188] sm:$0xff]
    %v2837 = vld [vmem:[#allocation10 + $0x190] sm:$0xff]
    %v2838 = vld [vmem:[#allocation10 + $0x198] sm:$0xff]
    %v2839 = vld [vmem:[#allocation10 + $0x1a0] sm:$0xff]
    %v2840 = vld [vmem:[#allocation10 + $0x1a8] sm:$0xff]
    %v2841 = vld [vmem:[#allocation10 + $0x1b0] sm:$0xff]
    %v2842 = vld [vmem:[#allocation10 + $0x1b8] sm:$0xff]
    %v2843 = vld [vmem:[#allocation10 + $0x1c0] sm:$0xff]
    %v2844 = vld [vmem:[#allocation10 + $0x1c8] sm:$0xff]
    %v2845 = vld [vmem:[#allocation10 + $0x1d0] sm:$0xff]
    %v2846 = vld [vmem:[#allocation10 + $0x1d8] sm:$0xff]
    %v2847 = vld [vmem:[#allocation10 + $0x1e0] sm:$0xff]
    %v2848 = vld [vmem:[#allocation10 + $0x1e8] sm:$0xff]
    %v2849 = vld [vmem:[#allocation10 + $0x1f0] sm:$0xff]
    %v2850 = vld [vmem:[#allocation10 + $0x1f8] sm:$0xff]
    %v2851 = vld [vmem:[#allocation10 + $0x200] sm:$0xff]
    %v2852 = vld [vmem:[#allocation10 + $0x208] sm:$0xff]
    %v2853 = vld [vmem:[#allocation10 + $0x210] sm:$0xff]
    %v2854 = vld [vmem:[#allocation10 + $0x218] sm:$0xff]
    %v2855 = vld [vmem:[#allocation10 + $0x220] sm:$0xff]
    %v2856 = vld [vmem:[#allocation10 + $0x228] sm:$0xff]
    %v2857 = vld [vmem:[#allocation10 + $0x230] sm:$0xff]
    %v2858 = vld [vmem:[#allocation10 + $0x238] sm:$0xff]
    %v2859 = vld [vmem:[#allocation10 + $0x240] sm:$0xff]
    %v2860 = vld [vmem:[#allocation10 + $0x248] sm:$0xff]
    %v2861 = vld [vmem:[#allocation10 + $0x250] sm:$0xff]
    %v2862 = vld [vmem:[#allocation10 + $0x258] sm:$0xff]
    %v2863 = vld [vmem:[#allocation10 + $0x260] sm:$0xff]
    %v2864 = vld [vmem:[#allocation10 + $0x268] sm:$0xff]
    %v2865 = vld [vmem:[#allocation10 + $0x270] sm:$0xff]
    %v2866 = vld [vmem:[#allocation10 + $0x278] sm:$0xff]
    %v2867 = vld [vmem:[#allocation10 + $0x280] sm:$0xff]
    %v2868 = vld [vmem:[#allocation10 + $0x288] sm:$0xff]
    %v2869 = vld [vmem:[#allocation10 + $0x290] sm:$0xff]
    %v2870 = vld [vmem:[#allocation10 + $0x298] sm:$0xff]
    %v2871 = vld [vmem:[#allocation10 + $0x2a0] sm:$0xff]
    %v2872 = vld [vmem:[#allocation10 + $0x2a8] sm:$0xff]
    %v2873 = vld [vmem:[#allocation10 + $0x2b0] sm:$0xff]
    %v2874 = vld [vmem:[#allocation10 + $0x2b8] sm:$0xff]
    %v2875 = vld [vmem:[#allocation10 + $0x2c0] sm:$0xff]
    %v2876 = vld [vmem:[#allocation10 + $0x2c8] sm:$0xff]
    %v2877 = vld [vmem:[#allocation10 + $0x2d0] sm:$0xff]
    %v2878 = vld [vmem:[#allocation10 + $0x2d8] sm:$0xff]
    %v2879 = vld [vmem:[#allocation10 + $0x2e0] sm:$0xff]
    %v2880 = vld [vmem:[#allocation10 + $0x2e8] sm:$0xff]
    %v2881 = vld [vmem:[#allocation10 + $0x2f0] sm:$0xff]
    %v2882 = vld [vmem:[#allocation10 + $0x2f8] sm:$0xff]
    %v2883 = vld [vmem:[#allocation10 + $0x300] sm:$0xff]
    %v2884 = vld [vmem:[#allocation10 + $0x308] sm:$0xff]
    %v2885 = vld [vmem:[#allocation10 + $0x310] sm:$0xff]
    %v2886 = vld [vmem:[#allocation10 + $0x318] sm:$0xff]
    %v2887 = vld [vmem:[#allocation10 + $0x320] sm:$0xff]
    %v2888 = vld [vmem:[#allocation10 + $0x328] sm:$0xff]
    %v2889 = vld [vmem:[#allocation10 + $0x330] sm:$0xff]
    %v2890 = vld [vmem:[#allocation10 + $0x338] sm:$0xff]
    %v2891 = vld [vmem:[#allocation10 + $0x340] sm:$0xff]
    %v2892 = vld [vmem:[#allocation10 + $0x348] sm:$0xff]
    %v2893 = vld [vmem:[#allocation10 + $0x350] sm:$0xff]
    %v2894 = vld [vmem:[#allocation10 + $0x358] sm:$0xff]
    %v2895 = vld [vmem:[#allocation10 + $0x360] sm:$0xff]
    %v2896 = vld [vmem:[#allocation10 + $0x368] sm:$0xff]
    %v2897 = vld [vmem:[#allocation10 + $0x370] sm:$0xff]
    %v2898 = vld [vmem:[#allocation10 + $0x378] sm:$0xff]
    %v2899 = vld [vmem:[#allocation10 + $0x380] sm:$0xff]
    %v2900 = vld [vmem:[#allocation10 + $0x388] sm:$0xff]
    %v2901 = vld [vmem:[#allocation10 + $0x390] sm:$0xff]
    %v2902 = vld [vmem:[#allocation10 + $0x398] sm:$0xff]
    %v2903 = vld [vmem:[#allocation10 + $0x3a0] sm:$0xff]
    %v2904 = vld [vmem:[#allocation10 + $0x3a8] sm:$0xff]
    %v2905 = vld [vmem:[#allocation10 + $0x3b0] sm:$0xff]
    %v2906 = vld [vmem:[#allocation10 + $0x3b8] sm:$0xff]
    %v2907 = vld [vmem:[#allocation10 + $0x3c0] sm:$0xff]
    %v2908 = vld [vmem:[#allocation10 + $0x3c8] sm:$0xff]
    %v2909 = vld [vmem:[#allocation10 + $0x3d0] sm:$0xff]
    %v2910 = vld [vmem:[#allocation10 + $0x3d8] sm:$0xff]
    %v2911 = vld [vmem:[#allocation10 + $0x3e0] sm:$0xff]
    %v2912 = vld [vmem:[#allocation10 + $0x3e8] sm:$0xff]
    %v2913 = vld [vmem:[#allocation10 + $0x3f0] sm:$0xff]
    %v2914 = vld [vmem:[#allocation10 + $0x3f8] sm:$0xff]
    %v2915 = vld [vmem:[%s5] sm:$0xf]
    %v2917 = vlaneseq
    %v2918 = vshrl.u32 %v2917, 7
    %v2919 = vsub.s32 0, %v2918
    %v2920 = vrot.slane %v2915, %v2919
    %v2921 = vlaneseq
    %v2922 = vshrl.u32 %v2921, 7
    %v2923 = vsub.s32 1, %v2922
    %v2924 = vrot.slane %v2915, %v2923
    %v2925 = vlaneseq
    %v2926 = vshrl.u32 %v2925, 7
    %v2927 = vsub.s32 2, %v2926
    %v2928 = vrot.slane %v2915, %v2927
    %v2929 = vlaneseq
    %v2930 = vshrl.u32 %v2929, 7
    %v2931 = vsub.s32 3, %v2930
    %v2932 = vrot.slane %v2915, %v2931
    %2937 = vmatprep.subr.mxu0 %v2788
    %2938 = vmatpush1.msra.mxu0 %v2787
    %2939 = vmatprep.subr.mxu0 %v2792
    %2940 = vmatpush1.msra.mxu0 %v2791
    %2941 = vmatprep.subr.mxu0 %v2796
    %2942 = vmatpush1.msra.mxu0 %v2795
    %2943 = vmatprep.subr.mxu0 %v2800
    %2944 = vmatpush1.msra.mxu0 %v2799
    %2945 = vmatprep.subr.mxu0 %v2804
    %2946 = vmatpush1.msra.mxu0 %v2803
    %2947 = vmatprep.subr.mxu0 %v2808
    %2948 = vmatpush1.msra.mxu0 %v2807
    %2949 = vmatprep.subr.mxu0 %v2812
    %2950 = vmatpush1.msra.mxu0 %v2811
    %2951 = vmatprep.subr.mxu0 %v2816
    %2952 = vmatpush1.msra.mxu0 %v2815
    %2953 = vmatprep.subr.mxu0 %v2820
    %2954 = vmatpush1.msra.mxu0 %v2819
    %2955 = vmatprep.subr.mxu0 %v2824
    %2956 = vmatpush1.msra.mxu0 %v2823
    %2957 = vmatprep.subr.mxu0 %v2828
    %2958 = vmatpush1.msra.mxu0 %v2827
    %2959 = vmatprep.subr.mxu0 %v2832
    %2960 = vmatpush1.msra.mxu0 %v2831
    %2961 = vmatprep.subr.mxu0 %v2836
    %2962 = vmatpush1.msra.mxu0 %v2835
    %2963 = vmatprep.subr.mxu0 %v2840
    %2964 = vmatpush1.msra.mxu0 %v2839
    %2965 = vmatprep.subr.mxu0 %v2844
    %2966 = vmatpush1.msra.mxu0 %v2843
    %2967 = vmatprep.subr.mxu0 %v2848
    %2968 = vmatpush1.msra.mxu0 %v2847
    %2969 = vmatprep.subr.mxu0 %v2852
    %2970 = vmatpush1.msra.mxu0 %v2851
    %2971 = vmatprep.subr.mxu0 %v2856
    %2972 = vmatpush1.msra.mxu0 %v2855
    %2973 = vmatprep.subr.mxu0 %v2860
    %2974 = vmatpush1.msra.mxu0 %v2859
    %2975 = vmatprep.subr.mxu0 %v2864
    %2976 = vmatpush1.msra.mxu0 %v2863
    %2977 = vmatprep.subr.mxu0 %v2868
    %2978 = vmatpush1.msra.mxu0 %v2867
    %2979 = vmatprep.subr.mxu0 %v2872
    %2980 = vmatpush1.msra.mxu0 %v2871
    %2981 = vmatprep.subr.mxu0 %v2876
    %2982 = vmatpush1.msra.mxu0 %v2875
    %2983 = vmatprep.subr.mxu0 %v2880
    %2984 = vmatpush1.msra.mxu0 %v2879
    %2985 = vmatprep.subr.mxu0 %v2884
    %2986 = vmatpush1.msra.mxu0 %v2883
    %2987 = vmatprep.subr.mxu0 %v2888
    %2988 = vmatpush1.msra.mxu0 %v2887
    %2989 = vmatprep.subr.mxu0 %v2892
    %2990 = vmatpush1.msra.mxu0 %v2891
    %2991 = vmatprep.subr.mxu0 %v2896
    %2992 = vmatpush1.msra.mxu0 %v2895
    %2993 = vmatprep.subr.mxu0 %v2900
    %2994 = vmatpush1.msra.mxu0 %v2899
    %2995 = vmatprep.subr.mxu0 %v2904
    %2996 = vmatpush1.msra.mxu0 %v2903
    %2997 = vmatprep.subr.mxu0 %v2908
    %2998 = vmatpush1.msra.mxu0 %v2907
    %2999 = vmatprep.subr.mxu0 %v2912
    %3000 = vmatpush1.msra.mxu0 %v2911
    %3001 = vmatprep.mubr.f32.mxu0 %v2551
    %3002 = vmatmul.mubr.f32.gmra.mrb[0].mxu0 %v2786
    %v3003 = vpop.f32.mrb[0].mxu0
    %v3004 = vadd.f32 %v2920, %v3003
    %v3005 = vpop.f32.mrb[0].mxu0
    %v3006 = vadd.f32 %v2924, %v3005
    %3007 = vdwg.mxu0
    %3008 = vmatprep.subr.mxu0 %v2790
    %3009 = vmatpush1.msra.mxu0 %v2789
    %3010 = vmatprep.subr.mxu0 %v2794
    %3011 = vmatpush1.msra.mxu0 %v2793
    %3012 = vmatprep.subr.mxu0 %v2798
    %3013 = vmatpush1.msra.mxu0 %v2797
    %3014 = vmatprep.subr.mxu0 %v2802
    %3015 = vmatpush1.msra.mxu0 %v2801
    %3016 = vmatprep.subr.mxu0 %v2806
    %3017 = vmatpush1.msra.mxu0 %v2805
    %3018 = vmatprep.subr.mxu0 %v2810
    %3019 = vmatpush1.msra.mxu0 %v2809
    %3020 = vmatprep.subr.mxu0 %v2814
    %3021 = vmatpush1.msra.mxu0 %v2813
    %3022 = vmatprep.subr.mxu0 %v2818
    %3023 = vmatpush1.msra.mxu0 %v2817
    %3024 = vmatprep.subr.mxu0 %v2822
    %3025 = vmatpush1.msra.mxu0 %v2821
    %3026 = vmatprep.subr.mxu0 %v2826
    %3027 = vmatpush1.msra.mxu0 %v2825
    %3028 = vmatprep.subr.mxu0 %v2830
    %3029 = vmatpush1.msra.mxu0 %v2829
    %3030 = vmatprep.subr.mxu0 %v2834
    %3031 = vmatpush1.msra.mxu0 %v2833
    %3032 = vmatprep.subr.mxu0 %v2838
    %3033 = vmatpush1.msra.mxu0 %v2837
    %3034 = vmatprep.subr.mxu0 %v2842
    %3035 = vmatpush1.msra.mxu0 %v2841
    %3036 = vmatprep.subr.mxu0 %v2846
    %3037 = vmatpush1.msra.mxu0 %v2845
    %3038 = vmatprep.subr.mxu0 %v2850
    %3039 = vmatpush1.msra.mxu0 %v2849
    %3040 = vmatprep.subr.mxu0 %v2854
    %3041 = vmatpush1.msra.mxu0 %v2853
    %3042 = vmatprep.subr.mxu0 %v2858
    %3043 = vmatpush1.msra.mxu0 %v2857
    %3044 = vmatprep.subr.mxu0 %v2862
    %3045 = vmatpush1.msra.mxu0 %v2861
    %3046 = vmatprep.subr.mxu0 %v2866
    %3047 = vmatpush1.msra.mxu0 %v2865
    %3048 = vmatprep.subr.mxu0 %v2870
    %3049 = vmatpush1.msra.mxu0 %v2869
    %3050 = vmatprep.subr.mxu0 %v2874
    %3051 = vmatpush1.msra.mxu0 %v2873
    %3052 = vmatprep.subr.mxu0 %v2878
    %3053 = vmatpush1.msra.mxu0 %v2877
    %3054 = vmatprep.subr.mxu0 %v2882
    %3055 = vmatpush1.msra.mxu0 %v2881
    %3056 = vmatprep.subr.mxu0 %v2886
    %3057 = vmatpush1.msra.mxu0 %v2885
    %3058 = vmatprep.subr.mxu0 %v2890
    %3059 = vmatpush1.msra.mxu0 %v2889
    %3060 = vmatprep.subr.mxu0 %v2894
    %3061 = vmatpush1.msra.mxu0 %v2893
    %3062 = vmatprep.subr.mxu0 %v2898
    %3063 = vmatpush1.msra.mxu0 %v2897
    %3064 = vmatprep.subr.mxu0 %v2902
    %3065 = vmatpush1.msra.mxu0 %v2901
    %3066 = vmatprep.subr.mxu0 %v2906
    %3067 = vmatpush1.msra.mxu0 %v2905
    %3068 = vmatprep.subr.mxu0 %v2910
    %3069 = vmatpush1.msra.mxu0 %v2909
    %3070 = vmatprep.subr.mxu0 %v2914
    %3071 = vmatpush1.msra.mxu0 %v2913
    %3072 = vmatprep.mubr.f32.mxu0 %v2551
    %3073 = vmatmul.mubr.f32.gmra.mrb[0].mxu0 %v2786
    %v3074 = vpop.f32.mrb[0].mxu0
    %v3075 = vadd.f32 %v2928, %v3074
    %v3076 = vpop.f32.mrb[0].mxu0
    %v3077 = vadd.f32 %v2932, %v3076
    %3078 = vdwg.mxu0
    %v3079 = vxor.u32 %v3004, 2147483648
    %v3080 = vmul.f32 %v3079, 1.442695
    %v3081 = vpow.pop %v3080
    %v3082 = vadd.f32 %v3081, 1.0
    %v3083 = vrcp.pop %v3082
    %v3084 = vmul.f32 1.0, %v3083
    %v3085 = vxor.u32 %v3006, 2147483648
    %v3086 = vmul.f32 %v3085, 1.442695
    %v3087 = vpow.pop %v3086
    %v3088 = vadd.f32 %v3087, 1.0
    %v3089 = vrcp.pop %v3088
    %v3090 = vmul.f32 1.0, %v3089
    %v3091 = vtanh.pop %v3075
    %v3092 = vxor.u32 %v3077, 2147483648
    %v3093 = vmul.f32 %v3092, 1.442695
    %v3094 = vpow.pop %v3093
    %v3095 = vadd.f32 %v3094, 1.0
    %v3096 = vrcp.pop %v3095
    %v3097 = vmul.f32 1.0, %v3096
    %v3098 = vmul.f32 %v3090, %v2549
    %v3099 = vmul.f32 %v3084, %v3091
    %v3100 = vadd.f32 %v3098, %v3099
    %v3101 = vtanh.pop %v3100
    %v3102 = vmul.f32 %v3097, %v3101
    %3103 = vst [vmem:[#allocation3 + $0x8] sm:$0x3] %v3102
    %v3104 = vld [vmem:[#allocation9] sm:$0xff]
    %v3105 = vld [vmem:[#allocation9 + $0x8] sm:$0xff]
    %v3106 = vld [vmem:[#allocation9 + $0x10] sm:$0xff]
    %v3107 = vld [vmem:[#allocation9 + $0x18] sm:$0xff]
    %v3108 = vld [vmem:[#allocation9 + $0x20] sm:$0xff]
    %v3109 = vld [vmem:[#allocation9 + $0x28] sm:$0xff]
    %v3110 = vld [vmem:[#allocation9 + $0x30] sm:$0xff]
    %v3111 = vld [vmem:[#allocation9 + $0x38] sm:$0xff]
    %v3112 = vld [vmem:[#allocation9 + $0x40] sm:$0xff]
    %v3113 = vld [vmem:[#allocation9 + $0x48] sm:$0xff]
    %v3114 = vld [vmem:[#allocation9 + $0x50] sm:$0xff]
    %v3115 = vld [vmem:[#allocation9 + $0x58] sm:$0xff]
    %v3116 = vld [vmem:[#allocation9 + $0x60] sm:$0xff]
    %v3117 = vld [vmem:[#allocation9 + $0x68] sm:$0xff]
    %v3118 = vld [vmem:[#allocation9 + $0x70] sm:$0xff]
    %v3119 = vld [vmem:[#allocation9 + $0x78] sm:$0xff]
    %v3120 = vld [vmem:[#allocation9 + $0x80] sm:$0xff]
    %v3121 = vld [vmem:[#allocation9 + $0x88] sm:$0xff]
    %v3122 = vld [vmem:[#allocation9 + $0x90] sm:$0xff]
    %v3123 = vld [vmem:[#allocation9 + $0x98] sm:$0xff]
    %v3124 = vld [vmem:[#allocation9 + $0xa0] sm:$0xff]
    %v3125 = vld [vmem:[#allocation9 + $0xa8] sm:$0xff]
    %v3126 = vld [vmem:[#allocation9 + $0xb0] sm:$0xff]
    %v3127 = vld [vmem:[#allocation9 + $0xb8] sm:$0xff]
    %v3128 = vld [vmem:[#allocation9 + $0xc0] sm:$0xff]
    %v3129 = vld [vmem:[#allocation9 + $0xc8] sm:$0xff]
    %v3130 = vld [vmem:[#allocation9 + $0xd0] sm:$0xff]
    %v3131 = vld [vmem:[#allocation9 + $0xd8] sm:$0xff]
    %v3132 = vld [vmem:[#allocation9 + $0xe0] sm:$0xff]
    %v3133 = vld [vmem:[#allocation9 + $0xe8] sm:$0xff]
    %v3134 = vld [vmem:[#allocation9 + $0xf0] sm:$0xff]
    %v3135 = vld [vmem:[#allocation9 + $0xf8] sm:$0xff]
    %v3136 = vld [vmem:[#allocation9 + $0x100] sm:$0xff]
    %v3137 = vld [vmem:[#allocation9 + $0x108] sm:$0xff]
    %v3138 = vld [vmem:[#allocation9 + $0x110] sm:$0xff]
    %v3139 = vld [vmem:[#allocation9 + $0x118] sm:$0xff]
    %v3140 = vld [vmem:[#allocation9 + $0x120] sm:$0xff]
    %v3141 = vld [vmem:[#allocation9 + $0x128] sm:$0xff]
    %v3142 = vld [vmem:[#allocation9 + $0x130] sm:$0xff]
    %v3143 = vld [vmem:[#allocation9 + $0x138] sm:$0xff]
    %v3144 = vld [vmem:[#allocation9 + $0x140] sm:$0xff]
    %v3145 = vld [vmem:[#allocation9 + $0x148] sm:$0xff]
    %v3146 = vld [vmem:[#allocation9 + $0x150] sm:$0xff]
    %v3147 = vld [vmem:[#allocation9 + $0x158] sm:$0xff]
    %v3148 = vld [vmem:[#allocation9 + $0x160] sm:$0xff]
    %v3149 = vld [vmem:[#allocation9 + $0x168] sm:$0xff]
    %v3150 = vld [vmem:[#allocation9 + $0x170] sm:$0xff]
    %v3151 = vld [vmem:[#allocation9 + $0x178] sm:$0xff]
    %v3152 = vld [vmem:[#allocation9 + $0x180] sm:$0xff]
    %v3153 = vld [vmem:[#allocation9 + $0x188] sm:$0xff]
    %v3154 = vld [vmem:[#allocation9 + $0x190] sm:$0xff]
    %v3155 = vld [vmem:[#allocation9 + $0x198] sm:$0xff]
    %v3156 = vld [vmem:[#allocation9 + $0x1a0] sm:$0xff]
    %v3157 = vld [vmem:[#allocation9 + $0x1a8] sm:$0xff]
    %v3158 = vld [vmem:[#allocation9 + $0x1b0] sm:$0xff]
    %v3159 = vld [vmem:[#allocation9 + $0x1b8] sm:$0xff]
    %v3160 = vld [vmem:[#allocation9 + $0x1c0] sm:$0xff]
    %v3161 = vld [vmem:[#allocation9 + $0x1c8] sm:$0xff]
    %v3162 = vld [vmem:[#allocation9 + $0x1d0] sm:$0xff]
    %v3163 = vld [vmem:[#allocation9 + $0x1d8] sm:$0xff]
    %v3164 = vld [vmem:[#allocation9 + $0x1e0] sm:$0xff]
    %v3165 = vld [vmem:[#allocation9 + $0x1e8] sm:$0xff]
    %v3166 = vld [vmem:[#allocation9 + $0x1f0] sm:$0xff]
    %v3167 = vld [vmem:[#allocation9 + $0x1f8] sm:$0xff]
    %v3168 = vld [vmem:[#allocation2 + $0x20] sm:$0xc]
    %v3169 = vld [vmem:[#allocation2 + $0x28] sm:$0xc]
    %v3170 = vld [vmem:[#allocation2 + $0x30] sm:$0xc]
    %v3171 = vld [vmem:[#allocation2 + $0x38] sm:$0xc]
    %v3176 = vrot.slane %v3168, 2
    %v3177 = vrot.slane %v3169, 2
    %v3178 = vrot.slane %v3170, 2
    %v3179 = vrot.slane %v3171, 2
    %3184 = vmatprep.subr.mxu0 %v3105
    %3185 = vmatpush1.msra.mxu0 %v3104
    %3186 = vmatprep.subr.mxu0 %v3109
    %3187 = vmatpush1.msra.mxu0 %v3108
    %3188 = vmatprep.subr.mxu0 %v3113
    %3189 = vmatpush1.msra.mxu0 %v3112
    %3190 = vmatprep.subr.mxu0 %v3117
    %3191 = vmatpush1.msra.mxu0 %v3116
    %3192 = vmatprep.subr.mxu0 %v3121
    %3193 = vmatpush1.msra.mxu0 %v3120
    %3194 = vmatprep.subr.mxu0 %v3125
    %3195 = vmatpush1.msra.mxu0 %v3124
    %3196 = vmatprep.subr.mxu0 %v3129
    %3197 = vmatpush1.msra.mxu0 %v3128
    %3198 = vmatprep.subr.mxu0 %v3133
    %3199 = vmatpush1.msra.mxu0 %v3132
    %3200 = vmatprep.subr.mxu0 %v3137
    %3201 = vmatpush1.msra.mxu0 %v3136
    %3202 = vmatprep.subr.mxu0 %v3141
    %3203 = vmatpush1.msra.mxu0 %v3140
    %3204 = vmatprep.subr.mxu0 %v3145
    %3205 = vmatpush1.msra.mxu0 %v3144
    %3206 = vmatprep.subr.mxu0 %v3149
    %3207 = vmatpush1.msra.mxu0 %v3148
    %3208 = vmatprep.subr.mxu0 %v3153
    %3209 = vmatpush1.msra.mxu0 %v3152
    %3210 = vmatprep.subr.mxu0 %v3157
    %3211 = vmatpush1.msra.mxu0 %v3156
    %3212 = vmatprep.subr.mxu0 %v3161
    %3213 = vmatpush1.msra.mxu0 %v3160
    %3214 = vmatprep.subr.mxu0 %v3165
    %3215 = vmatpush1.msra.mxu0 %v3164
    %3216 = vmatprep.subr.mxu0 0.0
    %3217 = vmatpush1.msra.mxu0 0.0
    %3218 = vmatprep.subr.mxu0 0.0
    %3219 = vmatpush1.msra.mxu0 0.0
    %3220 = vmatprep.subr.mxu0 0.0
    %3221 = vmatpush1.msra.mxu0 0.0
    %3222 = vmatprep.subr.mxu0 0.0
    %3223 = vmatpush1.msra.mxu0 0.0
    %3224 = vmatprep.subr.mxu0 0.0
    %3225 = vmatpush1.msra.mxu0 0.0
    %3226 = vmatprep.subr.mxu0 0.0
    %3227 = vmatpush1.msra.mxu0 0.0
    %3228 = vmatprep.subr.mxu0 0.0
    %3229 = vmatpush1.msra.mxu0 0.0
    %3230 = vmatprep.subr.mxu0 0.0
    %3231 = vmatpush1.msra.mxu0 0.0
    %3232 = vmatprep.subr.mxu0 0.0
    %3233 = vmatpush1.msra.mxu0 0.0
    %3234 = vmatprep.subr.mxu0 0.0
    %3235 = vmatpush1.msra.mxu0 0.0
    %3236 = vmatprep.subr.mxu0 0.0
    %3237 = vmatpush1.msra.mxu0 0.0
    %3238 = vmatprep.subr.mxu0 0.0
    %3239 = vmatpush1.msra.mxu0 0.0
    %3240 = vmatprep.subr.mxu0 0.0
    %3241 = vmatpush1.msra.mxu0 0.0
    %3242 = vmatprep.subr.mxu0 0.0
    %3243 = vmatpush1.msra.mxu0 0.0
    %3244 = vmatprep.subr.mxu0 0.0
    %3245 = vmatpush1.msra.mxu0 0.0
    %3246 = vmatprep.subr.mxu0 0.0
    %3247 = vmatpush1.msra.mxu0 0.0
    %3248 = vmatprep.mubr.f32.mxu0 0.0
    %3249 = vmatmul.mubr.f32.gmra.mrb[0].mxu0 %v2786
    %v3250 = vpop.f32.mrb[0].mxu0
    %v3251 = vadd.f32 %v3176, %v3250
    %v3252 = vpop.f32.mrb[0].mxu0
    %v3253 = vadd.f32 %v3177, %v3252
    %3254 = vdwg.mxu0
    %3255 = vmatprep.subr.mxu0 %v3107
    %3256 = vmatpush1.msra.mxu0 %v3106
    %3257 = vmatprep.subr.mxu0 %v3111
    %3258 = vmatpush1.msra.mxu0 %v3110
    %3259 = vmatprep.subr.mxu0 %v3115
    %3260 = vmatpush1.msra.mxu0 %v3114
    %3261 = vmatprep.subr.mxu0 %v3119
    %3262 = vmatpush1.msra.mxu0 %v3118
    %3263 = vmatprep.subr.mxu0 %v3123
    %3264 = vmatpush1.msra.mxu0 %v3122
    %3265 = vmatprep.subr.mxu0 %v3127
    %3266 = vmatpush1.msra.mxu0 %v3126
    %3267 = vmatprep.subr.mxu0 %v3131
    %3268 = vmatpush1.msra.mxu0 %v3130
    %3269 = vmatprep.subr.mxu0 %v3135
    %3270 = vmatpush1.msra.mxu0 %v3134
    %3271 = vmatprep.subr.mxu0 %v3139
    %3272 = vmatpush1.msra.mxu0 %v3138
    %3273 = vmatprep.subr.mxu0 %v3143
    %3274 = vmatpush1.msra.mxu0 %v3142
    %3275 = vmatprep.subr.mxu0 %v3147
    %3276 = vmatpush1.msra.mxu0 %v3146
    %3277 = vmatprep.subr.mxu0 %v3151
    %3278 = vmatpush1.msra.mxu0 %v3150
    %3279 = vmatprep.subr.mxu0 %v3155
    %3280 = vmatpush1.msra.mxu0 %v3154
    %3281 = vmatprep.subr.mxu0 %v3159
    %3282 = vmatpush1.msra.mxu0 %v3158
    %3283 = vmatprep.subr.mxu0 %v3163
    %3284 = vmatpush1.msra.mxu0 %v3162
    %3285 = vmatprep.subr.mxu0 %v3167
    %3286 = vmatpush1.msra.mxu0 %v3166
    %3287 = vmatprep.subr.mxu0 0.0
    %3288 = vmatpush1.msra.mxu0 0.0
    %3289 = vmatprep.subr.mxu0 0.0
    %3290 = vmatpush1.msra.mxu0 0.0
    %3291 = vmatprep.subr.mxu0 0.0
    %3292 = vmatpush1.msra.mxu0 0.0
    %3293 = vmatprep.subr.mxu0 0.0
    %3294 = vmatpush1.msra.mxu0 0.0
    %3295 = vmatprep.subr.mxu0 0.0
    %3296 = vmatpush1.msra.mxu0 0.0
    %3297 = vmatprep.subr.mxu0 0.0
    %3298 = vmatpush1.msra.mxu0 0.0
    %3299 = vmatprep.subr.mxu0 0.0
    %3300 = vmatpush1.msra.mxu0 0.0
    %3301 = vmatprep.subr.mxu0 0.0
    %3302 = vmatpush1.msra.mxu0 0.0
    %3303 = vmatprep.subr.mxu0 0.0
    %3304 = vmatpush1.msra.mxu0 0.0
    %3305 = vmatprep.subr.mxu0 0.0
    %3306 = vmatpush1.msra.mxu0 0.0
    %3307 = vmatprep.subr.mxu0 0.0
    %3308 = vmatpush1.msra.mxu0 0.0
    %3309 = vmatprep.subr.mxu0 0.0
    %3310 = vmatpush1.msra.mxu0 0.0
    %3311 = vmatprep.subr.mxu0 0.0
    %3312 = vmatpush1.msra.mxu0 0.0
    %3313 = vmatprep.subr.mxu0 0.0
    %3314 = vmatpush1.msra.mxu0 0.0
    %3315 = vmatprep.subr.mxu0 0.0
    %3316 = vmatpush1.msra.mxu0 0.0
    %3317 = vmatprep.subr.mxu0 0.0
    %3318 = vmatpush1.msra.mxu0 0.0
    %3319 = vmatprep.mubr.f32.mxu0 0.0
    %3320 = vmatmul.mubr.f32.gmra.mrb[0].mxu0 %v2786
    %v3321 = vpop.f32.mrb[0].mxu0
    %v3322 = vadd.f32 %v3178, %v3321
    %v3323 = vpop.f32.mrb[0].mxu0
    %v3324 = vadd.f32 %v3179, %v3323
    %3325 = vdwg.mxu0
    %v3326 = vxor.u32 %v3251, 2147483648
    %v3327 = vmul.f32 %v3326, 1.442695
    %v3328 = vpow.pop %v3327
    %v3329 = vadd.f32 %v3328, 1.0
    %v3330 = vrcp.pop %v3329
    %v3331 = vmul.f32 1.0, %v3330
    %v3332 = vxor.u32 %v3253, 2147483648
    %v3333 = vmul.f32 %v3332, 1.442695
    %v3334 = vpow.pop %v3333
    %v3335 = vadd.f32 %v3334, 1.0
    %v3336 = vrcp.pop %v3335
    %v3337 = vmul.f32 1.0, %v3336
    %v3338 = vtanh.pop %v3322
    %v3339 = vxor.u32 %v3324, 2147483648
    %v3340 = vmul.f32 %v3339, 1.442695
    %v3341 = vpow.pop %v3340
    %v3342 = vadd.f32 %v3341, 1.0
    %v3343 = vrcp.pop %v3342
    %v3344 = vmul.f32 1.0, %v3343
    %v3345 = vmul.f32 %v3337, %v2784
    %v3346 = vmul.f32 %v3331, %v3338
    %v3347 = vadd.f32 %v3345, %v3346
    %v3348 = vtanh.pop %v3347
    %v3349 = vmul.f32 %v3344, %v3348
    %v3350 = vld [vmem:[#allocation10] sm:$0xff]
    %v3351 = vld [vmem:[#allocation10 + $0x8] sm:$0xff]
    %v3352 = vld [vmem:[#allocation10 + $0x10] sm:$0xff]
    %v3353 = vld [vmem:[#allocation10 + $0x18] sm:$0xff]
    %v3354 = vld [vmem:[#allocation10 + $0x20] sm:$0xff]
    %v3355 = vld [vmem:[#allocation10 + $0x28] sm:$0xff]
    %v3356 = vld [vmem:[#allocation10 + $0x30] sm:$0xff]
    %v3357 = vld [vmem:[#allocation10 + $0x38] sm:$0xff]
    %v3358 = vld [vmem:[#allocation10 + $0x40] sm:$0xff]
    %v3359 = vld [vmem:[#allocation10 + $0x48] sm:$0xff]
    %v3360 = vld [vmem:[#allocation10 + $0x50] sm:$0xff]
    %v3361 = vld [vmem:[#allocation10 + $0x58] sm:$0xff]
    %v3362 = vld [vmem:[#allocation10 + $0x60] sm:$0xff]
    %v3363 = vld [vmem:[#allocation10 + $0x68] sm:$0xff]
    %v3364 = vld [vmem:[#allocation10 + $0x70] sm:$0xff]
    %v3365 = vld [vmem:[#allocation10 + $0x78] sm:$0xff]
    %v3366 = vld [vmem:[#allocation10 + $0x80] sm:$0xff]
    %v3367 = vld [vmem:[#allocation10 + $0x88] sm:$0xff]
    %v3368 = vld [vmem:[#allocation10 + $0x90] sm:$0xff]
    %v3369 = vld [vmem:[#allocation10 + $0x98] sm:$0xff]
    %v3370 = vld [vmem:[#allocation10 + $0xa0] sm:$0xff]
    %v3371 = vld [vmem:[#allocation10 + $0xa8] sm:$0xff]
    %v3372 = vld [vmem:[#allocation10 + $0xb0] sm:$0xff]
    %v3373 = vld [vmem:[#allocation10 + $0xb8] sm:$0xff]
    %v3374 = vld [vmem:[#allocation10 + $0xc0] sm:$0xff]
    %v3375 = vld [vmem:[#allocation10 + $0xc8] sm:$0xff]
    %v3376 = vld [vmem:[#allocation10 + $0xd0] sm:$0xff]
    %v3377 = vld [vmem:[#allocation10 + $0xd8] sm:$0xff]
    %v3378 = vld [vmem:[#allocation10 + $0xe0] sm:$0xff]
    %v3379 = vld [vmem:[#allocation10 + $0xe8] sm:$0xff]
    %v3380 = vld [vmem:[#allocation10 + $0xf0] sm:$0xff]
    %v3381 = vld [vmem:[#allocation10 + $0xf8] sm:$0xff]
    %v3382 = vld [vmem:[#allocation10 + $0x100] sm:$0xff]
    %v3383 = vld [vmem:[#allocation10 + $0x108] sm:$0xff]
    %v3384 = vld [vmem:[#allocation10 + $0x110] sm:$0xff]
    %v3385 = vld [vmem:[#allocation10 + $0x118] sm:$0xff]
    %v3386 = vld [vmem:[#allocation10 + $0x120] sm:$0xff]
    %v3387 = vld [vmem:[#allocation10 + $0x128] sm:$0xff]
    %v3388 = vld [vmem:[#allocation10 + $0x130] sm:$0xff]
    %v3389 = vld [vmem:[#allocation10 + $0x138] sm:$0xff]
    %v3390 = vld [vmem:[#allocation10 + $0x140] sm:$0xff]
    %v3391 = vld [vmem:[#allocation10 + $0x148] sm:$0xff]
    %v3392 = vld [vmem:[#allocation10 + $0x150] sm:$0xff]
    %v3393 = vld [vmem:[#allocation10 + $0x158] sm:$0xff]
    %v3394 = vld [vmem:[#allocation10 + $0x160] sm:$0xff]
    %v3395 = vld [vmem:[#allocation10 + $0x168] sm:$0xff]
    %v3396 = vld [vmem:[#allocation10 + $0x170] sm:$0xff]
    %v3397 = vld [vmem:[#allocation10 + $0x178] sm:$0xff]
    %v3398 = vld [vmem:[#allocation10 + $0x180] sm:$0xff]
    %v3399 = vld [vmem:[#allocation10 + $0x188] sm:$0xff]
    %v3400 = vld [vmem:[#allocation10 + $0x190] sm:$0xff]
    %v3401 = vld [vmem:[#allocation10 + $0x198] sm:$0xff]
    %v3402 = vld [vmem:[#allocation10 + $0x1a0] sm:$0xff]
    %v3403 = vld [vmem:[#allocation10 + $0x1a8] sm:$0xff]
    %v3404 = vld [vmem:[#allocation10 + $0x1b0] sm:$0xff]
    %v3405 = vld [vmem:[#allocation10 + $0x1b8] sm:$0xff]
    %v3406 = vld [vmem:[#allocation10 + $0x1c0] sm:$0xff]
    %v3407 = vld [vmem:[#allocation10 + $0x1c8] sm:$0xff]
    %v3408 = vld [vmem:[#allocation10 + $0x1d0] sm:$0xff]
    %v3409 = vld [vmem:[#allocation10 + $0x1d8] sm:$0xff]
    %v3410 = vld [vmem:[#allocation10 + $0x1e0] sm:$0xff]
    %v3411 = vld [vmem:[#allocation10 + $0x1e8] sm:$0xff]
    %v3412 = vld [vmem:[#allocation10 + $0x1f0] sm:$0xff]
    %v3413 = vld [vmem:[#allocation10 + $0x1f8] sm:$0xff]
    %v3414 = vld [vmem:[#allocation10 + $0x200] sm:$0xff]
    %v3415 = vld [vmem:[#allocation10 + $0x208] sm:$0xff]
    %v3416 = vld [vmem:[#allocation10 + $0x210] sm:$0xff]
    %v3417 = vld [vmem:[#allocation10 + $0x218] sm:$0xff]
    %v3418 = vld [vmem:[#allocation10 + $0x220] sm:$0xff]
    %v3419 = vld [vmem:[#allocation10 + $0x228] sm:$0xff]
    %v3420 = vld [vmem:[#allocation10 + $0x230] sm:$0xff]
    %v3421 = vld [vmem:[#allocation10 + $0x238] sm:$0xff]
    %v3422 = vld [vmem:[#allocation10 + $0x240] sm:$0xff]
    %v3423 = vld [vmem:[#allocation10 + $0x248] sm:$0xff]
    %v3424 = vld [vmem:[#allocation10 + $0x250] sm:$0xff]
    %v3425 = vld [vmem:[#allocation10 + $0x258] sm:$0xff]
    %v3426 = vld [vmem:[#allocation10 + $0x260] sm:$0xff]
    %v3427 = vld [vmem:[#allocation10 + $0x268] sm:$0xff]
    %v3428 = vld [vmem:[#allocation10 + $0x270] sm:$0xff]
    %v3429 = vld [vmem:[#allocation10 + $0x278] sm:$0xff]
    %v3430 = vld [vmem:[#allocation10 + $0x280] sm:$0xff]
    %v3431 = vld [vmem:[#allocation10 + $0x288] sm:$0xff]
    %v3432 = vld [vmem:[#allocation10 + $0x290] sm:$0xff]
    %v3433 = vld [vmem:[#allocation10 + $0x298] sm:$0xff]
    %v3434 = vld [vmem:[#allocation10 + $0x2a0] sm:$0xff]
    %v3435 = vld [vmem:[#allocation10 + $0x2a8] sm:$0xff]
    %v3436 = vld [vmem:[#allocation10 + $0x2b0] sm:$0xff]
    %v3437 = vld [vmem:[#allocation10 + $0x2b8] sm:$0xff]
    %v3438 = vld [vmem:[#allocation10 + $0x2c0] sm:$0xff]
    %v3439 = vld [vmem:[#allocation10 + $0x2c8] sm:$0xff]
    %v3440 = vld [vmem:[#allocation10 + $0x2d0] sm:$0xff]
    %v3441 = vld [vmem:[#allocation10 + $0x2d8] sm:$0xff]
    %v3442 = vld [vmem:[#allocation10 + $0x2e0] sm:$0xff]
    %v3443 = vld [vmem:[#allocation10 + $0x2e8] sm:$0xff]
    %v3444 = vld [vmem:[#allocation10 + $0x2f0] sm:$0xff]
    %v3445 = vld [vmem:[#allocation10 + $0x2f8] sm:$0xff]
    %v3446 = vld [vmem:[#allocation10 + $0x300] sm:$0xff]
    %v3447 = vld [vmem:[#allocation10 + $0x308] sm:$0xff]
    %v3448 = vld [vmem:[#allocation10 + $0x310] sm:$0xff]
    %v3449 = vld [vmem:[#allocation10 + $0x318] sm:$0xff]
    %v3450 = vld [vmem:[#allocation10 + $0x320] sm:$0xff]
    %v3451 = vld [vmem:[#allocation10 + $0x328] sm:$0xff]
    %v3452 = vld [vmem:[#allocation10 + $0x330] sm:$0xff]
    %v3453 = vld [vmem:[#allocation10 + $0x338] sm:$0xff]
    %v3454 = vld [vmem:[#allocation10 + $0x340] sm:$0xff]
    %v3455 = vld [vmem:[#allocation10 + $0x348] sm:$0xff]
    %v3456 = vld [vmem:[#allocation10 + $0x350] sm:$0xff]
    %v3457 = vld [vmem:[#allocation10 + $0x358] sm:$0xff]
    %v3458 = vld [vmem:[#allocation10 + $0x360] sm:$0xff]
    %v3459 = vld [vmem:[#allocation10 + $0x368] sm:$0xff]
    %v3460 = vld [vmem:[#allocation10 + $0x370] sm:$0xff]
    %v3461 = vld [vmem:[#allocation10 + $0x378] sm:$0xff]
    %v3462 = vld [vmem:[#allocation10 + $0x380] sm:$0xff]
    %v3463 = vld [vmem:[#allocation10 + $0x388] sm:$0xff]
    %v3464 = vld [vmem:[#allocation10 + $0x390] sm:$0xff]
    %v3465 = vld [vmem:[#allocation10 + $0x398] sm:$0xff]
    %v3466 = vld [vmem:[#allocation10 + $0x3a0] sm:$0xff]
    %v3467 = vld [vmem:[#allocation10 + $0x3a8] sm:$0xff]
    %v3468 = vld [vmem:[#allocation10 + $0x3b0] sm:$0xff]
    %v3469 = vld [vmem:[#allocation10 + $0x3b8] sm:$0xff]
    %v3470 = vld [vmem:[#allocation10 + $0x3c0] sm:$0xff]
    %v3471 = vld [vmem:[#allocation10 + $0x3c8] sm:$0xff]
    %v3472 = vld [vmem:[#allocation10 + $0x3d0] sm:$0xff]
    %v3473 = vld [vmem:[#allocation10 + $0x3d8] sm:$0xff]
    %v3474 = vld [vmem:[#allocation10 + $0x3e0] sm:$0xff]
    %v3475 = vld [vmem:[#allocation10 + $0x3e8] sm:$0xff]
    %v3476 = vld [vmem:[#allocation10 + $0x3f0] sm:$0xff]
    %v3477 = vld [vmem:[#allocation10 + $0x3f8] sm:$0xff]
    %v3478 = vld [vmem:[%s5] sm:$0xf]
    %v3480 = vlaneseq
    %v3481 = vshrl.u32 %v3480, 7
    %v3482 = vsub.s32 0, %v3481
    %v3483 = vrot.slane %v3478, %v3482
    %v3484 = vlaneseq
    %v3485 = vshrl.u32 %v3484, 7
    %v3486 = vsub.s32 1, %v3485
    %v3487 = vrot.slane %v3478, %v3486
    %v3488 = vlaneseq
    %v3489 = vshrl.u32 %v3488, 7
    %v3490 = vsub.s32 2, %v3489
    %v3491 = vrot.slane %v3478, %v3490
    %v3492 = vlaneseq
    %v3493 = vshrl.u32 %v3492, 7
    %v3494 = vsub.s32 3, %v3493
    %v3495 = vrot.slane %v3478, %v3494
    %3500 = vmatprep.subr.mxu0 %v3351
    %3501 = vmatpush1.msra.mxu0 %v3350
    %3502 = vmatprep.subr.mxu0 %v3355
    %3503 = vmatpush1.msra.mxu0 %v3354
    %3504 = vmatprep.subr.mxu0 %v3359
    %3505 = vmatpush1.msra.mxu0 %v3358
    %3506 = vmatprep.subr.mxu0 %v3363
    %3507 = vmatpush1.msra.mxu0 %v3362
    %3508 = vmatprep.subr.mxu0 %v3367
    %3509 = vmatpush1.msra.mxu0 %v3366
    %3510 = vmatprep.subr.mxu0 %v3371
    %3511 = vmatpush1.msra.mxu0 %v3370
    %3512 = vmatprep.subr.mxu0 %v3375
    %3513 = vmatpush1.msra.mxu0 %v3374
    %3514 = vmatprep.subr.mxu0 %v3379
    %3515 = vmatpush1.msra.mxu0 %v3378
    %3516 = vmatprep.subr.mxu0 %v3383
    %3517 = vmatpush1.msra.mxu0 %v3382
    %3518 = vmatprep.subr.mxu0 %v3387
    %3519 = vmatpush1.msra.mxu0 %v3386
    %3520 = vmatprep.subr.mxu0 %v3391
    %3521 = vmatpush1.msra.mxu0 %v3390
    %3522 = vmatprep.subr.mxu0 %v3395
    %3523 = vmatpush1.msra.mxu0 %v3394
    %3524 = vmatprep.subr.mxu0 %v3399
    %3525 = vmatpush1.msra.mxu0 %v3398
    %3526 = vmatprep.subr.mxu0 %v3403
    %3527 = vmatpush1.msra.mxu0 %v3402
    %3528 = vmatprep.subr.mxu0 %v3407
    %3529 = vmatpush1.msra.mxu0 %v3406
    %3530 = vmatprep.subr.mxu0 %v3411
    %3531 = vmatpush1.msra.mxu0 %v3410
    %3532 = vmatprep.subr.mxu0 %v3415
    %3533 = vmatpush1.msra.mxu0 %v3414
    %3534 = vmatprep.subr.mxu0 %v3419
    %3535 = vmatpush1.msra.mxu0 %v3418
    %3536 = vmatprep.subr.mxu0 %v3423
    %3537 = vmatpush1.msra.mxu0 %v3422
    %3538 = vmatprep.subr.mxu0 %v3427
    %3539 = vmatpush1.msra.mxu0 %v3426
    %3540 = vmatprep.subr.mxu0 %v3431
    %3541 = vmatpush1.msra.mxu0 %v3430
    %3542 = vmatprep.subr.mxu0 %v3435
    %3543 = vmatpush1.msra.mxu0 %v3434
    %3544 = vmatprep.subr.mxu0 %v3439
    %3545 = vmatpush1.msra.mxu0 %v3438
    %3546 = vmatprep.subr.mxu0 %v3443
    %3547 = vmatpush1.msra.mxu0 %v3442
    %3548 = vmatprep.subr.mxu0 %v3447
    %3549 = vmatpush1.msra.mxu0 %v3446
    %3550 = vmatprep.subr.mxu0 %v3451
    %3551 = vmatpush1.msra.mxu0 %v3450
    %3552 = vmatprep.subr.mxu0 %v3455
    %3553 = vmatpush1.msra.mxu0 %v3454
    %3554 = vmatprep.subr.mxu0 %v3459
    %3555 = vmatpush1.msra.mxu0 %v3458
    %3556 = vmatprep.subr.mxu0 %v3463
    %3557 = vmatpush1.msra.mxu0 %v3462
    %3558 = vmatprep.subr.mxu0 %v3467
    %3559 = vmatpush1.msra.mxu0 %v3466
    %3560 = vmatprep.subr.mxu0 %v3471
    %3561 = vmatpush1.msra.mxu0 %v3470
    %3562 = vmatprep.subr.mxu0 %v3475
    %3563 = vmatpush1.msra.mxu0 %v3474
    %3564 = vmatprep.mubr.f32.mxu0 %v3102
    %3565 = vmatmul.mubr.f32.gmra.mrb[0].mxu0 %v3349
    %v3566 = vpop.f32.mrb[0].mxu0
    %v3567 = vadd.f32 %v3483, %v3566
    %v3568 = vpop.f32.mrb[0].mxu0
    %v3569 = vadd.f32 %v3487, %v3568
    %3570 = vdwg.mxu0
    %3571 = vmatprep.subr.mxu0 %v3353
    %3572 = vmatpush1.msra.mxu0 %v3352
    %3573 = vmatprep.subr.mxu0 %v3357
    %3574 = vmatpush1.msra.mxu0 %v3356
    %3575 = vmatprep.subr.mxu0 %v3361
    %3576 = vmatpush1.msra.mxu0 %v3360
    %3577 = vmatprep.subr.mxu0 %v3365
    %3578 = vmatpush1.msra.mxu0 %v3364
    %3579 = vmatprep.subr.mxu0 %v3369
    %3580 = vmatpush1.msra.mxu0 %v3368
    %3581 = vmatprep.subr.mxu0 %v3373
    %3582 = vmatpush1.msra.mxu0 %v3372
    %3583 = vmatprep.subr.mxu0 %v3377
    %3584 = vmatpush1.msra.mxu0 %v3376
    %3585 = vmatprep.subr.mxu0 %v3381
    %3586 = vmatpush1.msra.mxu0 %v3380
    %3587 = vmatprep.subr.mxu0 %v3385
    %3588 = vmatpush1.msra.mxu0 %v3384
    %3589 = vmatprep.subr.mxu0 %v3389
    %3590 = vmatpush1.msra.mxu0 %v3388
    %3591 = vmatprep.subr.mxu0 %v3393
    %3592 = vmatpush1.msra.mxu0 %v3392
    %3593 = vmatprep.subr.mxu0 %v3397
    %3594 = vmatpush1.msra.mxu0 %v3396
    %3595 = vmatprep.subr.mxu0 %v3401
    %3596 = vmatpush1.msra.mxu0 %v3400
    %3597 = vmatprep.subr.mxu0 %v3405
    %3598 = vmatpush1.msra.mxu0 %v3404
    %3599 = vmatprep.subr.mxu0 %v3409
    %3600 = vmatpush1.msra.mxu0 %v3408
    %3601 = vmatprep.subr.mxu0 %v3413
    %3602 = vmatpush1.msra.mxu0 %v3412
    %3603 = vmatprep.subr.mxu0 %v3417
    %3604 = vmatpush1.msra.mxu0 %v3416
    %3605 = vmatprep.subr.mxu0 %v3421
    %3606 = vmatpush1.msra.mxu0 %v3420
    %3607 = vmatprep.subr.mxu0 %v3425
    %3608 = vmatpush1.msra.mxu0 %v3424
    %3609 = vmatprep.subr.mxu0 %v3429
    %3610 = vmatpush1.msra.mxu0 %v3428
    %3611 = vmatprep.subr.mxu0 %v3433
    %3612 = vmatpush1.msra.mxu0 %v3432
    %3613 = vmatprep.subr.mxu0 %v3437
    %3614 = vmatpush1.msra.mxu0 %v3436
    %3615 = vmatprep.subr.mxu0 %v3441
    %3616 = vmatpush1.msra.mxu0 %v3440
    %3617 = vmatprep.subr.mxu0 %v3445
    %3618 = vmatpush1.msra.mxu0 %v3444
    %3619 = vmatprep.subr.mxu0 %v3449
    %3620 = vmatpush1.msra.mxu0 %v3448
    %3621 = vmatprep.subr.mxu0 %v3453
    %3622 = vmatpush1.msra.mxu0 %v3452
    %3623 = vmatprep.subr.mxu0 %v3457
    %3624 = vmatpush1.msra.mxu0 %v3456
    %3625 = vmatprep.subr.mxu0 %v3461
    %3626 = vmatpush1.msra.mxu0 %v3460
    %3627 = vmatprep.subr.mxu0 %v3465
    %3628 = vmatpush1.msra.mxu0 %v3464
    %3629 = vmatprep.subr.mxu0 %v3469
    %3630 = vmatpush1.msra.mxu0 %v3468
    %3631 = vmatprep.subr.mxu0 %v3473
    %3632 = vmatpush1.msra.mxu0 %v3472
    %3633 = vmatprep.subr.mxu0 %v3477
    %3634 = vmatpush1.msra.mxu0 %v3476
    %3635 = vmatprep.mubr.f32.mxu0 %v3102
    %3636 = vmatmul.mubr.f32.gmra.mrb[0].mxu0 %v3349
    %v3637 = vpop.f32.mrb[0].mxu0
    %v3638 = vadd.f32 %v3491, %v3637
    %v3639 = vpop.f32.mrb[0].mxu0
    %v3640 = vadd.f32 %v3495, %v3639
    %3641 = vdwg.mxu0
    %v3642 = vxor.u32 %v3567, 2147483648
    %v3643 = vmul.f32 %v3642, 1.442695
    %v3644 = vpow.pop %v3643
    %v3645 = vadd.f32 %v3644, 1.0
    %v3646 = vrcp.pop %v3645
    %v3647 = vmul.f32 1.0, %v3646
    %v3648 = vxor.u32 %v3569, 2147483648
    %v3649 = vmul.f32 %v3648, 1.442695
    %v3650 = vpow.pop %v3649
    %v3651 = vadd.f32 %v3650, 1.0
    %v3652 = vrcp.pop %v3651
    %v3653 = vmul.f32 1.0, %v3652
    %v3654 = vtanh.pop %v3638
    %v3655 = vxor.u32 %v3640, 2147483648
    %v3656 = vmul.f32 %v3655, 1.442695
    %v3657 = vpow.pop %v3656
    %v3658 = vadd.f32 %v3657, 1.0
    %v3659 = vrcp.pop %v3658
    %v3660 = vmul.f32 1.0, %v3659
    %v3661 = vmul.f32 %v3653, %v3100
    %v3662 = vmul.f32 %v3647, %v3654
    %v3663 = vadd.f32 %v3661, %v3662
    %v3664 = vtanh.pop %v3663
    %v3665 = vmul.f32 %v3660, %v3664
    %3666 = vst [vmem:[#allocation3 + $0xa] sm:$0x3] %v3665
    %v3667 = vld [vmem:[#allocation9] sm:$0xff]
    %v3668 = vld [vmem:[#allocation9 + $0x8] sm:$0xff]
    %v3669 = vld [vmem:[#allocation9 + $0x10] sm:$0xff]
    %v3670 = vld [vmem:[#allocation9 + $0x18] sm:$0xff]
    %v3671 = vld [vmem:[#allocation9 + $0x20] sm:$0xff]
    %v3672 = vld [vmem:[#allocation9 + $0x28] sm:$0xff]
    %v3673 = vld [vmem:[#allocation9 + $0x30] sm:$0xff]
    %v3674 = vld [vmem:[#allocation9 + $0x38] sm:$0xff]
    %v3675 = vld [vmem:[#allocation9 + $0x40] sm:$0xff]
    %v3676 = vld [vmem:[#allocation9 + $0x48] sm:$0xff]
    %v3677 = vld [vmem:[#allocation9 + $0x50] sm:$0xff]
    %v3678 = vld [vmem:[#allocation9 + $0x58] sm:$0xff]
    %v3679 = vld [vmem:[#allocation9 + $0x60] sm:$0xff]
    %v3680 = vld [vmem:[#allocation9 + $0x68] sm:$0xff]
    %v3681 = vld [vmem:[#allocation9 + $0x70] sm:$0xff]
    %v3682 = vld [vmem:[#allocation9 + $0x78] sm:$0xff]
    %v3683 = vld [vmem:[#allocation9 + $0x80] sm:$0xff]
    %v3684 = vld [vmem:[#allocation9 + $0x88] sm:$0xff]
    %v3685 = vld [vmem:[#allocation9 + $0x90] sm:$0xff]
    %v3686 = vld [vmem:[#allocation9 + $0x98] sm:$0xff]
    %v3687 = vld [vmem:[#allocation9 + $0xa0] sm:$0xff]
    %v3688 = vld [vmem:[#allocation9 + $0xa8] sm:$0xff]
    %v3689 = vld [vmem:[#allocation9 + $0xb0] sm:$0xff]
    %v3690 = vld [vmem:[#allocation9 + $0xb8] sm:$0xff]
    %v3691 = vld [vmem:[#allocation9 + $0xc0] sm:$0xff]
    %v3692 = vld [vmem:[#allocation9 + $0xc8] sm:$0xff]
    %v3693 = vld [vmem:[#allocation9 + $0xd0] sm:$0xff]
    %v3694 = vld [vmem:[#allocation9 + $0xd8] sm:$0xff]
    %v3695 = vld [vmem:[#allocation9 + $0xe0] sm:$0xff]
    %v3696 = vld [vmem:[#allocation9 + $0xe8] sm:$0xff]
    %v3697 = vld [vmem:[#allocation9 + $0xf0] sm:$0xff]
    %v3698 = vld [vmem:[#allocation9 + $0xf8] sm:$0xff]
    %v3699 = vld [vmem:[#allocation9 + $0x100] sm:$0xff]
    %v3700 = vld [vmem:[#allocation9 + $0x108] sm:$0xff]
    %v3701 = vld [vmem:[#allocation9 + $0x110] sm:$0xff]
    %v3702 = vld [vmem:[#allocation9 + $0x118] sm:$0xff]
    %v3703 = vld [vmem:[#allocation9 + $0x120] sm:$0xff]
    %v3704 = vld [vmem:[#allocation9 + $0x128] sm:$0xff]
    %v3705 = vld [vmem:[#allocation9 + $0x130] sm:$0xff]
    %v3706 = vld [vmem:[#allocation9 + $0x138] sm:$0xff]
    %v3707 = vld [vmem:[#allocation9 + $0x140] sm:$0xff]
    %v3708 = vld [vmem:[#allocation9 + $0x148] sm:$0xff]
    %v3709 = vld [vmem:[#allocation9 + $0x150] sm:$0xff]
    %v3710 = vld [vmem:[#allocation9 + $0x158] sm:$0xff]
    %v3711 = vld [vmem:[#allocation9 + $0x160] sm:$0xff]
    %v3712 = vld [vmem:[#allocation9 + $0x168] sm:$0xff]
    %v3713 = vld [vmem:[#allocation9 + $0x170] sm:$0xff]
    %v3714 = vld [vmem:[#allocation9 + $0x178] sm:$0xff]
    %v3715 = vld [vmem:[#allocation9 + $0x180] sm:$0xff]
    %v3716 = vld [vmem:[#allocation9 + $0x188] sm:$0xff]
    %v3717 = vld [vmem:[#allocation9 + $0x190] sm:$0xff]
    %v3718 = vld [vmem:[#allocation9 + $0x198] sm:$0xff]
    %v3719 = vld [vmem:[#allocation9 + $0x1a0] sm:$0xff]
    %v3720 = vld [vmem:[#allocation9 + $0x1a8] sm:$0xff]
    %v3721 = vld [vmem:[#allocation9 + $0x1b0] sm:$0xff]
    %v3722 = vld [vmem:[#allocation9 + $0x1b8] sm:$0xff]
    %v3723 = vld [vmem:[#allocation9 + $0x1c0] sm:$0xff]
    %v3724 = vld [vmem:[#allocation9 + $0x1c8] sm:$0xff]
    %v3725 = vld [vmem:[#allocation9 + $0x1d0] sm:$0xff]
    %v3726 = vld [vmem:[#allocation9 + $0x1d8] sm:$0xff]
    %v3727 = vld [vmem:[#allocation9 + $0x1e0] sm:$0xff]
    %v3728 = vld [vmem:[#allocation9 + $0x1e8] sm:$0xff]
    %v3729 = vld [vmem:[#allocation9 + $0x1f0] sm:$0xff]
    %v3730 = vld [vmem:[#allocation9 + $0x1f8] sm:$0xff]
    %v3731 = vld [vmem:[#allocation2 + $0x20] sm:$0x30]
    %v3732 = vld [vmem:[#allocation2 + $0x28] sm:$0x30]
    %v3733 = vld [vmem:[#allocation2 + $0x30] sm:$0x30]
    %v3734 = vld [vmem:[#allocation2 + $0x38] sm:$0x30]
    %v3739 = vrot.slane %v3731, 4
    %v3740 = vrot.slane %v3732, 4
    %v3741 = vrot.slane %v3733, 4
    %v3742 = vrot.slane %v3734, 4
    %3747 = vmatprep.subr.mxu0 %v3668
    %3748 = vmatpush1.msra.mxu0 %v3667
    %3749 = vmatprep.subr.mxu0 %v3672
    %3750 = vmatpush1.msra.mxu0 %v3671
    %3751 = vmatprep.subr.mxu0 %v3676
    %3752 = vmatpush1.msra.mxu0 %v3675
    %3753 = vmatprep.subr.mxu0 %v3680
    %3754 = vmatpush1.msra.mxu0 %v3679
    %3755 = vmatprep.subr.mxu0 %v3684
    %3756 = vmatpush1.msra.mxu0 %v3683
    %3757 = vmatprep.subr.mxu0 %v3688
    %3758 = vmatpush1.msra.mxu0 %v3687
    %3759 = vmatprep.subr.mxu0 %v3692
    %3760 = vmatpush1.msra.mxu0 %v3691
    %3761 = vmatprep.subr.mxu0 %v3696
    %3762 = vmatpush1.msra.mxu0 %v3695
    %3763 = vmatprep.subr.mxu0 %v3700
    %3764 = vmatpush1.msra.mxu0 %v3699
    %3765 = vmatprep.subr.mxu0 %v3704
    %3766 = vmatpush1.msra.mxu0 %v3703
    %3767 = vmatprep.subr.mxu0 %v3708
    %3768 = vmatpush1.msra.mxu0 %v3707
    %3769 = vmatprep.subr.mxu0 %v3712
    %3770 = vmatpush1.msra.mxu0 %v3711
    %3771 = vmatprep.subr.mxu0 %v3716
    %3772 = vmatpush1.msra.mxu0 %v3715
    %3773 = vmatprep.subr.mxu0 %v3720
    %3774 = vmatpush1.msra.mxu0 %v3719
    %3775 = vmatprep.subr.mxu0 %v3724
    %3776 = vmatpush1.msra.mxu0 %v3723
    %3777 = vmatprep.subr.mxu0 %v3728
    %3778 = vmatpush1.msra.mxu0 %v3727
    %3779 = vmatprep.subr.mxu0 0.0
    %3780 = vmatpush1.msra.mxu0 0.0
    %3781 = vmatprep.subr.mxu0 0.0
    %3782 = vmatpush1.msra.mxu0 0.0
    %3783 = vmatprep.subr.mxu0 0.0
    %3784 = vmatpush1.msra.mxu0 0.0
    %3785 = vmatprep.subr.mxu0 0.0
    %3786 = vmatpush1.msra.mxu0 0.0
    %3787 = vmatprep.subr.mxu0 0.0
    %3788 = vmatpush1.msra.mxu0 0.0
    %3789 = vmatprep.subr.mxu0 0.0
    %3790 = vmatpush1.msra.mxu0 0.0
    %3791 = vmatprep.subr.mxu0 0.0
    %3792 = vmatpush1.msra.mxu0 0.0
    %3793 = vmatprep.subr.mxu0 0.0
    %3794 = vmatpush1.msra.mxu0 0.0
    %3795 = vmatprep.subr.mxu0 0.0
    %3796 = vmatpush1.msra.mxu0 0.0
    %3797 = vmatprep.subr.mxu0 0.0
    %3798 = vmatpush1.msra.mxu0 0.0
    %3799 = vmatprep.subr.mxu0 0.0
    %3800 = vmatpush1.msra.mxu0 0.0
    %3801 = vmatprep.subr.mxu0 0.0
    %3802 = vmatpush1.msra.mxu0 0.0
    %3803 = vmatprep.subr.mxu0 0.0
    %3804 = vmatpush1.msra.mxu0 0.0
    %3805 = vmatprep.subr.mxu0 0.0
    %3806 = vmatpush1.msra.mxu0 0.0
    %3807 = vmatprep.subr.mxu0 0.0
    %3808 = vmatpush1.msra.mxu0 0.0
    %3809 = vmatprep.subr.mxu0 0.0
    %3810 = vmatpush1.msra.mxu0 0.0
    %3811 = vmatprep.mubr.f32.mxu0 0.0
    %3812 = vmatmul.mubr.f32.gmra.mrb[0].mxu0 %v3349
    %v3813 = vpop.f32.mrb[0].mxu0
    %v3814 = vadd.f32 %v3739, %v3813
    %v3815 = vpop.f32.mrb[0].mxu0
    %v3816 = vadd.f32 %v3740, %v3815
    %3817 = vdwg.mxu0
    %3818 = vmatprep.subr.mxu0 %v3670
    %3819 = vmatpush1.msra.mxu0 %v3669
    %3820 = vmatprep.subr.mxu0 %v3674
    %3821 = vmatpush1.msra.mxu0 %v3673
    %3822 = vmatprep.subr.mxu0 %v3678
    %3823 = vmatpush1.msra.mxu0 %v3677
    %3824 = vmatprep.subr.mxu0 %v3682
    %3825 = vmatpush1.msra.mxu0 %v3681
    %3826 = vmatprep.subr.mxu0 %v3686
    %3827 = vmatpush1.msra.mxu0 %v3685
    %3828 = vmatprep.subr.mxu0 %v3690
    %3829 = vmatpush1.msra.mxu0 %v3689
    %3830 = vmatprep.subr.mxu0 %v3694
    %3831 = vmatpush1.msra.mxu0 %v3693
    %3832 = vmatprep.subr.mxu0 %v3698
    %3833 = vmatpush1.msra.mxu0 %v3697
    %3834 = vmatprep.subr.mxu0 %v3702
    %3835 = vmatpush1.msra.mxu0 %v3701
    %3836 = vmatprep.subr.mxu0 %v3706
    %3837 = vmatpush1.msra.mxu0 %v3705
    %3838 = vmatprep.subr.mxu0 %v3710
    %3839 = vmatpush1.msra.mxu0 %v3709
    %3840 = vmatprep.subr.mxu0 %v3714
    %3841 = vmatpush1.msra.mxu0 %v3713
    %3842 = vmatprep.subr.mxu0 %v3718
    %3843 = vmatpush1.msra.mxu0 %v3717
    %3844 = vmatprep.subr.mxu0 %v3722
    %3845 = vmatpush1.msra.mxu0 %v3721
    %3846 = vmatprep.subr.mxu0 %v3726
    %3847 = vmatpush1.msra.mxu0 %v3725
    %3848 = vmatprep.subr.mxu0 %v3730
    %3849 = vmatpush1.msra.mxu0 %v3729
    %3850 = vmatprep.subr.mxu0 0.0
    %3851 = vmatpush1.msra.mxu0 0.0
    %3852 = vmatprep.subr.mxu0 0.0
    %3853 = vmatpush1.msra.mxu0 0.0
    %3854 = vmatprep.subr.mxu0 0.0
    %3855 = vmatpush1.msra.mxu0 0.0
    %3856 = vmatprep.subr.mxu0 0.0
    %3857 = vmatpush1.msra.mxu0 0.0
    %3858 = vmatprep.subr.mxu0 0.0
    %3859 = vmatpush1.msra.mxu0 0.0
    %3860 = vmatprep.subr.mxu0 0.0
    %3861 = vmatpush1.msra.mxu0 0.0
    %3862 = vmatprep.subr.mxu0 0.0
    %3863 = vmatpush1.msra.mxu0 0.0
    %3864 = vmatprep.subr.mxu0 0.0
    %3865 = vmatpush1.msra.mxu0 0.0
    %3866 = vmatprep.subr.mxu0 0.0
    %3867 = vmatpush1.msra.mxu0 0.0
    %3868 = vmatprep.subr.mxu0 0.0
    %3869 = vmatpush1.msra.mxu0 0.0
    %3870 = vmatprep.subr.mxu0 0.0
    %3871 = vmatpush1.msra.mxu0 0.0
    %3872 = vmatprep.subr.mxu0 0.0
    %3873 = vmatpush1.msra.mxu0 0.0
    %3874 = vmatprep.subr.mxu0 0.0
    %3875 = vmatpush1.msra.mxu0 0.0
    %3876 = vmatprep.subr.mxu0 0.0
    %3877 = vmatpush1.msra.mxu0 0.0
    %3878 = vmatprep.subr.mxu0 0.0
    %3879 = vmatpush1.msra.mxu0 0.0
    %3880 = vmatprep.subr.mxu0 0.0
    %3881 = vmatpush1.msra.mxu0 0.0
    %3882 = vmatprep.mubr.f32.mxu0 0.0
    %3883 = vmatmul.mubr.f32.gmra.mrb[0].mxu0 %v3349
    %v3884 = vpop.f32.mrb[0].mxu0
    %v3885 = vadd.f32 %v3741, %v3884
    %v3886 = vpop.f32.mrb[0].mxu0
    %v3887 = vadd.f32 %v3742, %v3886
    %3888 = vdwg.mxu0
    %v3889 = vxor.u32 %v3814, 2147483648
    %v3890 = vmul.f32 %v3889, 1.442695
    %v3891 = vpow.pop %v3890
    %v3892 = vadd.f32 %v3891, 1.0
    %v3893 = vrcp.pop %v3892
    %v3894 = vmul.f32 1.0, %v3893
    %v3895 = vxor.u32 %v3816, 2147483648
    %v3896 = vmul.f32 %v3895, 1.442695
    %v3897 = vpow.pop %v3896
    %v3898 = vadd.f32 %v3897, 1.0
    %v3899 = vrcp.pop %v3898
    %v3900 = vmul.f32 1.0, %v3899
    %v3901 = vtanh.pop %v3885
    %v3902 = vxor.u32 %v3887, 2147483648
    %v3903 = vmul.f32 %v3902, 1.442695
    %v3904 = vpow.pop %v3903
    %v3905 = vadd.f32 %v3904, 1.0
    %v3906 = vrcp.pop %v3905
    %v3907 = vmul.f32 1.0, %v3906
    %v3908 = vmul.f32 %v3900, %v3347
    %v3909 = vmul.f32 %v3894, %v3901
    %v3910 = vadd.f32 %v3908, %v3909
    %v3911 = vtanh.pop %v3910
    %v3912 = vmul.f32 %v3907, %v3911
    %v3913 = vld [vmem:[#allocation10] sm:$0xff]
    %v3914 = vld [vmem:[#allocation10 + $0x8] sm:$0xff]
    %v3915 = vld [vmem:[#allocation10 + $0x10] sm:$0xff]
    %v3916 = vld [vmem:[#allocation10 + $0x18] sm:$0xff]
    %v3917 = vld [vmem:[#allocation10 + $0x20] sm:$0xff]
    %v3918 = vld [vmem:[#allocation10 + $0x28] sm:$0xff]
    %v3919 = vld [vmem:[#allocation10 + $0x30] sm:$0xff]
    %v3920 = vld [vmem:[#allocation10 + $0x38] sm:$0xff]
    %v3921 = vld [vmem:[#allocation10 + $0x40] sm:$0xff]
    %v3922 = vld [vmem:[#allocation10 + $0x48] sm:$0xff]
    %v3923 = vld [vmem:[#allocation10 + $0x50] sm:$0xff]
    %v3924 = vld [vmem:[#allocation10 + $0x58] sm:$0xff]
    %v3925 = vld [vmem:[#allocation10 + $0x60] sm:$0xff]
    %v3926 = vld [vmem:[#allocation10 + $0x68] sm:$0xff]
    %v3927 = vld [vmem:[#allocation10 + $0x70] sm:$0xff]
    %v3928 = vld [vmem:[#allocation10 + $0x78] sm:$0xff]
    %v3929 = vld [vmem:[#allocation10 + $0x80] sm:$0xff]
    %v3930 = vld [vmem:[#allocation10 + $0x88] sm:$0xff]
    %v3931 = vld [vmem:[#allocation10 + $0x90] sm:$0xff]
    %v3932 = vld [vmem:[#allocation10 + $0x98] sm:$0xff]
    %v3933 = vld [vmem:[#allocation10 + $0xa0] sm:$0xff]
    %v3934 = vld [vmem:[#allocation10 + $0xa8] sm:$0xff]
    %v3935 = vld [vmem:[#allocation10 + $0xb0] sm:$0xff]
    %v3936 = vld [vmem:[#allocation10 + $0xb8] sm:$0xff]
    %v3937 = vld [vmem:[#allocation10 + $0xc0] sm:$0xff]
    %v3938 = vld [vmem:[#allocation10 + $0xc8] sm:$0xff]
    %v3939 = vld [vmem:[#allocation10 + $0xd0] sm:$0xff]
    %v3940 = vld [vmem:[#allocation10 + $0xd8] sm:$0xff]
    %v3941 = vld [vmem:[#allocation10 + $0xe0] sm:$0xff]
    %v3942 = vld [vmem:[#allocation10 + $0xe8] sm:$0xff]
    %v3943 = vld [vmem:[#allocation10 + $0xf0] sm:$0xff]
    %v3944 = vld [vmem:[#allocation10 + $0xf8] sm:$0xff]
    %v3945 = vld [vmem:[#allocation10 + $0x100] sm:$0xff]
    %v3946 = vld [vmem:[#allocation10 + $0x108] sm:$0xff]
    %v3947 = vld [vmem:[#allocation10 + $0x110] sm:$0xff]
    %v3948 = vld [vmem:[#allocation10 + $0x118] sm:$0xff]
    %v3949 = vld [vmem:[#allocation10 + $0x120] sm:$0xff]
    %v3950 = vld [vmem:[#allocation10 + $0x128] sm:$0xff]
    %v3951 = vld [vmem:[#allocation10 + $0x130] sm:$0xff]
    %v3952 = vld [vmem:[#allocation10 + $0x138] sm:$0xff]
    %v3953 = vld [vmem:[#allocation10 + $0x140] sm:$0xff]
    %v3954 = vld [vmem:[#allocation10 + $0x148] sm:$0xff]
    %v3955 = vld [vmem:[#allocation10 + $0x150] sm:$0xff]
    %v3956 = vld [vmem:[#allocation10 + $0x158] sm:$0xff]
    %v3957 = vld [vmem:[#allocation10 + $0x160] sm:$0xff]
    %v3958 = vld [vmem:[#allocation10 + $0x168] sm:$0xff]
    %v3959 = vld [vmem:[#allocation10 + $0x170] sm:$0xff]
    %v3960 = vld [vmem:[#allocation10 + $0x178] sm:$0xff]
    %v3961 = vld [vmem:[#allocation10 + $0x180] sm:$0xff]
    %v3962 = vld [vmem:[#allocation10 + $0x188] sm:$0xff]
    %v3963 = vld [vmem:[#allocation10 + $0x190] sm:$0xff]
    %v3964 = vld [vmem:[#allocation10 + $0x198] sm:$0xff]
    %v3965 = vld [vmem:[#allocation10 + $0x1a0] sm:$0xff]
    %v3966 = vld [vmem:[#allocation10 + $0x1a8] sm:$0xff]
    %v3967 = vld [vmem:[#allocation10 + $0x1b0] sm:$0xff]
    %v3968 = vld [vmem:[#allocation10 + $0x1b8] sm:$0xff]
    %v3969 = vld [vmem:[#allocation10 + $0x1c0] sm:$0xff]
    %v3970 = vld [vmem:[#allocation10 + $0x1c8] sm:$0xff]
    %v3971 = vld [vmem:[#allocation10 + $0x1d0] sm:$0xff]
    %v3972 = vld [vmem:[#allocation10 + $0x1d8] sm:$0xff]
    %v3973 = vld [vmem:[#allocation10 + $0x1e0] sm:$0xff]
    %v3974 = vld [vmem:[#allocation10 + $0x1e8] sm:$0xff]
    %v3975 = vld [vmem:[#allocation10 + $0x1f0] sm:$0xff]
    %v3976 = vld [vmem:[#allocation10 + $0x1f8] sm:$0xff]
    %v3977 = vld [vmem:[#allocation10 + $0x200] sm:$0xff]
    %v3978 = vld [vmem:[#allocation10 + $0x208] sm:$0xff]
    %v3979 = vld [vmem:[#allocation10 + $0x210] sm:$0xff]
    %v3980 = vld [vmem:[#allocation10 + $0x218] sm:$0xff]
    %v3981 = vld [vmem:[#allocation10 + $0x220] sm:$0xff]
    %v3982 = vld [vmem:[#allocation10 + $0x228] sm:$0xff]
    %v3983 = vld [vmem:[#allocation10 + $0x230] sm:$0xff]
    %v3984 = vld [vmem:[#allocation10 + $0x238] sm:$0xff]
    %v3985 = vld [vmem:[#allocation10 + $0x240] sm:$0xff]
    %v3986 = vld [vmem:[#allocation10 + $0x248] sm:$0xff]
    %v3987 = vld [vmem:[#allocation10 + $0x250] sm:$0xff]
    %v3988 = vld [vmem:[#allocation10 + $0x258] sm:$0xff]
    %v3989 = vld [vmem:[#allocation10 + $0x260] sm:$0xff]
    %v3990 = vld [vmem:[#allocation10 + $0x268] sm:$0xff]
    %v3991 = vld [vmem:[#allocation10 + $0x270] sm:$0xff]
    %v3992 = vld [vmem:[#allocation10 + $0x278] sm:$0xff]
    %v3993 = vld [vmem:[#allocation10 + $0x280] sm:$0xff]
    %v3994 = vld [vmem:[#allocation10 + $0x288] sm:$0xff]
    %v3995 = vld [vmem:[#allocation10 + $0x290] sm:$0xff]
    %v3996 = vld [vmem:[#allocation10 + $0x298] sm:$0xff]
    %v3997 = vld [vmem:[#allocation10 + $0x2a0] sm:$0xff]
    %v3998 = vld [vmem:[#allocation10 + $0x2a8] sm:$0xff]
    %v3999 = vld [vmem:[#allocation10 + $0x2b0] sm:$0xff]
    %v4000 = vld [vmem:[#allocation10 + $0x2b8] sm:$0xff]
    %v4001 = vld [vmem:[#allocation10 + $0x2c0] sm:$0xff]
    %v4002 = vld [vmem:[#allocation10 + $0x2c8] sm:$0xff]
    %v4003 = vld [vmem:[#allocation10 + $0x2d0] sm:$0xff]
    %v4004 = vld [vmem:[#allocation10 + $0x2d8] sm:$0xff]
    %v4005 = vld [vmem:[#allocation10 + $0x2e0] sm:$0xff]
    %v4006 = vld [vmem:[#allocation10 + $0x2e8] sm:$0xff]
    %v4007 = vld [vmem:[#allocation10 + $0x2f0] sm:$0xff]
    %v4008 = vld [vmem:[#allocation10 + $0x2f8] sm:$0xff]
    %v4009 = vld [vmem:[#allocation10 + $0x300] sm:$0xff]
    %v4010 = vld [vmem:[#allocation10 + $0x308] sm:$0xff]
    %v4011 = vld [vmem:[#allocation10 + $0x310] sm:$0xff]
    %v4012 = vld [vmem:[#allocation10 + $0x318] sm:$0xff]
    %v4013 = vld [vmem:[#allocation10 + $0x320] sm:$0xff]
    %v4014 = vld [vmem:[#allocation10 + $0x328] sm:$0xff]
    %v4015 = vld [vmem:[#allocation10 + $0x330] sm:$0xff]
    %v4016 = vld [vmem:[#allocation10 + $0x338] sm:$0xff]
    %v4017 = vld [vmem:[#allocation10 + $0x340] sm:$0xff]
    %v4018 = vld [vmem:[#allocation10 + $0x348] sm:$0xff]
    %v4019 = vld [vmem:[#allocation10 + $0x350] sm:$0xff]
    %v4020 = vld [vmem:[#allocation10 + $0x358] sm:$0xff]
    %v4021 = vld [vmem:[#allocation10 + $0x360] sm:$0xff]
    %v4022 = vld [vmem:[#allocation10 + $0x368] sm:$0xff]
    %v4023 = vld [vmem:[#allocation10 + $0x370] sm:$0xff]
    %v4024 = vld [vmem:[#allocation10 + $0x378] sm:$0xff]
    %v4025 = vld [vmem:[#allocation10 + $0x380] sm:$0xff]
    %v4026 = vld [vmem:[#allocation10 + $0x388] sm:$0xff]
    %v4027 = vld [vmem:[#allocation10 + $0x390] sm:$0xff]
    %v4028 = vld [vmem:[#allocation10 + $0x398] sm:$0xff]
    %v4029 = vld [vmem:[#allocation10 + $0x3a0] sm:$0xff]
    %v4030 = vld [vmem:[#allocation10 + $0x3a8] sm:$0xff]
    %v4031 = vld [vmem:[#allocation10 + $0x3b0] sm:$0xff]
    %v4032 = vld [vmem:[#allocation10 + $0x3b8] sm:$0xff]
    %v4033 = vld [vmem:[#allocation10 + $0x3c0] sm:$0xff]
    %v4034 = vld [vmem:[#allocation10 + $0x3c8] sm:$0xff]
    %v4035 = vld [vmem:[#allocation10 + $0x3d0] sm:$0xff]
    %v4036 = vld [vmem:[#allocation10 + $0x3d8] sm:$0xff]
    %v4037 = vld [vmem:[#allocation10 + $0x3e0] sm:$0xff]
    %v4038 = vld [vmem:[#allocation10 + $0x3e8] sm:$0xff]
    %v4039 = vld [vmem:[#allocation10 + $0x3f0] sm:$0xff]
    %v4040 = vld [vmem:[#allocation10 + $0x3f8] sm:$0xff]
    %v4041 = vld [vmem:[%s5] sm:$0xf]
    %v4043 = vlaneseq
    %v4044 = vshrl.u32 %v4043, 7
    %v4045 = vsub.s32 0, %v4044
    %v4046 = vrot.slane %v4041, %v4045
    %v4047 = vlaneseq
    %v4048 = vshrl.u32 %v4047, 7
    %v4049 = vsub.s32 1, %v4048
    %v4050 = vrot.slane %v4041, %v4049
    %v4051 = vlaneseq
    %v4052 = vshrl.u32 %v4051, 7
    %v4053 = vsub.s32 2, %v4052
    %v4054 = vrot.slane %v4041, %v4053
    %v4055 = vlaneseq
    %v4056 = vshrl.u32 %v4055, 7
    %v4057 = vsub.s32 3, %v4056
    %v4058 = vrot.slane %v4041, %v4057
    %4063 = vmatprep.subr.mxu0 %v3914
    %4064 = vmatpush1.msra.mxu0 %v3913
    %4065 = vmatprep.subr.mxu0 %v3918
    %4066 = vmatpush1.msra.mxu0 %v3917
    %4067 = vmatprep.subr.mxu0 %v3922
    %4068 = vmatpush1.msra.mxu0 %v3921
    %4069 = vmatprep.subr.mxu0 %v3926
    %4070 = vmatpush1.msra.mxu0 %v3925
    %4071 = vmatprep.subr.mxu0 %v3930
    %4072 = vmatpush1.msra.mxu0 %v3929
    %4073 = vmatprep.subr.mxu0 %v3934
    %4074 = vmatpush1.msra.mxu0 %v3933
    %4075 = vmatprep.subr.mxu0 %v3938
    %4076 = vmatpush1.msra.mxu0 %v3937
    %4077 = vmatprep.subr.mxu0 %v3942
    %4078 = vmatpush1.msra.mxu0 %v3941
    %4079 = vmatprep.subr.mxu0 %v3946
    %4080 = vmatpush1.msra.mxu0 %v3945
    %4081 = vmatprep.subr.mxu0 %v3950
    %4082 = vmatpush1.msra.mxu0 %v3949
    %4083 = vmatprep.subr.mxu0 %v3954
    %4084 = vmatpush1.msra.mxu0 %v3953
    %4085 = vmatprep.subr.mxu0 %v3958
    %4086 = vmatpush1.msra.mxu0 %v3957
    %4087 = vmatprep.subr.mxu0 %v3962
    %4088 = vmatpush1.msra.mxu0 %v3961
    %4089 = vmatprep.subr.mxu0 %v3966
    %4090 = vmatpush1.msra.mxu0 %v3965
    %4091 = vmatprep.subr.mxu0 %v3970
    %4092 = vmatpush1.msra.mxu0 %v3969
    %4093 = vmatprep.subr.mxu0 %v3974
    %4094 = vmatpush1.msra.mxu0 %v3973
    %4095 = vmatprep.subr.mxu0 %v3978
    %4096 = vmatpush1.msra.mxu0 %v3977
    %4097 = vmatprep.subr.mxu0 %v3982
    %4098 = vmatpush1.msra.mxu0 %v3981
    %4099 = vmatprep.subr.mxu0 %v3986
    %4100 = vmatpush1.msra.mxu0 %v3985
    %4101 = vmatprep.subr.mxu0 %v3990
    %4102 = vmatpush1.msra.mxu0 %v3989
    %4103 = vmatprep.subr.mxu0 %v3994
    %4104 = vmatpush1.msra.mxu0 %v3993
    %4105 = vmatprep.subr.mxu0 %v3998
    %4106 = vmatpush1.msra.mxu0 %v3997
    %4107 = vmatprep.subr.mxu0 %v4002
    %4108 = vmatpush1.msra.mxu0 %v4001
    %4109 = vmatprep.subr.mxu0 %v4006
    %4110 = vmatpush1.msra.mxu0 %v4005
    %4111 = vmatprep.subr.mxu0 %v4010
    %4112 = vmatpush1.msra.mxu0 %v4009
    %4113 = vmatprep.subr.mxu0 %v4014
    %4114 = vmatpush1.msra.mxu0 %v4013
    %4115 = vmatprep.subr.mxu0 %v4018
    %4116 = vmatpush1.msra.mxu0 %v4017
    %4117 = vmatprep.subr.mxu0 %v4022
    %4118 = vmatpush1.msra.mxu0 %v4021
    %4119 = vmatprep.subr.mxu0 %v4026
    %4120 = vmatpush1.msra.mxu0 %v4025
    %4121 = vmatprep.subr.mxu0 %v4030
    %4122 = vmatpush1.msra.mxu0 %v4029
    %4123 = vmatprep.subr.mxu0 %v4034
    %4124 = vmatpush1.msra.mxu0 %v4033
    %4125 = vmatprep.subr.mxu0 %v4038
    %4126 = vmatpush1.msra.mxu0 %v4037
    %4127 = vmatprep.mubr.f32.mxu0 %v3665
    %4128 = vmatmul.mubr.f32.gmra.mrb[0].mxu0 %v3912
    %v4129 = vpop.f32.mrb[0].mxu0
    %v4130 = vadd.f32 %v4046, %v4129
    %v4131 = vpop.f32.mrb[0].mxu0
    %v4132 = vadd.f32 %v4050, %v4131
    %4133 = vdwg.mxu0
    %4134 = vmatprep.subr.mxu0 %v3916
    %4135 = vmatpush1.msra.mxu0 %v3915
    %4136 = vmatprep.subr.mxu0 %v3920
    %4137 = vmatpush1.msra.mxu0 %v3919
    %4138 = vmatprep.subr.mxu0 %v3924
    %4139 = vmatpush1.msra.mxu0 %v3923
    %4140 = vmatprep.subr.mxu0 %v3928
    %4141 = vmatpush1.msra.mxu0 %v3927
    %4142 = vmatprep.subr.mxu0 %v3932
    %4143 = vmatpush1.msra.mxu0 %v3931
    %4144 = vmatprep.subr.mxu0 %v3936
    %4145 = vmatpush1.msra.mxu0 %v3935
    %4146 = vmatprep.subr.mxu0 %v3940
    %4147 = vmatpush1.msra.mxu0 %v3939
    %4148 = vmatprep.subr.mxu0 %v3944
    %4149 = vmatpush1.msra.mxu0 %v3943
    %4150 = vmatprep.subr.mxu0 %v3948
    %4151 = vmatpush1.msra.mxu0 %v3947
    %4152 = vmatprep.subr.mxu0 %v3952
    %4153 = vmatpush1.msra.mxu0 %v3951
    %4154 = vmatprep.subr.mxu0 %v3956
    %4155 = vmatpush1.msra.mxu0 %v3955
    %4156 = vmatprep.subr.mxu0 %v3960
    %4157 = vmatpush1.msra.mxu0 %v3959
    %4158 = vmatprep.subr.mxu0 %v3964
    %4159 = vmatpush1.msra.mxu0 %v3963
    %4160 = vmatprep.subr.mxu0 %v3968
    %4161 = vmatpush1.msra.mxu0 %v3967
    %4162 = vmatprep.subr.mxu0 %v3972
    %4163 = vmatpush1.msra.mxu0 %v3971
    %4164 = vmatprep.subr.mxu0 %v3976
    %4165 = vmatpush1.msra.mxu0 %v3975
    %4166 = vmatprep.subr.mxu0 %v3980
    %4167 = vmatpush1.msra.mxu0 %v3979
    %4168 = vmatprep.subr.mxu0 %v3984
    %4169 = vmatpush1.msra.mxu0 %v3983
    %4170 = vmatprep.subr.mxu0 %v3988
    %4171 = vmatpush1.msra.mxu0 %v3987
    %4172 = vmatprep.subr.mxu0 %v3992
    %4173 = vmatpush1.msra.mxu0 %v3991
    %4174 = vmatprep.subr.mxu0 %v3996
    %4175 = vmatpush1.msra.mxu0 %v3995
    %4176 = vmatprep.subr.mxu0 %v4000
    %4177 = vmatpush1.msra.mxu0 %v3999
    %4178 = vmatprep.subr.mxu0 %v4004
    %4179 = vmatpush1.msra.mxu0 %v4003
    %4180 = vmatprep.subr.mxu0 %v4008
    %4181 = vmatpush1.msra.mxu0 %v4007
    %4182 = vmatprep.subr.mxu0 %v4012
    %4183 = vmatpush1.msra.mxu0 %v4011
    %4184 = vmatprep.subr.mxu0 %v4016
    %4185 = vmatpush1.msra.mxu0 %v4015
    %4186 = vmatprep.subr.mxu0 %v4020
    %4187 = vmatpush1.msra.mxu0 %v4019
    %4188 = vmatprep.subr.mxu0 %v4024
    %4189 = vmatpush1.msra.mxu0 %v4023
    %4190 = vmatprep.subr.mxu0 %v4028
    %4191 = vmatpush1.msra.mxu0 %v4027
    %4192 = vmatprep.subr.mxu0 %v4032
    %4193 = vmatpush1.msra.mxu0 %v4031
    %4194 = vmatprep.subr.mxu0 %v4036
    %4195 = vmatpush1.msra.mxu0 %v4035
    %4196 = vmatprep.subr.mxu0 %v4040
    %4197 = vmatpush1.msra.mxu0 %v4039
    %4198 = vmatprep.mubr.f32.mxu0 %v3665
    %4199 = vmatmul.mubr.f32.gmra.mrb[0].mxu0 %v3912
    %v4200 = vpop.f32.mrb[0].mxu0
    %v4201 = vadd.f32 %v4054, %v4200
    %v4202 = vpop.f32.mrb[0].mxu0
    %v4203 = vadd.f32 %v4058, %v4202
    %4204 = vdwg.mxu0
    %v4205 = vxor.u32 %v4130, 2147483648
    %v4206 = vmul.f32 %v4205, 1.442695
    %v4207 = vpow.pop %v4206
    %v4208 = vadd.f32 %v4207, 1.0
    %v4209 = vrcp.pop %v4208
    %v4210 = vmul.f32 1.0, %v4209
    %v4211 = vxor.u32 %v4132, 2147483648
    %v4212 = vmul.f32 %v4211, 1.442695
    %v4213 = vpow.pop %v4212
    %v4214 = vadd.f32 %v4213, 1.0
    %v4215 = vrcp.pop %v4214
    %v4216 = vmul.f32 1.0, %v4215
    %v4217 = vtanh.pop %v4201
    %v4218 = vxor.u32 %v4203, 2147483648
    %v4219 = vmul.f32 %v4218, 1.442695
    %v4220 = vpow.pop %v4219
    %v4221 = vadd.f32 %v4220, 1.0
    %v4222 = vrcp.pop %v4221
    %v4223 = vmul.f32 1.0, %v4222
    %v4224 = vmul.f32 %v4216, %v3663
    %v4225 = vmul.f32 %v4210, %v4217
    %v4226 = vadd.f32 %v4224, %v4225
    %v4227 = vtanh.pop %v4226
    %v4228 = vmul.f32 %v4223, %v4227
    %4229 = vst [vmem:[#allocation3 + $0xc] sm:$0x3] %v4228
    %v4230 = vld [vmem:[#allocation9] sm:$0xff]
    %v4231 = vld [vmem:[#allocation9 + $0x8] sm:$0xff]
    %v4232 = vld [vmem:[#allocation9 + $0x10] sm:$0xff]
    %v4233 = vld [vmem:[#allocation9 + $0x18] sm:$0xff]
    %v4234 = vld [vmem:[#allocation9 + $0x20] sm:$0xff]
    %v4235 = vld [vmem:[#allocation9 + $0x28] sm:$0xff]
    %v4236 = vld [vmem:[#allocation9 + $0x30] sm:$0xff]
    %v4237 = vld [vmem:[#allocation9 + $0x38] sm:$0xff]
    %v4238 = vld [vmem:[#allocation9 + $0x40] sm:$0xff]
    %v4239 = vld [vmem:[#allocation9 + $0x48] sm:$0xff]
    %v4240 = vld [vmem:[#allocation9 + $0x50] sm:$0xff]
    %v4241 = vld [vmem:[#allocation9 + $0x58] sm:$0xff]
    %v4242 = vld [vmem:[#allocation9 + $0x60] sm:$0xff]
    %v4243 = vld [vmem:[#allocation9 + $0x68] sm:$0xff]
    %v4244 = vld [vmem:[#allocation9 + $0x70] sm:$0xff]
    %v4245 = vld [vmem:[#allocation9 + $0x78] sm:$0xff]
    %v4246 = vld [vmem:[#allocation9 + $0x80] sm:$0xff]
    %v4247 = vld [vmem:[#allocation9 + $0x88] sm:$0xff]
    %v4248 = vld [vmem:[#allocation9 + $0x90] sm:$0xff]
    %v4249 = vld [vmem:[#allocation9 + $0x98] sm:$0xff]
    %v4250 = vld [vmem:[#allocation9 + $0xa0] sm:$0xff]
    %v4251 = vld [vmem:[#allocation9 + $0xa8] sm:$0xff]
    %v4252 = vld [vmem:[#allocation9 + $0xb0] sm:$0xff]
    %v4253 = vld [vmem:[#allocation9 + $0xb8] sm:$0xff]
    %v4254 = vld [vmem:[#allocation9 + $0xc0] sm:$0xff]
    %v4255 = vld [vmem:[#allocation9 + $0xc8] sm:$0xff]
    %v4256 = vld [vmem:[#allocation9 + $0xd0] sm:$0xff]
    %v4257 = vld [vmem:[#allocation9 + $0xd8] sm:$0xff]
    %v4258 = vld [vmem:[#allocation9 + $0xe0] sm:$0xff]
    %v4259 = vld [vmem:[#allocation9 + $0xe8] sm:$0xff]
    %v4260 = vld [vmem:[#allocation9 + $0xf0] sm:$0xff]
    %v4261 = vld [vmem:[#allocation9 + $0xf8] sm:$0xff]
    %v4262 = vld [vmem:[#allocation9 + $0x100] sm:$0xff]
    %v4263 = vld [vmem:[#allocation9 + $0x108] sm:$0xff]
    %v4264 = vld [vmem:[#allocation9 + $0x110] sm:$0xff]
    %v4265 = vld [vmem:[#allocation9 + $0x118] sm:$0xff]
    %v4266 = vld [vmem:[#allocation9 + $0x120] sm:$0xff]
    %v4267 = vld [vmem:[#allocation9 + $0x128] sm:$0xff]
    %v4268 = vld [vmem:[#allocation9 + $0x130] sm:$0xff]
    %v4269 = vld [vmem:[#allocation9 + $0x138] sm:$0xff]
    %v4270 = vld [vmem:[#allocation9 + $0x140] sm:$0xff]
    %v4271 = vld [vmem:[#allocation9 + $0x148] sm:$0xff]
    %v4272 = vld [vmem:[#allocation9 + $0x150] sm:$0xff]
    %v4273 = vld [vmem:[#allocation9 + $0x158] sm:$0xff]
    %v4274 = vld [vmem:[#allocation9 + $0x160] sm:$0xff]
    %v4275 = vld [vmem:[#allocation9 + $0x168] sm:$0xff]
    %v4276 = vld [vmem:[#allocation9 + $0x170] sm:$0xff]
    %v4277 = vld [vmem:[#allocation9 + $0x178] sm:$0xff]
    %v4278 = vld [vmem:[#allocation9 + $0x180] sm:$0xff]
    %v4279 = vld [vmem:[#allocation9 + $0x188] sm:$0xff]
    %v4280 = vld [vmem:[#allocation9 + $0x190] sm:$0xff]
    %v4281 = vld [vmem:[#allocation9 + $0x198] sm:$0xff]
    %v4282 = vld [vmem:[#allocation9 + $0x1a0] sm:$0xff]
    %v4283 = vld [vmem:[#allocation9 + $0x1a8] sm:$0xff]
    %v4284 = vld [vmem:[#allocation9 + $0x1b0] sm:$0xff]
    %v4285 = vld [vmem:[#allocation9 + $0x1b8] sm:$0xff]
    %v4286 = vld [vmem:[#allocation9 + $0x1c0] sm:$0xff]
    %v4287 = vld [vmem:[#allocation9 + $0x1c8] sm:$0xff]
    %v4288 = vld [vmem:[#allocation9 + $0x1d0] sm:$0xff]
    %v4289 = vld [vmem:[#allocation9 + $0x1d8] sm:$0xff]
    %v4290 = vld [vmem:[#allocation9 + $0x1e0] sm:$0xff]
    %v4291 = vld [vmem:[#allocation9 + $0x1e8] sm:$0xff]
    %v4292 = vld [vmem:[#allocation9 + $0x1f0] sm:$0xff]
    %v4293 = vld [vmem:[#allocation9 + $0x1f8] sm:$0xff]
    %v4294 = vld [vmem:[#allocation2 + $0x20] sm:$0xc0]
    %v4295 = vld [vmem:[#allocation2 + $0x28] sm:$0xc0]
    %v4296 = vld [vmem:[#allocation2 + $0x30] sm:$0xc0]
    %v4297 = vld [vmem:[#allocation2 + $0x38] sm:$0xc0]
    %v4302 = vrot.slane %v4294, 6
    %v4303 = vrot.slane %v4295, 6
    %v4304 = vrot.slane %v4296, 6
    %v4305 = vrot.slane %v4297, 6
    %4310 = vmatprep.subr.mxu0 %v4231
    %4311 = vmatpush1.msra.mxu0 %v4230
    %4312 = vmatprep.subr.mxu0 %v4235
    %4313 = vmatpush1.msra.mxu0 %v4234
    %4314 = vmatprep.subr.mxu0 %v4239
    %4315 = vmatpush1.msra.mxu0 %v4238
    %4316 = vmatprep.subr.mxu0 %v4243
    %4317 = vmatpush1.msra.mxu0 %v4242
    %4318 = vmatprep.subr.mxu0 %v4247
    %4319 = vmatpush1.msra.mxu0 %v4246
    %4320 = vmatprep.subr.mxu0 %v4251
    %4321 = vmatpush1.msra.mxu0 %v4250
    %4322 = vmatprep.subr.mxu0 %v4255
    %4323 = vmatpush1.msra.mxu0 %v4254
    %4324 = vmatprep.subr.mxu0 %v4259
    %4325 = vmatpush1.msra.mxu0 %v4258
    %4326 = vmatprep.subr.mxu0 %v4263
    %4327 = vmatpush1.msra.mxu0 %v4262
    %4328 = vmatprep.subr.mxu0 %v4267
    %4329 = vmatpush1.msra.mxu0 %v4266
    %4330 = vmatprep.subr.mxu0 %v4271
    %4331 = vmatpush1.msra.mxu0 %v4270
    %4332 = vmatprep.subr.mxu0 %v4275
    %4333 = vmatpush1.msra.mxu0 %v4274
    %4334 = vmatprep.subr.mxu0 %v4279
    %4335 = vmatpush1.msra.mxu0 %v4278
    %4336 = vmatprep.subr.mxu0 %v4283
    %4337 = vmatpush1.msra.mxu0 %v4282
    %4338 = vmatprep.subr.mxu0 %v4287
    %4339 = vmatpush1.msra.mxu0 %v4286
    %4340 = vmatprep.subr.mxu0 %v4291
    %4341 = vmatpush1.msra.mxu0 %v4290
    %4342 = vmatprep.subr.mxu0 0.0
    %4343 = vmatpush1.msra.mxu0 0.0
    %4344 = vmatprep.subr.mxu0 0.0
    %4345 = vmatpush1.msra.mxu0 0.0
    %4346 = vmatprep.subr.mxu0 0.0
    %4347 = vmatpush1.msra.mxu0 0.0
    %4348 = vmatprep.subr.mxu0 0.0
    %4349 = vmatpush1.msra.mxu0 0.0
    %4350 = vmatprep.subr.mxu0 0.0
    %4351 = vmatpush1.msra.mxu0 0.0
    %4352 = vmatprep.subr.mxu0 0.0
    %4353 = vmatpush1.msra.mxu0 0.0
    %4354 = vmatprep.subr.mxu0 0.0
    %4355 = vmatpush1.msra.mxu0 0.0
    %4356 = vmatprep.subr.mxu0 0.0
    %4357 = vmatpush1.msra.mxu0 0.0
    %4358 = vmatprep.subr.mxu0 0.0
    %4359 = vmatpush1.msra.mxu0 0.0
    %4360 = vmatprep.subr.mxu0 0.0
    %4361 = vmatpush1.msra.mxu0 0.0
    %4362 = vmatprep.subr.mxu0 0.0
    %4363 = vmatpush1.msra.mxu0 0.0
    %4364 = vmatprep.subr.mxu0 0.0
    %4365 = vmatpush1.msra.mxu0 0.0
    %4366 = vmatprep.subr.mxu0 0.0
    %4367 = vmatpush1.msra.mxu0 0.0
    %4368 = vmatprep.subr.mxu0 0.0
    %4369 = vmatpush1.msra.mxu0 0.0
    %4370 = vmatprep.subr.mxu0 0.0
    %4371 = vmatpush1.msra.mxu0 0.0
    %4372 = vmatprep.subr.mxu0 0.0
    %4373 = vmatpush1.msra.mxu0 0.0
    %4374 = vmatprep.mubr.f32.mxu0 0.0
    %4375 = vmatmul.mubr.f32.gmra.mrb[0].mxu0 %v3912
    %v4376 = vpop.f32.mrb[0].mxu0
    %v4377 = vadd.f32 %v4302, %v4376
    %v4378 = vpop.f32.mrb[0].mxu0
    %v4379 = vadd.f32 %v4303, %v4378
    %4380 = vdwg.mxu0
    %4381 = vmatprep.subr.mxu0 %v4233
    %4382 = vmatpush1.msra.mxu0 %v4232
    %4383 = vmatprep.subr.mxu0 %v4237
    %4384 = vmatpush1.msra.mxu0 %v4236
    %4385 = vmatprep.subr.mxu0 %v4241
    %4386 = vmatpush1.msra.mxu0 %v4240
    %4387 = vmatprep.subr.mxu0 %v4245
    %4388 = vmatpush1.msra.mxu0 %v4244
    %4389 = vmatprep.subr.mxu0 %v4249
    %4390 = vmatpush1.msra.mxu0 %v4248
    %4391 = vmatprep.subr.mxu0 %v4253
    %4392 = vmatpush1.msra.mxu0 %v4252
    %4393 = vmatprep.subr.mxu0 %v4257
    %4394 = vmatpush1.msra.mxu0 %v4256
    %4395 = vmatprep.subr.mxu0 %v4261
    %4396 = vmatpush1.msra.mxu0 %v4260
    %4397 = vmatprep.subr.mxu0 %v4265
    %4398 = vmatpush1.msra.mxu0 %v4264
    %4399 = vmatprep.subr.mxu0 %v4269
    %4400 = vmatpush1.msra.mxu0 %v4268
    %4401 = vmatprep.subr.mxu0 %v4273
    %4402 = vmatpush1.msra.mxu0 %v4272
    %4403 = vmatprep.subr.mxu0 %v4277
    %4404 = vmatpush1.msra.mxu0 %v4276
    %4405 = vmatprep.subr.mxu0 %v4281
    %4406 = vmatpush1.msra.mxu0 %v4280
    %4407 = vmatprep.subr.mxu0 %v4285
    %4408 = vmatpush1.msra.mxu0 %v4284
    %4409 = vmatprep.subr.mxu0 %v4289
    %4410 = vmatpush1.msra.mxu0 %v4288
    %4411 = vmatprep.subr.mxu0 %v4293
    %4412 = vmatpush1.msra.mxu0 %v4292
    %4413 = vmatprep.subr.mxu0 0.0
    %4414 = vmatpush1.msra.mxu0 0.0
    %4415 = vmatprep.subr.mxu0 0.0
    %4416 = vmatpush1.msra.mxu0 0.0
    %4417 = vmatprep.subr.mxu0 0.0
    %4418 = vmatpush1.msra.mxu0 0.0
    %4419 = vmatprep.subr.mxu0 0.0
    %4420 = vmatpush1.msra.mxu0 0.0
    %4421 = vmatprep.subr.mxu0 0.0
    %4422 = vmatpush1.msra.mxu0 0.0
    %4423 = vmatprep.subr.mxu0 0.0
    %4424 = vmatpush1.msra.mxu0 0.0
    %4425 = vmatprep.subr.mxu0 0.0
    %4426 = vmatpush1.msra.mxu0 0.0
    %4427 = vmatprep.subr.mxu0 0.0
    %4428 = vmatpush1.msra.mxu0 0.0
    %4429 = vmatprep.subr.mxu0 0.0
    %4430 = vmatpush1.msra.mxu0 0.0
    %4431 = vmatprep.subr.mxu0 0.0
    %4432 = vmatpush1.msra.mxu0 0.0
    %4433 = vmatprep.subr.mxu0 0.0
    %4434 = vmatpush1.msra.mxu0 0.0
    %4435 = vmatprep.subr.mxu0 0.0
    %4436 = vmatpush1.msra.mxu0 0.0
    %4437 = vmatprep.subr.mxu0 0.0
    %4438 = vmatpush1.msra.mxu0 0.0
    %4439 = vmatprep.subr.mxu0 0.0
    %4440 = vmatpush1.msra.mxu0 0.0
    %4441 = vmatprep.subr.mxu0 0.0
    %4442 = vmatpush1.msra.mxu0 0.0
    %4443 = vmatprep.subr.mxu0 0.0
    %4444 = vmatpush1.msra.mxu0 0.0
    %4445 = vmatprep.mubr.f32.mxu0 0.0
    %4446 = vmatmul.mubr.f32.gmra.mrb[0].mxu0 %v3912
    %v4447 = vpop.f32.mrb[0].mxu0
    %v4448 = vadd.f32 %v4304, %v4447
    %v4449 = vpop.f32.mrb[0].mxu0
    %v4450 = vadd.f32 %v4305, %v4449
    %4451 = vdwg.mxu0
    %v4452 = vxor.u32 %v4377, 2147483648
    %v4453 = vmul.f32 %v4452, 1.442695
    %v4454 = vpow.pop %v4453
    %v4455 = vadd.f32 %v4454, 1.0
    %v4456 = vrcp.pop %v4455
    %v4457 = vmul.f32 1.0, %v4456
    %v4458 = vxor.u32 %v4379, 2147483648
    %v4459 = vmul.f32 %v4458, 1.442695
    %v4460 = vpow.pop %v4459
    %v4461 = vadd.f32 %v4460, 1.0
    %v4462 = vrcp.pop %v4461
    %v4463 = vmul.f32 1.0, %v4462
    %v4464 = vtanh.pop %v4448
    %v4465 = vxor.u32 %v4450, 2147483648
    %v4466 = vmul.f32 %v4465, 1.442695
    %v4467 = vpow.pop %v4466
    %v4468 = vadd.f32 %v4467, 1.0
    %v4469 = vrcp.pop %v4468
    %v4470 = vmul.f32 1.0, %v4469
    %v4471 = vmul.f32 %v4463, %v3910
    %v4472 = vmul.f32 %v4457, %v4464
    %v4473 = vadd.f32 %v4471, %v4472
    %v4474 = vtanh.pop %v4473
    %v4475 = vmul.f32 %v4470, %v4474
    %v4476 = vld [vmem:[#allocation10] sm:$0xff]
    %v4477 = vld [vmem:[#allocation10 + $0x8] sm:$0xff]
    %v4478 = vld [vmem:[#allocation10 + $0x10] sm:$0xff]
    %v4479 = vld [vmem:[#allocation10 + $0x18] sm:$0xff]
    %v4480 = vld [vmem:[#allocation10 + $0x20] sm:$0xff]
    %v4481 = vld [vmem:[#allocation10 + $0x28] sm:$0xff]
    %v4482 = vld [vmem:[#allocation10 + $0x30] sm:$0xff]
    %v4483 = vld [vmem:[#allocation10 + $0x38] sm:$0xff]
    %v4484 = vld [vmem:[#allocation10 + $0x40] sm:$0xff]
    %v4485 = vld [vmem:[#allocation10 + $0x48] sm:$0xff]
    %v4486 = vld [vmem:[#allocation10 + $0x50] sm:$0xff]
    %v4487 = vld [vmem:[#allocation10 + $0x58] sm:$0xff]
    %v4488 = vld [vmem:[#allocation10 + $0x60] sm:$0xff]
    %v4489 = vld [vmem:[#allocation10 + $0x68] sm:$0xff]
    %v4490 = vld [vmem:[#allocation10 + $0x70] sm:$0xff]
    %v4491 = vld [vmem:[#allocation10 + $0x78] sm:$0xff]
    %v4492 = vld [vmem:[#allocation10 + $0x80] sm:$0xff]
    %v4493 = vld [vmem:[#allocation10 + $0x88] sm:$0xff]
    %v4494 = vld [vmem:[#allocation10 + $0x90] sm:$0xff]
    %v4495 = vld [vmem:[#allocation10 + $0x98] sm:$0xff]
    %v4496 = vld [vmem:[#allocation10 + $0xa0] sm:$0xff]
    %v4497 = vld [vmem:[#allocation10 + $0xa8] sm:$0xff]
    %v4498 = vld [vmem:[#allocation10 + $0xb0] sm:$0xff]
    %v4499 = vld [vmem:[#allocation10 + $0xb8] sm:$0xff]
    %v4500 = vld [vmem:[#allocation10 + $0xc0] sm:$0xff]
    %v4501 = vld [vmem:[#allocation10 + $0xc8] sm:$0xff]
    %v4502 = vld [vmem:[#allocation10 + $0xd0] sm:$0xff]
    %v4503 = vld [vmem:[#allocation10 + $0xd8] sm:$0xff]
    %v4504 = vld [vmem:[#allocation10 + $0xe0] sm:$0xff]
    %v4505 = vld [vmem:[#allocation10 + $0xe8] sm:$0xff]
    %v4506 = vld [vmem:[#allocation10 + $0xf0] sm:$0xff]
    %v4507 = vld [vmem:[#allocation10 + $0xf8] sm:$0xff]
    %v4508 = vld [vmem:[#allocation10 + $0x100] sm:$0xff]
    %v4509 = vld [vmem:[#allocation10 + $0x108] sm:$0xff]
    %v4510 = vld [vmem:[#allocation10 + $0x110] sm:$0xff]
    %v4511 = vld [vmem:[#allocation10 + $0x118] sm:$0xff]
    %v4512 = vld [vmem:[#allocation10 + $0x120] sm:$0xff]
    %v4513 = vld [vmem:[#allocation10 + $0x128] sm:$0xff]
    %v4514 = vld [vmem:[#allocation10 + $0x130] sm:$0xff]
    %v4515 = vld [vmem:[#allocation10 + $0x138] sm:$0xff]
    %v4516 = vld [vmem:[#allocation10 + $0x140] sm:$0xff]
    %v4517 = vld [vmem:[#allocation10 + $0x148] sm:$0xff]
    %v4518 = vld [vmem:[#allocation10 + $0x150] sm:$0xff]
    %v4519 = vld [vmem:[#allocation10 + $0x158] sm:$0xff]
    %v4520 = vld [vmem:[#allocation10 + $0x160] sm:$0xff]
    %v4521 = vld [vmem:[#allocation10 + $0x168] sm:$0xff]
    %v4522 = vld [vmem:[#allocation10 + $0x170] sm:$0xff]
    %v4523 = vld [vmem:[#allocation10 + $0x178] sm:$0xff]
    %v4524 = vld [vmem:[#allocation10 + $0x180] sm:$0xff]
    %v4525 = vld [vmem:[#allocation10 + $0x188] sm:$0xff]
    %v4526 = vld [vmem:[#allocation10 + $0x190] sm:$0xff]
    %v4527 = vld [vmem:[#allocation10 + $0x198] sm:$0xff]
    %v4528 = vld [vmem:[#allocation10 + $0x1a0] sm:$0xff]
    %v4529 = vld [vmem:[#allocation10 + $0x1a8] sm:$0xff]
    %v4530 = vld [vmem:[#allocation10 + $0x1b0] sm:$0xff]
    %v4531 = vld [vmem:[#allocation10 + $0x1b8] sm:$0xff]
    %v4532 = vld [vmem:[#allocation10 + $0x1c0] sm:$0xff]
    %v4533 = vld [vmem:[#allocation10 + $0x1c8] sm:$0xff]
    %v4534 = vld [vmem:[#allocation10 + $0x1d0] sm:$0xff]
    %v4535 = vld [vmem:[#allocation10 + $0x1d8] sm:$0xff]
    %v4536 = vld [vmem:[#allocation10 + $0x1e0] sm:$0xff]
    %v4537 = vld [vmem:[#allocation10 + $0x1e8] sm:$0xff]
    %v4538 = vld [vmem:[#allocation10 + $0x1f0] sm:$0xff]
    %v4539 = vld [vmem:[#allocation10 + $0x1f8] sm:$0xff]
    %v4540 = vld [vmem:[#allocation10 + $0x200] sm:$0xff]
    %v4541 = vld [vmem:[#allocation10 + $0x208] sm:$0xff]
    %v4542 = vld [vmem:[#allocation10 + $0x210] sm:$0xff]
    %v4543 = vld [vmem:[#allocation10 + $0x218] sm:$0xff]
    %v4544 = vld [vmem:[#allocation10 + $0x220] sm:$0xff]
    %v4545 = vld [vmem:[#allocation10 + $0x228] sm:$0xff]
    %v4546 = vld [vmem:[#allocation10 + $0x230] sm:$0xff]
    %v4547 = vld [vmem:[#allocation10 + $0x238] sm:$0xff]
    %v4548 = vld [vmem:[#allocation10 + $0x240] sm:$0xff]
    %v4549 = vld [vmem:[#allocation10 + $0x248] sm:$0xff]
    %v4550 = vld [vmem:[#allocation10 + $0x250] sm:$0xff]
    %v4551 = vld [vmem:[#allocation10 + $0x258] sm:$0xff]
    %v4552 = vld [vmem:[#allocation10 + $0x260] sm:$0xff]
    %v4553 = vld [vmem:[#allocation10 + $0x268] sm:$0xff]
    %v4554 = vld [vmem:[#allocation10 + $0x270] sm:$0xff]
    %v4555 = vld [vmem:[#allocation10 + $0x278] sm:$0xff]
    %v4556 = vld [vmem:[#allocation10 + $0x280] sm:$0xff]
    %v4557 = vld [vmem:[#allocation10 + $0x288] sm:$0xff]
    %v4558 = vld [vmem:[#allocation10 + $0x290] sm:$0xff]
    %v4559 = vld [vmem:[#allocation10 + $0x298] sm:$0xff]
    %v4560 = vld [vmem:[#allocation10 + $0x2a0] sm:$0xff]
    %v4561 = vld [vmem:[#allocation10 + $0x2a8] sm:$0xff]
    %v4562 = vld [vmem:[#allocation10 + $0x2b0] sm:$0xff]
    %v4563 = vld [vmem:[#allocation10 + $0x2b8] sm:$0xff]
    %v4564 = vld [vmem:[#allocation10 + $0x2c0] sm:$0xff]
    %v4565 = vld [vmem:[#allocation10 + $0x2c8] sm:$0xff]
    %v4566 = vld [vmem:[#allocation10 + $0x2d0] sm:$0xff]
    %v4567 = vld [vmem:[#allocation10 + $0x2d8] sm:$0xff]
    %v4568 = vld [vmem:[#allocation10 + $0x2e0] sm:$0xff]
    %v4569 = vld [vmem:[#allocation10 + $0x2e8] sm:$0xff]
    %v4570 = vld [vmem:[#allocation10 + $0x2f0] sm:$0xff]
    %v4571 = vld [vmem:[#allocation10 + $0x2f8] sm:$0xff]
    %v4572 = vld [vmem:[#allocation10 + $0x300] sm:$0xff]
    %v4573 = vld [vmem:[#allocation10 + $0x308] sm:$0xff]
    %v4574 = vld [vmem:[#allocation10 + $0x310] sm:$0xff]
    %v4575 = vld [vmem:[#allocation10 + $0x318] sm:$0xff]
    %v4576 = vld [vmem:[#allocation10 + $0x320] sm:$0xff]
    %v4577 = vld [vmem:[#allocation10 + $0x328] sm:$0xff]
    %v4578 = vld [vmem:[#allocation10 + $0x330] sm:$0xff]
    %v4579 = vld [vmem:[#allocation10 + $0x338] sm:$0xff]
    %v4580 = vld [vmem:[#allocation10 + $0x340] sm:$0xff]
    %v4581 = vld [vmem:[#allocation10 + $0x348] sm:$0xff]
    %v4582 = vld [vmem:[#allocation10 + $0x350] sm:$0xff]
    %v4583 = vld [vmem:[#allocation10 + $0x358] sm:$0xff]
    %v4584 = vld [vmem:[#allocation10 + $0x360] sm:$0xff]
    %v4585 = vld [vmem:[#allocation10 + $0x368] sm:$0xff]
    %v4586 = vld [vmem:[#allocation10 + $0x370] sm:$0xff]
    %v4587 = vld [vmem:[#allocation10 + $0x378] sm:$0xff]
    %v4588 = vld [vmem:[#allocation10 + $0x380] sm:$0xff]
    %v4589 = vld [vmem:[#allocation10 + $0x388] sm:$0xff]
    %v4590 = vld [vmem:[#allocation10 + $0x390] sm:$0xff]
    %v4591 = vld [vmem:[#allocation10 + $0x398] sm:$0xff]
    %v4592 = vld [vmem:[#allocation10 + $0x3a0] sm:$0xff]
    %v4593 = vld [vmem:[#allocation10 + $0x3a8] sm:$0xff]
    %v4594 = vld [vmem:[#allocation10 + $0x3b0] sm:$0xff]
    %v4595 = vld [vmem:[#allocation10 + $0x3b8] sm:$0xff]
    %v4596 = vld [vmem:[#allocation10 + $0x3c0] sm:$0xff]
    %v4597 = vld [vmem:[#allocation10 + $0x3c8] sm:$0xff]
    %v4598 = vld [vmem:[#allocation10 + $0x3d0] sm:$0xff]
    %v4599 = vld [vmem:[#allocation10 + $0x3d8] sm:$0xff]
    %v4600 = vld [vmem:[#allocation10 + $0x3e0] sm:$0xff]
    %v4601 = vld [vmem:[#allocation10 + $0x3e8] sm:$0xff]
    %v4602 = vld [vmem:[#allocation10 + $0x3f0] sm:$0xff]
    %v4603 = vld [vmem:[#allocation10 + $0x3f8] sm:$0xff]
    %v4604 = vld [vmem:[%s5] sm:$0xf]
    %v4606 = vlaneseq
    %v4607 = vshrl.u32 %v4606, 7
    %v4608 = vsub.s32 0, %v4607
    %v4609 = vrot.slane %v4604, %v4608
    %v4610 = vlaneseq
    %v4611 = vshrl.u32 %v4610, 7
    %v4612 = vsub.s32 1, %v4611
    %v4613 = vrot.slane %v4604, %v4612
    %v4614 = vlaneseq
    %v4615 = vshrl.u32 %v4614, 7
    %v4616 = vsub.s32 2, %v4615
    %v4617 = vrot.slane %v4604, %v4616
    %v4618 = vlaneseq
    %v4619 = vshrl.u32 %v4618, 7
    %v4620 = vsub.s32 3, %v4619
    %v4621 = vrot.slane %v4604, %v4620
    %4626 = vmatprep.subr.mxu0 %v4477
    %4627 = vmatpush1.msra.mxu0 %v4476
    %4628 = vmatprep.subr.mxu0 %v4481
    %4629 = vmatpush1.msra.mxu0 %v4480
    %4630 = vmatprep.subr.mxu0 %v4485
    %4631 = vmatpush1.msra.mxu0 %v4484
    %4632 = vmatprep.subr.mxu0 %v4489
    %4633 = vmatpush1.msra.mxu0 %v4488
    %4634 = vmatprep.subr.mxu0 %v4493
    %4635 = vmatpush1.msra.mxu0 %v4492
    %4636 = vmatprep.subr.mxu0 %v4497
    %4637 = vmatpush1.msra.mxu0 %v4496
    %4638 = vmatprep.subr.mxu0 %v4501
    %4639 = vmatpush1.msra.mxu0 %v4500
    %4640 = vmatprep.subr.mxu0 %v4505
    %4641 = vmatpush1.msra.mxu0 %v4504
    %4642 = vmatprep.subr.mxu0 %v4509
    %4643 = vmatpush1.msra.mxu0 %v4508
    %4644 = vmatprep.subr.mxu0 %v4513
    %4645 = vmatpush1.msra.mxu0 %v4512
    %4646 = vmatprep.subr.mxu0 %v4517
    %4647 = vmatpush1.msra.mxu0 %v4516
    %4648 = vmatprep.subr.mxu0 %v4521
    %4649 = vmatpush1.msra.mxu0 %v4520
    %4650 = vmatprep.subr.mxu0 %v4525
    %4651 = vmatpush1.msra.mxu0 %v4524
    %4652 = vmatprep.subr.mxu0 %v4529
    %4653 = vmatpush1.msra.mxu0 %v4528
    %4654 = vmatprep.subr.mxu0 %v4533
    %4655 = vmatpush1.msra.mxu0 %v4532
    %4656 = vmatprep.subr.mxu0 %v4537
    %4657 = vmatpush1.msra.mxu0 %v4536
    %4658 = vmatprep.subr.mxu0 %v4541
    %4659 = vmatpush1.msra.mxu0 %v4540
    %4660 = vmatprep.subr.mxu0 %v4545
    %4661 = vmatpush1.msra.mxu0 %v4544
    %4662 = vmatprep.subr.mxu0 %v4549
    %4663 = vmatpush1.msra.mxu0 %v4548
    %4664 = vmatprep.subr.mxu0 %v4553
    %4665 = vmatpush1.msra.mxu0 %v4552
    %4666 = vmatprep.subr.mxu0 %v4557
    %4667 = vmatpush1.msra.mxu0 %v4556
    %4668 = vmatprep.subr.mxu0 %v4561
    %4669 = vmatpush1.msra.mxu0 %v4560
    %4670 = vmatprep.subr.mxu0 %v4565
    %4671 = vmatpush1.msra.mxu0 %v4564
    %4672 = vmatprep.subr.mxu0 %v4569
    %4673 = vmatpush1.msra.mxu0 %v4568
    %4674 = vmatprep.subr.mxu0 %v4573
    %4675 = vmatpush1.msra.mxu0 %v4572
    %4676 = vmatprep.subr.mxu0 %v4577
    %4677 = vmatpush1.msra.mxu0 %v4576
    %4678 = vmatprep.subr.mxu0 %v4581
    %4679 = vmatpush1.msra.mxu0 %v4580
    %4680 = vmatprep.subr.mxu0 %v4585
    %4681 = vmatpush1.msra.mxu0 %v4584
    %4682 = vmatprep.subr.mxu0 %v4589
    %4683 = vmatpush1.msra.mxu0 %v4588
    %4684 = vmatprep.subr.mxu0 %v4593
    %4685 = vmatpush1.msra.mxu0 %v4592
    %4686 = vmatprep.subr.mxu0 %v4597
    %4687 = vmatpush1.msra.mxu0 %v4596
    %4688 = vmatprep.subr.mxu0 %v4601
    %4689 = vmatpush1.msra.mxu0 %v4600
    %4690 = vmatprep.mubr.f32.mxu0 %v4228
    %4691 = vmatmul.mubr.f32.gmra.mrb[0].mxu0 %v4475
    %v4692 = vpop.f32.mrb[0].mxu0
    %v4693 = vadd.f32 %v4609, %v4692
    %v4694 = vpop.f32.mrb[0].mxu0
    %v4695 = vadd.f32 %v4613, %v4694
    %4696 = vdwg.mxu0
    %4697 = vmatprep.subr.mxu0 %v4479
    %4698 = vmatpush1.msra.mxu0 %v4478
    %4699 = vmatprep.subr.mxu0 %v4483
    %4700 = vmatpush1.msra.mxu0 %v4482
    %4701 = vmatprep.subr.mxu0 %v4487
    %4702 = vmatpush1.msra.mxu0 %v4486
    %4703 = vmatprep.subr.mxu0 %v4491
    %4704 = vmatpush1.msra.mxu0 %v4490
    %4705 = vmatprep.subr.mxu0 %v4495
    %4706 = vmatpush1.msra.mxu0 %v4494
    %4707 = vmatprep.subr.mxu0 %v4499
    %4708 = vmatpush1.msra.mxu0 %v4498
    %4709 = vmatprep.subr.mxu0 %v4503
    %4710 = vmatpush1.msra.mxu0 %v4502
    %4711 = vmatprep.subr.mxu0 %v4507
    %4712 = vmatpush1.msra.mxu0 %v4506
    %4713 = vmatprep.subr.mxu0 %v4511
    %4714 = vmatpush1.msra.mxu0 %v4510
    %4715 = vmatprep.subr.mxu0 %v4515
    %4716 = vmatpush1.msra.mxu0 %v4514
    %4717 = vmatprep.subr.mxu0 %v4519
    %4718 = vmatpush1.msra.mxu0 %v4518
    %4719 = vmatprep.subr.mxu0 %v4523
    %4720 = vmatpush1.msra.mxu0 %v4522
    %4721 = vmatprep.subr.mxu0 %v4527
    %4722 = vmatpush1.msra.mxu0 %v4526
    %4723 = vmatprep.subr.mxu0 %v4531
    %4724 = vmatpush1.msra.mxu0 %v4530
    %4725 = vmatprep.subr.mxu0 %v4535
    %4726 = vmatpush1.msra.mxu0 %v4534
    %4727 = vmatprep.subr.mxu0 %v4539
    %4728 = vmatpush1.msra.mxu0 %v4538
    %4729 = vmatprep.subr.mxu0 %v4543
    %4730 = vmatpush1.msra.mxu0 %v4542
    %4731 = vmatprep.subr.mxu0 %v4547
    %4732 = vmatpush1.msra.mxu0 %v4546
    %4733 = vmatprep.subr.mxu0 %v4551
    %4734 = vmatpush1.msra.mxu0 %v4550
    %4735 = vmatprep.subr.mxu0 %v4555
    %4736 = vmatpush1.msra.mxu0 %v4554
    %4737 = vmatprep.subr.mxu0 %v4559
    %4738 = vmatpush1.msra.mxu0 %v4558
    %4739 = vmatprep.subr.mxu0 %v4563
    %4740 = vmatpush1.msra.mxu0 %v4562
    %4741 = vmatprep.subr.mxu0 %v4567
    %4742 = vmatpush1.msra.mxu0 %v4566
    %4743 = vmatprep.subr.mxu0 %v4571
    %4744 = vmatpush1.msra.mxu0 %v4570
    %4745 = vmatprep.subr.mxu0 %v4575
    %4746 = vmatpush1.msra.mxu0 %v4574
    %4747 = vmatprep.subr.mxu0 %v4579
    %4748 = vmatpush1.msra.mxu0 %v4578
    %4749 = vmatprep.subr.mxu0 %v4583
    %4750 = vmatpush1.msra.mxu0 %v4582
    %4751 = vmatprep.subr.mxu0 %v4587
    %4752 = vmatpush1.msra.mxu0 %v4586
    %4753 = vmatprep.subr.mxu0 %v4591
    %4754 = vmatpush1.msra.mxu0 %v4590
    %4755 = vmatprep.subr.mxu0 %v4595
    %4756 = vmatpush1.msra.mxu0 %v4594
    %4757 = vmatprep.subr.mxu0 %v4599
    %4758 = vmatpush1.msra.mxu0 %v4598
    %4759 = vmatprep.subr.mxu0 %v4603
    %4760 = vmatpush1.msra.mxu0 %v4602
    %4761 = vmatprep.mubr.f32.mxu0 %v4228
    %4762 = vmatmul.mubr.f32.gmra.mrb[0].mxu0 %v4475
    %v4763 = vpop.f32.mrb[0].mxu0
    %v4764 = vadd.f32 %v4617, %v4763
    %v4765 = vpop.f32.mrb[0].mxu0
    %v4766 = vadd.f32 %v4621, %v4765
    %4767 = vdwg.mxu0
    %v4768 = vxor.u32 %v4693, 2147483648
    %v4769 = vmul.f32 %v4768, 1.442695
    %v4770 = vpow.pop %v4769
    %v4771 = vadd.f32 %v4770, 1.0
    %v4772 = vrcp.pop %v4771
    %v4773 = vmul.f32 1.0, %v4772
    %v4774 = vxor.u32 %v4695, 2147483648
    %v4775 = vmul.f32 %v4774, 1.442695
    %v4776 = vpow.pop %v4775
    %v4777 = vadd.f32 %v4776, 1.0
    %v4778 = vrcp.pop %v4777
    %v4779 = vmul.f32 1.0, %v4778
    %v4780 = vtanh.pop %v4764
    %v4781 = vxor.u32 %v4766, 2147483648
    %v4782 = vmul.f32 %v4781, 1.442695
    %v4783 = vpow.pop %v4782
    %v4784 = vadd.f32 %v4783, 1.0
    %v4785 = vrcp.pop %v4784
    %v4786 = vmul.f32 1.0, %v4785
    %v4787 = vmul.f32 %v4779, %v4226
    %v4788 = vmul.f32 %v4773, %v4780
    %v4789 = vadd.f32 %v4787, %v4788
    %v4790 = vtanh.pop %v4789
    %v4791 = vmul.f32 %v4786, %v4790
    %4792 = vst [vmem:[#allocation3 + $0xe] sm:$0x3] %v4791
    %v4793 = vld [vmem:[#allocation3] sm:$0xff]
    %v4794 = vld [vmem:[#allocation3 + $0x8] sm:$0xff]
    %v4795 = vld [vmem:[#allocation12] sm:$0xff]
    %v4796 = vld [vmem:[#allocation12 + $0x8] sm:$0xff]
    %v4797 = vld [vmem:[#allocation12 + $0x10] sm:$0xff]
    %v4798 = vld [vmem:[#allocation12 + $0x18] sm:$0xff]
    %v4799 = vld [vmem:[#allocation12 + $0x20] sm:$0xff]
    %v4800 = vld [vmem:[#allocation12 + $0x28] sm:$0xff]
    %v4801 = vld [vmem:[#allocation12 + $0x30] sm:$0xff]
    %v4802 = vld [vmem:[#allocation12 + $0x38] sm:$0xff]
    %v4803 = vld [vmem:[#allocation12 + $0x40] sm:$0xff]
    %v4804 = vld [vmem:[#allocation12 + $0x48] sm:$0xff]
    %v4805 = vld [vmem:[#allocation12 + $0x50] sm:$0xff]
    %v4806 = vld [vmem:[#allocation12 + $0x58] sm:$0xff]
    %v4807 = vld [vmem:[#allocation12 + $0x60] sm:$0xff]
    %v4808 = vld [vmem:[#allocation12 + $0x68] sm:$0xff]
    %v4809 = vld [vmem:[#allocation12 + $0x70] sm:$0xff]
    %v4810 = vld [vmem:[#allocation12 + $0x78] sm:$0xff]
    %v4811 = vld [vmem:[%s7] sm:$0x1]
    %v4813 = vlaneseq
    %v4814 = vshrl.u32 %v4813, 7
    %v4815 = vsub.s32 0, %v4814
    %v4816 = vrot.slane %v4811, %v4815
    %4818 = vmatprep.subr.mxu0 0.0
    %4819 = vmatpush1.msra.mxu0 %v4795
    %4820 = vmatprep.subr.mxu0 0.0
    %4821 = vmatpush1.msra.mxu0 %v4796
    %4822 = vmatprep.subr.mxu0 0.0
    %4823 = vmatpush1.msra.mxu0 %v4797
    %4824 = vmatprep.subr.mxu0 0.0
    %4825 = vmatpush1.msra.mxu0 %v4798
    %4826 = vmatprep.subr.mxu0 0.0
    %4827 = vmatpush1.msra.mxu0 %v4799
    %4828 = vmatprep.subr.mxu0 0.0
    %4829 = vmatpush1.msra.mxu0 %v4800
    %4830 = vmatprep.subr.mxu0 0.0
    %4831 = vmatpush1.msra.mxu0 %v4801
    %4832 = vmatprep.subr.mxu0 0.0
    %4833 = vmatpush1.msra.mxu0 %v4802
    %4834 = vmatprep.subr.mxu0 0.0
    %4835 = vmatpush1.msra.mxu0 %v4803
    %4836 = vmatprep.subr.mxu0 0.0
    %4837 = vmatpush1.msra.mxu0 %v4804
    %4838 = vmatprep.subr.mxu0 0.0
    %4839 = vmatpush1.msra.mxu0 %v4805
    %4840 = vmatprep.subr.mxu0 0.0
    %4841 = vmatpush1.msra.mxu0 %v4806
    %4842 = vmatprep.subr.mxu0 0.0
    %4843 = vmatpush1.msra.mxu0 %v4807
    %4844 = vmatprep.subr.mxu0 0.0
    %4845 = vmatpush1.msra.mxu0 %v4808
    %4846 = vmatprep.subr.mxu0 0.0
    %4847 = vmatpush1.msra.mxu0 %v4809
    %4848 = vmatprep.subr.mxu0 0.0
    %4849 = vmatpush1.msra.mxu0 %v4810
    %4850 = vmatprep.subr.mxu0 0.0
    %4851 = vmatpush1.msra.mxu0 0.0
    %4852 = vmatprep.subr.mxu0 0.0
    %4853 = vmatpush1.msra.mxu0 0.0
    %4854 = vmatprep.subr.mxu0 0.0
    %4855 = vmatpush1.msra.mxu0 0.0
    %4856 = vmatprep.subr.mxu0 0.0
    %4857 = vmatpush1.msra.mxu0 0.0
    %4858 = vmatprep.subr.mxu0 0.0
    %4859 = vmatpush1.msra.mxu0 0.0
    %4860 = vmatprep.subr.mxu0 0.0
    %4861 = vmatpush1.msra.mxu0 0.0
    %4862 = vmatprep.subr.mxu0 0.0
    %4863 = vmatpush1.msra.mxu0 0.0
    %4864 = vmatprep.subr.mxu0 0.0
    %4865 = vmatpush1.msra.mxu0 0.0
    %4866 = vmatprep.subr.mxu0 0.0
    %4867 = vmatpush1.msra.mxu0 0.0
    %4868 = vmatprep.subr.mxu0 0.0
    %4869 = vmatpush1.msra.mxu0 0.0
    %4870 = vmatprep.subr.mxu0 0.0
    %4871 = vmatpush1.msra.mxu0 0.0
    %4872 = vmatprep.subr.mxu0 0.0
    %4873 = vmatpush1.msra.mxu0 0.0
    %4874 = vmatprep.subr.mxu0 0.0
    %4875 = vmatpush1.msra.mxu0 0.0
    %4876 = vmatprep.subr.mxu0 0.0
    %4877 = vmatpush1.msra.mxu0 0.0
    %4878 = vmatprep.subr.mxu0 0.0
    %4879 = vmatpush1.msra.mxu0 0.0
    %4880 = vmatprep.subr.mxu0 0.0
    %4881 = vmatpush1.msra.mxu0 0.0
    %4882 = vmatprep.mubr.f32.mxu0 0.0
    %4883 = vmatmul.mubr.f32.gmra.mrb[0].mxu0 %v4793
    %v4884 = vpop.f32.mrb[0].mxu0
    %v4885 = vadd.f32 %v4816, %v4884
    %v4886 = vpop.f32.mrb[0].mxu0
    %4887 = vmatprep.mubr.f32.mxu0 0.0
    %4888 = vmatmul.mubr.f32.gmra.mrb[0].mxu0 %v4794
    %v4889 = vpop.f32.mrb[0].mxu0
    %v4890 = vadd.f32 %v4816, %v4889
    %v4891 = vpop.f32.mrb[0].mxu0
    %4892 = vdwg.mxu0
    %v4893 = vmax.f32 %v4885, 0.0
    %v4894 = vmax.f32 %v4890, 0.0
    %v4895 = vld [vmem:[%s8] sm:$0x1]
    %v4897 = vlaneseq
    %v4898 = vshrl.u32 %v4897, 7
    %v4899 = vsub.s32 0, %v4898
    %v4900 = vrot.slane %v4895, %v4899
    %v4902 = vmul.f32 %v4893, %v4900
    %v4903 = vmul.f32 %v4894, %v4900
    %4904 = vadd.xlane.f32.xlu0 %v4902
    %v4905 = vpop.xlane.xlu0 %4904
    %4906 = vadd.xlane.f32.xlu0 %v4903
    %v4907 = vpop.xlane.xlu0 %4906
    %s4908 = sld [smem:[#allocation4]]
    %v4909 = vstv %s4908
    %v4910 = vadd.f32 %v4905, %v4909
    %v4911 = vadd.f32 %v4907, %v4909
    %v4912 = vxor.u32 %v4910, 2147483648
    %v4913 = vxor.u32 %v4911, 2147483648
    %v4914 = vmul.f32 %v4912, 1.442695
    %v4915 = vpow.pop %v4914
    %v4916 = vmul.f32 %v4913, 1.442695
    %v4917 = vpow.pop %v4916
    %v4918 = vadd.f32 %v4915, 1.0
    %v4919 = vadd.f32 %v4917, 1.0
    %v4920 = vrcp.pop %v4918
    %v4921 = vmul.f32 1.0, %v4920
    %v4922 = vrcp.pop %v4919
    %v4923 = vmul.f32 1.0, %v4922
    %v4924 = vmul.f32 %v4921, 99.0
    %v4925 = vmul.f32 %v4923, 99.0
    %vm4926 = vcmask 7168
    %4927 = vst.msk [vmem:[%s10] sm:$0xff] %vm4926, %v4924
    %4928 = vst.msk [vmem:[%s10 + $0x8] sm:$0xff] %vm4926, %v4925
    // Predicated region
    $region62: #{tpu_custom_call.1} parent=1 // pred_check
      _
    $region63: #{tpu_custom_call.1} parent=1 // pred_check_branch
      %4930 = sbr.rel (0) target = $region65
    $region64: #{tpu_custom_call.1} parent=1 // pred_region
      _
    $region65: #{tpu_custom_call.1} parent=1 // pred_fallthru
      _
    // Predicated region
    $region66: #{tpu_custom_call.1} parent=1 // pred_check
      _
    $region67: #{tpu_custom_call.1} parent=1 // pred_check_branch
      %4932 = sbr.rel (0) target = $region69
    $region68: #{tpu_custom_call.1} parent=1 // pred_region
      _
    $region69: #{tpu_custom_call.1} parent=1 // pred_fallthru
      _
    %4933 = vsyncpa [#allocation6], 1
    %4934 = vsyncpa [#allocation8], 1
    %4935 = vsyncpa [#allocation11], 1

</llo_original>
